<compile_context>
chip_gen: v7x
topology: tpu7x:2x2x1
jax: 0.10.0
libtpu: 0.0.40
codegen_flags: <defaults>
</compile_context>

<pallas_src>
import functools

import jax
import jax.numpy as jnp
from jax.experimental import pallas as pl
from jax.experimental.pallas import tpu as pltpu


def _round_up(x, m):
    return ((x + m - 1) // m) * m


# ----------------------------------------------------------------------------
# Pallas kernel 1: fused  out = act((x @ w) * scale + bias)
#   bf16 operands on the MXU, f32 accumulation, f32 epilogue, downcast at store.
# ----------------------------------------------------------------------------
def _mm_kernel(x_ref, w_ref, s_ref, b_ref, o_ref, *, act):
    y = jnp.dot(x_ref[...], w_ref[...], preferred_element_type=jnp.float32)
    y = y * s_ref[...] + b_ref[...]            # f32 epilogue (v5e: no bf16 VALU)
    if act == "relu":
        y = jnp.maximum(y, 0.0)
    o_ref[...] = y.astype(o_ref.dtype)


_TM_MAX = 1024    # capped M tile: double-buffers comfortably, never one huge block
_M_ALIGN = 16     # bf16 sublane packing => M blocks must be multiples of 16


def matmul_bias_act(x, w, scale, bias, act="none", out_dtype=jnp.bfloat16):
    """Fused (x @ w) * scale + bias (+ activation).  x:(M,K)  w:(K,N) -> (M,N)."""
    M, K = x.shape
    _, N = w.shape
    tm = min(_TM_MAX, _round_up(M, _M_ALIGN))
    M_pad = _round_up(M, tm)
    if M_pad != M:
        x = jnp.pad(x, ((0, M_pad - M), (0, 0)))
    grid = (M_pad // tm,)
    out = pl.pallas_call(
        functools.partial(_mm_kernel, act=act),
        out_shape=jax.ShapeDtypeStruct((M_pad, N), out_dtype),
        grid_spec=pltpu.PrefetchScalarGridSpec(
            num_scalar_prefetch=0,
            grid=grid,
            in_specs=[
                pl.BlockSpec((tm, K), lambda i: (i, 0)),
                pl.BlockSpec((K, N), lambda i: (0, 0)),
                pl.BlockSpec((1, N), lambda i: (0, 0)),
                pl.BlockSpec((1, N), lambda i: (0, 0)),
            ],
            out_specs=pl.BlockSpec((tm, N), lambda i: (i, 0)),
        ),
        compiler_params=pltpu.CompilerParams(
            dimension_semantics=("parallel",),
            vmem_limit_bytes=32 * 1024 * 1024,
        ),
    )(x.astype(jnp.bfloat16), w.astype(jnp.bfloat16),
      scale.reshape(1, N).astype(jnp.float32),
      bias.reshape(1, N).astype(jnp.float32))
    return out[:M]


# ----------------------------------------------------------------------------
# Pallas kernel 2: fused Conv2d(1x1) + Sigmoid + per-row spatial min-max norm.
#   Heatmap is produced directly in (K, H*W) layout: lane dim = H*W (dense).
# ----------------------------------------------------------------------------
def _head_final_kernel(x_ref, w_ref, b_ref, o_ref):
    # x_ref: (Cin, HW) bf16 ; w_ref: (K, Cin) bf16 ; b_ref: (K, 1) f32 ; o: (K, HW) f32
    hm = jnp.dot(w_ref[...], x_ref[...], preferred_element_type=jnp.float32)
    hm = jax.nn.sigmoid(hm + b_ref[...])
    mn = jnp.min(hm, axis=-1, keepdims=True)
    mx = jnp.max(hm, axis=-1, keepdims=True)
    inv = pl.reciprocal(mx - mn + 1e-8, approx=True)     # EUP slot, otherwise idle
    o_ref[...] = jnp.clip((hm - mn) * inv, 0.0, 1.0)


def heatmap_head(xt, wf, bf):
    """xt: (B, Cin, H*W) features; wf: (K, Cin); bf: (K,) -> (B, K, H*W) f32."""
    B, Cin, HW = xt.shape
    K = wf.shape[0]
    return pl.pallas_call(
        _head_final_kernel,
        out_shape=jax.ShapeDtypeStruct((B, K, HW), jnp.float32),
        grid_spec=pltpu.PrefetchScalarGridSpec(
            num_scalar_prefetch=0,
            grid=(B,),
            in_specs=[
                pl.BlockSpec((None, Cin, HW), lambda b: (b, 0, 0)),
                pl.BlockSpec((K, Cin), lambda b: (0, 0)),
                pl.BlockSpec((K, 1), lambda b: (0, 0)),
            ],
            out_specs=pl.BlockSpec((None, K, HW), lambda b: (b, 0, 0)),
        ),
        compiler_params=pltpu.CompilerParams(
            dimension_semantics=("parallel",),
            vmem_limit_bytes=32 * 1024 * 1024,
        ),
    )(xt.astype(jnp.bfloat16), wf.astype(jnp.bfloat16),
      bf.reshape(K, 1).astype(jnp.float32))


# ----------------------------------------------------------------------------
# Conv / ConvTranspose lowered to a shared 3x3 im2col + Pallas matmul
# ----------------------------------------------------------------------------
def _im2col9(x_nhwc):
    """3x3 / stride 1 / pad 1 im2col: (B,H,W,C) -> (B*H*W, 9*C), tap order (dy,dx,c)."""
    B, H, W, C = x_nhwc.shape
    xp = jnp.pad(x_nhwc, ((0, 0), (1, 1), (1, 1), (0, 0)))
    pats = jnp.stack(
        [xp[:, dy:dy + H, dx:dx + W, :] for dy in range(3) for dx in range(3)],
        axis=3,
    )  # (B, H, W, 9, C)
    # TODO(synk): im2col is still materialized by XLA in HBM (9x activation traffic);
    #             moving it inside the kernel (halo row-blocks + in-kernel shifted
    #             slices) would remove that traffic entirely.
    return pats.reshape(B * H * W, 9 * C)


def conv3x3_bn_relu(x, W, fused_scale, fused_bias):
    """x: (B,H,W,Cin) NHWC, W: (Cout,Cin,3,3) PyTorch layout.  Conv+BN(eval)+ReLU."""
    B, H, Wd, Cin = x.shape
    Cout = W.shape[0]
    pats = _im2col9(x)
    Wm = jnp.transpose(W, (2, 3, 1, 0)).reshape(9 * Cin, Cout)
    y = matmul_bias_act(pats, Wm, fused_scale, fused_bias, act="relu")
    return y.reshape(B, H, Wd, Cout)


# ConvTranspose2d(k=4, s=2, p=1): each output-parity (a,c) sub-grid is a 2x2 conv.
_KTAP = ((3, 1), (2, 0))  # kernel taps per (parity, tap-index)


def _deconv_weight_9tap(Wt):
    """Pack ConvTranspose2d (Cin,Cout,4,4) weights into one (9*Cin, 4*Cout) matrix so
    all four output parities come from a single lane-dense (N=4*Cout) matmul over the
    shared 3x3 im2col (unused taps are zero)."""
    Cin, Cout = Wt.shape[0], Wt.shape[1]
    Wm = jnp.zeros((3, 3, Cin, 4, Cout), Wt.dtype)
    for a in range(2):
        for c in range(2):
            p = 2 * a + c
            for r in range(2):
                for s in range(2):
                    Wm = Wm.at[a + r, c + s, :, p, :].set(
                        Wt[:, :, _KTAP[a][r], _KTAP[c][s]])
    return Wm.reshape(9 * Cin, 4 * Cout)


def convtranspose4x4s2p1_relu(x, Wt, b, out_layout="nhwc"):
    """x: (B,H,W,Cin), Wt: (Cin,Cout,4,4) PyTorch ConvTranspose2d layout, b: (Cout,).
    One fused matmul with N = 4*Cout; parities de-interleaved afterwards."""
    B, H, Wd, Cin = x.shape
    Cout = Wt.shape[1]
    pats = _im2col9(x)
    Wm = _deconv_weight_9tap(Wt)
    y = matmul_bias_act(pats, Wm, jnp.ones((4 * Cout,), jnp.float32),
                        jnp.tile(b, 4), act="relu")
    y = y.reshape(B, H, Wd, 2, 2, Cout)                  # [b, i, j, a, c, co]
    if out_layout == "chw_flat":
        # de-interleave straight into channels-first / flattened-spatial layout
        y = jnp.transpose(y, (0, 5, 1, 3, 2, 4))         # (B, Cout, H, 2, W, 2)
        return y.reshape(B, Cout, 4 * H * Wd)
    y = jnp.transpose(y, (0, 1, 3, 2, 4, 5))             # (B, H, 2, W, 2, Cout)
    return y.reshape(B, 2 * H, 2 * Wd, Cout)


# ----------------------------------------------------------------------------
# KeypointNet forward
# ----------------------------------------------------------------------------
PATCH = 32  # backbone output stride (EfficientNet-B1 stride-32 feature map)


def keypointnet_forward(x_nchw, params):
    B, C, H, W = x_nchw.shape
    assert H % PATCH == 0 and W % PATCH == 0, "spatial dims must be multiples of 32"
    x = jnp.transpose(x_nchw, (0, 2, 3, 1)).astype(jnp.float32)   # NHWC

    # --- backbone (stub, see TODO above): stride-32 patch-embed + ReLU ---
    Hp, Wp = H // PATCH, W // PATCH
    patches = (x.reshape(B, Hp, PATCH, Wp, PATCH, C)
                 .transpose(0, 1, 3, 2, 4, 5)
                 .reshape(B * Hp * Wp, PATCH * PATCH * C))
    Cb = params["W_pe"].shape[1]
    feat = matmul_bias_act(patches, params["W_pe"], jnp.ones((Cb,), jnp.float32),
                           params["b_pe"], act="relu").reshape(B, Hp, Wp, Cb)

    # --- head ---
    h = conv3x3_bn_relu(feat, params["W1"], params["bn_scale"], params["bn_bias"])
    # Dropout2d(p=0.1): eval-mode identity.
    for i in range(4):
        h = convtranspose4x4s2p1_relu(h, params[f"Wt{i}"], params[f"bt{i}"])
    # last deconv de-interleaves directly into (B, Cout, H*W) for the final kernel
    h = convtranspose4x4s2p1_relu(h, params["Wt4"], params["bt4"],
                                  out_layout="chw_flat")

    # --- fused 1x1 conv + sigmoid + per-(B,K) spatial min-max norm (one kernel) ---
    K = params["Wf"].shape[0]
    hm = heatmap_head(h, params["Wf"].reshape(K, -1), params["bf"])
    return hm.reshape(B, K, H, W)


# ----------------------------------------------------------------------------
# Deterministic parameter construction
# ----------------------------------------------------------------------------
def make_params(key, in_ch=3, backbone_ch=32, head_ch=32, num_keypoints=8):
    keys = jax.random.split(key, 32)
    kit = iter(keys)
    p = {}
    p["W_pe"] = jax.random.normal(next(kit), (PATCH * PATCH * in_ch, backbone_ch)) * 0.02
    p["b_pe"] = jax.random.normal(next(kit), (backbone_ch,)) * 0.01

    # Conv2d(backbone_ch, head_ch, 3, padding=1) + BatchNorm2d(head_ch) (eval, folded)
    p["W1"] = jax.random.normal(next(kit), (head_ch, backbone_ch, 3, 3)) * 0.05
    b1 = jax.random.normal(next(kit), (head_ch,)) * 0.01
    gamma = jnp.ones((head_ch,)) + jax.random.normal(next(kit), (head_ch,)) * 0.01
    beta = jax.random.normal(next(kit), (head_ch,)) * 0.01
    run_mean = jax.random.normal(next(kit), (head_ch,)) * 0.01
    run_var = jnp.ones((head_ch,))
    s = gamma / jnp.sqrt(run_var + 1e-5)
    p["bn_scale"] = s
    p["bn_bias"] = (b1 - run_mean) * s + beta

    # 5 x ConvTranspose2d(head_ch, head_ch, 4, stride=2, padding=1)
    for i in range(5):
        p[f"Wt{i}"] = jax.random.normal(next(kit), (head_ch, head_ch, 4, 4)) * 0.05
        p[f"bt{i}"] = jax.random.normal(next(kit), (head_ch,)) * 0.01

    # Conv2d(head_ch, num_keypoints, 1)
    p["Wf"] = jax.random.normal(next(kit), (num_keypoints, head_ch, 1, 1)) * 0.05
    p["bf"] = jax.random.normal(next(kit), (num_keypoints,)) * 0.01
    return {k: v.astype(jnp.float32) for k, v in p.items()}


# ----------------------------------------------------------------------------
if __name__ == "__main__":
    key = jax.random.PRNGKey(0)
    k_param, k_in = jax.random.split(key)

    # small shapes: B=2, C=3, 64x64 input -> stride-32 features (2x2) -> 5x2 upsample -> 64x64
    x = jax.random.normal(k_in, (2, 3, 64, 64), dtype=jnp.float32)
    params = make_params(k_param, in_ch=3, backbone_ch=32, head_ch=32, num_keypoints=8)

    fwd = jax.jit(keypointnet_forward)
    out = fwd(x, params)
    out = jax.block_until_ready(out)

    assert out.shape == (2, 8, 64, 64), out.shape
    assert bool(jnp.all(jnp.isfinite(out)))
    assert bool(jnp.all((out >= 0.0) & (out <= 1.0)))
    print("KERNEL_OK")
</pallas_src>

<mosaic_0001>
module attributes {stable_mosaic.version = 11 : i64} {
  func.func @_mm_kernel(%arg0: i32, %arg1: memref<16x3072xbf16, #tpu.memory_space<vmem>>, %arg2: memref<3072x32xbf16, #tpu.memory_space<vmem>>, %arg3: memref<1x32xf32, #tpu.memory_space<vmem>>, %arg4: memref<1x32xf32, #tpu.memory_space<vmem>>, %arg5: memref<16x32xbf16, #tpu.memory_space<vmem>>) attributes {dimension_semantics = [#tpu.dimension_semantics<parallel>], iteration_bounds = array<i64: 1>, scalar_prefetch = 0 : i64, scratch_operands = 0 : i64, tpu.core_type = #tpu.core_type<tc>, window_params = [{transform_indices = @transform_0, window_bounds = array<i64: 16, 3072>}, {pipeline_mode = #tpu.pipeline_mode<synchronous>, transform_indices = @transform_1, window_bounds = array<i64: 3072, 32>}, {pipeline_mode = #tpu.pipeline_mode<synchronous>, transform_indices = @transform_2, window_bounds = array<i64: 1, 32>}, {pipeline_mode = #tpu.pipeline_mode<synchronous>, transform_indices = @transform_3, window_bounds = array<i64: 1, 32>}, {transform_indices = @transform_4, window_bounds = array<i64: 16, 32>}]} {
    %c0 = arith.constant 0 : index
    %c0_0 = arith.constant 0 : index
    %0 = vector.load %arg1[%c0, %c0_0] : memref<16x3072xbf16, #tpu.memory_space<vmem>>, vector<16x3072xbf16>
    %c0_1 = arith.constant 0 : index
    %c0_2 = arith.constant 0 : index
    %1 = vector.load %arg2[%c0_1, %c0_2] : memref<3072x32xbf16, #tpu.memory_space<vmem>>, vector<3072x32xbf16>
    %cst = arith.constant dense<0.000000e+00> : vector<16x32xf32>
    %2 = tpu.matmul %0, %1, %cst {dimension_numbers = #tpu.dot_dimension_numbers<[1], [0], [0], [1], [0, 0, 1, 1], [], []>} : vector<16x3072xbf16>, vector<3072x32xbf16>, vector<16x32xf32> -> vector<16x32xf32>
    %c0_3 = arith.constant 0 : index
    %c0_4 = arith.constant 0 : index
    %3 = vector.load %arg3[%c0_3, %c0_4] : memref<1x32xf32, #tpu.memory_space<vmem>>, vector<1x32xf32>
    %4 = vector.broadcast %3 : vector<1x32xf32> to vector<16x32xf32>
    %5 = arith.mulf %2, %4 : vector<16x32xf32>
    %c0_5 = arith.constant 0 : index
    %c0_6 = arith.constant 0 : index
    %6 = vector.load %arg4[%c0_5, %c0_6] : memref<1x32xf32, #tpu.memory_space<vmem>>, vector<1x32xf32>
    %7 = vector.broadcast %6 : vector<1x32xf32> to vector<16x32xf32>
    %8 = arith.addf %5, %7 : vector<16x32xf32>
    %cst_7 = arith.constant 0.000000e+00 : f32
    %9 = vector.broadcast %cst_7 : f32 to vector<16x32xf32>
    %10 = arith.maximumf %8, %9 : vector<16x32xf32>
    %11 = arith.truncf %10 : vector<16x32xf32> to vector<16x32xbf16>
    %c0_8 = arith.constant 0 : index
    %c0_9 = arith.constant 0 : index
    %12 = vector.load %arg5[%c0_8, %c0_9] : memref<16x32xbf16, #tpu.memory_space<vmem>>, vector<16x32xbf16>
    tpu.vector_store %arg5[%c0_8, %c0_9], %11 {strides = array<i32>} : memref<16x32xbf16, #tpu.memory_space<vmem>>, vector<16x32xbf16>,
    return
  }
  func.func @transform_0(%arg0: i32) -> (i32, i32) {
    %c0_i32 = arith.constant 0 : i32
    %c0_i32_0 = arith.constant 0 : i32
    return %arg0, %c0_i32 : i32, i32
  }
  func.func @transform_1(%arg0: i32) -> (i32, i32) {
    %c0_i32 = arith.constant 0 : i32
    %c0_i32_0 = arith.constant 0 : i32
    %c0_i32_1 = arith.constant 0 : i32
    return %c0_i32, %c0_i32_0 : i32, i32
  }
  func.func @transform_2(%arg0: i32) -> (i32, i32) {
    %c0_i32 = arith.constant 0 : i32
    %c0_i32_0 = arith.constant 0 : i32
    %c0_i32_1 = arith.constant 0 : i32
    return %c0_i32, %c0_i32_0 : i32, i32
  }
  func.func @transform_3(%arg0: i32) -> (i32, i32) {
    %c0_i32 = arith.constant 0 : i32
    %c0_i32_0 = arith.constant 0 : i32
    %c0_i32_1 = arith.constant 0 : i32
    return %c0_i32, %c0_i32_0 : i32, i32
  }
  func.func @transform_4(%arg0: i32) -> (i32, i32) {
    %c0_i32 = arith.constant 0 : i32
    %c0_i32_0 = arith.constant 0 : i32
    return %arg0, %c0_i32 : i32, i32
  }
}

module attributes {stable_mosaic.version = 11 : i64} {
  func.func @_mm_kernel(%arg0: i32, %arg1: memref<16x288xbf16, #tpu.memory_space<vmem>>, %arg2: memref<288x32xbf16, #tpu.memory_space<vmem>>, %arg3: memref<1x32xf32, #tpu.memory_space<vmem>>, %arg4: memref<1x32xf32, #tpu.memory_space<vmem>>, %arg5: memref<16x32xbf16, #tpu.memory_space<vmem>>) attributes {dimension_semantics = [#tpu.dimension_semantics<parallel>], iteration_bounds = array<i64: 1>, scalar_prefetch = 0 : i64, scratch_operands = 0 : i64, tpu.core_type = #tpu.core_type<tc>, window_params = [{transform_indices = @transform_0, window_bounds = array<i64: 16, 288>}, {pipeline_mode = #tpu.pipeline_mode<synchronous>, transform_indices = @transform_1, window_bounds = array<i64: 288, 32>}, {pipeline_mode = #tpu.pipeline_mode<synchronous>, transform_indices = @transform_2, window_bounds = array<i64: 1, 32>}, {pipeline_mode = #tpu.pipeline_mode<synchronous>, transform_indices = @transform_3, window_bounds = array<i64: 1, 32>}, {transform_indices = @transform_4, window_bounds = array<i64: 16, 32>}]} {
    %c0 = arith.constant 0 : index
    %c0_0 = arith.constant 0 : index
    %0 = vector.load %arg1[%c0, %c0_0] : memref<16x288xbf16, #tpu.memory_space<vmem>>, vector<16x288xbf16>
    %c0_1 = arith.constant 0 : index
    %c0_2 = arith.constant 0 : index
    %1 = vector.load %arg2[%c0_1, %c0_2] : memref<288x32xbf16, #tpu.memory_space<vmem>>, vector<288x32xbf16>
    %cst = arith.constant dense<0.000000e+00> : vector<16x32xf32>
    %2 = tpu.matmul %0, %1, %cst {dimension_numbers = #tpu.dot_dimension_numbers<[1], [0], [0], [1], [0, 0, 1, 1], [], []>} : vector<16x288xbf16>, vector<288x32xbf16>, vector<16x32xf32> -> vector<16x32xf32>
    %c0_3 = arith.constant 0 : index
    %c0_4 = arith.constant 0 : index
    %3 = vector.load %arg3[%c0_3, %c0_4] : memref<1x32xf32, #tpu.memory_space<vmem>>, vector<1x32xf32>
    %4 = vector.broadcast %3 : vector<1x32xf32> to vector<16x32xf32>
    %5 = arith.mulf %2, %4 : vector<16x32xf32>
    %c0_5 = arith.constant 0 : index
    %c0_6 = arith.constant 0 : index
    %6 = vector.load %arg4[%c0_5, %c0_6] : memref<1x32xf32, #tpu.memory_space<vmem>>, vector<1x32xf32>
    %7 = vector.broadcast %6 : vector<1x32xf32> to vector<16x32xf32>
    %8 = arith.addf %5, %7 : vector<16x32xf32>
    %cst_7 = arith.constant 0.000000e+00 : f32
    %9 = vector.broadcast %cst_7 : f32 to vector<16x32xf32>
    %10 = arith.maximumf %8, %9 : vector<16x32xf32>
    %11 = arith.truncf %10 : vector<16x32xf32> to vector<16x32xbf16>
    %c0_8 = arith.constant 0 : index
    %c0_9 = arith.constant 0 : index
    %12 = vector.load %arg5[%c0_8, %c0_9] : memref<16x32xbf16, #tpu.memory_space<vmem>>, vector<16x32xbf16>
    tpu.vector_store %arg5[%c0_8, %c0_9], %11 {strides = array<i32>} : memref<16x32xbf16, #tpu.memory_space<vmem>>, vector<16x32xbf16>,
    return
  }
  func.func @transform_0(%arg0: i32) -> (i32, i32) {
    %c0_i32 = arith.constant 0 : i32
    %c0_i32_0 = arith.constant 0 : i32
    return %arg0, %c0_i32 : i32, i32
  }
  func.func @transform_1(%arg0: i32) -> (i32, i32) {
    %c0_i32 = arith.constant 0 : i32
    %c0_i32_0 = arith.constant 0 : i32
    %c0_i32_1 = arith.constant 0 : i32
    return %c0_i32, %c0_i32_0 : i32, i32
  }
  func.func @transform_2(%arg0: i32) -> (i32, i32) {
    %c0_i32 = arith.constant 0 : i32
    %c0_i32_0 = arith.constant 0 : i32
    %c0_i32_1 = arith.constant 0 : i32
    return %c0_i32, %c0_i32_0 : i32, i32
  }
  func.func @transform_3(%arg0: i32) -> (i32, i32) {
    %c0_i32 = arith.constant 0 : i32
    %c0_i32_0 = arith.constant 0 : i32
    %c0_i32_1 = arith.constant 0 : i32
    return %c0_i32, %c0_i32_0 : i32, i32
  }
  func.func @transform_4(%arg0: i32) -> (i32, i32) {
    %c0_i32 = arith.constant 0 : i32
    %c0_i32_0 = arith.constant 0 : i32
    return %arg0, %c0_i32 : i32, i32
  }
}

module attributes {stable_mosaic.version = 11 : i64} {
  func.func @_mm_kernel(%arg0: i32, %arg1: memref<16x288xbf16, #tpu.memory_space<vmem>>, %arg2: memref<288x128xbf16, #tpu.memory_space<vmem>>, %arg3: memref<1x128xf32, #tpu.memory_space<vmem>>, %arg4: memref<1x128xf32, #tpu.memory_space<vmem>>, %arg5: memref<16x128xbf16, #tpu.memory_space<vmem>>) attributes {dimension_semantics = [#tpu.dimension_semantics<parallel>], iteration_bounds = array<i64: 1>, scalar_prefetch = 0 : i64, scratch_operands = 0 : i64, tpu.core_type = #tpu.core_type<tc>, window_params = [{transform_indices = @transform_0, window_bounds = array<i64: 16, 288>}, {pipeline_mode = #tpu.pipeline_mode<synchronous>, transform_indices = @transform_1, window_bounds = array<i64: 288, 128>}, {pipeline_mode = #tpu.pipeline_mode<synchronous>, transform_indices = @transform_2, window_bounds = array<i64: 1, 128>}, {pipeline_mode = #tpu.pipeline_mode<synchronous>, transform_indices = @transform_3, window_bounds = array<i64: 1, 128>}, {transform_indices = @transform_4, window_bounds = array<i64: 16, 128>}]} {
    %c0 = arith.constant 0 : index
    %c0_0 = arith.constant 0 : index
    %0 = vector.load %arg1[%c0, %c0_0] : memref<16x288xbf16, #tpu.memory_space<vmem>>, vector<16x288xbf16>
    %c0_1 = arith.constant 0 : index
    %c0_2 = arith.constant 0 : index
    %1 = vector.load %arg2[%c0_1, %c0_2] : memref<288x128xbf16, #tpu.memory_space<vmem>>, vector<288x128xbf16>
    %cst = arith.constant dense<0.000000e+00> : vector<16x128xf32>
    %2 = tpu.matmul %0, %1, %cst {dimension_numbers = #tpu.dot_dimension_numbers<[1], [0], [0], [1], [0, 0, 1, 1], [], []>} : vector<16x288xbf16>, vector<288x128xbf16>, vector<16x128xf32> -> vector<16x128xf32>
    %c0_3 = arith.constant 0 : index
    %c0_4 = arith.constant 0 : index
    %3 = vector.load %arg3[%c0_3, %c0_4] : memref<1x128xf32, #tpu.memory_space<vmem>>, vector<1x128xf32>
    %4 = vector.broadcast %3 : vector<1x128xf32> to vector<16x128xf32>
    %5 = arith.mulf %2, %4 : vector<16x128xf32>
    %c0_5 = arith.constant 0 : index
    %c0_6 = arith.constant 0 : index
    %6 = vector.load %arg4[%c0_5, %c0_6] : memref<1x128xf32, #tpu.memory_space<vmem>>, vector<1x128xf32>
    %7 = vector.broadcast %6 : vector<1x128xf32> to vector<16x128xf32>
    %8 = arith.addf %5, %7 : vector<16x128xf32>
    %cst_7 = arith.constant 0.000000e+00 : f32
    %9 = vector.broadcast %cst_7 : f32 to vector<16x128xf32>
    %10 = arith.maximumf %8, %9 : vector<16x128xf32>
    %11 = arith.truncf %10 : vector<16x128xf32> to vector<16x128xbf16>
    %c0_8 = arith.constant 0 : index
    %c0_9 = arith.constant 0 : index
    %12 = vector.load %arg5[%c0_8, %c0_9] : memref<16x128xbf16, #tpu.memory_space<vmem>>, vector<16x128xbf16>
    tpu.vector_store %arg5[%c0_8, %c0_9], %11 {strides = array<i32>} : memref<16x128xbf16, #tpu.memory_space<vmem>>, vector<16x128xbf16>,
    return
  }
  func.func @transform_0(%arg0: i32) -> (i32, i32) {
    %c0_i32 = arith.constant 0 : i32
    %c0_i32_0 = arith.constant 0 : i32
    return %arg0, %c0_i32 : i32, i32
  }
  func.func @transform_1(%arg0: i32) -> (i32, i32) {
    %c0_i32 = arith.constant 0 : i32
    %c0_i32_0 = arith.constant 0 : i32
    %c0_i32_1 = arith.constant 0 : i32
    return %c0_i32, %c0_i32_0 : i32, i32
  }
  func.func @transform_2(%arg0: i32) -> (i32, i32) {
    %c0_i32 = arith.constant 0 : i32
    %c0_i32_0 = arith.constant 0 : i32
    %c0_i32_1 = arith.constant 0 : i32
    return %c0_i32, %c0_i32_0 : i32, i32
  }
  func.func @transform_3(%arg0: i32) -> (i32, i32) {
    %c0_i32 = arith.constant 0 : i32
    %c0_i32_0 = arith.constant 0 : i32
    %c0_i32_1 = arith.constant 0 : i32
    return %c0_i32, %c0_i32_0 : i32, i32
  }
  func.func @transform_4(%arg0: i32) -> (i32, i32) {
    %c0_i32 = arith.constant 0 : i32
    %c0_i32_0 = arith.constant 0 : i32
    return %arg0, %c0_i32 : i32, i32
  }
}

module attributes {stable_mosaic.version = 11 : i64} {
  func.func @_mm_kernel(%arg0: i32, %arg1: memref<32x288xbf16, #tpu.memory_space<vmem>>, %arg2: memref<288x128xbf16, #tpu.memory_space<vmem>>, %arg3: memref<1x128xf32, #tpu.memory_space<vmem>>, %arg4: memref<1x128xf32, #tpu.memory_space<vmem>>, %arg5: memref<32x128xbf16, #tpu.memory_space<vmem>>) attributes {dimension_semantics = [#tpu.dimension_semantics<parallel>], iteration_bounds = array<i64: 1>, scalar_prefetch = 0 : i64, scratch_operands = 0 : i64, tpu.core_type = #tpu.core_type<tc>, window_params = [{transform_indices = @transform_0, window_bounds = array<i64: 32, 288>}, {pipeline_mode = #tpu.pipeline_mode<synchronous>, transform_indices = @transform_1, window_bounds = array<i64: 288, 128>}, {pipeline_mode = #tpu.pipeline_mode<synchronous>, transform_indices = @transform_2, window_bounds = array<i64: 1, 128>}, {pipeline_mode = #tpu.pipeline_mode<synchronous>, transform_indices = @transform_3, window_bounds = array<i64: 1, 128>}, {transform_indices = @transform_4, window_bounds = array<i64: 32, 128>}]} {
    %c0 = arith.constant 0 : index
    %c0_0 = arith.constant 0 : index
    %0 = vector.load %arg1[%c0, %c0_0] : memref<32x288xbf16, #tpu.memory_space<vmem>>, vector<32x288xbf16>
    %c0_1 = arith.constant 0 : index
    %c0_2 = arith.constant 0 : index
    %1 = vector.load %arg2[%c0_1, %c0_2] : memref<288x128xbf16, #tpu.memory_space<vmem>>, vector<288x128xbf16>
    %cst = arith.constant dense<0.000000e+00> : vector<32x128xf32>
    %2 = tpu.matmul %0, %1, %cst {dimension_numbers = #tpu.dot_dimension_numbers<[1], [0], [0], [1], [0, 0, 1, 1], [], []>} : vector<32x288xbf16>, vector<288x128xbf16>, vector<32x128xf32> -> vector<32x128xf32>
    %c0_3 = arith.constant 0 : index
    %c0_4 = arith.constant 0 : index
    %3 = vector.load %arg3[%c0_3, %c0_4] : memref<1x128xf32, #tpu.memory_space<vmem>>, vector<1x128xf32>
    %4 = vector.broadcast %3 : vector<1x128xf32> to vector<32x128xf32>
    %5 = arith.mulf %2, %4 : vector<32x128xf32>
    %c0_5 = arith.constant 0 : index
    %c0_6 = arith.constant 0 : index
    %6 = vector.load %arg4[%c0_5, %c0_6] : memref<1x128xf32, #tpu.memory_space<vmem>>, vector<1x128xf32>
    %7 = vector.broadcast %6 : vector<1x128xf32> to vector<32x128xf32>
    %8 = arith.addf %5, %7 : vector<32x128xf32>
    %cst_7 = arith.constant 0.000000e+00 : f32
    %9 = vector.broadcast %cst_7 : f32 to vector<32x128xf32>
    %10 = arith.maximumf %8, %9 : vector<32x128xf32>
    %11 = arith.truncf %10 : vector<32x128xf32> to vector<32x128xbf16>
    %c0_8 = arith.constant 0 : index
    %c0_9 = arith.constant 0 : index
    %12 = vector.load %arg5[%c0_8, %c0_9] : memref<32x128xbf16, #tpu.memory_space<vmem>>, vector<32x128xbf16>
    tpu.vector_store %arg5[%c0_8, %c0_9], %11 {strides = array<i32>} : memref<32x128xbf16, #tpu.memory_space<vmem>>, vector<32x128xbf16>,
    return
  }
  func.func @transform_0(%arg0: i32) -> (i32, i32) {
    %c0_i32 = arith.constant 0 : i32
    %c0_i32_0 = arith.constant 0 : i32
    return %arg0, %c0_i32 : i32, i32
  }
  func.func @transform_1(%arg0: i32) -> (i32, i32) {
    %c0_i32 = arith.constant 0 : i32
    %c0_i32_0 = arith.constant 0 : i32
    %c0_i32_1 = arith.constant 0 : i32
    return %c0_i32, %c0_i32_0 : i32, i32
  }
  func.func @transform_2(%arg0: i32) -> (i32, i32) {
    %c0_i32 = arith.constant 0 : i32
    %c0_i32_0 = arith.constant 0 : i32
    %c0_i32_1 = arith.constant 0 : i32
    return %c0_i32, %c0_i32_0 : i32, i32
  }
  func.func @transform_3(%arg0: i32) -> (i32, i32) {
    %c0_i32 = arith.constant 0 : i32
    %c0_i32_0 = arith.constant 0 : i32
    %c0_i32_1 = arith.constant 0 : i32
    return %c0_i32, %c0_i32_0 : i32, i32
  }
  func.func @transform_4(%arg0: i32) -> (i32, i32) {
    %c0_i32 = arith.constant 0 : i32
    %c0_i32_0 = arith.constant 0 : i32
    return %arg0, %c0_i32 : i32, i32
  }
}

module attributes {stable_mosaic.version = 11 : i64} {
  func.func @_mm_kernel(%arg0: i32, %arg1: memref<128x288xbf16, #tpu.memory_space<vmem>>, %arg2: memref<288x128xbf16, #tpu.memory_space<vmem>>, %arg3: memref<1x128xf32, #tpu.memory_space<vmem>>, %arg4: memref<1x128xf32, #tpu.memory_space<vmem>>, %arg5: memref<128x128xbf16, #tpu.memory_space<vmem>>) attributes {dimension_semantics = [#tpu.dimension_semantics<parallel>], iteration_bounds = array<i64: 1>, scalar_prefetch = 0 : i64, scratch_operands = 0 : i64, tpu.core_type = #tpu.core_type<tc>, window_params = [{transform_indices = @transform_0, window_bounds = array<i64: 128, 288>}, {pipeline_mode = #tpu.pipeline_mode<synchronous>, transform_indices = @transform_1, window_bounds = array<i64: 288, 128>}, {pipeline_mode = #tpu.pipeline_mode<synchronous>, transform_indices = @transform_2, window_bounds = array<i64: 1, 128>}, {pipeline_mode = #tpu.pipeline_mode<synchronous>, transform_indices = @transform_3, window_bounds = array<i64: 1, 128>}, {transform_indices = @transform_4, window_bounds = array<i64: 128, 128>}]} {
    %c0 = arith.constant 0 : index
    %c0_0 = arith.constant 0 : index
    %0 = vector.load %arg1[%c0, %c0_0] : memref<128x288xbf16, #tpu.memory_space<vmem>>, vector<128x288xbf16>
    %c0_1 = arith.constant 0 : index
    %c0_2 = arith.constant 0 : index
    %1 = vector.load %arg2[%c0_1, %c0_2] : memref<288x128xbf16, #tpu.memory_space<vmem>>, vector<288x128xbf16>
    %cst = arith.constant dense<0.000000e+00> : vector<128x128xf32>
    %2 = tpu.matmul %0, %1, %cst {dimension_numbers = #tpu.dot_dimension_numbers<[1], [0], [0], [1], [0, 0, 1, 1], [], []>} : vector<128x288xbf16>, vector<288x128xbf16>, vector<128x128xf32> -> vector<128x128xf32>
    %c0_3 = arith.constant 0 : index
    %c0_4 = arith.constant 0 : index
    %3 = vector.load %arg3[%c0_3, %c0_4] : memref<1x128xf32, #tpu.memory_space<vmem>>, vector<1x128xf32>
    %4 = vector.broadcast %3 : vector<1x128xf32> to vector<128x128xf32>
    %5 = arith.mulf %2, %4 : vector<128x128xf32>
    %c0_5 = arith.constant 0 : index
    %c0_6 = arith.constant 0 : index
    %6 = vector.load %arg4[%c0_5, %c0_6] : memref<1x128xf32, #tpu.memory_space<vmem>>, vector<1x128xf32>
    %7 = vector.broadcast %6 : vector<1x128xf32> to vector<128x128xf32>
    %8 = arith.addf %5, %7 : vector<128x128xf32>
    %cst_7 = arith.constant 0.000000e+00 : f32
    %9 = vector.broadcast %cst_7 : f32 to vector<128x128xf32>
    %10 = arith.maximumf %8, %9 : vector<128x128xf32>
    %11 = arith.truncf %10 : vector<128x128xf32> to vector<128x128xbf16>
    %c0_8 = arith.constant 0 : index
    %c0_9 = arith.constant 0 : index
    %12 = vector.load %arg5[%c0_8, %c0_9] : memref<128x128xbf16, #tpu.memory_space<vmem>>, vector<128x128xbf16>
    tpu.vector_store %arg5[%c0_8, %c0_9], %11 {strides = array<i32>} : memref<128x128xbf16, #tpu.memory_space<vmem>>, vector<128x128xbf16>,
    return
  }
  func.func @transform_0(%arg0: i32) -> (i32, i32) {
    %c0_i32 = arith.constant 0 : i32
    %c0_i32_0 = arith.constant 0 : i32
    return %arg0, %c0_i32 : i32, i32
  }
  func.func @transform_1(%arg0: i32) -> (i32, i32) {
    %c0_i32 = arith.constant 0 : i32
    %c0_i32_0 = arith.constant 0 : i32
    %c0_i32_1 = arith.constant 0 : i32
    return %c0_i32, %c0_i32_0 : i32, i32
  }
  func.func @transform_2(%arg0: i32) -> (i32, i32) {
    %c0_i32 = arith.constant 0 : i32
    %c0_i32_0 = arith.constant 0 : i32
    %c0_i32_1 = arith.constant 0 : i32
    return %c0_i32, %c0_i32_0 : i32, i32
  }
  func.func @transform_3(%arg0: i32) -> (i32, i32) {
    %c0_i32 = arith.constant 0 : i32
    %c0_i32_0 = arith.constant 0 : i32
    %c0_i32_1 = arith.constant 0 : i32
    return %c0_i32, %c0_i32_0 : i32, i32
  }
  func.func @transform_4(%arg0: i32) -> (i32, i32) {
    %c0_i32 = arith.constant 0 : i32
    %c0_i32_0 = arith.constant 0 : i32
    return %arg0, %c0_i32 : i32, i32
  }
}

module attributes {stable_mosaic.version = 11 : i64} {
  func.func @_mm_kernel(%arg0: i32, %arg1: memref<512x288xbf16, #tpu.memory_space<vmem>>, %arg2: memref<288x128xbf16, #tpu.memory_space<vmem>>, %arg3: memref<1x128xf32, #tpu.memory_space<vmem>>, %arg4: memref<1x128xf32, #tpu.memory_space<vmem>>, %arg5: memref<512x128xbf16, #tpu.memory_space<vmem>>) attributes {dimension_semantics = [#tpu.dimension_semantics<parallel>], iteration_bounds = array<i64: 1>, scalar_prefetch = 0 : i64, scratch_operands = 0 : i64, tpu.core_type = #tpu.core_type<tc>, window_params = [{transform_indices = @transform_0, window_bounds = array<i64: 512, 288>}, {pipeline_mode = #tpu.pipeline_mode<synchronous>, transform_indices = @transform_1, window_bounds = array<i64: 288, 128>}, {pipeline_mode = #tpu.pipeline_mode<synchronous>, transform_indices = @transform_2, window_bounds = array<i64: 1, 128>}, {pipeline_mode = #tpu.pipeline_mode<synchronous>, transform_indices = @transform_3, window_bounds = array<i64: 1, 128>}, {transform_indices = @transform_4, window_bounds = array<i64: 512, 128>}]} {
    %c0 = arith.constant 0 : index
    %c0_0 = arith.constant 0 : index
    %0 = vector.load %arg1[%c0, %c0_0] : memref<512x288xbf16, #tpu.memory_space<vmem>>, vector<512x288xbf16>
    %c0_1 = arith.constant 0 : index
    %c0_2 = arith.constant 0 : index
    %1 = vector.load %arg2[%c0_1, %c0_2] : memref<288x128xbf16, #tpu.memory_space<vmem>>, vector<288x128xbf16>
    %cst = arith.constant dense<0.000000e+00> : vector<512x128xf32>
    %2 = tpu.matmul %0, %1, %cst {dimension_numbers = #tpu.dot_dimension_numbers<[1], [0], [0], [1], [0, 0, 1, 1], [], []>} : vector<512x288xbf16>, vector<288x128xbf16>, vector<512x128xf32> -> vector<512x128xf32>
    %c0_3 = arith.constant 0 : index
    %c0_4 = arith.constant 0 : index
    %3 = vector.load %arg3[%c0_3, %c0_4] : memref<1x128xf32, #tpu.memory_space<vmem>>, vector<1x128xf32>
    %4 = vector.broadcast %3 : vector<1x128xf32> to vector<512x128xf32>
    %5 = arith.mulf %2, %4 : vector<512x128xf32>
    %c0_5 = arith.constant 0 : index
    %c0_6 = arith.constant 0 : index
    %6 = vector.load %arg4[%c0_5, %c0_6] : memref<1x128xf32, #tpu.memory_space<vmem>>, vector<1x128xf32>
    %7 = vector.broadcast %6 : vector<1x128xf32> to vector<512x128xf32>
    %8 = arith.addf %5, %7 : vector<512x128xf32>
    %cst_7 = arith.constant 0.000000e+00 : f32
    %9 = vector.broadcast %cst_7 : f32 to vector<512x128xf32>
    %10 = arith.maximumf %8, %9 : vector<512x128xf32>
    %11 = arith.truncf %10 : vector<512x128xf32> to vector<512x128xbf16>
    %c0_8 = arith.constant 0 : index
    %c0_9 = arith.constant 0 : index
    %12 = vector.load %arg5[%c0_8, %c0_9] : memref<512x128xbf16, #tpu.memory_space<vmem>>, vector<512x128xbf16>
    tpu.vector_store %arg5[%c0_8, %c0_9], %11 {strides = array<i32>} : memref<512x128xbf16, #tpu.memory_space<vmem>>, vector<512x128xbf16>,
    return
  }
  func.func @transform_0(%arg0: i32) -> (i32, i32) {
    %c0_i32 = arith.constant 0 : i32
    %c0_i32_0 = arith.constant 0 : i32
    return %arg0, %c0_i32 : i32, i32
  }
  func.func @transform_1(%arg0: i32) -> (i32, i32) {
    %c0_i32 = arith.constant 0 : i32
    %c0_i32_0 = arith.constant 0 : i32
    %c0_i32_1 = arith.constant 0 : i32
    return %c0_i32, %c0_i32_0 : i32, i32
  }
  func.func @transform_2(%arg0: i32) -> (i32, i32) {
    %c0_i32 = arith.constant 0 : i32
    %c0_i32_0 = arith.constant 0 : i32
    %c0_i32_1 = arith.constant 0 : i32
    return %c0_i32, %c0_i32_0 : i32, i32
  }
  func.func @transform_3(%arg0: i32) -> (i32, i32) {
    %c0_i32 = arith.constant 0 : i32
    %c0_i32_0 = arith.constant 0 : i32
    %c0_i32_1 = arith.constant 0 : i32
    return %c0_i32, %c0_i32_0 : i32, i32
  }
  func.func @transform_4(%arg0: i32) -> (i32, i32) {
    %c0_i32 = arith.constant 0 : i32
    %c0_i32_0 = arith.constant 0 : i32
    return %arg0, %c0_i32 : i32, i32
  }
}

module attributes {stable_mosaic.version = 11 : i64} {
  func.func @_mm_kernel(%arg0: i32, %arg1: memref<1024x288xbf16, #tpu.memory_space<vmem>>, %arg2: memref<288x128xbf16, #tpu.memory_space<vmem>>, %arg3: memref<1x128xf32, #tpu.memory_space<vmem>>, %arg4: memref<1x128xf32, #tpu.memory_space<vmem>>, %arg5: memref<1024x128xbf16, #tpu.memory_space<vmem>>) attributes {dimension_semantics = [#tpu.dimension_semantics<parallel>], iteration_bounds = array<i64: 2>, scalar_prefetch = 0 : i64, scratch_operands = 0 : i64, tpu.core_type = #tpu.core_type<tc>, window_params = [{transform_indices = @transform_0, window_bounds = array<i64: 1024, 288>}, {pipeline_mode = #tpu.pipeline_mode<synchronous>, transform_indices = @transform_1, window_bounds = array<i64: 288, 128>}, {pipeline_mode = #tpu.pipeline_mode<synchronous>, transform_indices = @transform_2, window_bounds = array<i64: 1, 128>}, {pipeline_mode = #tpu.pipeline_mode<synchronous>, transform_indices = @transform_3, window_bounds = array<i64: 1, 128>}, {transform_indices = @transform_4, window_bounds = array<i64: 1024, 128>}]} {
    %c0 = arith.constant 0 : index
    %c0_0 = arith.constant 0 : index
    %0 = vector.load %arg1[%c0, %c0_0] : memref<1024x288xbf16, #tpu.memory_space<vmem>>, vector<1024x288xbf16>
    %c0_1 = arith.constant 0 : index
    %c0_2 = arith.constant 0 : index
    %1 = vector.load %arg2[%c0_1, %c0_2] : memref<288x128xbf16, #tpu.memory_space<vmem>>, vector<288x128xbf16>
    %cst = arith.constant dense<0.000000e+00> : vector<1024x128xf32>
    %2 = tpu.matmul %0, %1, %cst {dimension_numbers = #tpu.dot_dimension_numbers<[1], [0], [0], [1], [0, 0, 1, 1], [], []>} : vector<1024x288xbf16>, vector<288x128xbf16>, vector<1024x128xf32> -> vector<1024x128xf32>
    %c0_3 = arith.constant 0 : index
    %c0_4 = arith.constant 0 : index
    %3 = vector.load %arg3[%c0_3, %c0_4] : memref<1x128xf32, #tpu.memory_space<vmem>>, vector<1x128xf32>
    %4 = vector.broadcast %3 : vector<1x128xf32> to vector<1024x128xf32>
    %5 = arith.mulf %2, %4 : vector<1024x128xf32>
    %c0_5 = arith.constant 0 : index
    %c0_6 = arith.constant 0 : index
    %6 = vector.load %arg4[%c0_5, %c0_6] : memref<1x128xf32, #tpu.memory_space<vmem>>, vector<1x128xf32>
    %7 = vector.broadcast %6 : vector<1x128xf32> to vector<1024x128xf32>
    %8 = arith.addf %5, %7 : vector<1024x128xf32>
    %cst_7 = arith.constant 0.000000e+00 : f32
    %9 = vector.broadcast %cst_7 : f32 to vector<1024x128xf32>
    %10 = arith.maximumf %8, %9 : vector<1024x128xf32>
    %11 = arith.truncf %10 : vector<1024x128xf32> to vector<1024x128xbf16>
    %c0_8 = arith.constant 0 : index
    %c0_9 = arith.constant 0 : index
    %12 = vector.load %arg5[%c0_8, %c0_9] : memref<1024x128xbf16, #tpu.memory_space<vmem>>, vector<1024x128xbf16>
    tpu.vector_store %arg5[%c0_8, %c0_9], %11 {strides = array<i32>} : memref<1024x128xbf16, #tpu.memory_space<vmem>>, vector<1024x128xbf16>,
    return
  }
  func.func @transform_0(%arg0: i32) -> (i32, i32) {
    %c0_i32 = arith.constant 0 : i32
    %c0_i32_0 = arith.constant 0 : i32
    return %arg0, %c0_i32 : i32, i32
  }
  func.func @transform_1(%arg0: i32) -> (i32, i32) {
    %c0_i32 = arith.constant 0 : i32
    %c0_i32_0 = arith.constant 0 : i32
    %c0_i32_1 = arith.constant 0 : i32
    return %c0_i32, %c0_i32_0 : i32, i32
  }
  func.func @transform_2(%arg0: i32) -> (i32, i32) {
    %c0_i32 = arith.constant 0 : i32
    %c0_i32_0 = arith.constant 0 : i32
    %c0_i32_1 = arith.constant 0 : i32
    return %c0_i32, %c0_i32_0 : i32, i32
  }
  func.func @transform_3(%arg0: i32) -> (i32, i32) {
    %c0_i32 = arith.constant 0 : i32
    %c0_i32_0 = arith.constant 0 : i32
    %c0_i32_1 = arith.constant 0 : i32
    return %c0_i32, %c0_i32_0 : i32, i32
  }
  func.func @transform_4(%arg0: i32) -> (i32, i32) {
    %c0_i32 = arith.constant 0 : i32
    %c0_i32_0 = arith.constant 0 : i32
    return %arg0, %c0_i32 : i32, i32
  }
}

module attributes {stable_mosaic.version = 11 : i64} {
  func.func @_head_final_kernel(%arg0: i32, %arg1: memref<1x32x4096xbf16, #tpu.memory_space<vmem>>, %arg2: memref<8x32xbf16, #tpu.memory_space<vmem>>, %arg3: memref<8x1xf32, #tpu.memory_space<vmem>>, %arg4: memref<1x8x4096xf32, #tpu.memory_space<vmem>>) attributes {dimension_semantics = [#tpu.dimension_semantics<parallel>], iteration_bounds = array<i64: 2>, scalar_prefetch = 0 : i64, scratch_operands = 0 : i64, tpu.core_type = #tpu.core_type<tc>, window_params = [{transform_indices = @transform_0, window_bounds = array<i64: 1, 32, 4096>}, {pipeline_mode = #tpu.pipeline_mode<synchronous>, transform_indices = @transform_1, window_bounds = array<i64: 8, 32>}, {pipeline_mode = #tpu.pipeline_mode<synchronous>, transform_indices = @transform_2, window_bounds = array<i64: 8, 1>}, {transform_indices = @transform_3, window_bounds = array<i64: 1, 8, 4096>}]} {
    %c0 = arith.constant 0 : index
    %c0_0 = arith.constant 0 : index
    %0 = vector.load %arg2[%c0, %c0_0] : memref<8x32xbf16, #tpu.memory_space<vmem>>, vector<8x32xbf16>
    %c0_1 = arith.constant 0 : index
    %c0_2 = arith.constant 0 : index
    %c0_3 = arith.constant 0 : index
    %1 = vector.load %arg1[%c0_1, %c0_2, %c0_3] : memref<1x32x4096xbf16, #tpu.memory_space<vmem>>, vector<1x32x4096xbf16>
    %2 = vector.shape_cast %1 : vector<1x32x4096xbf16> to vector<32x4096xbf16>
    %cst = arith.constant dense<0.000000e+00> : vector<8x4096xf32>
    %3 = tpu.matmul %0, %2, %cst {dimension_numbers = #tpu.dot_dimension_numbers<[1], [0], [0], [1], [0, 0, 1, 1], [], []>} : vector<8x32xbf16>, vector<32x4096xbf16>, vector<8x4096xf32> -> vector<8x4096xf32>
    %c0_4 = arith.constant 0 : index
    %c0_5 = arith.constant 0 : index
    %4 = vector.load %arg3[%c0_4, %c0_5] : memref<8x1xf32, #tpu.memory_space<vmem>>, vector<8x1xf32>
    %5 = vector.broadcast %4 : vector<8x1xf32> to vector<8x4096xf32>
    %6 = arith.addf %3, %5 : vector<8x4096xf32>
    %7 = arith.negf %6 : vector<8x4096xf32>
    %8 = math.exp %7 : vector<8x4096xf32>
    %cst_6 = arith.constant 1.000000e+00 : f32
    %9 = vector.broadcast %cst_6 : f32 to vector<8x4096xf32>
    %10 = arith.addf %9, %8 : vector<8x4096xf32>
    %11 = arith.divf %9, %10 : vector<8x4096xf32>
    %cst_7 = arith.constant dense<0x7F800000> : vector<8xf32>
    %12 = vector.multi_reduction <minimumf>, %11, %cst_7 [1] : vector<8x4096xf32> to vector<8xf32>
    %13 = vector.shape_cast %12 : vector<8xf32> to vector<8x1xf32>
    %cst_8 = arith.constant dense<0xFF800000> : vector<8xf32>
    %14 = vector.multi_reduction <maximumf>, %11, %cst_8 [1] : vector<8x4096xf32> to vector<8xf32>
    %15 = vector.shape_cast %14 : vector<8xf32> to vector<8x1xf32>
    %16 = arith.subf %15, %13 : vector<8x1xf32>
    %cst_9 = arith.constant 9.99999993E-9 : f32
    %17 = vector.broadcast %cst_9 : f32 to vector<8x1xf32>
    %18 = arith.addf %16, %17 : vector<8x1xf32>
    %19 = tpu.reciprocal %18 {approx = true} : vector<8x1xf32> -> vector<8x1xf32>
    %20 = vector.broadcast %13 : vector<8x1xf32> to vector<8x4096xf32>
    %21 = arith.subf %11, %20 : vector<8x4096xf32>
    %22 = vector.broadcast %19 : vector<8x1xf32> to vector<8x4096xf32>
    %23 = arith.mulf %21, %22 : vector<8x4096xf32>
    %cst_10 = arith.constant 0.000000e+00 : f32
    %cst_11 = arith.constant 1.000000e+00 : f32
    %24 = vector.broadcast %cst_10 : f32 to vector<8x4096xf32>
    %25 = arith.maximumf %24, %23 : vector<8x4096xf32>
    %26 = vector.broadcast %cst_11 : f32 to vector<8x4096xf32>
    %27 = arith.minimumf %26, %25 : vector<8x4096xf32>
    %c0_12 = arith.constant 0 : index
    %c0_13 = arith.constant 0 : index
    %c0_14 = arith.constant 0 : index
    %28 = vector.load %arg4[%c0_12, %c0_13, %c0_14] : memref<1x8x4096xf32, #tpu.memory_space<vmem>>, vector<1x8x4096xf32>
    %29 = vector.shape_cast %28 : vector<1x8x4096xf32> to vector<8x4096xf32>
    %30 = vector.shape_cast %27 : vector<8x4096xf32> to vector<1x8x4096xf32>
    tpu.vector_store %arg4[%c0_12, %c0_13, %c0_14], %30 {strides = array<i32>} : memref<1x8x4096xf32, #tpu.memory_space<vmem>>, vector<1x8x4096xf32>,
    return
  }
  func.func @transform_0(%arg0: i32) -> (i32, i32, i32) {
    %c0_i32 = arith.constant 0 : i32
    %c0_i32_0 = arith.constant 0 : i32
    %c0_i32_1 = arith.constant 0 : i32
    return %arg0, %c0_i32, %c0_i32_0 : i32, i32, i32
  }
  func.func @transform_1(%arg0: i32) -> (i32, i32) {
    %c0_i32 = arith.constant 0 : i32
    %c0_i32_0 = arith.constant 0 : i32
    %c0_i32_1 = arith.constant 0 : i32
    return %c0_i32, %c0_i32_0 : i32, i32
  }
  func.func @transform_2(%arg0: i32) -> (i32, i32) {
    %c0_i32 = arith.constant 0 : i32
    %c0_i32_0 = arith.constant 0 : i32
    %c0_i32_1 = arith.constant 0 : i32
    return %c0_i32, %c0_i32_0 : i32, i32
  }
  func.func @transform_3(%arg0: i32) -> (i32, i32, i32) {
    %c0_i32 = arith.constant 0 : i32
    %c0_i32_0 = arith.constant 0 : i32
    %c0_i32_1 = arith.constant 0 : i32
    return %arg0, %c0_i32, %c0_i32_0 : i32, i32, i32
  }
}

</mosaic_0001>

<llo_original>
// kernel: keypointnet_forward.8
$region0: #{keypointnet_forward.8}
  #allocation0 [shape = 'u32[]', space=smem, size = 0x4, offset = 0x4, fixed_abs, tag = 'smem constant byte address 0x4 - core index']
  #allocation1 [shape = 'u32[144,128]{1,0:T(1,128)}', space=vmem, size = 0x12000, scoped, tag = 'internal scratch']
  %s0 = inlined_call_operand.vmem [shape: bf16[16,3072], index: 0, kind: input, shape index: {}]
  %s1 = inlined_call_operand.vmem [shape: bf16[3072,32], index: 1, kind: input, shape index: {}]
  %s2 = inlined_call_operand.vmem [shape: f32[1,32], index: 2, kind: input, shape index: {}]
  %s3 = inlined_call_operand.vmem [shape: f32[1,32], index: 3, kind: input, shape index: {}]
  %s4 = inlined_call_operand.vmem [shape: bf16[16,32], index: 4, kind: output, shape index: {}]
  %s5 = sld [smem:[#allocation0]]
  $region26: #{keypointnet_forward.8} parent=0
    _
  %s7 = ssub.s32 1, %s5
  %s8 = scalar_select 0, %s7, %s5
  // Predicated region
  $region2: #{keypointnet_forward.8} parent=0 // pred_check
    _
  $region3: #{keypointnet_forward.8} parent=0 // pred_check_branch
    %10 = sbr.rel (0) target = $region5
  $region4: #{keypointnet_forward.8} parent=0 // pred_region
    _
  $region5: #{keypointnet_forward.8} parent=0 // pred_fallthru
    _
  // Predicated region
  $region6: #{keypointnet_forward.8} parent=0 // pred_check
    _
  $region7: #{keypointnet_forward.8} parent=0 // pred_check_branch
    %12 = sbr.rel (0) target = $region9
  $region8: #{keypointnet_forward.8} parent=0 // pred_region
    _
  $region9: #{keypointnet_forward.8} parent=0 // pred_fallthru
    _
  // Predicated region
  $region10: #{keypointnet_forward.8} parent=0 // pred_check
    _
  $region11: #{keypointnet_forward.8} parent=0 // pred_check_branch
    %14 = sbr.rel (0) target = $region13
  $region12: #{keypointnet_forward.8} parent=0 // pred_region
    _
  $region13: #{keypointnet_forward.8} parent=0 // pred_fallthru
    _
  // Predicated region
  $region14: #{keypointnet_forward.8} parent=0 // pred_check
    _
  $region15: #{keypointnet_forward.8} parent=0 // pred_check_branch
    %16 = sbr.rel (0) target = $region17
  $region16: #{keypointnet_forward.8} parent=0 // pred_region
    _
  $region17: #{keypointnet_forward.8} parent=0 // pred_fallthru
    _
  %v18 = vld [vmem:[%s0] sm:$0xff]
  %v19 = vld [vmem:[%s0 + $0x8] sm:$0xff]
  %v20 = vld [vmem:[%s0 + $0x10] sm:$0xff]
  %v21 = vld [vmem:[%s0 + $0x18] sm:$0xff]
  %v22 = vld [vmem:[%s0 + $0x20] sm:$0xff]
  %v23 = vld [vmem:[%s0 + $0x28] sm:$0xff]
  %v24 = vld [vmem:[%s0 + $0x30] sm:$0xff]
  %v25 = vld [vmem:[%s0 + $0x38] sm:$0xff]
  %v26 = vld [vmem:[%s0 + $0x40] sm:$0xff]
  %v27 = vld [vmem:[%s0 + $0x48] sm:$0xff]
  %v28 = vld [vmem:[%s0 + $0x50] sm:$0xff]
  %v29 = vld [vmem:[%s0 + $0x58] sm:$0xff]
  %v30 = vld [vmem:[%s0 + $0x60] sm:$0xff]
  %v31 = vld [vmem:[%s0 + $0x68] sm:$0xff]
  %v32 = vld [vmem:[%s0 + $0x70] sm:$0xff]
  %v33 = vld [vmem:[%s0 + $0x78] sm:$0xff]
  %v34 = vld [vmem:[%s0 + $0x80] sm:$0xff]
  %v35 = vld [vmem:[%s0 + $0x88] sm:$0xff]
  %v36 = vld [vmem:[%s0 + $0x90] sm:$0xff]
  %v37 = vld [vmem:[%s0 + $0x98] sm:$0xff]
  %v38 = vld [vmem:[%s0 + $0xa0] sm:$0xff]
  %v39 = vld [vmem:[%s0 + $0xa8] sm:$0xff]
  %v40 = vld [vmem:[%s0 + $0xb0] sm:$0xff]
  %v41 = vld [vmem:[%s0 + $0xb8] sm:$0xff]
  %v42 = vld [vmem:[%s1] sm:$0xf]
  %v43 = vld [vmem:[%s1 + $0x4] sm:$0xf]
  %v44 = vld [vmem:[%s1 + $0x8] sm:$0xf]
  %v45 = vld [vmem:[%s1 + $0xc] sm:$0xf]
  %v46 = vld [vmem:[%s1 + $0x10] sm:$0xf]
  %v47 = vld [vmem:[%s1 + $0x14] sm:$0xf]
  %v48 = vld [vmem:[%s1 + $0x18] sm:$0xf]
  %v49 = vld [vmem:[%s1 + $0x1c] sm:$0xf]
  %v50 = vld [vmem:[%s1 + $0x20] sm:$0xf]
  %v51 = vld [vmem:[%s1 + $0x24] sm:$0xf]
  %v52 = vld [vmem:[%s1 + $0x28] sm:$0xf]
  %v53 = vld [vmem:[%s1 + $0x2c] sm:$0xf]
  %v54 = vld [vmem:[%s1 + $0x30] sm:$0xf]
  %v55 = vld [vmem:[%s1 + $0x34] sm:$0xf]
  %v56 = vld [vmem:[%s1 + $0x38] sm:$0xf]
  %v57 = vld [vmem:[%s1 + $0x3c] sm:$0xf]
  %v58 = vld [vmem:[%s1 + $0x40] sm:$0xf]
  %v59 = vld [vmem:[%s1 + $0x44] sm:$0xf]
  %v60 = vld [vmem:[%s1 + $0x48] sm:$0xf]
  %v61 = vld [vmem:[%s1 + $0x4c] sm:$0xf]
  %v62 = vld [vmem:[%s1 + $0x50] sm:$0xf]
  %v63 = vld [vmem:[%s1 + $0x54] sm:$0xf]
  %v64 = vld [vmem:[%s1 + $0x58] sm:$0xf]
  %v65 = vld [vmem:[%s1 + $0x5c] sm:$0xf]
  %v66 = vld [vmem:[%s1 + $0x60] sm:$0xf]
  %v67 = vld [vmem:[%s1 + $0x64] sm:$0xf]
  %v68 = vld [vmem:[%s1 + $0x68] sm:$0xf]
  %v69 = vld [vmem:[%s1 + $0x6c] sm:$0xf]
  %v70 = vld [vmem:[%s1 + $0x70] sm:$0xf]
  %v71 = vld [vmem:[%s1 + $0x74] sm:$0xf]
  %v72 = vld [vmem:[%s1 + $0x78] sm:$0xf]
  %v73 = vld [vmem:[%s1 + $0x7c] sm:$0xf]
  %v74 = vld [vmem:[%s1 + $0x80] sm:$0xf]
  %v75 = vld [vmem:[%s1 + $0x84] sm:$0xf]
  %v76 = vld [vmem:[%s1 + $0x88] sm:$0xf]
  %v77 = vld [vmem:[%s1 + $0x8c] sm:$0xf]
  %v78 = vld [vmem:[%s1 + $0x90] sm:$0xf]
  %v79 = vld [vmem:[%s1 + $0x94] sm:$0xf]
  %v80 = vld [vmem:[%s1 + $0x98] sm:$0xf]
  %v81 = vld [vmem:[%s1 + $0x9c] sm:$0xf]
  %v82 = vld [vmem:[%s1 + $0xa0] sm:$0xf]
  %v83 = vld [vmem:[%s1 + $0xa4] sm:$0xf]
  %v84 = vld [vmem:[%s1 + $0xa8] sm:$0xf]
  %v85 = vld [vmem:[%s1 + $0xac] sm:$0xf]
  %v86 = vld [vmem:[%s1 + $0xb0] sm:$0xf]
  %v87 = vld [vmem:[%s1 + $0xb4] sm:$0xf]
  %v88 = vld [vmem:[%s1 + $0xb8] sm:$0xf]
  %v89 = vld [vmem:[%s1 + $0xbc] sm:$0xf]
  %v90 = vld [vmem:[%s1 + $0xc0] sm:$0xf]
  %v91 = vld [vmem:[%s1 + $0xc4] sm:$0xf]
  %v92 = vld [vmem:[%s1 + $0xc8] sm:$0xf]
  %v93 = vld [vmem:[%s1 + $0xcc] sm:$0xf]
  %v94 = vld [vmem:[%s1 + $0xd0] sm:$0xf]
  %v95 = vld [vmem:[%s1 + $0xd4] sm:$0xf]
  %v96 = vld [vmem:[%s1 + $0xd8] sm:$0xf]
  %v97 = vld [vmem:[%s1 + $0xdc] sm:$0xf]
  %v98 = vld [vmem:[%s1 + $0xe0] sm:$0xf]
  %v99 = vld [vmem:[%s1 + $0xe4] sm:$0xf]
  %v100 = vld [vmem:[%s1 + $0xe8] sm:$0xf]
  %v101 = vld [vmem:[%s1 + $0xec] sm:$0xf]
  %v102 = vld [vmem:[%s1 + $0xf0] sm:$0xf]
  %v103 = vld [vmem:[%s1 + $0xf4] sm:$0xf]
  %v104 = vld [vmem:[%s1 + $0xf8] sm:$0xf]
  %v105 = vld [vmem:[%s1 + $0xfc] sm:$0xf]
  %v106 = vld [vmem:[%s1 + $0x100] sm:$0xf]
  %v107 = vld [vmem:[%s1 + $0x104] sm:$0xf]
  %v108 = vld [vmem:[%s1 + $0x108] sm:$0xf]
  %v109 = vld [vmem:[%s1 + $0x10c] sm:$0xf]
  %v110 = vld [vmem:[%s1 + $0x110] sm:$0xf]
  %v111 = vld [vmem:[%s1 + $0x114] sm:$0xf]
  %v112 = vld [vmem:[%s1 + $0x118] sm:$0xf]
  %v113 = vld [vmem:[%s1 + $0x11c] sm:$0xf]
  %v114 = vld [vmem:[%s1 + $0x120] sm:$0xf]
  %v115 = vld [vmem:[%s1 + $0x124] sm:$0xf]
  %v116 = vld [vmem:[%s1 + $0x128] sm:$0xf]
  %v117 = vld [vmem:[%s1 + $0x12c] sm:$0xf]
  %v118 = vld [vmem:[%s1 + $0x130] sm:$0xf]
  %v119 = vld [vmem:[%s1 + $0x134] sm:$0xf]
  %v120 = vld [vmem:[%s1 + $0x138] sm:$0xf]
  %v121 = vld [vmem:[%s1 + $0x13c] sm:$0xf]
  %v122 = vld [vmem:[%s1 + $0x140] sm:$0xf]
  %v123 = vld [vmem:[%s1 + $0x144] sm:$0xf]
  %v124 = vld [vmem:[%s1 + $0x148] sm:$0xf]
  %v125 = vld [vmem:[%s1 + $0x14c] sm:$0xf]
  %v126 = vld [vmem:[%s1 + $0x150] sm:$0xf]
  %v127 = vld [vmem:[%s1 + $0x154] sm:$0xf]
  %v128 = vld [vmem:[%s1 + $0x158] sm:$0xf]
  %v129 = vld [vmem:[%s1 + $0x15c] sm:$0xf]
  %v130 = vld [vmem:[%s1 + $0x160] sm:$0xf]
  %v131 = vld [vmem:[%s1 + $0x164] sm:$0xf]
  %v132 = vld [vmem:[%s1 + $0x168] sm:$0xf]
  %v133 = vld [vmem:[%s1 + $0x16c] sm:$0xf]
  %v134 = vld [vmem:[%s1 + $0x170] sm:$0xf]
  %v135 = vld [vmem:[%s1 + $0x174] sm:$0xf]
  %v136 = vld [vmem:[%s1 + $0x178] sm:$0xf]
  %v137 = vld [vmem:[%s1 + $0x17c] sm:$0xf]
  %v138 = vld [vmem:[%s1 + $0x180] sm:$0xf]
  %v139 = vld [vmem:[%s1 + $0x184] sm:$0xf]
  %v140 = vld [vmem:[%s1 + $0x188] sm:$0xf]
  %v141 = vld [vmem:[%s1 + $0x18c] sm:$0xf]
  %v142 = vld [vmem:[%s1 + $0x190] sm:$0xf]
  %v143 = vld [vmem:[%s1 + $0x194] sm:$0xf]
  %v144 = vld [vmem:[%s1 + $0x198] sm:$0xf]
  %v145 = vld [vmem:[%s1 + $0x19c] sm:$0xf]
  %v146 = vld [vmem:[%s1 + $0x1a0] sm:$0xf]
  %v147 = vld [vmem:[%s1 + $0x1a4] sm:$0xf]
  %v148 = vld [vmem:[%s1 + $0x1a8] sm:$0xf]
  %v149 = vld [vmem:[%s1 + $0x1ac] sm:$0xf]
  %v150 = vld [vmem:[%s1 + $0x1b0] sm:$0xf]
  %v151 = vld [vmem:[%s1 + $0x1b4] sm:$0xf]
  %v152 = vld [vmem:[%s1 + $0x1b8] sm:$0xf]
  %v153 = vld [vmem:[%s1 + $0x1bc] sm:$0xf]
  %v154 = vld [vmem:[%s1 + $0x1c0] sm:$0xf]
  %v155 = vld [vmem:[%s1 + $0x1c4] sm:$0xf]
  %v156 = vld [vmem:[%s1 + $0x1c8] sm:$0xf]
  %v157 = vld [vmem:[%s1 + $0x1cc] sm:$0xf]
  %v158 = vld [vmem:[%s1 + $0x1d0] sm:$0xf]
  %v159 = vld [vmem:[%s1 + $0x1d4] sm:$0xf]
  %v160 = vld [vmem:[%s1 + $0x1d8] sm:$0xf]
  %v161 = vld [vmem:[%s1 + $0x1dc] sm:$0xf]
  %v162 = vld [vmem:[%s1 + $0x1e0] sm:$0xf]
  %v163 = vld [vmem:[%s1 + $0x1e4] sm:$0xf]
  %v164 = vld [vmem:[%s1 + $0x1e8] sm:$0xf]
  %v165 = vld [vmem:[%s1 + $0x1ec] sm:$0xf]
  %v166 = vld [vmem:[%s1 + $0x1f0] sm:$0xf]
  %v167 = vld [vmem:[%s1 + $0x1f4] sm:$0xf]
  %v168 = vld [vmem:[%s1 + $0x1f8] sm:$0xf]
  %v169 = vld [vmem:[%s1 + $0x1fc] sm:$0xf]
  %v170 = vld [vmem:[%s1 + $0x200] sm:$0xf]
  %v171 = vld [vmem:[%s1 + $0x204] sm:$0xf]
  %v172 = vld [vmem:[%s1 + $0x208] sm:$0xf]
  %v173 = vld [vmem:[%s1 + $0x20c] sm:$0xf]
  %v174 = vld [vmem:[%s1 + $0x210] sm:$0xf]
  %v175 = vld [vmem:[%s1 + $0x214] sm:$0xf]
  %v176 = vld [vmem:[%s1 + $0x218] sm:$0xf]
  %v177 = vld [vmem:[%s1 + $0x21c] sm:$0xf]
  %v178 = vld [vmem:[%s1 + $0x220] sm:$0xf]
  %v179 = vld [vmem:[%s1 + $0x224] sm:$0xf]
  %v180 = vld [vmem:[%s1 + $0x228] sm:$0xf]
  %v181 = vld [vmem:[%s1 + $0x22c] sm:$0xf]
  %v182 = vld [vmem:[%s1 + $0x230] sm:$0xf]
  %v183 = vld [vmem:[%s1 + $0x234] sm:$0xf]
  %v184 = vld [vmem:[%s1 + $0x238] sm:$0xf]
  %v185 = vld [vmem:[%s1 + $0x23c] sm:$0xf]
  %v186 = vld [vmem:[%s1 + $0x240] sm:$0xf]
  %v187 = vld [vmem:[%s1 + $0x244] sm:$0xf]
  %v188 = vld [vmem:[%s1 + $0x248] sm:$0xf]
  %v189 = vld [vmem:[%s1 + $0x24c] sm:$0xf]
  %v190 = vld [vmem:[%s1 + $0x250] sm:$0xf]
  %v191 = vld [vmem:[%s1 + $0x254] sm:$0xf]
  %v192 = vld [vmem:[%s1 + $0x258] sm:$0xf]
  %v193 = vld [vmem:[%s1 + $0x25c] sm:$0xf]
  %v194 = vld [vmem:[%s1 + $0x260] sm:$0xf]
  %v195 = vld [vmem:[%s1 + $0x264] sm:$0xf]
  %v196 = vld [vmem:[%s1 + $0x268] sm:$0xf]
  %v197 = vld [vmem:[%s1 + $0x26c] sm:$0xf]
  %v198 = vld [vmem:[%s1 + $0x270] sm:$0xf]
  %v199 = vld [vmem:[%s1 + $0x274] sm:$0xf]
  %v200 = vld [vmem:[%s1 + $0x278] sm:$0xf]
  %v201 = vld [vmem:[%s1 + $0x27c] sm:$0xf]
  %v202 = vld [vmem:[%s1 + $0x280] sm:$0xf]
  %v203 = vld [vmem:[%s1 + $0x284] sm:$0xf]
  %v204 = vld [vmem:[%s1 + $0x288] sm:$0xf]
  %v205 = vld [vmem:[%s1 + $0x28c] sm:$0xf]
  %v206 = vld [vmem:[%s1 + $0x290] sm:$0xf]
  %v207 = vld [vmem:[%s1 + $0x294] sm:$0xf]
  %v208 = vld [vmem:[%s1 + $0x298] sm:$0xf]
  %v209 = vld [vmem:[%s1 + $0x29c] sm:$0xf]
  %v210 = vld [vmem:[%s1 + $0x2a0] sm:$0xf]
  %v211 = vld [vmem:[%s1 + $0x2a4] sm:$0xf]
  %v212 = vld [vmem:[%s1 + $0x2a8] sm:$0xf]
  %v213 = vld [vmem:[%s1 + $0x2ac] sm:$0xf]
  %v214 = vld [vmem:[%s1 + $0x2b0] sm:$0xf]
  %v215 = vld [vmem:[%s1 + $0x2b4] sm:$0xf]
  %v216 = vld [vmem:[%s1 + $0x2b8] sm:$0xf]
  %v217 = vld [vmem:[%s1 + $0x2bc] sm:$0xf]
  %v218 = vld [vmem:[%s1 + $0x2c0] sm:$0xf]
  %v219 = vld [vmem:[%s1 + $0x2c4] sm:$0xf]
  %v220 = vld [vmem:[%s1 + $0x2c8] sm:$0xf]
  %v221 = vld [vmem:[%s1 + $0x2cc] sm:$0xf]
  %v222 = vld [vmem:[%s1 + $0x2d0] sm:$0xf]
  %v223 = vld [vmem:[%s1 + $0x2d4] sm:$0xf]
  %v224 = vld [vmem:[%s1 + $0x2d8] sm:$0xf]
  %v225 = vld [vmem:[%s1 + $0x2dc] sm:$0xf]
  %v226 = vld [vmem:[%s1 + $0x2e0] sm:$0xf]
  %v227 = vld [vmem:[%s1 + $0x2e4] sm:$0xf]
  %v228 = vld [vmem:[%s1 + $0x2e8] sm:$0xf]
  %v229 = vld [vmem:[%s1 + $0x2ec] sm:$0xf]
  %v230 = vld [vmem:[%s1 + $0x2f0] sm:$0xf]
  %v231 = vld [vmem:[%s1 + $0x2f4] sm:$0xf]
  %v232 = vld [vmem:[%s1 + $0x2f8] sm:$0xf]
  %v233 = vld [vmem:[%s1 + $0x2fc] sm:$0xf]
  %v234 = vld [vmem:[%s1 + $0x300] sm:$0xf]
  %v235 = vld [vmem:[%s1 + $0x304] sm:$0xf]
  %v236 = vld [vmem:[%s1 + $0x308] sm:$0xf]
  %v237 = vld [vmem:[%s1 + $0x30c] sm:$0xf]
  %v238 = vld [vmem:[%s1 + $0x310] sm:$0xf]
  %v239 = vld [vmem:[%s1 + $0x314] sm:$0xf]
  %v240 = vld [vmem:[%s1 + $0x318] sm:$0xf]
  %v241 = vld [vmem:[%s1 + $0x31c] sm:$0xf]
  %v242 = vld [vmem:[%s1 + $0x320] sm:$0xf]
  %v243 = vld [vmem:[%s1 + $0x324] sm:$0xf]
  %v244 = vld [vmem:[%s1 + $0x328] sm:$0xf]
  %v245 = vld [vmem:[%s1 + $0x32c] sm:$0xf]
  %v246 = vld [vmem:[%s1 + $0x330] sm:$0xf]
  %v247 = vld [vmem:[%s1 + $0x334] sm:$0xf]
  %v248 = vld [vmem:[%s1 + $0x338] sm:$0xf]
  %v249 = vld [vmem:[%s1 + $0x33c] sm:$0xf]
  %v250 = vld [vmem:[%s1 + $0x340] sm:$0xf]
  %v251 = vld [vmem:[%s1 + $0x344] sm:$0xf]
  %v252 = vld [vmem:[%s1 + $0x348] sm:$0xf]
  %v253 = vld [vmem:[%s1 + $0x34c] sm:$0xf]
  %v254 = vld [vmem:[%s1 + $0x350] sm:$0xf]
  %v255 = vld [vmem:[%s1 + $0x354] sm:$0xf]
  %v256 = vld [vmem:[%s1 + $0x358] sm:$0xf]
  %v257 = vld [vmem:[%s1 + $0x35c] sm:$0xf]
  %v258 = vld [vmem:[%s1 + $0x360] sm:$0xf]
  %v259 = vld [vmem:[%s1 + $0x364] sm:$0xf]
  %v260 = vld [vmem:[%s1 + $0x368] sm:$0xf]
  %v261 = vld [vmem:[%s1 + $0x36c] sm:$0xf]
  %v262 = vld [vmem:[%s1 + $0x370] sm:$0xf]
  %v263 = vld [vmem:[%s1 + $0x374] sm:$0xf]
  %v264 = vld [vmem:[%s1 + $0x378] sm:$0xf]
  %v265 = vld [vmem:[%s1 + $0x37c] sm:$0xf]
  %v266 = vld [vmem:[%s1 + $0x380] sm:$0xf]
  %v267 = vld [vmem:[%s1 + $0x384] sm:$0xf]
  %v268 = vld [vmem:[%s1 + $0x388] sm:$0xf]
  %v269 = vld [vmem:[%s1 + $0x38c] sm:$0xf]
  %v270 = vld [vmem:[%s1 + $0x390] sm:$0xf]
  %v271 = vld [vmem:[%s1 + $0x394] sm:$0xf]
  %v272 = vld [vmem:[%s1 + $0x398] sm:$0xf]
  %v273 = vld [vmem:[%s1 + $0x39c] sm:$0xf]
  %v274 = vld [vmem:[%s1 + $0x3a0] sm:$0xf]
  %v275 = vld [vmem:[%s1 + $0x3a4] sm:$0xf]
  %v276 = vld [vmem:[%s1 + $0x3a8] sm:$0xf]
  %v277 = vld [vmem:[%s1 + $0x3ac] sm:$0xf]
  %v278 = vld [vmem:[%s1 + $0x3b0] sm:$0xf]
  %v279 = vld [vmem:[%s1 + $0x3b4] sm:$0xf]
  %v280 = vld [vmem:[%s1 + $0x3b8] sm:$0xf]
  %v281 = vld [vmem:[%s1 + $0x3bc] sm:$0xf]
  %v282 = vld [vmem:[%s1 + $0x3c0] sm:$0xf]
  %v283 = vld [vmem:[%s1 + $0x3c4] sm:$0xf]
  %v284 = vld [vmem:[%s1 + $0x3c8] sm:$0xf]
  %v285 = vld [vmem:[%s1 + $0x3cc] sm:$0xf]
  %v286 = vld [vmem:[%s1 + $0x3d0] sm:$0xf]
  %v287 = vld [vmem:[%s1 + $0x3d4] sm:$0xf]
  %v288 = vld [vmem:[%s1 + $0x3d8] sm:$0xf]
  %v289 = vld [vmem:[%s1 + $0x3dc] sm:$0xf]
  %v290 = vld [vmem:[%s1 + $0x3e0] sm:$0xf]
  %v291 = vld [vmem:[%s1 + $0x3e4] sm:$0xf]
  %v292 = vld [vmem:[%s1 + $0x3e8] sm:$0xf]
  %v293 = vld [vmem:[%s1 + $0x3ec] sm:$0xf]
  %v294 = vld [vmem:[%s1 + $0x3f0] sm:$0xf]
  %v295 = vld [vmem:[%s1 + $0x3f4] sm:$0xf]
  %v296 = vld [vmem:[%s1 + $0x3f8] sm:$0xf]
  %v297 = vld [vmem:[%s1 + $0x3fc] sm:$0xf]
  %v298 = vld [vmem:[%s1 + $0x400] sm:$0xf]
  %v299 = vld [vmem:[%s1 + $0x404] sm:$0xf]
  %v300 = vld [vmem:[%s1 + $0x408] sm:$0xf]
  %v301 = vld [vmem:[%s1 + $0x40c] sm:$0xf]
  %v302 = vld [vmem:[%s1 + $0x410] sm:$0xf]
  %v303 = vld [vmem:[%s1 + $0x414] sm:$0xf]
  %v304 = vld [vmem:[%s1 + $0x418] sm:$0xf]
  %v305 = vld [vmem:[%s1 + $0x41c] sm:$0xf]
  %v306 = vld [vmem:[%s1 + $0x420] sm:$0xf]
  %v307 = vld [vmem:[%s1 + $0x424] sm:$0xf]
  %v308 = vld [vmem:[%s1 + $0x428] sm:$0xf]
  %v309 = vld [vmem:[%s1 + $0x42c] sm:$0xf]
  %v310 = vld [vmem:[%s1 + $0x430] sm:$0xf]
  %v311 = vld [vmem:[%s1 + $0x434] sm:$0xf]
  %v312 = vld [vmem:[%s1 + $0x438] sm:$0xf]
  %v313 = vld [vmem:[%s1 + $0x43c] sm:$0xf]
  %v314 = vld [vmem:[%s1 + $0x440] sm:$0xf]
  %v315 = vld [vmem:[%s1 + $0x444] sm:$0xf]
  %v316 = vld [vmem:[%s1 + $0x448] sm:$0xf]
  %v317 = vld [vmem:[%s1 + $0x44c] sm:$0xf]
  %v318 = vld [vmem:[%s1 + $0x450] sm:$0xf]
  %v319 = vld [vmem:[%s1 + $0x454] sm:$0xf]
  %v320 = vld [vmem:[%s1 + $0x458] sm:$0xf]
  %v321 = vld [vmem:[%s1 + $0x45c] sm:$0xf]
  %v322 = vld [vmem:[%s1 + $0x460] sm:$0xf]
  %v323 = vld [vmem:[%s1 + $0x464] sm:$0xf]
  %v324 = vld [vmem:[%s1 + $0x468] sm:$0xf]
  %v325 = vld [vmem:[%s1 + $0x46c] sm:$0xf]
  %v326 = vld [vmem:[%s1 + $0x470] sm:$0xf]
  %v327 = vld [vmem:[%s1 + $0x474] sm:$0xf]
  %v328 = vld [vmem:[%s1 + $0x478] sm:$0xf]
  %v329 = vld [vmem:[%s1 + $0x47c] sm:$0xf]
  %v330 = vld [vmem:[%s1 + $0x480] sm:$0xf]
  %v331 = vld [vmem:[%s1 + $0x484] sm:$0xf]
  %v332 = vld [vmem:[%s1 + $0x488] sm:$0xf]
  %v333 = vld [vmem:[%s1 + $0x48c] sm:$0xf]
  %v334 = vld [vmem:[%s1 + $0x490] sm:$0xf]
  %v335 = vld [vmem:[%s1 + $0x494] sm:$0xf]
  %v336 = vld [vmem:[%s1 + $0x498] sm:$0xf]
  %v337 = vld [vmem:[%s1 + $0x49c] sm:$0xf]
  %v338 = vld [vmem:[%s1 + $0x4a0] sm:$0xf]
  %v339 = vld [vmem:[%s1 + $0x4a4] sm:$0xf]
  %v340 = vld [vmem:[%s1 + $0x4a8] sm:$0xf]
  %v341 = vld [vmem:[%s1 + $0x4ac] sm:$0xf]
  %v342 = vld [vmem:[%s1 + $0x4b0] sm:$0xf]
  %v343 = vld [vmem:[%s1 + $0x4b4] sm:$0xf]
  %v344 = vld [vmem:[%s1 + $0x4b8] sm:$0xf]
  %v345 = vld [vmem:[%s1 + $0x4bc] sm:$0xf]
  %v346 = vld [vmem:[%s1 + $0x4c0] sm:$0xf]
  %v347 = vld [vmem:[%s1 + $0x4c4] sm:$0xf]
  %v348 = vld [vmem:[%s1 + $0x4c8] sm:$0xf]
  %v349 = vld [vmem:[%s1 + $0x4cc] sm:$0xf]
  %v350 = vld [vmem:[%s1 + $0x4d0] sm:$0xf]
  %v351 = vld [vmem:[%s1 + $0x4d4] sm:$0xf]
  %v352 = vld [vmem:[%s1 + $0x4d8] sm:$0xf]
  %v353 = vld [vmem:[%s1 + $0x4dc] sm:$0xf]
  %v354 = vld [vmem:[%s1 + $0x4e0] sm:$0xf]
  %v355 = vld [vmem:[%s1 + $0x4e4] sm:$0xf]
  %v356 = vld [vmem:[%s1 + $0x4e8] sm:$0xf]
  %v357 = vld [vmem:[%s1 + $0x4ec] sm:$0xf]
  %v358 = vld [vmem:[%s1 + $0x4f0] sm:$0xf]
  %v359 = vld [vmem:[%s1 + $0x4f4] sm:$0xf]
  %v360 = vld [vmem:[%s1 + $0x4f8] sm:$0xf]
  %v361 = vld [vmem:[%s1 + $0x4fc] sm:$0xf]
  %v362 = vld [vmem:[%s1 + $0x500] sm:$0xf]
  %v363 = vld [vmem:[%s1 + $0x504] sm:$0xf]
  %v364 = vld [vmem:[%s1 + $0x508] sm:$0xf]
  %v365 = vld [vmem:[%s1 + $0x50c] sm:$0xf]
  %v366 = vld [vmem:[%s1 + $0x510] sm:$0xf]
  %v367 = vld [vmem:[%s1 + $0x514] sm:$0xf]
  %v368 = vld [vmem:[%s1 + $0x518] sm:$0xf]
  %v369 = vld [vmem:[%s1 + $0x51c] sm:$0xf]
  %v370 = vld [vmem:[%s1 + $0x520] sm:$0xf]
  %v371 = vld [vmem:[%s1 + $0x524] sm:$0xf]
  %v372 = vld [vmem:[%s1 + $0x528] sm:$0xf]
  %v373 = vld [vmem:[%s1 + $0x52c] sm:$0xf]
  %v374 = vld [vmem:[%s1 + $0x530] sm:$0xf]
  %v375 = vld [vmem:[%s1 + $0x534] sm:$0xf]
  %v376 = vld [vmem:[%s1 + $0x538] sm:$0xf]
  %v377 = vld [vmem:[%s1 + $0x53c] sm:$0xf]
  %v378 = vld [vmem:[%s1 + $0x540] sm:$0xf]
  %v379 = vld [vmem:[%s1 + $0x544] sm:$0xf]
  %v380 = vld [vmem:[%s1 + $0x548] sm:$0xf]
  %v381 = vld [vmem:[%s1 + $0x54c] sm:$0xf]
  %v382 = vld [vmem:[%s1 + $0x550] sm:$0xf]
  %v383 = vld [vmem:[%s1 + $0x554] sm:$0xf]
  %v384 = vld [vmem:[%s1 + $0x558] sm:$0xf]
  %v385 = vld [vmem:[%s1 + $0x55c] sm:$0xf]
  %v386 = vld [vmem:[%s1 + $0x560] sm:$0xf]
  %v387 = vld [vmem:[%s1 + $0x564] sm:$0xf]
  %v388 = vld [vmem:[%s1 + $0x568] sm:$0xf]
  %v389 = vld [vmem:[%s1 + $0x56c] sm:$0xf]
  %v390 = vld [vmem:[%s1 + $0x570] sm:$0xf]
  %v391 = vld [vmem:[%s1 + $0x574] sm:$0xf]
  %v392 = vld [vmem:[%s1 + $0x578] sm:$0xf]
  %v393 = vld [vmem:[%s1 + $0x57c] sm:$0xf]
  %v394 = vld [vmem:[%s1 + $0x580] sm:$0xf]
  %v395 = vld [vmem:[%s1 + $0x584] sm:$0xf]
  %v396 = vld [vmem:[%s1 + $0x588] sm:$0xf]
  %v397 = vld [vmem:[%s1 + $0x58c] sm:$0xf]
  %v398 = vld [vmem:[%s1 + $0x590] sm:$0xf]
  %v399 = vld [vmem:[%s1 + $0x594] sm:$0xf]
  %v400 = vld [vmem:[%s1 + $0x598] sm:$0xf]
  %v401 = vld [vmem:[%s1 + $0x59c] sm:$0xf]
  %v402 = vld [vmem:[%s1 + $0x5a0] sm:$0xf]
  %v403 = vld [vmem:[%s1 + $0x5a4] sm:$0xf]
  %v404 = vld [vmem:[%s1 + $0x5a8] sm:$0xf]
  %v405 = vld [vmem:[%s1 + $0x5ac] sm:$0xf]
  %v406 = vld [vmem:[%s1 + $0x5b0] sm:$0xf]
  %v407 = vld [vmem:[%s1 + $0x5b4] sm:$0xf]
  %v408 = vld [vmem:[%s1 + $0x5b8] sm:$0xf]
  %v409 = vld [vmem:[%s1 + $0x5bc] sm:$0xf]
  %v410 = vld [vmem:[%s1 + $0x5c0] sm:$0xf]
  %v411 = vld [vmem:[%s1 + $0x5c4] sm:$0xf]
  %v412 = vld [vmem:[%s1 + $0x5c8] sm:$0xf]
  %v413 = vld [vmem:[%s1 + $0x5cc] sm:$0xf]
  %v414 = vld [vmem:[%s1 + $0x5d0] sm:$0xf]
  %v415 = vld [vmem:[%s1 + $0x5d4] sm:$0xf]
  %v416 = vld [vmem:[%s1 + $0x5d8] sm:$0xf]
  %v417 = vld [vmem:[%s1 + $0x5dc] sm:$0xf]
  %v418 = vld [vmem:[%s1 + $0x5e0] sm:$0xf]
  %v419 = vld [vmem:[%s1 + $0x5e4] sm:$0xf]
  %v420 = vld [vmem:[%s1 + $0x5e8] sm:$0xf]
  %v421 = vld [vmem:[%s1 + $0x5ec] sm:$0xf]
  %v422 = vld [vmem:[%s1 + $0x5f0] sm:$0xf]
  %v423 = vld [vmem:[%s1 + $0x5f4] sm:$0xf]
  %v424 = vld [vmem:[%s1 + $0x5f8] sm:$0xf]
  %v425 = vld [vmem:[%s1 + $0x5fc] sm:$0xf]
  %v450 = vunpack.c.l.b16 %v18
  %v451 = vunpack.c.h.b16 %v18
  %v452 = vunpack.c.l.b16 %v19
  %v453 = vunpack.c.h.b16 %v19
  %v454 = vunpack.c.l.b16 %v20
  %v455 = vunpack.c.h.b16 %v20
  %v456 = vunpack.c.l.b16 %v21
  %v457 = vunpack.c.h.b16 %v21
  %v458 = vunpack.c.l.b16 %v22
  %v459 = vunpack.c.h.b16 %v22
  %v460 = vunpack.c.l.b16 %v23
  %v461 = vunpack.c.h.b16 %v23
  %v462 = vunpack.c.l.b16 %v24
  %v463 = vunpack.c.h.b16 %v24
  %v464 = vunpack.c.l.b16 %v25
  %v465 = vunpack.c.h.b16 %v25
  %v466 = vunpack.c.l.b16 %v26
  %v467 = vunpack.c.h.b16 %v26
  %v468 = vunpack.c.l.b16 %v27
  %v469 = vunpack.c.h.b16 %v27
  %v470 = vunpack.c.l.b16 %v28
  %v471 = vunpack.c.h.b16 %v28
  %v472 = vunpack.c.l.b16 %v29
  %v473 = vunpack.c.h.b16 %v29
  %v474 = vunpack.c.l.b16 %v30
  %v475 = vunpack.c.h.b16 %v30
  %v476 = vunpack.c.l.b16 %v31
  %v477 = vunpack.c.h.b16 %v31
  %v478 = vunpack.c.l.b16 %v32
  %v479 = vunpack.c.h.b16 %v32
  %v480 = vunpack.c.l.b16 %v33
  %v481 = vunpack.c.h.b16 %v33
  %v482 = vunpack.c.l.b16 %v34
  %v483 = vunpack.c.h.b16 %v34
  %v484 = vunpack.c.l.b16 %v35
  %v485 = vunpack.c.h.b16 %v35
  %v486 = vunpack.c.l.b16 %v36
  %v487 = vunpack.c.h.b16 %v36
  %v488 = vunpack.c.l.b16 %v37
  %v489 = vunpack.c.h.b16 %v37
  %v490 = vunpack.c.l.b16 %v38
  %v491 = vunpack.c.h.b16 %v38
  %v492 = vunpack.c.l.b16 %v39
  %v493 = vunpack.c.h.b16 %v39
  %v494 = vunpack.c.l.b16 %v40
  %v495 = vunpack.c.h.b16 %v40
  %v496 = vunpack.c.l.b16 %v41
  %v497 = vunpack.c.h.b16 %v41
  %v498 = vpack.c.b16 %v474, %v450
  %v499 = vpack.c.b16 %v475, %v451
  %v500 = vpack.c.b16 %v476, %v452
  %v501 = vpack.c.b16 %v477, %v453
  %v502 = vpack.c.b16 %v478, %v454
  %v503 = vpack.c.b16 %v479, %v455
  %v504 = vpack.c.b16 %v480, %v456
  %v505 = vpack.c.b16 %v481, %v457
  %v506 = vpack.c.b16 %v482, %v458
  %v507 = vpack.c.b16 %v483, %v459
  %v508 = vpack.c.b16 %v484, %v460
  %v509 = vpack.c.b16 %v485, %v461
  %v510 = vpack.c.b16 %v486, %v462
  %v511 = vpack.c.b16 %v487, %v463
  %v512 = vpack.c.b16 %v488, %v464
  %v513 = vpack.c.b16 %v489, %v465
  %v514 = vpack.c.b16 %v490, %v466
  %v515 = vpack.c.b16 %v491, %v467
  %v516 = vpack.c.b16 %v492, %v468
  %v517 = vpack.c.b16 %v493, %v469
  %v518 = vpack.c.b16 %v494, %v470
  %v519 = vpack.c.b16 %v495, %v471
  %v520 = vpack.c.b16 %v496, %v472
  %v521 = vpack.c.b16 %v497, %v473
  %v930 = vunpack.c.l.b16 %v42
  %v931 = vunpack.c.l.b16 %v43
  %v932 = vunpack.c.l.b16 %v44
  %v933 = vunpack.c.l.b16 %v45
  %v934 = vunpack.c.l.b16 %v46
  %v935 = vunpack.c.l.b16 %v47
  %v936 = vunpack.c.l.b16 %v48
  %v937 = vunpack.c.l.b16 %v49
  %v938 = vunpack.c.l.b16 %v50
  %v939 = vunpack.c.l.b16 %v51
  %v940 = vunpack.c.l.b16 %v52
  %v941 = vunpack.c.l.b16 %v53
  %v942 = vunpack.c.l.b16 %v54
  %v943 = vunpack.c.l.b16 %v55
  %v944 = vunpack.c.l.b16 %v56
  %v945 = vunpack.c.l.b16 %v57
  %v946 = vunpack.c.l.b16 %v58
  %v947 = vunpack.c.l.b16 %v59
  %v948 = vunpack.c.l.b16 %v60
  %v949 = vunpack.c.l.b16 %v61
  %v950 = vunpack.c.l.b16 %v62
  %v951 = vunpack.c.l.b16 %v63
  %v952 = vunpack.c.l.b16 %v64
  %v953 = vunpack.c.l.b16 %v65
  %v954 = vunpack.c.l.b16 %v66
  %v955 = vunpack.c.l.b16 %v67
  %v956 = vunpack.c.l.b16 %v68
  %v957 = vunpack.c.l.b16 %v69
  %v958 = vunpack.c.l.b16 %v70
  %v959 = vunpack.c.l.b16 %v71
  %v960 = vunpack.c.l.b16 %v72
  %v961 = vunpack.c.l.b16 %v73
  %v962 = vunpack.c.l.b16 %v74
  %v963 = vunpack.c.l.b16 %v75
  %v964 = vunpack.c.l.b16 %v76
  %v965 = vunpack.c.l.b16 %v77
  %v966 = vunpack.c.l.b16 %v78
  %v967 = vunpack.c.l.b16 %v79
  %v968 = vunpack.c.l.b16 %v80
  %v969 = vunpack.c.l.b16 %v81
  %v970 = vunpack.c.l.b16 %v82
  %v971 = vunpack.c.l.b16 %v83
  %v972 = vunpack.c.l.b16 %v84
  %v973 = vunpack.c.l.b16 %v85
  %v974 = vunpack.c.l.b16 %v86
  %v975 = vunpack.c.l.b16 %v87
  %v976 = vunpack.c.l.b16 %v88
  %v977 = vunpack.c.l.b16 %v89
  %v978 = vunpack.c.l.b16 %v90
  %v979 = vunpack.c.l.b16 %v91
  %v980 = vunpack.c.l.b16 %v92
  %v981 = vunpack.c.l.b16 %v93
  %v982 = vunpack.c.l.b16 %v94
  %v983 = vunpack.c.l.b16 %v95
  %v984 = vunpack.c.l.b16 %v96
  %v985 = vunpack.c.l.b16 %v97
  %v986 = vunpack.c.l.b16 %v98
  %v987 = vunpack.c.l.b16 %v99
  %v988 = vunpack.c.l.b16 %v100
  %v989 = vunpack.c.l.b16 %v101
  %v990 = vunpack.c.l.b16 %v102
  %v991 = vunpack.c.l.b16 %v103
  %v992 = vunpack.c.l.b16 %v104
  %v993 = vunpack.c.l.b16 %v105
  %v994 = vunpack.c.l.b16 %v106
  %v995 = vunpack.c.l.b16 %v107
  %v996 = vunpack.c.l.b16 %v108
  %v997 = vunpack.c.l.b16 %v109
  %v998 = vunpack.c.l.b16 %v110
  %v999 = vunpack.c.l.b16 %v111
  %v1000 = vunpack.c.l.b16 %v112
  %v1001 = vunpack.c.l.b16 %v113
  %v1002 = vunpack.c.l.b16 %v114
  %v1003 = vunpack.c.l.b16 %v115
  %v1004 = vunpack.c.l.b16 %v116
  %v1005 = vunpack.c.l.b16 %v117
  %v1006 = vunpack.c.l.b16 %v118
  %v1007 = vunpack.c.l.b16 %v119
  %v1008 = vunpack.c.l.b16 %v120
  %v1009 = vunpack.c.l.b16 %v121
  %v1010 = vunpack.c.l.b16 %v122
  %v1011 = vunpack.c.l.b16 %v123
  %v1012 = vunpack.c.l.b16 %v124
  %v1013 = vunpack.c.l.b16 %v125
  %v1014 = vunpack.c.l.b16 %v126
  %v1015 = vunpack.c.l.b16 %v127
  %v1016 = vunpack.c.l.b16 %v128
  %v1017 = vunpack.c.l.b16 %v129
  %v1018 = vunpack.c.l.b16 %v130
  %v1019 = vunpack.c.l.b16 %v131
  %v1020 = vunpack.c.l.b16 %v132
  %v1021 = vunpack.c.l.b16 %v133
  %v1022 = vunpack.c.l.b16 %v134
  %v1023 = vunpack.c.l.b16 %v135
  %v1024 = vunpack.c.l.b16 %v136
  %v1025 = vunpack.c.l.b16 %v137
  %v1026 = vunpack.c.l.b16 %v138
  %v1027 = vunpack.c.l.b16 %v139
  %v1028 = vunpack.c.l.b16 %v140
  %v1029 = vunpack.c.l.b16 %v141
  %v1030 = vunpack.c.l.b16 %v142
  %v1031 = vunpack.c.l.b16 %v143
  %v1032 = vunpack.c.l.b16 %v144
  %v1033 = vunpack.c.l.b16 %v145
  %v1034 = vunpack.c.l.b16 %v146
  %v1035 = vunpack.c.l.b16 %v147
  %v1036 = vunpack.c.l.b16 %v148
  %v1037 = vunpack.c.l.b16 %v149
  %v1038 = vunpack.c.l.b16 %v150
  %v1039 = vunpack.c.l.b16 %v151
  %v1040 = vunpack.c.l.b16 %v152
  %v1041 = vunpack.c.l.b16 %v153
  %v1042 = vunpack.c.l.b16 %v154
  %v1043 = vunpack.c.l.b16 %v155
  %v1044 = vunpack.c.l.b16 %v156
  %v1045 = vunpack.c.l.b16 %v157
  %v1046 = vunpack.c.l.b16 %v158
  %v1047 = vunpack.c.l.b16 %v159
  %v1048 = vunpack.c.l.b16 %v160
  %v1049 = vunpack.c.l.b16 %v161
  %v1050 = vunpack.c.l.b16 %v162
  %v1051 = vunpack.c.l.b16 %v163
  %v1052 = vunpack.c.l.b16 %v164
  %v1053 = vunpack.c.l.b16 %v165
  %v1054 = vunpack.c.l.b16 %v166
  %v1055 = vunpack.c.l.b16 %v167
  %v1056 = vunpack.c.l.b16 %v168
  %v1057 = vunpack.c.l.b16 %v169
  %v1058 = vunpack.c.l.b16 %v170
  %v1059 = vunpack.c.l.b16 %v171
  %v1060 = vunpack.c.l.b16 %v172
  %v1061 = vunpack.c.l.b16 %v173
  %v1062 = vunpack.c.l.b16 %v174
  %v1063 = vunpack.c.l.b16 %v175
  %v1064 = vunpack.c.l.b16 %v176
  %v1065 = vunpack.c.l.b16 %v177
  %v1066 = vunpack.c.l.b16 %v178
  %v1067 = vunpack.c.l.b16 %v179
  %v1068 = vunpack.c.l.b16 %v180
  %v1069 = vunpack.c.l.b16 %v181
  %v1070 = vunpack.c.l.b16 %v182
  %v1071 = vunpack.c.l.b16 %v183
  %v1072 = vunpack.c.l.b16 %v184
  %v1073 = vunpack.c.l.b16 %v185
  %v1074 = vunpack.c.l.b16 %v186
  %v1075 = vunpack.c.l.b16 %v187
  %v1076 = vunpack.c.l.b16 %v188
  %v1077 = vunpack.c.l.b16 %v189
  %v1078 = vunpack.c.l.b16 %v190
  %v1079 = vunpack.c.l.b16 %v191
  %v1080 = vunpack.c.l.b16 %v192
  %v1081 = vunpack.c.l.b16 %v193
  %v1082 = vunpack.c.l.b16 %v194
  %v1083 = vunpack.c.l.b16 %v195
  %v1084 = vunpack.c.l.b16 %v196
  %v1085 = vunpack.c.l.b16 %v197
  %v1086 = vunpack.c.l.b16 %v198
  %v1087 = vunpack.c.l.b16 %v199
  %v1088 = vunpack.c.l.b16 %v200
  %v1089 = vunpack.c.l.b16 %v201
  %v1090 = vunpack.c.l.b16 %v202
  %v1091 = vunpack.c.l.b16 %v203
  %v1092 = vunpack.c.l.b16 %v204
  %v1093 = vunpack.c.l.b16 %v205
  %v1094 = vunpack.c.l.b16 %v206
  %v1095 = vunpack.c.l.b16 %v207
  %v1096 = vunpack.c.l.b16 %v208
  %v1097 = vunpack.c.l.b16 %v209
  %v1098 = vunpack.c.l.b16 %v210
  %v1099 = vunpack.c.l.b16 %v211
  %v1100 = vunpack.c.l.b16 %v212
  %v1101 = vunpack.c.l.b16 %v213
  %v1102 = vunpack.c.l.b16 %v214
  %v1103 = vunpack.c.l.b16 %v215
  %v1104 = vunpack.c.l.b16 %v216
  %v1105 = vunpack.c.l.b16 %v217
  %v1106 = vunpack.c.l.b16 %v218
  %v1107 = vunpack.c.l.b16 %v219
  %v1108 = vunpack.c.l.b16 %v220
  %v1109 = vunpack.c.l.b16 %v221
  %v1110 = vunpack.c.l.b16 %v222
  %v1111 = vunpack.c.l.b16 %v223
  %v1112 = vunpack.c.l.b16 %v224
  %v1113 = vunpack.c.l.b16 %v225
  %v1114 = vunpack.c.l.b16 %v226
  %v1115 = vunpack.c.l.b16 %v227
  %v1116 = vunpack.c.l.b16 %v228
  %v1117 = vunpack.c.l.b16 %v229
  %v1118 = vunpack.c.l.b16 %v230
  %v1119 = vunpack.c.l.b16 %v231
  %v1120 = vunpack.c.l.b16 %v232
  %v1121 = vunpack.c.l.b16 %v233
  %v1122 = vunpack.c.l.b16 %v234
  %v1123 = vunpack.c.l.b16 %v235
  %v1124 = vunpack.c.l.b16 %v236
  %v1125 = vunpack.c.l.b16 %v237
  %v1126 = vunpack.c.l.b16 %v238
  %v1127 = vunpack.c.l.b16 %v239
  %v1128 = vunpack.c.l.b16 %v240
  %v1129 = vunpack.c.l.b16 %v241
  %v1130 = vunpack.c.l.b16 %v242
  %v1131 = vunpack.c.l.b16 %v243
  %v1132 = vunpack.c.l.b16 %v244
  %v1133 = vunpack.c.l.b16 %v245
  %v1134 = vunpack.c.l.b16 %v246
  %v1135 = vunpack.c.l.b16 %v247
  %v1136 = vunpack.c.l.b16 %v248
  %v1137 = vunpack.c.l.b16 %v249
  %v1138 = vunpack.c.l.b16 %v250
  %v1139 = vunpack.c.l.b16 %v251
  %v1140 = vunpack.c.l.b16 %v252
  %v1141 = vunpack.c.l.b16 %v253
  %v1142 = vunpack.c.l.b16 %v254
  %v1143 = vunpack.c.l.b16 %v255
  %v1144 = vunpack.c.l.b16 %v256
  %v1145 = vunpack.c.l.b16 %v257
  %v1146 = vunpack.c.l.b16 %v258
  %v1147 = vunpack.c.l.b16 %v259
  %v1148 = vunpack.c.l.b16 %v260
  %v1149 = vunpack.c.l.b16 %v261
  %v1150 = vunpack.c.l.b16 %v262
  %v1151 = vunpack.c.l.b16 %v263
  %v1152 = vunpack.c.l.b16 %v264
  %v1153 = vunpack.c.l.b16 %v265
  %v1154 = vunpack.c.l.b16 %v266
  %v1155 = vunpack.c.l.b16 %v267
  %v1156 = vunpack.c.l.b16 %v268
  %v1157 = vunpack.c.l.b16 %v269
  %v1158 = vunpack.c.l.b16 %v270
  %v1159 = vunpack.c.l.b16 %v271
  %v1160 = vunpack.c.l.b16 %v272
  %v1161 = vunpack.c.l.b16 %v273
  %v1162 = vunpack.c.l.b16 %v274
  %v1163 = vunpack.c.l.b16 %v275
  %v1164 = vunpack.c.l.b16 %v276
  %v1165 = vunpack.c.l.b16 %v277
  %v1166 = vunpack.c.l.b16 %v278
  %v1167 = vunpack.c.l.b16 %v279
  %v1168 = vunpack.c.l.b16 %v280
  %v1169 = vunpack.c.l.b16 %v281
  %v1170 = vunpack.c.l.b16 %v282
  %v1171 = vunpack.c.l.b16 %v283
  %v1172 = vunpack.c.l.b16 %v284
  %v1173 = vunpack.c.l.b16 %v285
  %v1174 = vunpack.c.l.b16 %v286
  %v1175 = vunpack.c.l.b16 %v287
  %v1176 = vunpack.c.l.b16 %v288
  %v1177 = vunpack.c.l.b16 %v289
  %v1178 = vunpack.c.l.b16 %v290
  %v1179 = vunpack.c.l.b16 %v291
  %v1180 = vunpack.c.l.b16 %v292
  %v1181 = vunpack.c.l.b16 %v293
  %v1182 = vunpack.c.l.b16 %v294
  %v1183 = vunpack.c.l.b16 %v295
  %v1184 = vunpack.c.l.b16 %v296
  %v1185 = vunpack.c.l.b16 %v297
  %v1186 = vunpack.c.l.b16 %v298
  %v1187 = vunpack.c.l.b16 %v299
  %v1188 = vunpack.c.l.b16 %v300
  %v1189 = vunpack.c.l.b16 %v301
  %v1190 = vunpack.c.l.b16 %v302
  %v1191 = vunpack.c.l.b16 %v303
  %v1192 = vunpack.c.l.b16 %v304
  %v1193 = vunpack.c.l.b16 %v305
  %v1194 = vunpack.c.l.b16 %v306
  %v1195 = vunpack.c.l.b16 %v307
  %v1196 = vunpack.c.l.b16 %v308
  %v1197 = vunpack.c.l.b16 %v309
  %v1198 = vunpack.c.l.b16 %v310
  %v1199 = vunpack.c.l.b16 %v311
  %v1200 = vunpack.c.l.b16 %v312
  %v1201 = vunpack.c.l.b16 %v313
  %v1202 = vunpack.c.l.b16 %v314
  %v1203 = vunpack.c.l.b16 %v315
  %v1204 = vunpack.c.l.b16 %v316
  %v1205 = vunpack.c.l.b16 %v317
  %v1206 = vunpack.c.l.b16 %v318
  %v1207 = vunpack.c.l.b16 %v319
  %v1208 = vunpack.c.l.b16 %v320
  %v1209 = vunpack.c.l.b16 %v321
  %v1210 = vunpack.c.l.b16 %v322
  %v1211 = vunpack.c.l.b16 %v323
  %v1212 = vunpack.c.l.b16 %v324
  %v1213 = vunpack.c.l.b16 %v325
  %v1214 = vunpack.c.l.b16 %v326
  %v1215 = vunpack.c.l.b16 %v327
  %v1216 = vunpack.c.l.b16 %v328
  %v1217 = vunpack.c.l.b16 %v329
  %v1218 = vunpack.c.l.b16 %v330
  %v1219 = vunpack.c.l.b16 %v331
  %v1220 = vunpack.c.l.b16 %v332
  %v1221 = vunpack.c.l.b16 %v333
  %v1222 = vunpack.c.l.b16 %v334
  %v1223 = vunpack.c.l.b16 %v335
  %v1224 = vunpack.c.l.b16 %v336
  %v1225 = vunpack.c.l.b16 %v337
  %v1226 = vunpack.c.l.b16 %v338
  %v1227 = vunpack.c.l.b16 %v339
  %v1228 = vunpack.c.l.b16 %v340
  %v1229 = vunpack.c.l.b16 %v341
  %v1230 = vunpack.c.l.b16 %v342
  %v1231 = vunpack.c.l.b16 %v343
  %v1232 = vunpack.c.l.b16 %v344
  %v1233 = vunpack.c.l.b16 %v345
  %v1234 = vunpack.c.l.b16 %v346
  %v1235 = vunpack.c.l.b16 %v347
  %v1236 = vunpack.c.l.b16 %v348
  %v1237 = vunpack.c.l.b16 %v349
  %v1238 = vunpack.c.l.b16 %v350
  %v1239 = vunpack.c.l.b16 %v351
  %v1240 = vunpack.c.l.b16 %v352
  %v1241 = vunpack.c.l.b16 %v353
  %v1242 = vunpack.c.l.b16 %v354
  %v1243 = vunpack.c.l.b16 %v355
  %v1244 = vunpack.c.l.b16 %v356
  %v1245 = vunpack.c.l.b16 %v357
  %v1246 = vunpack.c.l.b16 %v358
  %v1247 = vunpack.c.l.b16 %v359
  %v1248 = vunpack.c.l.b16 %v360
  %v1249 = vunpack.c.l.b16 %v361
  %v1250 = vunpack.c.l.b16 %v362
  %v1251 = vunpack.c.l.b16 %v363
  %v1252 = vunpack.c.l.b16 %v364
  %v1253 = vunpack.c.l.b16 %v365
  %v1254 = vunpack.c.l.b16 %v366
  %v1255 = vunpack.c.l.b16 %v367
  %v1256 = vunpack.c.l.b16 %v368
  %v1257 = vunpack.c.l.b16 %v369
  %v1258 = vunpack.c.l.b16 %v370
  %v1259 = vunpack.c.l.b16 %v371
  %v1260 = vunpack.c.l.b16 %v372
  %v1261 = vunpack.c.l.b16 %v373
  %v1262 = vunpack.c.l.b16 %v374
  %v1263 = vunpack.c.l.b16 %v375
  %v1264 = vunpack.c.l.b16 %v376
  %v1265 = vunpack.c.l.b16 %v377
  %v1266 = vunpack.c.l.b16 %v378
  %v1267 = vunpack.c.l.b16 %v379
  %v1268 = vunpack.c.l.b16 %v380
  %v1269 = vunpack.c.l.b16 %v381
  %v1270 = vunpack.c.l.b16 %v382
  %v1271 = vunpack.c.l.b16 %v383
  %v1272 = vunpack.c.l.b16 %v384
  %v1273 = vunpack.c.l.b16 %v385
  %v1274 = vunpack.c.l.b16 %v386
  %v1275 = vunpack.c.l.b16 %v387
  %v1276 = vunpack.c.l.b16 %v388
  %v1277 = vunpack.c.l.b16 %v389
  %v1278 = vunpack.c.l.b16 %v390
  %v1279 = vunpack.c.l.b16 %v391
  %v1280 = vunpack.c.l.b16 %v392
  %v1281 = vunpack.c.l.b16 %v393
  %v1282 = vunpack.c.l.b16 %v394
  %v1283 = vunpack.c.l.b16 %v395
  %v1284 = vunpack.c.l.b16 %v396
  %v1285 = vunpack.c.l.b16 %v397
  %v1286 = vunpack.c.l.b16 %v398
  %v1287 = vunpack.c.l.b16 %v399
  %v1288 = vunpack.c.l.b16 %v400
  %v1289 = vunpack.c.l.b16 %v401
  %v1290 = vunpack.c.l.b16 %v402
  %v1291 = vunpack.c.l.b16 %v403
  %v1292 = vunpack.c.l.b16 %v404
  %v1293 = vunpack.c.l.b16 %v405
  %v1294 = vunpack.c.l.b16 %v406
  %v1295 = vunpack.c.l.b16 %v407
  %v1296 = vunpack.c.l.b16 %v408
  %v1297 = vunpack.c.l.b16 %v409
  %v1298 = vunpack.c.l.b16 %v410
  %v1299 = vunpack.c.l.b16 %v411
  %v1300 = vunpack.c.l.b16 %v412
  %v1301 = vunpack.c.l.b16 %v413
  %v1302 = vunpack.c.l.b16 %v414
  %v1303 = vunpack.c.l.b16 %v415
  %v1304 = vunpack.c.l.b16 %v416
  %v1305 = vunpack.c.l.b16 %v417
  %v1306 = vunpack.c.l.b16 %v418
  %v1307 = vunpack.c.l.b16 %v419
  %v1308 = vunpack.c.l.b16 %v420
  %v1309 = vunpack.c.l.b16 %v421
  %v1310 = vunpack.c.l.b16 %v422
  %v1311 = vunpack.c.l.b16 %v423
  %v1312 = vunpack.c.l.b16 %v424
  %v1313 = vunpack.c.l.b16 %v425
  %v1314 = vpack.c.b16 %v931, %v930
  %v1315 = vpack.c.b16 %v933, %v932
  %v1316 = vpack.c.b16 %v935, %v934
  %v1317 = vpack.c.b16 %v937, %v936
  %v1318 = vpack.c.b16 %v939, %v938
  %v1319 = vpack.c.b16 %v941, %v940
  %v1320 = vpack.c.b16 %v943, %v942
  %v1321 = vpack.c.b16 %v945, %v944
  %v1322 = vpack.c.b16 %v947, %v946
  %v1323 = vpack.c.b16 %v949, %v948
  %v1324 = vpack.c.b16 %v951, %v950
  %v1325 = vpack.c.b16 %v953, %v952
  %v1326 = vpack.c.b16 %v955, %v954
  %v1327 = vpack.c.b16 %v957, %v956
  %v1328 = vpack.c.b16 %v959, %v958
  %v1329 = vpack.c.b16 %v961, %v960
  %v1330 = vpack.c.b16 %v963, %v962
  %v1331 = vpack.c.b16 %v965, %v964
  %v1332 = vpack.c.b16 %v967, %v966
  %v1333 = vpack.c.b16 %v969, %v968
  %v1334 = vpack.c.b16 %v971, %v970
  %v1335 = vpack.c.b16 %v973, %v972
  %v1336 = vpack.c.b16 %v975, %v974
  %v1337 = vpack.c.b16 %v977, %v976
  %v1338 = vpack.c.b16 %v979, %v978
  %v1339 = vpack.c.b16 %v981, %v980
  %v1340 = vpack.c.b16 %v983, %v982
  %v1341 = vpack.c.b16 %v985, %v984
  %v1342 = vpack.c.b16 %v987, %v986
  %v1343 = vpack.c.b16 %v989, %v988
  %v1344 = vpack.c.b16 %v991, %v990
  %v1345 = vpack.c.b16 %v993, %v992
  %v1346 = vpack.c.b16 %v995, %v994
  %v1347 = vpack.c.b16 %v997, %v996
  %v1348 = vpack.c.b16 %v999, %v998
  %v1349 = vpack.c.b16 %v1001, %v1000
  %v1350 = vpack.c.b16 %v1003, %v1002
  %v1351 = vpack.c.b16 %v1005, %v1004
  %v1352 = vpack.c.b16 %v1007, %v1006
  %v1353 = vpack.c.b16 %v1009, %v1008
  %v1354 = vpack.c.b16 %v1011, %v1010
  %v1355 = vpack.c.b16 %v1013, %v1012
  %v1356 = vpack.c.b16 %v1015, %v1014
  %v1357 = vpack.c.b16 %v1017, %v1016
  %v1358 = vpack.c.b16 %v1019, %v1018
  %v1359 = vpack.c.b16 %v1021, %v1020
  %v1360 = vpack.c.b16 %v1023, %v1022
  %v1361 = vpack.c.b16 %v1025, %v1024
  %v1362 = vpack.c.b16 %v1027, %v1026
  %v1363 = vpack.c.b16 %v1029, %v1028
  %v1364 = vpack.c.b16 %v1031, %v1030
  %v1365 = vpack.c.b16 %v1033, %v1032
  %v1366 = vpack.c.b16 %v1035, %v1034
  %v1367 = vpack.c.b16 %v1037, %v1036
  %v1368 = vpack.c.b16 %v1039, %v1038
  %v1369 = vpack.c.b16 %v1041, %v1040
  %v1370 = vpack.c.b16 %v1043, %v1042
  %v1371 = vpack.c.b16 %v1045, %v1044
  %v1372 = vpack.c.b16 %v1047, %v1046
  %v1373 = vpack.c.b16 %v1049, %v1048
  %v1374 = vpack.c.b16 %v1051, %v1050
  %v1375 = vpack.c.b16 %v1053, %v1052
  %v1376 = vpack.c.b16 %v1055, %v1054
  %v1377 = vpack.c.b16 %v1057, %v1056
  %v1378 = vpack.c.b16 %v1059, %v1058
  %v1379 = vpack.c.b16 %v1061, %v1060
  %v1380 = vpack.c.b16 %v1063, %v1062
  %v1381 = vpack.c.b16 %v1065, %v1064
  %v1382 = vpack.c.b16 %v1067, %v1066
  %v1383 = vpack.c.b16 %v1069, %v1068
  %v1384 = vpack.c.b16 %v1071, %v1070
  %v1385 = vpack.c.b16 %v1073, %v1072
  %v1386 = vpack.c.b16 %v1075, %v1074
  %v1387 = vpack.c.b16 %v1077, %v1076
  %v1388 = vpack.c.b16 %v1079, %v1078
  %v1389 = vpack.c.b16 %v1081, %v1080
  %v1390 = vpack.c.b16 %v1083, %v1082
  %v1391 = vpack.c.b16 %v1085, %v1084
  %v1392 = vpack.c.b16 %v1087, %v1086
  %v1393 = vpack.c.b16 %v1089, %v1088
  %v1394 = vpack.c.b16 %v1091, %v1090
  %v1395 = vpack.c.b16 %v1093, %v1092
  %v1396 = vpack.c.b16 %v1095, %v1094
  %v1397 = vpack.c.b16 %v1097, %v1096
  %v1398 = vpack.c.b16 %v1099, %v1098
  %v1399 = vpack.c.b16 %v1101, %v1100
  %v1400 = vpack.c.b16 %v1103, %v1102
  %v1401 = vpack.c.b16 %v1105, %v1104
  %v1402 = vpack.c.b16 %v1107, %v1106
  %v1403 = vpack.c.b16 %v1109, %v1108
  %v1404 = vpack.c.b16 %v1111, %v1110
  %v1405 = vpack.c.b16 %v1113, %v1112
  %v1406 = vpack.c.b16 %v1115, %v1114
  %v1407 = vpack.c.b16 %v1117, %v1116
  %v1408 = vpack.c.b16 %v1119, %v1118
  %v1409 = vpack.c.b16 %v1121, %v1120
  %v1410 = vpack.c.b16 %v1123, %v1122
  %v1411 = vpack.c.b16 %v1125, %v1124
  %v1412 = vpack.c.b16 %v1127, %v1126
  %v1413 = vpack.c.b16 %v1129, %v1128
  %v1414 = vpack.c.b16 %v1131, %v1130
  %v1415 = vpack.c.b16 %v1133, %v1132
  %v1416 = vpack.c.b16 %v1135, %v1134
  %v1417 = vpack.c.b16 %v1137, %v1136
  %v1418 = vpack.c.b16 %v1139, %v1138
  %v1419 = vpack.c.b16 %v1141, %v1140
  %v1420 = vpack.c.b16 %v1143, %v1142
  %v1421 = vpack.c.b16 %v1145, %v1144
  %v1422 = vpack.c.b16 %v1147, %v1146
  %v1423 = vpack.c.b16 %v1149, %v1148
  %v1424 = vpack.c.b16 %v1151, %v1150
  %v1425 = vpack.c.b16 %v1153, %v1152
  %v1426 = vpack.c.b16 %v1155, %v1154
  %v1427 = vpack.c.b16 %v1157, %v1156
  %v1428 = vpack.c.b16 %v1159, %v1158
  %v1429 = vpack.c.b16 %v1161, %v1160
  %v1430 = vpack.c.b16 %v1163, %v1162
  %v1431 = vpack.c.b16 %v1165, %v1164
  %v1432 = vpack.c.b16 %v1167, %v1166
  %v1433 = vpack.c.b16 %v1169, %v1168
  %v1434 = vpack.c.b16 %v1171, %v1170
  %v1435 = vpack.c.b16 %v1173, %v1172
  %v1436 = vpack.c.b16 %v1175, %v1174
  %v1437 = vpack.c.b16 %v1177, %v1176
  %v1438 = vpack.c.b16 %v1179, %v1178
  %v1439 = vpack.c.b16 %v1181, %v1180
  %v1440 = vpack.c.b16 %v1183, %v1182
  %v1441 = vpack.c.b16 %v1185, %v1184
  %v1442 = vpack.c.b16 %v1187, %v1186
  %v1443 = vpack.c.b16 %v1189, %v1188
  %v1444 = vpack.c.b16 %v1191, %v1190
  %v1445 = vpack.c.b16 %v1193, %v1192
  %v1446 = vpack.c.b16 %v1195, %v1194
  %v1447 = vpack.c.b16 %v1197, %v1196
  %v1448 = vpack.c.b16 %v1199, %v1198
  %v1449 = vpack.c.b16 %v1201, %v1200
  %v1450 = vpack.c.b16 %v1203, %v1202
  %v1451 = vpack.c.b16 %v1205, %v1204
  %v1452 = vpack.c.b16 %v1207, %v1206
  %v1453 = vpack.c.b16 %v1209, %v1208
  %v1454 = vpack.c.b16 %v1211, %v1210
  %v1455 = vpack.c.b16 %v1213, %v1212
  %v1456 = vpack.c.b16 %v1215, %v1214
  %v1457 = vpack.c.b16 %v1217, %v1216
  %v1458 = vpack.c.b16 %v1219, %v1218
  %v1459 = vpack.c.b16 %v1221, %v1220
  %v1460 = vpack.c.b16 %v1223, %v1222
  %v1461 = vpack.c.b16 %v1225, %v1224
  %v1462 = vpack.c.b16 %v1227, %v1226
  %v1463 = vpack.c.b16 %v1229, %v1228
  %v1464 = vpack.c.b16 %v1231, %v1230
  %v1465 = vpack.c.b16 %v1233, %v1232
  %v1466 = vpack.c.b16 %v1235, %v1234
  %v1467 = vpack.c.b16 %v1237, %v1236
  %v1468 = vpack.c.b16 %v1239, %v1238
  %v1469 = vpack.c.b16 %v1241, %v1240
  %v1470 = vpack.c.b16 %v1243, %v1242
  %v1471 = vpack.c.b16 %v1245, %v1244
  %v1472 = vpack.c.b16 %v1247, %v1246
  %v1473 = vpack.c.b16 %v1249, %v1248
  %v1474 = vpack.c.b16 %v1251, %v1250
  %v1475 = vpack.c.b16 %v1253, %v1252
  %v1476 = vpack.c.b16 %v1255, %v1254
  %v1477 = vpack.c.b16 %v1257, %v1256
  %v1478 = vpack.c.b16 %v1259, %v1258
  %v1479 = vpack.c.b16 %v1261, %v1260
  %v1480 = vpack.c.b16 %v1263, %v1262
  %v1481 = vpack.c.b16 %v1265, %v1264
  %v1482 = vpack.c.b16 %v1267, %v1266
  %v1483 = vpack.c.b16 %v1269, %v1268
  %v1484 = vpack.c.b16 %v1271, %v1270
  %v1485 = vpack.c.b16 %v1273, %v1272
  %v1486 = vpack.c.b16 %v1275, %v1274
  %v1487 = vpack.c.b16 %v1277, %v1276
  %v1488 = vpack.c.b16 %v1279, %v1278
  %v1489 = vpack.c.b16 %v1281, %v1280
  %v1490 = vpack.c.b16 %v1283, %v1282
  %v1491 = vpack.c.b16 %v1285, %v1284
  %v1492 = vpack.c.b16 %v1287, %v1286
  %v1493 = vpack.c.b16 %v1289, %v1288
  %v1494 = vpack.c.b16 %v1291, %v1290
  %v1495 = vpack.c.b16 %v1293, %v1292
  %v1496 = vpack.c.b16 %v1295, %v1294
  %v1497 = vpack.c.b16 %v1297, %v1296
  %v1498 = vpack.c.b16 %v1299, %v1298
  %v1499 = vpack.c.b16 %v1301, %v1300
  %v1500 = vpack.c.b16 %v1303, %v1302
  %v1501 = vpack.c.b16 %v1305, %v1304
  %v1502 = vpack.c.b16 %v1307, %v1306
  %v1503 = vpack.c.b16 %v1309, %v1308
  %v1504 = vpack.c.b16 %v1311, %v1310
  %v1505 = vpack.c.b16 %v1313, %v1312
  %1698 = vmatprep.subr.bf16.mxu0 0
  %1699 = vmatpush1.bf16.msra.mxu0 %v1314
  %1700 = vmatprep.subr.bf16.mxu0 0
  %1701 = vmatpush1.bf16.msra.mxu0 %v1315
  %1702 = vmatprep.subr.bf16.mxu0 0
  %1703 = vmatpush1.bf16.msra.mxu0 %v1316
  %1704 = vmatprep.subr.bf16.mxu0 0
  %1705 = vmatpush1.bf16.msra.mxu0 %v1317
  %1706 = vmatprep.subr.bf16.mxu0 0
  %1707 = vmatpush1.bf16.msra.mxu0 %v1318
  %1708 = vmatprep.subr.bf16.mxu0 0
  %1709 = vmatpush1.bf16.msra.mxu0 %v1319
  %1710 = vmatprep.subr.bf16.mxu0 0
  %1711 = vmatpush1.bf16.msra.mxu0 %v1320
  %1712 = vmatprep.subr.bf16.mxu0 0
  %1713 = vmatpush1.bf16.msra.mxu0 %v1321
  %1714 = vmatprep.subr.bf16.mxu0 0
  %1715 = vmatpush1.bf16.msra.mxu0 %v1322
  %1716 = vmatprep.subr.bf16.mxu0 0
  %1717 = vmatpush1.bf16.msra.mxu0 %v1323
  %1718 = vmatprep.subr.bf16.mxu0 0
  %1719 = vmatpush1.bf16.msra.mxu0 %v1324
  %1720 = vmatprep.subr.bf16.mxu0 0
  %1721 = vmatpush1.bf16.msra.mxu0 %v1325
  %1722 = vmatprep.subr.bf16.mxu0 0
  %1723 = vmatpush1.bf16.msra.mxu0 %v1326
  %1724 = vmatprep.subr.bf16.mxu0 0
  %1725 = vmatpush1.bf16.msra.mxu0 %v1327
  %1726 = vmatprep.subr.bf16.mxu0 0
  %1727 = vmatpush1.bf16.msra.mxu0 %v1328
  %1728 = vmatprep.subr.bf16.mxu0 0
  %1729 = vmatpush1.bf16.msra.mxu0 %v1329
  %1730 = vmatprep.mubr.bf16.mxu0 %v499
  %1731 = vmatmul.mubr.bf16.gmra.mrb[0].mxu0 %v498
  %v1732 = vpop.f32.mrb[0].mxu0
  %v1733 = vadd.f32 0.0, %v1732
  %v1734 = vpop.f32.mrb[0].mxu0
  %v1735 = vpop.f32.mrb[0].mxu0
  %v1736 = vadd.f32 0.0, %v1735
  %v1737 = vpop.f32.mrb[0].mxu0
  %1738 = vdwg.mxu0
  %1739 = vmatprep.subr.bf16.mxu0 0
  %1740 = vmatpush1.bf16.msra.mxu0 %v1330
  %1741 = vmatprep.subr.bf16.mxu0 0
  %1742 = vmatpush1.bf16.msra.mxu0 %v1331
  %1743 = vmatprep.subr.bf16.mxu0 0
  %1744 = vmatpush1.bf16.msra.mxu0 %v1332
  %1745 = vmatprep.subr.bf16.mxu0 0
  %1746 = vmatpush1.bf16.msra.mxu0 %v1333
  %1747 = vmatprep.subr.bf16.mxu0 0
  %1748 = vmatpush1.bf16.msra.mxu0 %v1334
  %1749 = vmatprep.subr.bf16.mxu0 0
  %1750 = vmatpush1.bf16.msra.mxu0 %v1335
  %1751 = vmatprep.subr.bf16.mxu0 0
  %1752 = vmatpush1.bf16.msra.mxu0 %v1336
  %1753 = vmatprep.subr.bf16.mxu0 0
  %1754 = vmatpush1.bf16.msra.mxu0 %v1337
  %1755 = vmatprep.subr.bf16.mxu0 0
  %1756 = vmatpush1.bf16.msra.mxu0 %v1338
  %1757 = vmatprep.subr.bf16.mxu0 0
  %1758 = vmatpush1.bf16.msra.mxu0 %v1339
  %1759 = vmatprep.subr.bf16.mxu0 0
  %1760 = vmatpush1.bf16.msra.mxu0 %v1340
  %1761 = vmatprep.subr.bf16.mxu0 0
  %1762 = vmatpush1.bf16.msra.mxu0 %v1341
  %1763 = vmatprep.subr.bf16.mxu0 0
  %1764 = vmatpush1.bf16.msra.mxu0 %v1342
  %1765 = vmatprep.subr.bf16.mxu0 0
  %1766 = vmatpush1.bf16.msra.mxu0 %v1343
  %1767 = vmatprep.subr.bf16.mxu0 0
  %1768 = vmatpush1.bf16.msra.mxu0 %v1344
  %1769 = vmatprep.subr.bf16.mxu0 0
  %1770 = vmatpush1.bf16.msra.mxu0 %v1345
  %1771 = vmatprep.mubr.bf16.mxu0 %v501
  %1772 = vmatmul.mubr.bf16.gmra.mrb[0].mxu0 %v500
  %v1773 = vpop.f32.mrb[0].mxu0
  %v1774 = vadd.f32 %v1733, %v1773
  %v1775 = vpop.f32.mrb[0].mxu0
  %v1776 = vpop.f32.mrb[0].mxu0
  %v1777 = vadd.f32 %v1736, %v1776
  %v1778 = vpop.f32.mrb[0].mxu0
  %1779 = vdwg.mxu0
  %1780 = vmatprep.subr.bf16.mxu0 0
  %1781 = vmatpush1.bf16.msra.mxu0 %v1346
  %1782 = vmatprep.subr.bf16.mxu0 0
  %1783 = vmatpush1.bf16.msra.mxu0 %v1347
  %1784 = vmatprep.subr.bf16.mxu0 0
  %1785 = vmatpush1.bf16.msra.mxu0 %v1348
  %1786 = vmatprep.subr.bf16.mxu0 0
  %1787 = vmatpush1.bf16.msra.mxu0 %v1349
  %1788 = vmatprep.subr.bf16.mxu0 0
  %1789 = vmatpush1.bf16.msra.mxu0 %v1350
  %1790 = vmatprep.subr.bf16.mxu0 0
  %1791 = vmatpush1.bf16.msra.mxu0 %v1351
  %1792 = vmatprep.subr.bf16.mxu0 0
  %1793 = vmatpush1.bf16.msra.mxu0 %v1352
  %1794 = vmatprep.subr.bf16.mxu0 0
  %1795 = vmatpush1.bf16.msra.mxu0 %v1353
  %1796 = vmatprep.subr.bf16.mxu0 0
  %1797 = vmatpush1.bf16.msra.mxu0 %v1354
  %1798 = vmatprep.subr.bf16.mxu0 0
  %1799 = vmatpush1.bf16.msra.mxu0 %v1355
  %1800 = vmatprep.subr.bf16.mxu0 0
  %1801 = vmatpush1.bf16.msra.mxu0 %v1356
  %1802 = vmatprep.subr.bf16.mxu0 0
  %1803 = vmatpush1.bf16.msra.mxu0 %v1357
  %1804 = vmatprep.subr.bf16.mxu0 0
  %1805 = vmatpush1.bf16.msra.mxu0 %v1358
  %1806 = vmatprep.subr.bf16.mxu0 0
  %1807 = vmatpush1.bf16.msra.mxu0 %v1359
  %1808 = vmatprep.subr.bf16.mxu0 0
  %1809 = vmatpush1.bf16.msra.mxu0 %v1360
  %1810 = vmatprep.subr.bf16.mxu0 0
  %1811 = vmatpush1.bf16.msra.mxu0 %v1361
  %1812 = vmatprep.mubr.bf16.mxu0 %v503
  %1813 = vmatmul.mubr.bf16.gmra.mrb[0].mxu0 %v502
  %v1814 = vpop.f32.mrb[0].mxu0
  %v1815 = vadd.f32 %v1774, %v1814
  %v1816 = vpop.f32.mrb[0].mxu0
  %v1817 = vpop.f32.mrb[0].mxu0
  %v1818 = vadd.f32 %v1777, %v1817
  %v1819 = vpop.f32.mrb[0].mxu0
  %1820 = vdwg.mxu0
  %1821 = vmatprep.subr.bf16.mxu0 0
  %1822 = vmatpush1.bf16.msra.mxu0 %v1362
  %1823 = vmatprep.subr.bf16.mxu0 0
  %1824 = vmatpush1.bf16.msra.mxu0 %v1363
  %1825 = vmatprep.subr.bf16.mxu0 0
  %1826 = vmatpush1.bf16.msra.mxu0 %v1364
  %1827 = vmatprep.subr.bf16.mxu0 0
  %1828 = vmatpush1.bf16.msra.mxu0 %v1365
  %1829 = vmatprep.subr.bf16.mxu0 0
  %1830 = vmatpush1.bf16.msra.mxu0 %v1366
  %1831 = vmatprep.subr.bf16.mxu0 0
  %1832 = vmatpush1.bf16.msra.mxu0 %v1367
  %1833 = vmatprep.subr.bf16.mxu0 0
  %1834 = vmatpush1.bf16.msra.mxu0 %v1368
  %1835 = vmatprep.subr.bf16.mxu0 0
  %1836 = vmatpush1.bf16.msra.mxu0 %v1369
  %1837 = vmatprep.subr.bf16.mxu0 0
  %1838 = vmatpush1.bf16.msra.mxu0 %v1370
  %1839 = vmatprep.subr.bf16.mxu0 0
  %1840 = vmatpush1.bf16.msra.mxu0 %v1371
  %1841 = vmatprep.subr.bf16.mxu0 0
  %1842 = vmatpush1.bf16.msra.mxu0 %v1372
  %1843 = vmatprep.subr.bf16.mxu0 0
  %1844 = vmatpush1.bf16.msra.mxu0 %v1373
  %1845 = vmatprep.subr.bf16.mxu0 0
  %1846 = vmatpush1.bf16.msra.mxu0 %v1374
  %1847 = vmatprep.subr.bf16.mxu0 0
  %1848 = vmatpush1.bf16.msra.mxu0 %v1375
  %1849 = vmatprep.subr.bf16.mxu0 0
  %1850 = vmatpush1.bf16.msra.mxu0 %v1376
  %1851 = vmatprep.subr.bf16.mxu0 0
  %1852 = vmatpush1.bf16.msra.mxu0 %v1377
  %1853 = vmatprep.mubr.bf16.mxu0 %v505
  %1854 = vmatmul.mubr.bf16.gmra.mrb[0].mxu0 %v504
  %v1855 = vpop.f32.mrb[0].mxu0
  %v1856 = vadd.f32 %v1815, %v1855
  %v1857 = vpop.f32.mrb[0].mxu0
  %v1858 = vpop.f32.mrb[0].mxu0
  %v1859 = vadd.f32 %v1818, %v1858
  %v1860 = vpop.f32.mrb[0].mxu0
  %1861 = vdwg.mxu0
  %1862 = vmatprep.subr.bf16.mxu0 0
  %1863 = vmatpush1.bf16.msra.mxu0 %v1378
  %1864 = vmatprep.subr.bf16.mxu0 0
  %1865 = vmatpush1.bf16.msra.mxu0 %v1379
  %1866 = vmatprep.subr.bf16.mxu0 0
  %1867 = vmatpush1.bf16.msra.mxu0 %v1380
  %1868 = vmatprep.subr.bf16.mxu0 0
  %1869 = vmatpush1.bf16.msra.mxu0 %v1381
  %1870 = vmatprep.subr.bf16.mxu0 0
  %1871 = vmatpush1.bf16.msra.mxu0 %v1382
  %1872 = vmatprep.subr.bf16.mxu0 0
  %1873 = vmatpush1.bf16.msra.mxu0 %v1383
  %1874 = vmatprep.subr.bf16.mxu0 0
  %1875 = vmatpush1.bf16.msra.mxu0 %v1384
  %1876 = vmatprep.subr.bf16.mxu0 0
  %1877 = vmatpush1.bf16.msra.mxu0 %v1385
  %1878 = vmatprep.subr.bf16.mxu0 0
  %1879 = vmatpush1.bf16.msra.mxu0 %v1386
  %1880 = vmatprep.subr.bf16.mxu0 0
  %1881 = vmatpush1.bf16.msra.mxu0 %v1387
  %1882 = vmatprep.subr.bf16.mxu0 0
  %1883 = vmatpush1.bf16.msra.mxu0 %v1388
  %1884 = vmatprep.subr.bf16.mxu0 0
  %1885 = vmatpush1.bf16.msra.mxu0 %v1389
  %1886 = vmatprep.subr.bf16.mxu0 0
  %1887 = vmatpush1.bf16.msra.mxu0 %v1390
  %1888 = vmatprep.subr.bf16.mxu0 0
  %1889 = vmatpush1.bf16.msra.mxu0 %v1391
  %1890 = vmatprep.subr.bf16.mxu0 0
  %1891 = vmatpush1.bf16.msra.mxu0 %v1392
  %1892 = vmatprep.subr.bf16.mxu0 0
  %1893 = vmatpush1.bf16.msra.mxu0 %v1393
  %1894 = vmatprep.mubr.bf16.mxu0 %v507
  %1895 = vmatmul.mubr.bf16.gmra.mrb[0].mxu0 %v506
  %v1896 = vpop.f32.mrb[0].mxu0
  %v1897 = vadd.f32 %v1856, %v1896
  %v1898 = vpop.f32.mrb[0].mxu0
  %v1899 = vpop.f32.mrb[0].mxu0
  %v1900 = vadd.f32 %v1859, %v1899
  %v1901 = vpop.f32.mrb[0].mxu0
  %1902 = vdwg.mxu0
  %1903 = vmatprep.subr.bf16.mxu0 0
  %1904 = vmatpush1.bf16.msra.mxu0 %v1394
  %1905 = vmatprep.subr.bf16.mxu0 0
  %1906 = vmatpush1.bf16.msra.mxu0 %v1395
  %1907 = vmatprep.subr.bf16.mxu0 0
  %1908 = vmatpush1.bf16.msra.mxu0 %v1396
  %1909 = vmatprep.subr.bf16.mxu0 0
  %1910 = vmatpush1.bf16.msra.mxu0 %v1397
  %1911 = vmatprep.subr.bf16.mxu0 0
  %1912 = vmatpush1.bf16.msra.mxu0 %v1398
  %1913 = vmatprep.subr.bf16.mxu0 0
  %1914 = vmatpush1.bf16.msra.mxu0 %v1399
  %1915 = vmatprep.subr.bf16.mxu0 0
  %1916 = vmatpush1.bf16.msra.mxu0 %v1400
  %1917 = vmatprep.subr.bf16.mxu0 0
  %1918 = vmatpush1.bf16.msra.mxu0 %v1401
  %1919 = vmatprep.subr.bf16.mxu0 0
  %1920 = vmatpush1.bf16.msra.mxu0 %v1402
  %1921 = vmatprep.subr.bf16.mxu0 0
  %1922 = vmatpush1.bf16.msra.mxu0 %v1403
  %1923 = vmatprep.subr.bf16.mxu0 0
  %1924 = vmatpush1.bf16.msra.mxu0 %v1404
  %1925 = vmatprep.subr.bf16.mxu0 0
  %1926 = vmatpush1.bf16.msra.mxu0 %v1405
  %1927 = vmatprep.subr.bf16.mxu0 0
  %1928 = vmatpush1.bf16.msra.mxu0 %v1406
  %1929 = vmatprep.subr.bf16.mxu0 0
  %1930 = vmatpush1.bf16.msra.mxu0 %v1407
  %1931 = vmatprep.subr.bf16.mxu0 0
  %1932 = vmatpush1.bf16.msra.mxu0 %v1408
  %1933 = vmatprep.subr.bf16.mxu0 0
  %1934 = vmatpush1.bf16.msra.mxu0 %v1409
  %1935 = vmatprep.mubr.bf16.mxu0 %v509
  %1936 = vmatmul.mubr.bf16.gmra.mrb[0].mxu0 %v508
  %v1937 = vpop.f32.mrb[0].mxu0
  %v1938 = vadd.f32 %v1897, %v1937
  %v1939 = vpop.f32.mrb[0].mxu0
  %v1940 = vpop.f32.mrb[0].mxu0
  %v1941 = vadd.f32 %v1900, %v1940
  %v1942 = vpop.f32.mrb[0].mxu0
  %1943 = vdwg.mxu0
  %1944 = vmatprep.subr.bf16.mxu0 0
  %1945 = vmatpush1.bf16.msra.mxu0 %v1410
  %1946 = vmatprep.subr.bf16.mxu0 0
  %1947 = vmatpush1.bf16.msra.mxu0 %v1411
  %1948 = vmatprep.subr.bf16.mxu0 0
  %1949 = vmatpush1.bf16.msra.mxu0 %v1412
  %1950 = vmatprep.subr.bf16.mxu0 0
  %1951 = vmatpush1.bf16.msra.mxu0 %v1413
  %1952 = vmatprep.subr.bf16.mxu0 0
  %1953 = vmatpush1.bf16.msra.mxu0 %v1414
  %1954 = vmatprep.subr.bf16.mxu0 0
  %1955 = vmatpush1.bf16.msra.mxu0 %v1415
  %1956 = vmatprep.subr.bf16.mxu0 0
  %1957 = vmatpush1.bf16.msra.mxu0 %v1416
  %1958 = vmatprep.subr.bf16.mxu0 0
  %1959 = vmatpush1.bf16.msra.mxu0 %v1417
  %1960 = vmatprep.subr.bf16.mxu0 0
  %1961 = vmatpush1.bf16.msra.mxu0 %v1418
  %1962 = vmatprep.subr.bf16.mxu0 0
  %1963 = vmatpush1.bf16.msra.mxu0 %v1419
  %1964 = vmatprep.subr.bf16.mxu0 0
  %1965 = vmatpush1.bf16.msra.mxu0 %v1420
  %1966 = vmatprep.subr.bf16.mxu0 0
  %1967 = vmatpush1.bf16.msra.mxu0 %v1421
  %1968 = vmatprep.subr.bf16.mxu0 0
  %1969 = vmatpush1.bf16.msra.mxu0 %v1422
  %1970 = vmatprep.subr.bf16.mxu0 0
  %1971 = vmatpush1.bf16.msra.mxu0 %v1423
  %1972 = vmatprep.subr.bf16.mxu0 0
  %1973 = vmatpush1.bf16.msra.mxu0 %v1424
  %1974 = vmatprep.subr.bf16.mxu0 0
  %1975 = vmatpush1.bf16.msra.mxu0 %v1425
  %1976 = vmatprep.mubr.bf16.mxu0 %v511
  %1977 = vmatmul.mubr.bf16.gmra.mrb[0].mxu0 %v510
  %v1978 = vpop.f32.mrb[0].mxu0
  %v1979 = vadd.f32 %v1938, %v1978
  %v1980 = vpop.f32.mrb[0].mxu0
  %v1981 = vpop.f32.mrb[0].mxu0
  %v1982 = vadd.f32 %v1941, %v1981
  %v1983 = vpop.f32.mrb[0].mxu0
  %1984 = vdwg.mxu0
  %1985 = vmatprep.subr.bf16.mxu0 0
  %1986 = vmatpush1.bf16.msra.mxu0 %v1426
  %1987 = vmatprep.subr.bf16.mxu0 0
  %1988 = vmatpush1.bf16.msra.mxu0 %v1427
  %1989 = vmatprep.subr.bf16.mxu0 0
  %1990 = vmatpush1.bf16.msra.mxu0 %v1428
  %1991 = vmatprep.subr.bf16.mxu0 0
  %1992 = vmatpush1.bf16.msra.mxu0 %v1429
  %1993 = vmatprep.subr.bf16.mxu0 0
  %1994 = vmatpush1.bf16.msra.mxu0 %v1430
  %1995 = vmatprep.subr.bf16.mxu0 0
  %1996 = vmatpush1.bf16.msra.mxu0 %v1431
  %1997 = vmatprep.subr.bf16.mxu0 0
  %1998 = vmatpush1.bf16.msra.mxu0 %v1432
  %1999 = vmatprep.subr.bf16.mxu0 0
  %2000 = vmatpush1.bf16.msra.mxu0 %v1433
  %2001 = vmatprep.subr.bf16.mxu0 0
  %2002 = vmatpush1.bf16.msra.mxu0 %v1434
  %2003 = vmatprep.subr.bf16.mxu0 0
  %2004 = vmatpush1.bf16.msra.mxu0 %v1435
  %2005 = vmatprep.subr.bf16.mxu0 0
  %2006 = vmatpush1.bf16.msra.mxu0 %v1436
  %2007 = vmatprep.subr.bf16.mxu0 0
  %2008 = vmatpush1.bf16.msra.mxu0 %v1437
  %2009 = vmatprep.subr.bf16.mxu0 0
  %2010 = vmatpush1.bf16.msra.mxu0 %v1438
  %2011 = vmatprep.subr.bf16.mxu0 0
  %2012 = vmatpush1.bf16.msra.mxu0 %v1439
  %2013 = vmatprep.subr.bf16.mxu0 0
  %2014 = vmatpush1.bf16.msra.mxu0 %v1440
  %2015 = vmatprep.subr.bf16.mxu0 0
  %2016 = vmatpush1.bf16.msra.mxu0 %v1441
  %2017 = vmatprep.mubr.bf16.mxu0 %v513
  %2018 = vmatmul.mubr.bf16.gmra.mrb[0].mxu0 %v512
  %v2019 = vpop.f32.mrb[0].mxu0
  %v2020 = vadd.f32 %v1979, %v2019
  %v2021 = vpop.f32.mrb[0].mxu0
  %v2022 = vpop.f32.mrb[0].mxu0
  %v2023 = vadd.f32 %v1982, %v2022
  %v2024 = vpop.f32.mrb[0].mxu0
  %2025 = vdwg.mxu0
  %2026 = vmatprep.subr.bf16.mxu0 0
  %2027 = vmatpush1.bf16.msra.mxu0 %v1442
  %2028 = vmatprep.subr.bf16.mxu0 0
  %2029 = vmatpush1.bf16.msra.mxu0 %v1443
  %2030 = vmatprep.subr.bf16.mxu0 0
  %2031 = vmatpush1.bf16.msra.mxu0 %v1444
  %2032 = vmatprep.subr.bf16.mxu0 0
  %2033 = vmatpush1.bf16.msra.mxu0 %v1445
  %2034 = vmatprep.subr.bf16.mxu0 0
  %2035 = vmatpush1.bf16.msra.mxu0 %v1446
  %2036 = vmatprep.subr.bf16.mxu0 0
  %2037 = vmatpush1.bf16.msra.mxu0 %v1447
  %2038 = vmatprep.subr.bf16.mxu0 0
  %2039 = vmatpush1.bf16.msra.mxu0 %v1448
  %2040 = vmatprep.subr.bf16.mxu0 0
  %2041 = vmatpush1.bf16.msra.mxu0 %v1449
  %2042 = vmatprep.subr.bf16.mxu0 0
  %2043 = vmatpush1.bf16.msra.mxu0 %v1450
  %2044 = vmatprep.subr.bf16.mxu0 0
  %2045 = vmatpush1.bf16.msra.mxu0 %v1451
  %2046 = vmatprep.subr.bf16.mxu0 0
  %2047 = vmatpush1.bf16.msra.mxu0 %v1452
  %2048 = vmatprep.subr.bf16.mxu0 0
  %2049 = vmatpush1.bf16.msra.mxu0 %v1453
  %2050 = vmatprep.subr.bf16.mxu0 0
  %2051 = vmatpush1.bf16.msra.mxu0 %v1454
  %2052 = vmatprep.subr.bf16.mxu0 0
  %2053 = vmatpush1.bf16.msra.mxu0 %v1455
  %2054 = vmatprep.subr.bf16.mxu0 0
  %2055 = vmatpush1.bf16.msra.mxu0 %v1456
  %2056 = vmatprep.subr.bf16.mxu0 0
  %2057 = vmatpush1.bf16.msra.mxu0 %v1457
  %2058 = vmatprep.mubr.bf16.mxu0 %v515
  %2059 = vmatmul.mubr.bf16.gmra.mrb[0].mxu0 %v514
  %v2060 = vpop.f32.mrb[0].mxu0
  %v2061 = vadd.f32 %v2020, %v2060
  %v2062 = vpop.f32.mrb[0].mxu0
  %v2063 = vpop.f32.mrb[0].mxu0
  %v2064 = vadd.f32 %v2023, %v2063
  %v2065 = vpop.f32.mrb[0].mxu0
  %2066 = vdwg.mxu0
  %2067 = vmatprep.subr.bf16.mxu0 0
  %2068 = vmatpush1.bf16.msra.mxu0 %v1458
  %2069 = vmatprep.subr.bf16.mxu0 0
  %2070 = vmatpush1.bf16.msra.mxu0 %v1459
  %2071 = vmatprep.subr.bf16.mxu0 0
  %2072 = vmatpush1.bf16.msra.mxu0 %v1460
  %2073 = vmatprep.subr.bf16.mxu0 0
  %2074 = vmatpush1.bf16.msra.mxu0 %v1461
  %2075 = vmatprep.subr.bf16.mxu0 0
  %2076 = vmatpush1.bf16.msra.mxu0 %v1462
  %2077 = vmatprep.subr.bf16.mxu0 0
  %2078 = vmatpush1.bf16.msra.mxu0 %v1463
  %2079 = vmatprep.subr.bf16.mxu0 0
  %2080 = vmatpush1.bf16.msra.mxu0 %v1464
  %2081 = vmatprep.subr.bf16.mxu0 0
  %2082 = vmatpush1.bf16.msra.mxu0 %v1465
  %2083 = vmatprep.subr.bf16.mxu0 0
  %2084 = vmatpush1.bf16.msra.mxu0 %v1466
  %2085 = vmatprep.subr.bf16.mxu0 0
  %2086 = vmatpush1.bf16.msra.mxu0 %v1467
  %2087 = vmatprep.subr.bf16.mxu0 0
  %2088 = vmatpush1.bf16.msra.mxu0 %v1468
  %2089 = vmatprep.subr.bf16.mxu0 0
  %2090 = vmatpush1.bf16.msra.mxu0 %v1469
  %2091 = vmatprep.subr.bf16.mxu0 0
  %2092 = vmatpush1.bf16.msra.mxu0 %v1470
  %2093 = vmatprep.subr.bf16.mxu0 0
  %2094 = vmatpush1.bf16.msra.mxu0 %v1471
  %2095 = vmatprep.subr.bf16.mxu0 0
  %2096 = vmatpush1.bf16.msra.mxu0 %v1472
  %2097 = vmatprep.subr.bf16.mxu0 0
  %2098 = vmatpush1.bf16.msra.mxu0 %v1473
  %2099 = vmatprep.mubr.bf16.mxu0 %v517
  %2100 = vmatmul.mubr.bf16.gmra.mrb[0].mxu0 %v516
  %v2101 = vpop.f32.mrb[0].mxu0
  %v2102 = vadd.f32 %v2061, %v2101
  %v2103 = vpop.f32.mrb[0].mxu0
  %v2104 = vpop.f32.mrb[0].mxu0
  %v2105 = vadd.f32 %v2064, %v2104
  %v2106 = vpop.f32.mrb[0].mxu0
  %2107 = vdwg.mxu0
  %2108 = vmatprep.subr.bf16.mxu0 0
  %2109 = vmatpush1.bf16.msra.mxu0 %v1474
  %2110 = vmatprep.subr.bf16.mxu0 0
  %2111 = vmatpush1.bf16.msra.mxu0 %v1475
  %2112 = vmatprep.subr.bf16.mxu0 0
  %2113 = vmatpush1.bf16.msra.mxu0 %v1476
  %2114 = vmatprep.subr.bf16.mxu0 0
  %2115 = vmatpush1.bf16.msra.mxu0 %v1477
  %2116 = vmatprep.subr.bf16.mxu0 0
  %2117 = vmatpush1.bf16.msra.mxu0 %v1478
  %2118 = vmatprep.subr.bf16.mxu0 0
  %2119 = vmatpush1.bf16.msra.mxu0 %v1479
  %2120 = vmatprep.subr.bf16.mxu0 0
  %2121 = vmatpush1.bf16.msra.mxu0 %v1480
  %2122 = vmatprep.subr.bf16.mxu0 0
  %2123 = vmatpush1.bf16.msra.mxu0 %v1481
  %2124 = vmatprep.subr.bf16.mxu0 0
  %2125 = vmatpush1.bf16.msra.mxu0 %v1482
  %2126 = vmatprep.subr.bf16.mxu0 0
  %2127 = vmatpush1.bf16.msra.mxu0 %v1483
  %2128 = vmatprep.subr.bf16.mxu0 0
  %2129 = vmatpush1.bf16.msra.mxu0 %v1484
  %2130 = vmatprep.subr.bf16.mxu0 0
  %2131 = vmatpush1.bf16.msra.mxu0 %v1485
  %2132 = vmatprep.subr.bf16.mxu0 0
  %2133 = vmatpush1.bf16.msra.mxu0 %v1486
  %2134 = vmatprep.subr.bf16.mxu0 0
  %2135 = vmatpush1.bf16.msra.mxu0 %v1487
  %2136 = vmatprep.subr.bf16.mxu0 0
  %2137 = vmatpush1.bf16.msra.mxu0 %v1488
  %2138 = vmatprep.subr.bf16.mxu0 0
  %2139 = vmatpush1.bf16.msra.mxu0 %v1489
  %2140 = vmatprep.mubr.bf16.mxu0 %v519
  %2141 = vmatmul.mubr.bf16.gmra.mrb[0].mxu0 %v518
  %v2142 = vpop.f32.mrb[0].mxu0
  %v2143 = vadd.f32 %v2102, %v2142
  %v2144 = vpop.f32.mrb[0].mxu0
  %v2145 = vpop.f32.mrb[0].mxu0
  %v2146 = vadd.f32 %v2105, %v2145
  %v2147 = vpop.f32.mrb[0].mxu0
  %2148 = vdwg.mxu0
  %2149 = vmatprep.subr.bf16.mxu0 0
  %2150 = vmatpush1.bf16.msra.mxu0 %v1490
  %2151 = vmatprep.subr.bf16.mxu0 0
  %2152 = vmatpush1.bf16.msra.mxu0 %v1491
  %2153 = vmatprep.subr.bf16.mxu0 0
  %2154 = vmatpush1.bf16.msra.mxu0 %v1492
  %2155 = vmatprep.subr.bf16.mxu0 0
  %2156 = vmatpush1.bf16.msra.mxu0 %v1493
  %2157 = vmatprep.subr.bf16.mxu0 0
  %2158 = vmatpush1.bf16.msra.mxu0 %v1494
  %2159 = vmatprep.subr.bf16.mxu0 0
  %2160 = vmatpush1.bf16.msra.mxu0 %v1495
  %2161 = vmatprep.subr.bf16.mxu0 0
  %2162 = vmatpush1.bf16.msra.mxu0 %v1496
  %2163 = vmatprep.subr.bf16.mxu0 0
  %2164 = vmatpush1.bf16.msra.mxu0 %v1497
  %2165 = vmatprep.subr.bf16.mxu0 0
  %2166 = vmatpush1.bf16.msra.mxu0 %v1498
  %2167 = vmatprep.subr.bf16.mxu0 0
  %2168 = vmatpush1.bf16.msra.mxu0 %v1499
  %2169 = vmatprep.subr.bf16.mxu0 0
  %2170 = vmatpush1.bf16.msra.mxu0 %v1500
  %2171 = vmatprep.subr.bf16.mxu0 0
  %2172 = vmatpush1.bf16.msra.mxu0 %v1501
  %2173 = vmatprep.subr.bf16.mxu0 0
  %2174 = vmatpush1.bf16.msra.mxu0 %v1502
  %2175 = vmatprep.subr.bf16.mxu0 0
  %2176 = vmatpush1.bf16.msra.mxu0 %v1503
  %2177 = vmatprep.subr.bf16.mxu0 0
  %2178 = vmatpush1.bf16.msra.mxu0 %v1504
  %2179 = vmatprep.subr.bf16.mxu0 0
  %2180 = vmatpush1.bf16.msra.mxu0 %v1505
  %2181 = vmatprep.mubr.bf16.mxu0 %v521
  %2182 = vmatmul.mubr.bf16.gmra.mrb[0].mxu0 %v520
  %v2183 = vpop.f32.mrb[0].mxu0
  %v2184 = vadd.f32 %v2143, %v2183
  %v2185 = vpop.f32.mrb[0].mxu0
  %v2186 = vpop.f32.mrb[0].mxu0
  %v2187 = vadd.f32 %v2146, %v2186
  %v2188 = vpop.f32.mrb[0].mxu0
  %2189 = vdwg.mxu0
  %v2190 = vld [vmem:[%s2] sm:$0x1]
  %v2192 = vlaneseq
  %v2193 = vshrl.u32 %v2192, 7
  %v2194 = vsub.s32 0, %v2193
  %v2195 = vrot.slane %v2190, %v2194
  %v2197 = vmul.f32 %v2184, %v2195
  %v2198 = vmul.f32 %v2187, %v2195
  %v2199 = vld [vmem:[%s3] sm:$0x1]
  %v2201 = vlaneseq
  %v2202 = vshrl.u32 %v2201, 7
  %v2203 = vsub.s32 0, %v2202
  %v2204 = vrot.slane %v2199, %v2203
  %v2206 = vadd.f32 %v2197, %v2204
  %v2207 = vadd.f32 %v2198, %v2204
  %v2208 = vmax.f32 %v2206, 0.0
  %v2209 = vmax.f32 %v2207, 0.0
  %v2210 = vpack.c.bf16 %v2209, %v2208
  %v2212 = vunpack.c.l.b16 %v2210
  %v2213 = vunpack.c.h.b16 %v2210
  %v2214 = vpack.c.b16 %v2212, %v2212
  %v2215 = vpack.c.b16 %v2213, %v2213
  %vm2218 = vcmask 257024
  %2219 = vst.msk [vmem:[%s4] sm:$0xf] %vm2218, %v2214
  %2220 = vst.msk [vmem:[%s4 + $0x4] sm:$0xf] %vm2218, %v2215
  // Predicated region
  $region18: #{keypointnet_forward.8} parent=0 // pred_check
    _
  $region19: #{keypointnet_forward.8} parent=0 // pred_check_branch
    %2222 = sbr.rel (0) target = $region21
  $region20: #{keypointnet_forward.8} parent=0 // pred_region
    _
  $region21: #{keypointnet_forward.8} parent=0 // pred_fallthru
    _
  // Predicated region
  $region22: #{keypointnet_forward.8} parent=0 // pred_check
    _
  $region23: #{keypointnet_forward.8} parent=0 // pred_check_branch
    %2224 = sbr.rel (0) target = $region25
  $region24: #{keypointnet_forward.8} parent=0 // pred_region
    _
  $region25: #{keypointnet_forward.8} parent=0 // pred_fallthru
    _

// kernel: keypointnet_forward.9
$region0: #{keypointnet_forward.9}
  #allocation0 [shape = 'u32[]', space=smem, size = 0x4, offset = 0x4, fixed_abs, tag = 'smem constant byte address 0x4 - core index']
  #allocation1 [shape = 'u32[144,128]{1,0:T(1,128)}', space=vmem, size = 0x12000, scoped, tag = 'internal scratch']
  %s0 = inlined_call_operand.vmem [shape: bf16[16,288], index: 0, kind: input, shape index: {}]
  %s1 = inlined_call_operand.vmem [shape: bf16[288,32], index: 1, kind: input, shape index: {}]
  %s2 = inlined_call_operand.vmem [shape: f32[1,32], index: 2, kind: input, shape index: {}]
  %s3 = inlined_call_operand.vmem [shape: f32[1,32], index: 3, kind: input, shape index: {}]
  %s4 = inlined_call_operand.vmem [shape: bf16[16,32], index: 4, kind: output, shape index: {}]
  %s5 = sld [smem:[#allocation0]]
  $region26: #{keypointnet_forward.9} parent=0
    _
  %s7 = ssub.s32 1, %s5
  %s8 = scalar_select 0, %s7, %s5
  // Predicated region
  $region2: #{keypointnet_forward.9} parent=0 // pred_check
    _
  $region3: #{keypointnet_forward.9} parent=0 // pred_check_branch
    %10 = sbr.rel (0) target = $region5
  $region4: #{keypointnet_forward.9} parent=0 // pred_region
    _
  $region5: #{keypointnet_forward.9} parent=0 // pred_fallthru
    _
  // Predicated region
  $region6: #{keypointnet_forward.9} parent=0 // pred_check
    _
  $region7: #{keypointnet_forward.9} parent=0 // pred_check_branch
    %12 = sbr.rel (0) target = $region9
  $region8: #{keypointnet_forward.9} parent=0 // pred_region
    _
  $region9: #{keypointnet_forward.9} parent=0 // pred_fallthru
    _
  // Predicated region
  $region10: #{keypointnet_forward.9} parent=0 // pred_check
    _
  $region11: #{keypointnet_forward.9} parent=0 // pred_check_branch
    %14 = sbr.rel (0) target = $region13
  $region12: #{keypointnet_forward.9} parent=0 // pred_region
    _
  $region13: #{keypointnet_forward.9} parent=0 // pred_fallthru
    _
  // Predicated region
  $region14: #{keypointnet_forward.9} parent=0 // pred_check
    _
  $region15: #{keypointnet_forward.9} parent=0 // pred_check_branch
    %16 = sbr.rel (0) target = $region17
  $region16: #{keypointnet_forward.9} parent=0 // pred_region
    _
  $region17: #{keypointnet_forward.9} parent=0 // pred_fallthru
    _
  %v18 = vld [vmem:[%s0] sm:$0xff]
  %v19 = vld [vmem:[%s0 + $0x8] sm:$0xf]
  %v20 = vld [vmem:[%s0 + $0xc] sm:$0xff]
  %v21 = vld [vmem:[%s0 + $0x14] sm:$0xf]
  %v22 = vld [vmem:[%s1] sm:$0xf]
  %v23 = vld [vmem:[%s1 + $0x4] sm:$0xf]
  %v24 = vld [vmem:[%s1 + $0x8] sm:$0xf]
  %v25 = vld [vmem:[%s1 + $0xc] sm:$0xf]
  %v26 = vld [vmem:[%s1 + $0x10] sm:$0xf]
  %v27 = vld [vmem:[%s1 + $0x14] sm:$0xf]
  %v28 = vld [vmem:[%s1 + $0x18] sm:$0xf]
  %v29 = vld [vmem:[%s1 + $0x1c] sm:$0xf]
  %v30 = vld [vmem:[%s1 + $0x20] sm:$0xf]
  %v31 = vld [vmem:[%s1 + $0x24] sm:$0xf]
  %v32 = vld [vmem:[%s1 + $0x28] sm:$0xf]
  %v33 = vld [vmem:[%s1 + $0x2c] sm:$0xf]
  %v34 = vld [vmem:[%s1 + $0x30] sm:$0xf]
  %v35 = vld [vmem:[%s1 + $0x34] sm:$0xf]
  %v36 = vld [vmem:[%s1 + $0x38] sm:$0xf]
  %v37 = vld [vmem:[%s1 + $0x3c] sm:$0xf]
  %v38 = vld [vmem:[%s1 + $0x40] sm:$0xf]
  %v39 = vld [vmem:[%s1 + $0x44] sm:$0xf]
  %v40 = vld [vmem:[%s1 + $0x48] sm:$0xf]
  %v41 = vld [vmem:[%s1 + $0x4c] sm:$0xf]
  %v42 = vld [vmem:[%s1 + $0x50] sm:$0xf]
  %v43 = vld [vmem:[%s1 + $0x54] sm:$0xf]
  %v44 = vld [vmem:[%s1 + $0x58] sm:$0xf]
  %v45 = vld [vmem:[%s1 + $0x5c] sm:$0xf]
  %v46 = vld [vmem:[%s1 + $0x60] sm:$0xf]
  %v47 = vld [vmem:[%s1 + $0x64] sm:$0xf]
  %v48 = vld [vmem:[%s1 + $0x68] sm:$0xf]
  %v49 = vld [vmem:[%s1 + $0x6c] sm:$0xf]
  %v50 = vld [vmem:[%s1 + $0x70] sm:$0xf]
  %v51 = vld [vmem:[%s1 + $0x74] sm:$0xf]
  %v52 = vld [vmem:[%s1 + $0x78] sm:$0xf]
  %v53 = vld [vmem:[%s1 + $0x7c] sm:$0xf]
  %v54 = vld [vmem:[%s1 + $0x80] sm:$0xf]
  %v55 = vld [vmem:[%s1 + $0x84] sm:$0xf]
  %v56 = vld [vmem:[%s1 + $0x88] sm:$0xf]
  %v57 = vld [vmem:[%s1 + $0x8c] sm:$0xf]
  %v62 = vunpack.c.l.b16 %v18
  %v63 = vunpack.c.h.b16 %v18
  %v64 = vunpack.c.l.b16 %v19
  %v65 = vunpack.c.l.b16 %v20
  %v66 = vunpack.c.h.b16 %v20
  %v67 = vunpack.c.l.b16 %v21
  %v68 = vpack.c.b16 %v65, %v62
  %v69 = vpack.c.b16 %v66, %v63
  %v70 = vpack.c.b16 %v67, %v64
  %v109 = vunpack.c.l.b16 %v22
  %v110 = vunpack.c.l.b16 %v23
  %v111 = vunpack.c.l.b16 %v24
  %v112 = vunpack.c.l.b16 %v25
  %v113 = vunpack.c.l.b16 %v26
  %v114 = vunpack.c.l.b16 %v27
  %v115 = vunpack.c.l.b16 %v28
  %v116 = vunpack.c.l.b16 %v29
  %v117 = vunpack.c.l.b16 %v30
  %v118 = vunpack.c.l.b16 %v31
  %v119 = vunpack.c.l.b16 %v32
  %v120 = vunpack.c.l.b16 %v33
  %v121 = vunpack.c.l.b16 %v34
  %v122 = vunpack.c.l.b16 %v35
  %v123 = vunpack.c.l.b16 %v36
  %v124 = vunpack.c.l.b16 %v37
  %v125 = vunpack.c.l.b16 %v38
  %v126 = vunpack.c.l.b16 %v39
  %v127 = vunpack.c.l.b16 %v40
  %v128 = vunpack.c.l.b16 %v41
  %v129 = vunpack.c.l.b16 %v42
  %v130 = vunpack.c.l.b16 %v43
  %v131 = vunpack.c.l.b16 %v44
  %v132 = vunpack.c.l.b16 %v45
  %v133 = vunpack.c.l.b16 %v46
  %v134 = vunpack.c.l.b16 %v47
  %v135 = vunpack.c.l.b16 %v48
  %v136 = vunpack.c.l.b16 %v49
  %v137 = vunpack.c.l.b16 %v50
  %v138 = vunpack.c.l.b16 %v51
  %v139 = vunpack.c.l.b16 %v52
  %v140 = vunpack.c.l.b16 %v53
  %v141 = vunpack.c.l.b16 %v54
  %v142 = vunpack.c.l.b16 %v55
  %v143 = vunpack.c.l.b16 %v56
  %v144 = vunpack.c.l.b16 %v57
  %v145 = vpack.c.b16 %v110, %v109
  %v146 = vpack.c.b16 %v112, %v111
  %v147 = vpack.c.b16 %v114, %v113
  %v148 = vpack.c.b16 %v116, %v115
  %v149 = vpack.c.b16 %v118, %v117
  %v150 = vpack.c.b16 %v120, %v119
  %v151 = vpack.c.b16 %v122, %v121
  %v152 = vpack.c.b16 %v124, %v123
  %v153 = vpack.c.b16 %v126, %v125
  %v154 = vpack.c.b16 %v128, %v127
  %v155 = vpack.c.b16 %v130, %v129
  %v156 = vpack.c.b16 %v132, %v131
  %v157 = vpack.c.b16 %v134, %v133
  %v158 = vpack.c.b16 %v136, %v135
  %v159 = vpack.c.b16 %v138, %v137
  %v160 = vpack.c.b16 %v140, %v139
  %v161 = vpack.c.b16 %v142, %v141
  %v162 = vpack.c.b16 %v144, %v143
  %vm181 = vcmask 261120
  %v183 = vsel %vm181, %v70, 0
  %185 = vmatprep.subr.bf16.mxu0 0
  %186 = vmatpush1.bf16.msra.mxu0 %v145
  %187 = vmatprep.subr.bf16.mxu0 0
  %188 = vmatpush1.bf16.msra.mxu0 %v146
  %189 = vmatprep.subr.bf16.mxu0 0
  %190 = vmatpush1.bf16.msra.mxu0 %v147
  %191 = vmatprep.subr.bf16.mxu0 0
  %192 = vmatpush1.bf16.msra.mxu0 %v148
  %193 = vmatprep.subr.bf16.mxu0 0
  %194 = vmatpush1.bf16.msra.mxu0 %v149
  %195 = vmatprep.subr.bf16.mxu0 0
  %196 = vmatpush1.bf16.msra.mxu0 %v150
  %197 = vmatprep.subr.bf16.mxu0 0
  %198 = vmatpush1.bf16.msra.mxu0 %v151
  %199 = vmatprep.subr.bf16.mxu0 0
  %200 = vmatpush1.bf16.msra.mxu0 %v152
  %201 = vmatprep.subr.bf16.mxu0 0
  %202 = vmatpush1.bf16.msra.mxu0 %v153
  %203 = vmatprep.subr.bf16.mxu0 0
  %204 = vmatpush1.bf16.msra.mxu0 %v154
  %205 = vmatprep.subr.bf16.mxu0 0
  %206 = vmatpush1.bf16.msra.mxu0 %v155
  %207 = vmatprep.subr.bf16.mxu0 0
  %208 = vmatpush1.bf16.msra.mxu0 %v156
  %209 = vmatprep.subr.bf16.mxu0 0
  %210 = vmatpush1.bf16.msra.mxu0 %v157
  %211 = vmatprep.subr.bf16.mxu0 0
  %212 = vmatpush1.bf16.msra.mxu0 %v158
  %213 = vmatprep.subr.bf16.mxu0 0
  %214 = vmatpush1.bf16.msra.mxu0 %v159
  %215 = vmatprep.subr.bf16.mxu0 0
  %216 = vmatpush1.bf16.msra.mxu0 %v160
  %217 = vmatprep.mubr.bf16.mxu0 %v69
  %218 = vmatmul.mubr.bf16.gmra.mrb[0].mxu0 %v68
  %v219 = vpop.f32.mrb[0].mxu0
  %v220 = vadd.f32 0.0, %v219
  %v221 = vpop.f32.mrb[0].mxu0
  %v222 = vpop.f32.mrb[0].mxu0
  %v223 = vadd.f32 0.0, %v222
  %v224 = vpop.f32.mrb[0].mxu0
  %225 = vdwg.mxu0
  %226 = vmatprep.subr.bf16.mxu0 0
  %227 = vmatpush1.bf16.msra.mxu0 %v161
  %228 = vmatprep.subr.bf16.mxu0 0
  %229 = vmatpush1.bf16.msra.mxu0 %v162
  %230 = vmatprep.subr.bf16.mxu0 0
  %231 = vmatpush1.bf16.msra.mxu0 0
  %232 = vmatprep.subr.bf16.mxu0 0
  %233 = vmatpush1.bf16.msra.mxu0 0
  %234 = vmatprep.subr.bf16.mxu0 0
  %235 = vmatpush1.bf16.msra.mxu0 0
  %236 = vmatprep.subr.bf16.mxu0 0
  %237 = vmatpush1.bf16.msra.mxu0 0
  %238 = vmatprep.subr.bf16.mxu0 0
  %239 = vmatpush1.bf16.msra.mxu0 0
  %240 = vmatprep.subr.bf16.mxu0 0
  %241 = vmatpush1.bf16.msra.mxu0 0
  %242 = vmatprep.subr.bf16.mxu0 0
  %243 = vmatpush1.bf16.msra.mxu0 0
  %244 = vmatprep.subr.bf16.mxu0 0
  %245 = vmatpush1.bf16.msra.mxu0 0
  %246 = vmatprep.subr.bf16.mxu0 0
  %247 = vmatpush1.bf16.msra.mxu0 0
  %248 = vmatprep.subr.bf16.mxu0 0
  %249 = vmatpush1.bf16.msra.mxu0 0
  %250 = vmatprep.subr.bf16.mxu0 0
  %251 = vmatpush1.bf16.msra.mxu0 0
  %252 = vmatprep.subr.bf16.mxu0 0
  %253 = vmatpush1.bf16.msra.mxu0 0
  %254 = vmatprep.subr.bf16.mxu0 0
  %255 = vmatpush1.bf16.msra.mxu0 0
  %256 = vmatprep.subr.bf16.mxu0 0
  %257 = vmatpush1.bf16.msra.mxu0 0
  %258 = vmatprep.mubr.bf16.mxu0 0
  %259 = vmatmul.mubr.bf16.gmra.mrb[0].mxu0 %v183
  %v260 = vpop.f32.mrb[0].mxu0
  %v261 = vadd.f32 %v220, %v260
  %v262 = vpop.f32.mrb[0].mxu0
  %v263 = vpop.f32.mrb[0].mxu0
  %v264 = vadd.f32 %v223, %v263
  %v265 = vpop.f32.mrb[0].mxu0
  %266 = vdwg.mxu0
  %v267 = vld [vmem:[%s2] sm:$0x1]
  %v269 = vlaneseq
  %v270 = vshrl.u32 %v269, 7
  %v271 = vsub.s32 0, %v270
  %v272 = vrot.slane %v267, %v271
  %v274 = vmul.f32 %v261, %v272
  %v275 = vmul.f32 %v264, %v272
  %v276 = vld [vmem:[%s3] sm:$0x1]
  %v278 = vlaneseq
  %v279 = vshrl.u32 %v278, 7
  %v280 = vsub.s32 0, %v279
  %v281 = vrot.slane %v276, %v280
  %v283 = vadd.f32 %v274, %v281
  %v284 = vadd.f32 %v275, %v281
  %v285 = vmax.f32 %v283, 0.0
  %v286 = vmax.f32 %v284, 0.0
  %v287 = vpack.c.bf16 %v286, %v285
  %v289 = vunpack.c.l.b16 %v287
  %v290 = vunpack.c.h.b16 %v287
  %v291 = vpack.c.b16 %v289, %v289
  %v292 = vpack.c.b16 %v290, %v290
  %vm295 = vcmask 257024
  %296 = vst.msk [vmem:[%s4] sm:$0xf] %vm295, %v291
  %297 = vst.msk [vmem:[%s4 + $0x4] sm:$0xf] %vm295, %v292
  // Predicated region
  $region18: #{keypointnet_forward.9} parent=0 // pred_check
    _
  $region19: #{keypointnet_forward.9} parent=0 // pred_check_branch
    %299 = sbr.rel (0) target = $region21
  $region20: #{keypointnet_forward.9} parent=0 // pred_region
    _
  $region21: #{keypointnet_forward.9} parent=0 // pred_fallthru
    _
  // Predicated region
  $region22: #{keypointnet_forward.9} parent=0 // pred_check
    _
  $region23: #{keypointnet_forward.9} parent=0 // pred_check_branch
    %301 = sbr.rel (0) target = $region25
  $region24: #{keypointnet_forward.9} parent=0 // pred_region
    _
  $region25: #{keypointnet_forward.9} parent=0 // pred_fallthru
    _

// kernel: tile.28
$region0: #{tile.28}
  #allocation0 [shape = 's32[1]{0}', space=sflag, size = 0x4, scoped, tag = 'scoped memory for tile.28']
  %s0 = inlined_call_operand.vmem [shape: f32[32], index: 0, kind: input, shape index: {}]
  %s1 = inlined_call_operand.vmem [shape: f32[4,32], index: 1, kind: output, shape index: {}]
  // Predicated region
  $region2: #{tile.28} parent=0 // pred_check
    _
  $region3: #{tile.28} parent=0 // pred_check_branch
    %3 = sbr.rel (0) target = $region5
  $region4: #{tile.28} parent=0 // pred_region
    _
  $region5: #{tile.28} parent=0 // pred_fallthru
    _
  %v4 = vld [vmem:[%s0] ss:$0 sm:$0xff]
  %5 = vst [vmem:[%s1] sm:$0xf] %v4

// kernel: tile.29
$region0: #{tile.29}
  %s0 = inlined_call_operand.vmem [shape: f32[4,32], index: 0, kind: input, shape index: {}]
  %s1 = inlined_call_operand.vmem [shape: f32[1,128], index: 1, kind: output, shape index: {}]
  $region1: #{tile.29} parent=0
    #allocation0 [shape = 'u8[4096]{0}', space=vmem, size = 0x1000, scoped, tag = 'scoped mem for output reshape']
    #allocation1 [shape = 'u8[4096]{0}', space=vmem, size = 0x1000, scoped, tag = 'scoped mem for input reshape']
    %s3 = sshllo.u32 0, 4
    %v4 = vld [vmem:[%s0] sm:%s3]
    %5 = vst [vmem:[#allocation1] sm:%s3] %v4
    %v6 = vld [vmem:[#allocation1] sm:$0x1]
    %vm7 = vcmask 261120
    %8 = vst.msk [vmem:[#allocation0] sm:$0x1] %vm7, %v6
    %s9 = scalar_lea.vmem [#allocation1], 3
    %v10 = vld [vmem:[%s9] sm:$0x1]
    %11 = vrot.lane.b32.xlu0 %v10, 96
    %v12 = vpop.permute.xlu0 %11
    %vm13 = vcmask 1048320
    %14 = vst.msk [vmem:[#allocation0] sm:$0x1] %vm13, %v12
    %s15 = scalar_lea.vmem [#allocation1], 2
    %v16 = vld [vmem:[%s15] sm:$0x1]
    %17 = vrot.lane.b32.xlu0 %v16, 64
    %v18 = vpop.permute.xlu0 %17
    %vm19 = vcmask 785920
    %20 = vst.msk [vmem:[#allocation0] sm:$0x1] %vm19, %v18
    %s21 = scalar_lea.vmem [#allocation1], 1
    %v22 = vld [vmem:[%s21] sm:$0x1]
    %23 = vrot.lane.b32.xlu0 %v22, 32
    %v24 = vpop.permute.xlu0 %23
    %vm25 = vcmask 523520
    %26 = vst.msk [vmem:[#allocation0] sm:$0x1] %vm25, %v24
    %s28 = sshllo.u32 0, 1
    %v30 = vld [vmem:[#allocation0] sm:%s28]
    %s31 = sshllo.u32 0, 1
    %32 = vst [vmem:[%s1] sm:%s31] %v30

// kernel: keypointnet_forward.10
$region0: #{keypointnet_forward.10}
  #allocation0 [shape = 'u32[]', space=smem, size = 0x4, offset = 0x4, fixed_abs, tag = 'smem constant byte address 0x4 - core index']
  #allocation1 [shape = 'u32[144,128]{1,0:T(1,128)}', space=vmem, size = 0x12000, scoped, tag = 'internal scratch']
  %s0 = inlined_call_operand.vmem [shape: bf16[16,288], index: 0, kind: input, shape index: {}]
  %s1 = inlined_call_operand.vmem [shape: bf16[288,128], index: 1, kind: input, shape index: {}]
  %s2 = inlined_call_operand.vmem [shape: f32[1,128], index: 2, kind: input, shape index: {}]
  %s3 = inlined_call_operand.vmem [shape: f32[1,128], index: 3, kind: input, shape index: {}]
  %s4 = inlined_call_operand.vmem [shape: bf16[16,128], index: 4, kind: output, shape index: {}]
  %s5 = sld [smem:[#allocation0]]
  $region26: #{keypointnet_forward.10} parent=0
    _
  %s7 = ssub.s32 1, %s5
  %s8 = scalar_select 0, %s7, %s5
  // Predicated region
  $region2: #{keypointnet_forward.10} parent=0 // pred_check
    _
  $region3: #{keypointnet_forward.10} parent=0 // pred_check_branch
    %10 = sbr.rel (0) target = $region5
  $region4: #{keypointnet_forward.10} parent=0 // pred_region
    _
  $region5: #{keypointnet_forward.10} parent=0 // pred_fallthru
    _
  // Predicated region
  $region6: #{keypointnet_forward.10} parent=0 // pred_check
    _
  $region7: #{keypointnet_forward.10} parent=0 // pred_check_branch
    %12 = sbr.rel (0) target = $region9
  $region8: #{keypointnet_forward.10} parent=0 // pred_region
    _
  $region9: #{keypointnet_forward.10} parent=0 // pred_fallthru
    _
  // Predicated region
  $region10: #{keypointnet_forward.10} parent=0 // pred_check
    _
  $region11: #{keypointnet_forward.10} parent=0 // pred_check_branch
    %14 = sbr.rel (0) target = $region13
  $region12: #{keypointnet_forward.10} parent=0 // pred_region
    _
  $region13: #{keypointnet_forward.10} parent=0 // pred_fallthru
    _
  // Predicated region
  $region14: #{keypointnet_forward.10} parent=0 // pred_check
    _
  $region15: #{keypointnet_forward.10} parent=0 // pred_check_branch
    %16 = sbr.rel (0) target = $region17
  $region16: #{keypointnet_forward.10} parent=0 // pred_region
    _
  $region17: #{keypointnet_forward.10} parent=0 // pred_fallthru
    _
  %v18 = vld [vmem:[%s0] sm:$0xff]
  %v19 = vld [vmem:[%s0 + $0x8] sm:$0xf]
  %v20 = vld [vmem:[%s0 + $0xc] sm:$0xff]
  %v21 = vld [vmem:[%s0 + $0x14] sm:$0xf]
  %v22 = vld [vmem:[%s1] sm:$0xf]
  %v23 = vld [vmem:[%s1 + $0x4] sm:$0xf]
  %v24 = vld [vmem:[%s1 + $0x8] sm:$0xf]
  %v25 = vld [vmem:[%s1 + $0xc] sm:$0xf]
  %v26 = vld [vmem:[%s1 + $0x10] sm:$0xf]
  %v27 = vld [vmem:[%s1 + $0x14] sm:$0xf]
  %v28 = vld [vmem:[%s1 + $0x18] sm:$0xf]
  %v29 = vld [vmem:[%s1 + $0x1c] sm:$0xf]
  %v30 = vld [vmem:[%s1 + $0x20] sm:$0xf]
  %v31 = vld [vmem:[%s1 + $0x24] sm:$0xf]
  %v32 = vld [vmem:[%s1 + $0x28] sm:$0xf]
  %v33 = vld [vmem:[%s1 + $0x2c] sm:$0xf]
  %v34 = vld [vmem:[%s1 + $0x30] sm:$0xf]
  %v35 = vld [vmem:[%s1 + $0x34] sm:$0xf]
  %v36 = vld [vmem:[%s1 + $0x38] sm:$0xf]
  %v37 = vld [vmem:[%s1 + $0x3c] sm:$0xf]
  %v38 = vld [vmem:[%s1 + $0x40] sm:$0xf]
  %v39 = vld [vmem:[%s1 + $0x44] sm:$0xf]
  %v40 = vld [vmem:[%s1 + $0x48] sm:$0xf]
  %v41 = vld [vmem:[%s1 + $0x4c] sm:$0xf]
  %v42 = vld [vmem:[%s1 + $0x50] sm:$0xf]
  %v43 = vld [vmem:[%s1 + $0x54] sm:$0xf]
  %v44 = vld [vmem:[%s1 + $0x58] sm:$0xf]
  %v45 = vld [vmem:[%s1 + $0x5c] sm:$0xf]
  %v46 = vld [vmem:[%s1 + $0x60] sm:$0xf]
  %v47 = vld [vmem:[%s1 + $0x64] sm:$0xf]
  %v48 = vld [vmem:[%s1 + $0x68] sm:$0xf]
  %v49 = vld [vmem:[%s1 + $0x6c] sm:$0xf]
  %v50 = vld [vmem:[%s1 + $0x70] sm:$0xf]
  %v51 = vld [vmem:[%s1 + $0x74] sm:$0xf]
  %v52 = vld [vmem:[%s1 + $0x78] sm:$0xf]
  %v53 = vld [vmem:[%s1 + $0x7c] sm:$0xf]
  %v54 = vld [vmem:[%s1 + $0x80] sm:$0xf]
  %v55 = vld [vmem:[%s1 + $0x84] sm:$0xf]
  %v56 = vld [vmem:[%s1 + $0x88] sm:$0xf]
  %v57 = vld [vmem:[%s1 + $0x8c] sm:$0xf]
  %v62 = vunpack.c.l.b16 %v18
  %v63 = vunpack.c.h.b16 %v18
  %v64 = vunpack.c.l.b16 %v19
  %v65 = vunpack.c.l.b16 %v20
  %v66 = vunpack.c.h.b16 %v20
  %v67 = vunpack.c.l.b16 %v21
  %v68 = vpack.c.b16 %v65, %v62
  %v69 = vpack.c.b16 %v66, %v63
  %v70 = vpack.c.b16 %v67, %v64
  %v109 = vunpack.c.l.b16 %v22
  %v110 = vunpack.c.l.b16 %v23
  %v111 = vunpack.c.l.b16 %v24
  %v112 = vunpack.c.l.b16 %v25
  %v113 = vunpack.c.l.b16 %v26
  %v114 = vunpack.c.l.b16 %v27
  %v115 = vunpack.c.l.b16 %v28
  %v116 = vunpack.c.l.b16 %v29
  %v117 = vunpack.c.l.b16 %v30
  %v118 = vunpack.c.l.b16 %v31
  %v119 = vunpack.c.l.b16 %v32
  %v120 = vunpack.c.l.b16 %v33
  %v121 = vunpack.c.l.b16 %v34
  %v122 = vunpack.c.l.b16 %v35
  %v123 = vunpack.c.l.b16 %v36
  %v124 = vunpack.c.l.b16 %v37
  %v125 = vunpack.c.l.b16 %v38
  %v126 = vunpack.c.l.b16 %v39
  %v127 = vunpack.c.l.b16 %v40
  %v128 = vunpack.c.l.b16 %v41
  %v129 = vunpack.c.l.b16 %v42
  %v130 = vunpack.c.l.b16 %v43
  %v131 = vunpack.c.l.b16 %v44
  %v132 = vunpack.c.l.b16 %v45
  %v133 = vunpack.c.l.b16 %v46
  %v134 = vunpack.c.l.b16 %v47
  %v135 = vunpack.c.l.b16 %v48
  %v136 = vunpack.c.l.b16 %v49
  %v137 = vunpack.c.l.b16 %v50
  %v138 = vunpack.c.l.b16 %v51
  %v139 = vunpack.c.l.b16 %v52
  %v140 = vunpack.c.l.b16 %v53
  %v141 = vunpack.c.l.b16 %v54
  %v142 = vunpack.c.l.b16 %v55
  %v143 = vunpack.c.l.b16 %v56
  %v144 = vunpack.c.l.b16 %v57
  %v145 = vpack.c.b16 %v110, %v109
  %v146 = vpack.c.b16 %v112, %v111
  %v147 = vpack.c.b16 %v114, %v113
  %v148 = vpack.c.b16 %v116, %v115
  %v149 = vpack.c.b16 %v118, %v117
  %v150 = vpack.c.b16 %v120, %v119
  %v151 = vpack.c.b16 %v122, %v121
  %v152 = vpack.c.b16 %v124, %v123
  %v153 = vpack.c.b16 %v126, %v125
  %v154 = vpack.c.b16 %v128, %v127
  %v155 = vpack.c.b16 %v130, %v129
  %v156 = vpack.c.b16 %v132, %v131
  %v157 = vpack.c.b16 %v134, %v133
  %v158 = vpack.c.b16 %v136, %v135
  %v159 = vpack.c.b16 %v138, %v137
  %v160 = vpack.c.b16 %v140, %v139
  %v161 = vpack.c.b16 %v142, %v141
  %v162 = vpack.c.b16 %v144, %v143
  %vm181 = vcmask 261120
  %v183 = vsel %vm181, %v70, 0
  %185 = vmatprep.subr.bf16.mxu0 0
  %186 = vmatpush1.bf16.msra.mxu0 %v145
  %187 = vmatprep.subr.bf16.mxu0 0
  %188 = vmatpush1.bf16.msra.mxu0 %v146
  %189 = vmatprep.subr.bf16.mxu0 0
  %190 = vmatpush1.bf16.msra.mxu0 %v147
  %191 = vmatprep.subr.bf16.mxu0 0
  %192 = vmatpush1.bf16.msra.mxu0 %v148
  %193 = vmatprep.subr.bf16.mxu0 0
  %194 = vmatpush1.bf16.msra.mxu0 %v149
  %195 = vmatprep.subr.bf16.mxu0 0
  %196 = vmatpush1.bf16.msra.mxu0 %v150
  %197 = vmatprep.subr.bf16.mxu0 0
  %198 = vmatpush1.bf16.msra.mxu0 %v151
  %199 = vmatprep.subr.bf16.mxu0 0
  %200 = vmatpush1.bf16.msra.mxu0 %v152
  %201 = vmatprep.subr.bf16.mxu0 0
  %202 = vmatpush1.bf16.msra.mxu0 %v153
  %203 = vmatprep.subr.bf16.mxu0 0
  %204 = vmatpush1.bf16.msra.mxu0 %v154
  %205 = vmatprep.subr.bf16.mxu0 0
  %206 = vmatpush1.bf16.msra.mxu0 %v155
  %207 = vmatprep.subr.bf16.mxu0 0
  %208 = vmatpush1.bf16.msra.mxu0 %v156
  %209 = vmatprep.subr.bf16.mxu0 0
  %210 = vmatpush1.bf16.msra.mxu0 %v157
  %211 = vmatprep.subr.bf16.mxu0 0
  %212 = vmatpush1.bf16.msra.mxu0 %v158
  %213 = vmatprep.subr.bf16.mxu0 0
  %214 = vmatpush1.bf16.msra.mxu0 %v159
  %215 = vmatprep.subr.bf16.mxu0 0
  %216 = vmatpush1.bf16.msra.mxu0 %v160
  %217 = vmatprep.mubr.bf16.mxu0 %v69
  %218 = vmatmul.mubr.bf16.gmra.mrb[0].mxu0 %v68
  %v219 = vpop.f32.mrb[0].mxu0
  %v220 = vadd.f32 0.0, %v219
  %v221 = vpop.f32.mrb[0].mxu0
  %v222 = vpop.f32.mrb[0].mxu0
  %v223 = vadd.f32 0.0, %v222
  %v224 = vpop.f32.mrb[0].mxu0
  %225 = vdwg.mxu0
  %226 = vmatprep.subr.bf16.mxu0 0
  %227 = vmatpush1.bf16.msra.mxu0 %v161
  %228 = vmatprep.subr.bf16.mxu0 0
  %229 = vmatpush1.bf16.msra.mxu0 %v162
  %230 = vmatprep.subr.bf16.mxu0 0
  %231 = vmatpush1.bf16.msra.mxu0 0
  %232 = vmatprep.subr.bf16.mxu0 0
  %233 = vmatpush1.bf16.msra.mxu0 0
  %234 = vmatprep.subr.bf16.mxu0 0
  %235 = vmatpush1.bf16.msra.mxu0 0
  %236 = vmatprep.subr.bf16.mxu0 0
  %237 = vmatpush1.bf16.msra.mxu0 0
  %238 = vmatprep.subr.bf16.mxu0 0
  %239 = vmatpush1.bf16.msra.mxu0 0
  %240 = vmatprep.subr.bf16.mxu0 0
  %241 = vmatpush1.bf16.msra.mxu0 0
  %242 = vmatprep.subr.bf16.mxu0 0
  %243 = vmatpush1.bf16.msra.mxu0 0
  %244 = vmatprep.subr.bf16.mxu0 0
  %245 = vmatpush1.bf16.msra.mxu0 0
  %246 = vmatprep.subr.bf16.mxu0 0
  %247 = vmatpush1.bf16.msra.mxu0 0
  %248 = vmatprep.subr.bf16.mxu0 0
  %249 = vmatpush1.bf16.msra.mxu0 0
  %250 = vmatprep.subr.bf16.mxu0 0
  %251 = vmatpush1.bf16.msra.mxu0 0
  %252 = vmatprep.subr.bf16.mxu0 0
  %253 = vmatpush1.bf16.msra.mxu0 0
  %254 = vmatprep.subr.bf16.mxu0 0
  %255 = vmatpush1.bf16.msra.mxu0 0
  %256 = vmatprep.subr.bf16.mxu0 0
  %257 = vmatpush1.bf16.msra.mxu0 0
  %258 = vmatprep.mubr.bf16.mxu0 0
  %259 = vmatmul.mubr.bf16.gmra.mrb[0].mxu0 %v183
  %v260 = vpop.f32.mrb[0].mxu0
  %v261 = vadd.f32 %v220, %v260
  %v262 = vpop.f32.mrb[0].mxu0
  %v263 = vpop.f32.mrb[0].mxu0
  %v264 = vadd.f32 %v223, %v263
  %v265 = vpop.f32.mrb[0].mxu0
  %266 = vdwg.mxu0
  %v267 = vld [vmem:[%s2] sm:$0x1]
  %v269 = vlaneseq
  %v270 = vshrl.u32 %v269, 7
  %v271 = vsub.s32 0, %v270
  %v272 = vrot.slane %v267, %v271
  %v274 = vmul.f32 %v261, %v272
  %v275 = vmul.f32 %v264, %v272
  %v276 = vld [vmem:[%s3] sm:$0x1]
  %v278 = vlaneseq
  %v279 = vshrl.u32 %v278, 7
  %v280 = vsub.s32 0, %v279
  %v281 = vrot.slane %v276, %v280
  %v283 = vadd.f32 %v274, %v281
  %v284 = vadd.f32 %v275, %v281
  %v285 = vmax.f32 %v283, 0.0
  %v286 = vmax.f32 %v284, 0.0
  %v287 = vpack.c.bf16 %v286, %v285
  %v289 = vunpack.c.l.b16 %v287
  %v290 = vunpack.c.h.b16 %v287
  %v291 = vpack.c.b16 %v289, %v289
  %v292 = vpack.c.b16 %v290, %v290
  %295 = vst [vmem:[%s4] sm:$0xf] %v291
  %296 = vst [vmem:[%s4 + $0x4] sm:$0xf] %v292
  // Predicated region
  $region18: #{keypointnet_forward.10} parent=0 // pred_check
    _
  $region19: #{keypointnet_forward.10} parent=0 // pred_check_branch
    %298 = sbr.rel (0) target = $region21
  $region20: #{keypointnet_forward.10} parent=0 // pred_region
    _
  $region21: #{keypointnet_forward.10} parent=0 // pred_fallthru
    _
  // Predicated region
  $region22: #{keypointnet_forward.10} parent=0 // pred_check
    _
  $region23: #{keypointnet_forward.10} parent=0 // pred_check_branch
    %300 = sbr.rel (0) target = $region25
  $region24: #{keypointnet_forward.10} parent=0 // pred_region
    _
  $region25: #{keypointnet_forward.10} parent=0 // pred_fallthru
    _

// kernel: keypointnet_forward.11
$region0: #{keypointnet_forward.11}
  #allocation0 [shape = 'u32[]', space=smem, size = 0x4, offset = 0x4, fixed_abs, tag = 'smem constant byte address 0x4 - core index']
  #allocation1 [shape = 'u32[144,128]{1,0:T(1,128)}', space=vmem, size = 0x12000, scoped, tag = 'internal scratch']
  %s0 = inlined_call_operand.vmem [shape: bf16[32,288], index: 0, kind: input, shape index: {}]
  %s1 = inlined_call_operand.vmem [shape: bf16[288,128], index: 1, kind: input, shape index: {}]
  %s2 = inlined_call_operand.vmem [shape: f32[1,128], index: 2, kind: input, shape index: {}]
  %s3 = inlined_call_operand.vmem [shape: f32[1,128], index: 3, kind: input, shape index: {}]
  %s4 = inlined_call_operand.vmem [shape: bf16[32,128], index: 4, kind: output, shape index: {}]
  %s5 = sld [smem:[#allocation0]]
  $region26: #{keypointnet_forward.11} parent=0
    _
  %s7 = ssub.s32 1, %s5
  %s8 = scalar_select 0, %s7, %s5
  // Predicated region
  $region2: #{keypointnet_forward.11} parent=0 // pred_check
    _
  $region3: #{keypointnet_forward.11} parent=0 // pred_check_branch
    %10 = sbr.rel (0) target = $region5
  $region4: #{keypointnet_forward.11} parent=0 // pred_region
    _
  $region5: #{keypointnet_forward.11} parent=0 // pred_fallthru
    _
  // Predicated region
  $region6: #{keypointnet_forward.11} parent=0 // pred_check
    _
  $region7: #{keypointnet_forward.11} parent=0 // pred_check_branch
    %12 = sbr.rel (0) target = $region9
  $region8: #{keypointnet_forward.11} parent=0 // pred_region
    _
  $region9: #{keypointnet_forward.11} parent=0 // pred_fallthru
    _
  // Predicated region
  $region10: #{keypointnet_forward.11} parent=0 // pred_check
    _
  $region11: #{keypointnet_forward.11} parent=0 // pred_check_branch
    %14 = sbr.rel (0) target = $region13
  $region12: #{keypointnet_forward.11} parent=0 // pred_region
    _
  $region13: #{keypointnet_forward.11} parent=0 // pred_fallthru
    _
  // Predicated region
  $region14: #{keypointnet_forward.11} parent=0 // pred_check
    _
  $region15: #{keypointnet_forward.11} parent=0 // pred_check_branch
    %16 = sbr.rel (0) target = $region17
  $region16: #{keypointnet_forward.11} parent=0 // pred_region
    _
  $region17: #{keypointnet_forward.11} parent=0 // pred_fallthru
    _
  %v18 = vld [vmem:[%s0] sm:$0xff]
  %v19 = vld [vmem:[%s0 + $0x8] sm:$0xf]
  %v20 = vld [vmem:[%s0 + $0xc] sm:$0xff]
  %v21 = vld [vmem:[%s0 + $0x14] sm:$0xf]
  %v22 = vld [vmem:[%s0 + $0x18] sm:$0xff]
  %v23 = vld [vmem:[%s0 + $0x20] sm:$0xf]
  %v24 = vld [vmem:[%s0 + $0x24] sm:$0xff]
  %v25 = vld [vmem:[%s0 + $0x2c] sm:$0xf]
  %v26 = vld [vmem:[%s1] sm:$0xf]
  %v27 = vld [vmem:[%s1 + $0x4] sm:$0xf]
  %v28 = vld [vmem:[%s1 + $0x8] sm:$0xf]
  %v29 = vld [vmem:[%s1 + $0xc] sm:$0xf]
  %v30 = vld [vmem:[%s1 + $0x10] sm:$0xf]
  %v31 = vld [vmem:[%s1 + $0x14] sm:$0xf]
  %v32 = vld [vmem:[%s1 + $0x18] sm:$0xf]
  %v33 = vld [vmem:[%s1 + $0x1c] sm:$0xf]
  %v34 = vld [vmem:[%s1 + $0x20] sm:$0xf]
  %v35 = vld [vmem:[%s1 + $0x24] sm:$0xf]
  %v36 = vld [vmem:[%s1 + $0x28] sm:$0xf]
  %v37 = vld [vmem:[%s1 + $0x2c] sm:$0xf]
  %v38 = vld [vmem:[%s1 + $0x30] sm:$0xf]
  %v39 = vld [vmem:[%s1 + $0x34] sm:$0xf]
  %v40 = vld [vmem:[%s1 + $0x38] sm:$0xf]
  %v41 = vld [vmem:[%s1 + $0x3c] sm:$0xf]
  %v42 = vld [vmem:[%s1 + $0x40] sm:$0xf]
  %v43 = vld [vmem:[%s1 + $0x44] sm:$0xf]
  %v44 = vld [vmem:[%s1 + $0x48] sm:$0xf]
  %v45 = vld [vmem:[%s1 + $0x4c] sm:$0xf]
  %v46 = vld [vmem:[%s1 + $0x50] sm:$0xf]
  %v47 = vld [vmem:[%s1 + $0x54] sm:$0xf]
  %v48 = vld [vmem:[%s1 + $0x58] sm:$0xf]
  %v49 = vld [vmem:[%s1 + $0x5c] sm:$0xf]
  %v50 = vld [vmem:[%s1 + $0x60] sm:$0xf]
  %v51 = vld [vmem:[%s1 + $0x64] sm:$0xf]
  %v52 = vld [vmem:[%s1 + $0x68] sm:$0xf]
  %v53 = vld [vmem:[%s1 + $0x6c] sm:$0xf]
  %v54 = vld [vmem:[%s1 + $0x70] sm:$0xf]
  %v55 = vld [vmem:[%s1 + $0x74] sm:$0xf]
  %v56 = vld [vmem:[%s1 + $0x78] sm:$0xf]
  %v57 = vld [vmem:[%s1 + $0x7c] sm:$0xf]
  %v58 = vld [vmem:[%s1 + $0x80] sm:$0xf]
  %v59 = vld [vmem:[%s1 + $0x84] sm:$0xf]
  %v60 = vld [vmem:[%s1 + $0x88] sm:$0xf]
  %v61 = vld [vmem:[%s1 + $0x8c] sm:$0xf]
  %v70 = vunpack.c.l.b16 %v18
  %v71 = vunpack.c.h.b16 %v18
  %v72 = vunpack.c.l.b16 %v19
  %v73 = vunpack.c.l.b16 %v20
  %v74 = vunpack.c.h.b16 %v20
  %v75 = vunpack.c.l.b16 %v21
  %v76 = vunpack.c.l.b16 %v22
  %v77 = vunpack.c.h.b16 %v22
  %v78 = vunpack.c.l.b16 %v23
  %v79 = vunpack.c.l.b16 %v24
  %v80 = vunpack.c.h.b16 %v24
  %v81 = vunpack.c.l.b16 %v25
  %v82 = vpack.c.b16 %v73, %v70
  %v83 = vpack.c.b16 %v74, %v71
  %v84 = vpack.c.b16 %v75, %v72
  %v85 = vpack.c.b16 %v79, %v76
  %v86 = vpack.c.b16 %v80, %v77
  %v87 = vpack.c.b16 %v81, %v78
  %v128 = vunpack.c.l.b16 %v26
  %v129 = vunpack.c.l.b16 %v27
  %v130 = vunpack.c.l.b16 %v28
  %v131 = vunpack.c.l.b16 %v29
  %v132 = vunpack.c.l.b16 %v30
  %v133 = vunpack.c.l.b16 %v31
  %v134 = vunpack.c.l.b16 %v32
  %v135 = vunpack.c.l.b16 %v33
  %v136 = vunpack.c.l.b16 %v34
  %v137 = vunpack.c.l.b16 %v35
  %v138 = vunpack.c.l.b16 %v36
  %v139 = vunpack.c.l.b16 %v37
  %v140 = vunpack.c.l.b16 %v38
  %v141 = vunpack.c.l.b16 %v39
  %v142 = vunpack.c.l.b16 %v40
  %v143 = vunpack.c.l.b16 %v41
  %v144 = vunpack.c.l.b16 %v42
  %v145 = vunpack.c.l.b16 %v43
  %v146 = vunpack.c.l.b16 %v44
  %v147 = vunpack.c.l.b16 %v45
  %v148 = vunpack.c.l.b16 %v46
  %v149 = vunpack.c.l.b16 %v47
  %v150 = vunpack.c.l.b16 %v48
  %v151 = vunpack.c.l.b16 %v49
  %v152 = vunpack.c.l.b16 %v50
  %v153 = vunpack.c.l.b16 %v51
  %v154 = vunpack.c.l.b16 %v52
  %v155 = vunpack.c.l.b16 %v53
  %v156 = vunpack.c.l.b16 %v54
  %v157 = vunpack.c.l.b16 %v55
  %v158 = vunpack.c.l.b16 %v56
  %v159 = vunpack.c.l.b16 %v57
  %v160 = vunpack.c.l.b16 %v58
  %v161 = vunpack.c.l.b16 %v59
  %v162 = vunpack.c.l.b16 %v60
  %v163 = vunpack.c.l.b16 %v61
  %v164 = vpack.c.b16 %v129, %v128
  %v165 = vpack.c.b16 %v131, %v130
  %v166 = vpack.c.b16 %v133, %v132
  %v167 = vpack.c.b16 %v135, %v134
  %v168 = vpack.c.b16 %v137, %v136
  %v169 = vpack.c.b16 %v139, %v138
  %v170 = vpack.c.b16 %v141, %v140
  %v171 = vpack.c.b16 %v143, %v142
  %v172 = vpack.c.b16 %v145, %v144
  %v173 = vpack.c.b16 %v147, %v146
  %v174 = vpack.c.b16 %v149, %v148
  %v175 = vpack.c.b16 %v151, %v150
  %v176 = vpack.c.b16 %v153, %v152
  %v177 = vpack.c.b16 %v155, %v154
  %v178 = vpack.c.b16 %v157, %v156
  %v179 = vpack.c.b16 %v159, %v158
  %v180 = vpack.c.b16 %v161, %v160
  %v181 = vpack.c.b16 %v163, %v162
  %vm200 = vcmask 261120
  %v202 = vsel %vm200, %v84, 0
  %v205 = vsel %vm200, %v87, 0
  %207 = vmatprep.subr.bf16.mxu0 0
  %208 = vmatpush1.bf16.msra.mxu0 %v164
  %209 = vmatprep.subr.bf16.mxu0 0
  %210 = vmatpush1.bf16.msra.mxu0 %v165
  %211 = vmatprep.subr.bf16.mxu0 0
  %212 = vmatpush1.bf16.msra.mxu0 %v166
  %213 = vmatprep.subr.bf16.mxu0 0
  %214 = vmatpush1.bf16.msra.mxu0 %v167
  %215 = vmatprep.subr.bf16.mxu0 0
  %216 = vmatpush1.bf16.msra.mxu0 %v168
  %217 = vmatprep.subr.bf16.mxu0 0
  %218 = vmatpush1.bf16.msra.mxu0 %v169
  %219 = vmatprep.subr.bf16.mxu0 0
  %220 = vmatpush1.bf16.msra.mxu0 %v170
  %221 = vmatprep.subr.bf16.mxu0 0
  %222 = vmatpush1.bf16.msra.mxu0 %v171
  %223 = vmatprep.subr.bf16.mxu0 0
  %224 = vmatpush1.bf16.msra.mxu0 %v172
  %225 = vmatprep.subr.bf16.mxu0 0
  %226 = vmatpush1.bf16.msra.mxu0 %v173
  %227 = vmatprep.subr.bf16.mxu0 0
  %228 = vmatpush1.bf16.msra.mxu0 %v174
  %229 = vmatprep.subr.bf16.mxu0 0
  %230 = vmatpush1.bf16.msra.mxu0 %v175
  %231 = vmatprep.subr.bf16.mxu0 0
  %232 = vmatpush1.bf16.msra.mxu0 %v176
  %233 = vmatprep.subr.bf16.mxu0 0
  %234 = vmatpush1.bf16.msra.mxu0 %v177
  %235 = vmatprep.subr.bf16.mxu0 0
  %236 = vmatpush1.bf16.msra.mxu0 %v178
  %237 = vmatprep.subr.bf16.mxu0 0
  %238 = vmatpush1.bf16.msra.mxu0 %v179
  %239 = vmatprep.mubr.bf16.mxu0 %v83
  %240 = vmatmul.mubr.bf16.gmra.mrb[0].mxu0 %v82
  %v241 = vpop.f32.mrb[0].mxu0
  %v242 = vadd.f32 0.0, %v241
  %v243 = vpop.f32.mrb[0].mxu0
  %v244 = vpop.f32.mrb[0].mxu0
  %v245 = vadd.f32 0.0, %v244
  %v246 = vpop.f32.mrb[0].mxu0
  %247 = vmatprep.mubr.bf16.mxu0 %v86
  %248 = vmatmul.mubr.bf16.gmra.mrb[0].mxu0 %v85
  %v249 = vpop.f32.mrb[0].mxu0
  %v250 = vadd.f32 0.0, %v249
  %v251 = vpop.f32.mrb[0].mxu0
  %v252 = vpop.f32.mrb[0].mxu0
  %v253 = vadd.f32 0.0, %v252
  %v254 = vpop.f32.mrb[0].mxu0
  %255 = vdwg.mxu0
  %256 = vmatprep.subr.bf16.mxu0 0
  %257 = vmatpush1.bf16.msra.mxu0 %v180
  %258 = vmatprep.subr.bf16.mxu0 0
  %259 = vmatpush1.bf16.msra.mxu0 %v181
  %260 = vmatprep.subr.bf16.mxu0 0
  %261 = vmatpush1.bf16.msra.mxu0 0
  %262 = vmatprep.subr.bf16.mxu0 0
  %263 = vmatpush1.bf16.msra.mxu0 0
  %264 = vmatprep.subr.bf16.mxu0 0
  %265 = vmatpush1.bf16.msra.mxu0 0
  %266 = vmatprep.subr.bf16.mxu0 0
  %267 = vmatpush1.bf16.msra.mxu0 0
  %268 = vmatprep.subr.bf16.mxu0 0
  %269 = vmatpush1.bf16.msra.mxu0 0
  %270 = vmatprep.subr.bf16.mxu0 0
  %271 = vmatpush1.bf16.msra.mxu0 0
  %272 = vmatprep.subr.bf16.mxu0 0
  %273 = vmatpush1.bf16.msra.mxu0 0
  %274 = vmatprep.subr.bf16.mxu0 0
  %275 = vmatpush1.bf16.msra.mxu0 0
  %276 = vmatprep.subr.bf16.mxu0 0
  %277 = vmatpush1.bf16.msra.mxu0 0
  %278 = vmatprep.subr.bf16.mxu0 0
  %279 = vmatpush1.bf16.msra.mxu0 0
  %280 = vmatprep.subr.bf16.mxu0 0
  %281 = vmatpush1.bf16.msra.mxu0 0
  %282 = vmatprep.subr.bf16.mxu0 0
  %283 = vmatpush1.bf16.msra.mxu0 0
  %284 = vmatprep.subr.bf16.mxu0 0
  %285 = vmatpush1.bf16.msra.mxu0 0
  %286 = vmatprep.subr.bf16.mxu0 0
  %287 = vmatpush1.bf16.msra.mxu0 0
  %288 = vmatprep.mubr.bf16.mxu0 0
  %289 = vmatmul.mubr.bf16.gmra.mrb[0].mxu0 %v202
  %v290 = vpop.f32.mrb[0].mxu0
  %v291 = vadd.f32 %v242, %v290
  %v292 = vpop.f32.mrb[0].mxu0
  %v293 = vpop.f32.mrb[0].mxu0
  %v294 = vadd.f32 %v245, %v293
  %v295 = vpop.f32.mrb[0].mxu0
  %296 = vmatprep.mubr.bf16.mxu0 0
  %297 = vmatmul.mubr.bf16.gmra.mrb[0].mxu0 %v205
  %v298 = vpop.f32.mrb[0].mxu0
  %v299 = vadd.f32 %v250, %v298
  %v300 = vpop.f32.mrb[0].mxu0
  %v301 = vpop.f32.mrb[0].mxu0
  %v302 = vadd.f32 %v253, %v301
  %v303 = vpop.f32.mrb[0].mxu0
  %304 = vdwg.mxu0
  %v305 = vld [vmem:[%s2] sm:$0x1]
  %v307 = vlaneseq
  %v308 = vshrl.u32 %v307, 7
  %v309 = vsub.s32 0, %v308
  %v310 = vrot.slane %v305, %v309
  %v312 = vmul.f32 %v291, %v310
  %v313 = vmul.f32 %v294, %v310
  %v314 = vmul.f32 %v299, %v310
  %v315 = vmul.f32 %v302, %v310
  %v316 = vld [vmem:[%s3] sm:$0x1]
  %v318 = vlaneseq
  %v319 = vshrl.u32 %v318, 7
  %v320 = vsub.s32 0, %v319
  %v321 = vrot.slane %v316, %v320
  %v323 = vadd.f32 %v312, %v321
  %v324 = vadd.f32 %v313, %v321
  %v325 = vadd.f32 %v314, %v321
  %v326 = vadd.f32 %v315, %v321
  %v327 = vmax.f32 %v323, 0.0
  %v328 = vmax.f32 %v324, 0.0
  %v329 = vmax.f32 %v325, 0.0
  %v330 = vmax.f32 %v326, 0.0
  %v331 = vpack.c.bf16 %v328, %v327
  %v332 = vpack.c.bf16 %v330, %v329
  %v335 = vunpack.c.l.b16 %v331
  %v336 = vunpack.c.h.b16 %v331
  %v337 = vunpack.c.l.b16 %v332
  %v338 = vunpack.c.h.b16 %v332
  %v339 = vpack.c.b16 %v335, %v335
  %v340 = vpack.c.b16 %v336, %v336
  %v341 = vpack.c.b16 %v337, %v337
  %v342 = vpack.c.b16 %v338, %v338
  %347 = vst [vmem:[%s4] sm:$0xf] %v339
  %348 = vst [vmem:[%s4 + $0x4] sm:$0xf] %v340
  %349 = vst [vmem:[%s4 + $0x8] sm:$0xf] %v341
  %350 = vst [vmem:[%s4 + $0xc] sm:$0xf] %v342
  // Predicated region
  $region18: #{keypointnet_forward.11} parent=0 // pred_check
    _
  $region19: #{keypointnet_forward.11} parent=0 // pred_check_branch
    %352 = sbr.rel (0) target = $region21
  $region20: #{keypointnet_forward.11} parent=0 // pred_region
    _
  $region21: #{keypointnet_forward.11} parent=0 // pred_fallthru
    _
  // Predicated region
  $region22: #{keypointnet_forward.11} parent=0 // pred_check
    _
  $region23: #{keypointnet_forward.11} parent=0 // pred_check_branch
    %354 = sbr.rel (0) target = $region25
  $region24: #{keypointnet_forward.11} parent=0 // pred_region
    _
  $region25: #{keypointnet_forward.11} parent=0 // pred_fallthru
    _

// kernel: keypointnet_forward.12
$region0: #{keypointnet_forward.12}
  #allocation0 [shape = 'u32[]', space=smem, size = 0x4, offset = 0x4, fixed_abs, tag = 'smem constant byte address 0x4 - core index']
  #allocation1 [shape = 'u32[144,128]{1,0:T(1,128)}', space=vmem, size = 0x12000, scoped, tag = 'internal scratch']
  %s0 = inlined_call_operand.vmem [shape: bf16[128,288], index: 0, kind: input, shape index: {}]
  %s1 = inlined_call_operand.vmem [shape: bf16[288,128], index: 1, kind: input, shape index: {}]
  %s2 = inlined_call_operand.vmem [shape: f32[1,128], index: 2, kind: input, shape index: {}]
  %s3 = inlined_call_operand.vmem [shape: f32[1,128], index: 3, kind: input, shape index: {}]
  %s4 = inlined_call_operand.vmem [shape: bf16[128,128], index: 4, kind: output, shape index: {}]
  %s5 = sld [smem:[#allocation0]]
  $region26: #{keypointnet_forward.12} parent=0
    _
  %s7 = ssub.s32 1, %s5
  %s8 = scalar_select 0, %s7, %s5
  // Predicated region
  $region2: #{keypointnet_forward.12} parent=0 // pred_check
    _
  $region3: #{keypointnet_forward.12} parent=0 // pred_check_branch
    %10 = sbr.rel (0) target = $region5
  $region4: #{keypointnet_forward.12} parent=0 // pred_region
    _
  $region5: #{keypointnet_forward.12} parent=0 // pred_fallthru
    _
  // Predicated region
  $region6: #{keypointnet_forward.12} parent=0 // pred_check
    _
  $region7: #{keypointnet_forward.12} parent=0 // pred_check_branch
    %12 = sbr.rel (0) target = $region9
  $region8: #{keypointnet_forward.12} parent=0 // pred_region
    _
  $region9: #{keypointnet_forward.12} parent=0 // pred_fallthru
    _
  // Predicated region
  $region10: #{keypointnet_forward.12} parent=0 // pred_check
    _
  $region11: #{keypointnet_forward.12} parent=0 // pred_check_branch
    %14 = sbr.rel (0) target = $region13
  $region12: #{keypointnet_forward.12} parent=0 // pred_region
    _
  $region13: #{keypointnet_forward.12} parent=0 // pred_fallthru
    _
  // Predicated region
  $region14: #{keypointnet_forward.12} parent=0 // pred_check
    _
  $region15: #{keypointnet_forward.12} parent=0 // pred_check_branch
    %16 = sbr.rel (0) target = $region17
  $region16: #{keypointnet_forward.12} parent=0 // pred_region
    _
  $region17: #{keypointnet_forward.12} parent=0 // pred_fallthru
    _
  %v18 = vld [vmem:[%s0] sm:$0xff]
  %v19 = vld [vmem:[%s0 + $0x8] sm:$0xf]
  %v20 = vld [vmem:[%s0 + $0xc] sm:$0xff]
  %v21 = vld [vmem:[%s0 + $0x14] sm:$0xf]
  %v22 = vld [vmem:[%s0 + $0x18] sm:$0xff]
  %v23 = vld [vmem:[%s0 + $0x20] sm:$0xf]
  %v24 = vld [vmem:[%s0 + $0x24] sm:$0xff]
  %v25 = vld [vmem:[%s0 + $0x2c] sm:$0xf]
  %v26 = vld [vmem:[%s0 + $0x30] sm:$0xff]
  %v27 = vld [vmem:[%s0 + $0x38] sm:$0xf]
  %v28 = vld [vmem:[%s0 + $0x3c] sm:$0xff]
  %v29 = vld [vmem:[%s0 + $0x44] sm:$0xf]
  %v30 = vld [vmem:[%s0 + $0x48] sm:$0xff]
  %v31 = vld [vmem:[%s0 + $0x50] sm:$0xf]
  %v32 = vld [vmem:[%s0 + $0x54] sm:$0xff]
  %v33 = vld [vmem:[%s0 + $0x5c] sm:$0xf]
  %v34 = vld [vmem:[%s0 + $0x60] sm:$0xff]
  %v35 = vld [vmem:[%s0 + $0x68] sm:$0xf]
  %v36 = vld [vmem:[%s0 + $0x6c] sm:$0xff]
  %v37 = vld [vmem:[%s0 + $0x74] sm:$0xf]
  %v38 = vld [vmem:[%s0 + $0x78] sm:$0xff]
  %v39 = vld [vmem:[%s0 + $0x80] sm:$0xf]
  %v40 = vld [vmem:[%s0 + $0x84] sm:$0xff]
  %v41 = vld [vmem:[%s0 + $0x8c] sm:$0xf]
  %v42 = vld [vmem:[%s0 + $0x90] sm:$0xff]
  %v43 = vld [vmem:[%s0 + $0x98] sm:$0xf]
  %v44 = vld [vmem:[%s0 + $0x9c] sm:$0xff]
  %v45 = vld [vmem:[%s0 + $0xa4] sm:$0xf]
  %v46 = vld [vmem:[%s0 + $0xa8] sm:$0xff]
  %v47 = vld [vmem:[%s0 + $0xb0] sm:$0xf]
  %v48 = vld [vmem:[%s0 + $0xb4] sm:$0xff]
  %v49 = vld [vmem:[%s0 + $0xbc] sm:$0xf]
  %v50 = vld [vmem:[%s1] sm:$0xf]
  %v51 = vld [vmem:[%s1 + $0x4] sm:$0xf]
  %v52 = vld [vmem:[%s1 + $0x8] sm:$0xf]
  %v53 = vld [vmem:[%s1 + $0xc] sm:$0xf]
  %v54 = vld [vmem:[%s1 + $0x10] sm:$0xf]
  %v55 = vld [vmem:[%s1 + $0x14] sm:$0xf]
  %v56 = vld [vmem:[%s1 + $0x18] sm:$0xf]
  %v57 = vld [vmem:[%s1 + $0x1c] sm:$0xf]
  %v58 = vld [vmem:[%s1 + $0x20] sm:$0xf]
  %v59 = vld [vmem:[%s1 + $0x24] sm:$0xf]
  %v60 = vld [vmem:[%s1 + $0x28] sm:$0xf]
  %v61 = vld [vmem:[%s1 + $0x2c] sm:$0xf]
  %v62 = vld [vmem:[%s1 + $0x30] sm:$0xf]
  %v63 = vld [vmem:[%s1 + $0x34] sm:$0xf]
  %v64 = vld [vmem:[%s1 + $0x38] sm:$0xf]
  %v65 = vld [vmem:[%s1 + $0x3c] sm:$0xf]
  %v66 = vld [vmem:[%s1 + $0x40] sm:$0xf]
  %v67 = vld [vmem:[%s1 + $0x44] sm:$0xf]
  %v68 = vld [vmem:[%s1 + $0x48] sm:$0xf]
  %v69 = vld [vmem:[%s1 + $0x4c] sm:$0xf]
  %v70 = vld [vmem:[%s1 + $0x50] sm:$0xf]
  %v71 = vld [vmem:[%s1 + $0x54] sm:$0xf]
  %v72 = vld [vmem:[%s1 + $0x58] sm:$0xf]
  %v73 = vld [vmem:[%s1 + $0x5c] sm:$0xf]
  %v74 = vld [vmem:[%s1 + $0x60] sm:$0xf]
  %v75 = vld [vmem:[%s1 + $0x64] sm:$0xf]
  %v76 = vld [vmem:[%s1 + $0x68] sm:$0xf]
  %v77 = vld [vmem:[%s1 + $0x6c] sm:$0xf]
  %v78 = vld [vmem:[%s1 + $0x70] sm:$0xf]
  %v79 = vld [vmem:[%s1 + $0x74] sm:$0xf]
  %v80 = vld [vmem:[%s1 + $0x78] sm:$0xf]
  %v81 = vld [vmem:[%s1 + $0x7c] sm:$0xf]
  %v82 = vld [vmem:[%s1 + $0x80] sm:$0xf]
  %v83 = vld [vmem:[%s1 + $0x84] sm:$0xf]
  %v84 = vld [vmem:[%s1 + $0x88] sm:$0xf]
  %v85 = vld [vmem:[%s1 + $0x8c] sm:$0xf]
  %v118 = vunpack.c.l.b16 %v18
  %v119 = vunpack.c.h.b16 %v18
  %v120 = vunpack.c.l.b16 %v19
  %v121 = vunpack.c.l.b16 %v20
  %v122 = vunpack.c.h.b16 %v20
  %v123 = vunpack.c.l.b16 %v21
  %v124 = vunpack.c.l.b16 %v22
  %v125 = vunpack.c.h.b16 %v22
  %v126 = vunpack.c.l.b16 %v23
  %v127 = vunpack.c.l.b16 %v24
  %v128 = vunpack.c.h.b16 %v24
  %v129 = vunpack.c.l.b16 %v25
  %v130 = vunpack.c.l.b16 %v26
  %v131 = vunpack.c.h.b16 %v26
  %v132 = vunpack.c.l.b16 %v27
  %v133 = vunpack.c.l.b16 %v28
  %v134 = vunpack.c.h.b16 %v28
  %v135 = vunpack.c.l.b16 %v29
  %v136 = vunpack.c.l.b16 %v30
  %v137 = vunpack.c.h.b16 %v30
  %v138 = vunpack.c.l.b16 %v31
  %v139 = vunpack.c.l.b16 %v32
  %v140 = vunpack.c.h.b16 %v32
  %v141 = vunpack.c.l.b16 %v33
  %v142 = vunpack.c.l.b16 %v34
  %v143 = vunpack.c.h.b16 %v34
  %v144 = vunpack.c.l.b16 %v35
  %v145 = vunpack.c.l.b16 %v36
  %v146 = vunpack.c.h.b16 %v36
  %v147 = vunpack.c.l.b16 %v37
  %v148 = vunpack.c.l.b16 %v38
  %v149 = vunpack.c.h.b16 %v38
  %v150 = vunpack.c.l.b16 %v39
  %v151 = vunpack.c.l.b16 %v40
  %v152 = vunpack.c.h.b16 %v40
  %v153 = vunpack.c.l.b16 %v41
  %v154 = vunpack.c.l.b16 %v42
  %v155 = vunpack.c.h.b16 %v42
  %v156 = vunpack.c.l.b16 %v43
  %v157 = vunpack.c.l.b16 %v44
  %v158 = vunpack.c.h.b16 %v44
  %v159 = vunpack.c.l.b16 %v45
  %v160 = vunpack.c.l.b16 %v46
  %v161 = vunpack.c.h.b16 %v46
  %v162 = vunpack.c.l.b16 %v47
  %v163 = vunpack.c.l.b16 %v48
  %v164 = vunpack.c.h.b16 %v48
  %v165 = vunpack.c.l.b16 %v49
  %v166 = vpack.c.b16 %v121, %v118
  %v167 = vpack.c.b16 %v122, %v119
  %v168 = vpack.c.b16 %v123, %v120
  %v169 = vpack.c.b16 %v127, %v124
  %v170 = vpack.c.b16 %v128, %v125
  %v171 = vpack.c.b16 %v129, %v126
  %v172 = vpack.c.b16 %v133, %v130
  %v173 = vpack.c.b16 %v134, %v131
  %v174 = vpack.c.b16 %v135, %v132
  %v175 = vpack.c.b16 %v139, %v136
  %v176 = vpack.c.b16 %v140, %v137
  %v177 = vpack.c.b16 %v141, %v138
  %v178 = vpack.c.b16 %v145, %v142
  %v179 = vpack.c.b16 %v146, %v143
  %v180 = vpack.c.b16 %v147, %v144
  %v181 = vpack.c.b16 %v151, %v148
  %v182 = vpack.c.b16 %v152, %v149
  %v183 = vpack.c.b16 %v153, %v150
  %v184 = vpack.c.b16 %v157, %v154
  %v185 = vpack.c.b16 %v158, %v155
  %v186 = vpack.c.b16 %v159, %v156
  %v187 = vpack.c.b16 %v163, %v160
  %v188 = vpack.c.b16 %v164, %v161
  %v189 = vpack.c.b16 %v165, %v162
  %v242 = vunpack.c.l.b16 %v50
  %v243 = vunpack.c.l.b16 %v51
  %v244 = vunpack.c.l.b16 %v52
  %v245 = vunpack.c.l.b16 %v53
  %v246 = vunpack.c.l.b16 %v54
  %v247 = vunpack.c.l.b16 %v55
  %v248 = vunpack.c.l.b16 %v56
  %v249 = vunpack.c.l.b16 %v57
  %v250 = vunpack.c.l.b16 %v58
  %v251 = vunpack.c.l.b16 %v59
  %v252 = vunpack.c.l.b16 %v60
  %v253 = vunpack.c.l.b16 %v61
  %v254 = vunpack.c.l.b16 %v62
  %v255 = vunpack.c.l.b16 %v63
  %v256 = vunpack.c.l.b16 %v64
  %v257 = vunpack.c.l.b16 %v65
  %v258 = vunpack.c.l.b16 %v66
  %v259 = vunpack.c.l.b16 %v67
  %v260 = vunpack.c.l.b16 %v68
  %v261 = vunpack.c.l.b16 %v69
  %v262 = vunpack.c.l.b16 %v70
  %v263 = vunpack.c.l.b16 %v71
  %v264 = vunpack.c.l.b16 %v72
  %v265 = vunpack.c.l.b16 %v73
  %v266 = vunpack.c.l.b16 %v74
  %v267 = vunpack.c.l.b16 %v75
  %v268 = vunpack.c.l.b16 %v76
  %v269 = vunpack.c.l.b16 %v77
  %v270 = vunpack.c.l.b16 %v78
  %v271 = vunpack.c.l.b16 %v79
  %v272 = vunpack.c.l.b16 %v80
  %v273 = vunpack.c.l.b16 %v81
  %v274 = vunpack.c.l.b16 %v82
  %v275 = vunpack.c.l.b16 %v83
  %v276 = vunpack.c.l.b16 %v84
  %v277 = vunpack.c.l.b16 %v85
  %v278 = vpack.c.b16 %v243, %v242
  %v279 = vpack.c.b16 %v245, %v244
  %v280 = vpack.c.b16 %v247, %v246
  %v281 = vpack.c.b16 %v249, %v248
  %v282 = vpack.c.b16 %v251, %v250
  %v283 = vpack.c.b16 %v253, %v252
  %v284 = vpack.c.b16 %v255, %v254
  %v285 = vpack.c.b16 %v257, %v256
  %v286 = vpack.c.b16 %v259, %v258
  %v287 = vpack.c.b16 %v261, %v260
  %v288 = vpack.c.b16 %v263, %v262
  %v289 = vpack.c.b16 %v265, %v264
  %v290 = vpack.c.b16 %v267, %v266
  %v291 = vpack.c.b16 %v269, %v268
  %v292 = vpack.c.b16 %v271, %v270
  %v293 = vpack.c.b16 %v273, %v272
  %v294 = vpack.c.b16 %v275, %v274
  %v295 = vpack.c.b16 %v277, %v276
  %vm314 = vcmask 261120
  %v316 = vsel %vm314, %v168, 0
  %v319 = vsel %vm314, %v171, 0
  %v322 = vsel %vm314, %v174, 0
  %v325 = vsel %vm314, %v177, 0
  %v328 = vsel %vm314, %v180, 0
  %v331 = vsel %vm314, %v183, 0
  %v334 = vsel %vm314, %v186, 0
  %v337 = vsel %vm314, %v189, 0
  %339 = vmatprep.subr.bf16.mxu0 0
  %340 = vmatpush1.bf16.msra.mxu0 %v278
  %341 = vmatprep.subr.bf16.mxu0 0
  %342 = vmatpush1.bf16.msra.mxu0 %v279
  %343 = vmatprep.subr.bf16.mxu0 0
  %344 = vmatpush1.bf16.msra.mxu0 %v280
  %345 = vmatprep.subr.bf16.mxu0 0
  %346 = vmatpush1.bf16.msra.mxu0 %v281
  %347 = vmatprep.subr.bf16.mxu0 0
  %348 = vmatpush1.bf16.msra.mxu0 %v282
  %349 = vmatprep.subr.bf16.mxu0 0
  %350 = vmatpush1.bf16.msra.mxu0 %v283
  %351 = vmatprep.subr.bf16.mxu0 0
  %352 = vmatpush1.bf16.msra.mxu0 %v284
  %353 = vmatprep.subr.bf16.mxu0 0
  %354 = vmatpush1.bf16.msra.mxu0 %v285
  %355 = vmatprep.subr.bf16.mxu0 0
  %356 = vmatpush1.bf16.msra.mxu0 %v286
  %357 = vmatprep.subr.bf16.mxu0 0
  %358 = vmatpush1.bf16.msra.mxu0 %v287
  %359 = vmatprep.subr.bf16.mxu0 0
  %360 = vmatpush1.bf16.msra.mxu0 %v288
  %361 = vmatprep.subr.bf16.mxu0 0
  %362 = vmatpush1.bf16.msra.mxu0 %v289
  %363 = vmatprep.subr.bf16.mxu0 0
  %364 = vmatpush1.bf16.msra.mxu0 %v290
  %365 = vmatprep.subr.bf16.mxu0 0
  %366 = vmatpush1.bf16.msra.mxu0 %v291
  %367 = vmatprep.subr.bf16.mxu0 0
  %368 = vmatpush1.bf16.msra.mxu0 %v292
  %369 = vmatprep.subr.bf16.mxu0 0
  %370 = vmatpush1.bf16.msra.mxu0 %v293
  %371 = vmatprep.mubr.bf16.mxu0 %v167
  %372 = vmatmul.mubr.bf16.gmra.mrb[0].mxu0 %v166
  %v373 = vpop.f32.mrb[0].mxu0
  %v374 = vadd.f32 0.0, %v373
  %v375 = vpop.f32.mrb[0].mxu0
  %v376 = vpop.f32.mrb[0].mxu0
  %v377 = vadd.f32 0.0, %v376
  %v378 = vpop.f32.mrb[0].mxu0
  %379 = vmatprep.mubr.bf16.mxu0 %v170
  %380 = vmatmul.mubr.bf16.gmra.mrb[0].mxu0 %v169
  %v381 = vpop.f32.mrb[0].mxu0
  %v382 = vadd.f32 0.0, %v381
  %v383 = vpop.f32.mrb[0].mxu0
  %v384 = vpop.f32.mrb[0].mxu0
  %v385 = vadd.f32 0.0, %v384
  %v386 = vpop.f32.mrb[0].mxu0
  %387 = vmatprep.mubr.bf16.mxu0 %v173
  %388 = vmatmul.mubr.bf16.gmra.mrb[0].mxu0 %v172
  %v389 = vpop.f32.mrb[0].mxu0
  %v390 = vadd.f32 0.0, %v389
  %v391 = vpop.f32.mrb[0].mxu0
  %v392 = vpop.f32.mrb[0].mxu0
  %v393 = vadd.f32 0.0, %v392
  %v394 = vpop.f32.mrb[0].mxu0
  %395 = vmatprep.mubr.bf16.mxu0 %v176
  %396 = vmatmul.mubr.bf16.gmra.mrb[0].mxu0 %v175
  %v397 = vpop.f32.mrb[0].mxu0
  %v398 = vadd.f32 0.0, %v397
  %v399 = vpop.f32.mrb[0].mxu0
  %v400 = vpop.f32.mrb[0].mxu0
  %v401 = vadd.f32 0.0, %v400
  %v402 = vpop.f32.mrb[0].mxu0
  %403 = vmatprep.mubr.bf16.mxu0 %v179
  %404 = vmatmul.mubr.bf16.gmra.mrb[0].mxu0 %v178
  %v405 = vpop.f32.mrb[0].mxu0
  %v406 = vadd.f32 0.0, %v405
  %v407 = vpop.f32.mrb[0].mxu0
  %v408 = vpop.f32.mrb[0].mxu0
  %v409 = vadd.f32 0.0, %v408
  %v410 = vpop.f32.mrb[0].mxu0
  %411 = vmatprep.mubr.bf16.mxu0 %v182
  %412 = vmatmul.mubr.bf16.gmra.mrb[0].mxu0 %v181
  %v413 = vpop.f32.mrb[0].mxu0
  %v414 = vadd.f32 0.0, %v413
  %v415 = vpop.f32.mrb[0].mxu0
  %v416 = vpop.f32.mrb[0].mxu0
  %v417 = vadd.f32 0.0, %v416
  %v418 = vpop.f32.mrb[0].mxu0
  %419 = vmatprep.mubr.bf16.mxu0 %v185
  %420 = vmatmul.mubr.bf16.gmra.mrb[0].mxu0 %v184
  %v421 = vpop.f32.mrb[0].mxu0
  %v422 = vadd.f32 0.0, %v421
  %v423 = vpop.f32.mrb[0].mxu0
  %v424 = vpop.f32.mrb[0].mxu0
  %v425 = vadd.f32 0.0, %v424
  %v426 = vpop.f32.mrb[0].mxu0
  %427 = vmatprep.mubr.bf16.mxu0 %v188
  %428 = vmatmul.mubr.bf16.gmra.mrb[0].mxu0 %v187
  %v429 = vpop.f32.mrb[0].mxu0
  %v430 = vadd.f32 0.0, %v429
  %v431 = vpop.f32.mrb[0].mxu0
  %v432 = vpop.f32.mrb[0].mxu0
  %v433 = vadd.f32 0.0, %v432
  %v434 = vpop.f32.mrb[0].mxu0
  %435 = vdwg.mxu0
  %436 = vmatprep.subr.bf16.mxu0 0
  %437 = vmatpush1.bf16.msra.mxu0 %v294
  %438 = vmatprep.subr.bf16.mxu0 0
  %439 = vmatpush1.bf16.msra.mxu0 %v295
  %440 = vmatprep.subr.bf16.mxu0 0
  %441 = vmatpush1.bf16.msra.mxu0 0
  %442 = vmatprep.subr.bf16.mxu0 0
  %443 = vmatpush1.bf16.msra.mxu0 0
  %444 = vmatprep.subr.bf16.mxu0 0
  %445 = vmatpush1.bf16.msra.mxu0 0
  %446 = vmatprep.subr.bf16.mxu0 0
  %447 = vmatpush1.bf16.msra.mxu0 0
  %448 = vmatprep.subr.bf16.mxu0 0
  %449 = vmatpush1.bf16.msra.mxu0 0
  %450 = vmatprep.subr.bf16.mxu0 0
  %451 = vmatpush1.bf16.msra.mxu0 0
  %452 = vmatprep.subr.bf16.mxu0 0
  %453 = vmatpush1.bf16.msra.mxu0 0
  %454 = vmatprep.subr.bf16.mxu0 0
  %455 = vmatpush1.bf16.msra.mxu0 0
  %456 = vmatprep.subr.bf16.mxu0 0
  %457 = vmatpush1.bf16.msra.mxu0 0
  %458 = vmatprep.subr.bf16.mxu0 0
  %459 = vmatpush1.bf16.msra.mxu0 0
  %460 = vmatprep.subr.bf16.mxu0 0
  %461 = vmatpush1.bf16.msra.mxu0 0
  %462 = vmatprep.subr.bf16.mxu0 0
  %463 = vmatpush1.bf16.msra.mxu0 0
  %464 = vmatprep.subr.bf16.mxu0 0
  %465 = vmatpush1.bf16.msra.mxu0 0
  %466 = vmatprep.subr.bf16.mxu0 0
  %467 = vmatpush1.bf16.msra.mxu0 0
  %468 = vmatprep.mubr.bf16.mxu0 0
  %469 = vmatmul.mubr.bf16.gmra.mrb[0].mxu0 %v316
  %v470 = vpop.f32.mrb[0].mxu0
  %v471 = vadd.f32 %v374, %v470
  %v472 = vpop.f32.mrb[0].mxu0
  %v473 = vpop.f32.mrb[0].mxu0
  %v474 = vadd.f32 %v377, %v473
  %v475 = vpop.f32.mrb[0].mxu0
  %476 = vmatprep.mubr.bf16.mxu0 0
  %477 = vmatmul.mubr.bf16.gmra.mrb[0].mxu0 %v319
  %v478 = vpop.f32.mrb[0].mxu0
  %v479 = vadd.f32 %v382, %v478
  %v480 = vpop.f32.mrb[0].mxu0
  %v481 = vpop.f32.mrb[0].mxu0
  %v482 = vadd.f32 %v385, %v481
  %v483 = vpop.f32.mrb[0].mxu0
  %484 = vmatprep.mubr.bf16.mxu0 0
  %485 = vmatmul.mubr.bf16.gmra.mrb[0].mxu0 %v322
  %v486 = vpop.f32.mrb[0].mxu0
  %v487 = vadd.f32 %v390, %v486
  %v488 = vpop.f32.mrb[0].mxu0
  %v489 = vpop.f32.mrb[0].mxu0
  %v490 = vadd.f32 %v393, %v489
  %v491 = vpop.f32.mrb[0].mxu0
  %492 = vmatprep.mubr.bf16.mxu0 0
  %493 = vmatmul.mubr.bf16.gmra.mrb[0].mxu0 %v325
  %v494 = vpop.f32.mrb[0].mxu0
  %v495 = vadd.f32 %v398, %v494
  %v496 = vpop.f32.mrb[0].mxu0
  %v497 = vpop.f32.mrb[0].mxu0
  %v498 = vadd.f32 %v401, %v497
  %v499 = vpop.f32.mrb[0].mxu0
  %500 = vmatprep.mubr.bf16.mxu0 0
  %501 = vmatmul.mubr.bf16.gmra.mrb[0].mxu0 %v328
  %v502 = vpop.f32.mrb[0].mxu0
  %v503 = vadd.f32 %v406, %v502
  %v504 = vpop.f32.mrb[0].mxu0
  %v505 = vpop.f32.mrb[0].mxu0
  %v506 = vadd.f32 %v409, %v505
  %v507 = vpop.f32.mrb[0].mxu0
  %508 = vmatprep.mubr.bf16.mxu0 0
  %509 = vmatmul.mubr.bf16.gmra.mrb[0].mxu0 %v331
  %v510 = vpop.f32.mrb[0].mxu0
  %v511 = vadd.f32 %v414, %v510
  %v512 = vpop.f32.mrb[0].mxu0
  %v513 = vpop.f32.mrb[0].mxu0
  %v514 = vadd.f32 %v417, %v513
  %v515 = vpop.f32.mrb[0].mxu0
  %516 = vmatprep.mubr.bf16.mxu0 0
  %517 = vmatmul.mubr.bf16.gmra.mrb[0].mxu0 %v334
  %v518 = vpop.f32.mrb[0].mxu0
  %v519 = vadd.f32 %v422, %v518
  %v520 = vpop.f32.mrb[0].mxu0
  %v521 = vpop.f32.mrb[0].mxu0
  %v522 = vadd.f32 %v425, %v521
  %v523 = vpop.f32.mrb[0].mxu0
  %524 = vmatprep.mubr.bf16.mxu0 0
  %525 = vmatmul.mubr.bf16.gmra.mrb[0].mxu0 %v337
  %v526 = vpop.f32.mrb[0].mxu0
  %v527 = vadd.f32 %v430, %v526
  %v528 = vpop.f32.mrb[0].mxu0
  %v529 = vpop.f32.mrb[0].mxu0
  %v530 = vadd.f32 %v433, %v529
  %v531 = vpop.f32.mrb[0].mxu0
  %532 = vdwg.mxu0
  %v533 = vld [vmem:[%s2] sm:$0x1]
  %v535 = vlaneseq
  %v536 = vshrl.u32 %v535, 7
  %v537 = vsub.s32 0, %v536
  %v538 = vrot.slane %v533, %v537
  %v540 = vmul.f32 %v471, %v538
  %v541 = vmul.f32 %v474, %v538
  %v542 = vmul.f32 %v479, %v538
  %v543 = vmul.f32 %v482, %v538
  %v544 = vmul.f32 %v487, %v538
  %v545 = vmul.f32 %v490, %v538
  %v546 = vmul.f32 %v495, %v538
  %v547 = vmul.f32 %v498, %v538
  %v548 = vmul.f32 %v503, %v538
  %v549 = vmul.f32 %v506, %v538
  %v550 = vmul.f32 %v511, %v538
  %v551 = vmul.f32 %v514, %v538
  %v552 = vmul.f32 %v519, %v538
  %v553 = vmul.f32 %v522, %v538
  %v554 = vmul.f32 %v527, %v538
  %v555 = vmul.f32 %v530, %v538
  %v556 = vld [vmem:[%s3] sm:$0x1]
  %v558 = vlaneseq
  %v559 = vshrl.u32 %v558, 7
  %v560 = vsub.s32 0, %v559
  %v561 = vrot.slane %v556, %v560
  %v563 = vadd.f32 %v540, %v561
  %v564 = vadd.f32 %v541, %v561
  %v565 = vadd.f32 %v542, %v561
  %v566 = vadd.f32 %v543, %v561
  %v567 = vadd.f32 %v544, %v561
  %v568 = vadd.f32 %v545, %v561
  %v569 = vadd.f32 %v546, %v561
  %v570 = vadd.f32 %v547, %v561
  %v571 = vadd.f32 %v548, %v561
  %v572 = vadd.f32 %v549, %v561
  %v573 = vadd.f32 %v550, %v561
  %v574 = vadd.f32 %v551, %v561
  %v575 = vadd.f32 %v552, %v561
  %v576 = vadd.f32 %v553, %v561
  %v577 = vadd.f32 %v554, %v561
  %v578 = vadd.f32 %v555, %v561
  %v579 = vmax.f32 %v563, 0.0
  %v580 = vmax.f32 %v564, 0.0
  %v581 = vmax.f32 %v565, 0.0
  %v582 = vmax.f32 %v566, 0.0
  %v583 = vmax.f32 %v567, 0.0
  %v584 = vmax.f32 %v568, 0.0
  %v585 = vmax.f32 %v569, 0.0
  %v586 = vmax.f32 %v570, 0.0
  %v587 = vmax.f32 %v571, 0.0
  %v588 = vmax.f32 %v572, 0.0
  %v589 = vmax.f32 %v573, 0.0
  %v590 = vmax.f32 %v574, 0.0
  %v591 = vmax.f32 %v575, 0.0
  %v592 = vmax.f32 %v576, 0.0
  %v593 = vmax.f32 %v577, 0.0
  %v594 = vmax.f32 %v578, 0.0
  %v595 = vpack.c.bf16 %v580, %v579
  %v596 = vpack.c.bf16 %v582, %v581
  %v597 = vpack.c.bf16 %v584, %v583
  %v598 = vpack.c.bf16 %v586, %v585
  %v599 = vpack.c.bf16 %v588, %v587
  %v600 = vpack.c.bf16 %v590, %v589
  %v601 = vpack.c.bf16 %v592, %v591
  %v602 = vpack.c.bf16 %v594, %v593
  %v611 = vunpack.c.l.b16 %v595
  %v612 = vunpack.c.h.b16 %v595
  %v613 = vunpack.c.l.b16 %v596
  %v614 = vunpack.c.h.b16 %v596
  %v615 = vunpack.c.l.b16 %v597
  %v616 = vunpack.c.h.b16 %v597
  %v617 = vunpack.c.l.b16 %v598
  %v618 = vunpack.c.h.b16 %v598
  %v619 = vunpack.c.l.b16 %v599
  %v620 = vunpack.c.h.b16 %v599
  %v621 = vunpack.c.l.b16 %v600
  %v622 = vunpack.c.h.b16 %v600
  %v623 = vunpack.c.l.b16 %v601
  %v624 = vunpack.c.h.b16 %v601
  %v625 = vunpack.c.l.b16 %v602
  %v626 = vunpack.c.h.b16 %v602
  %v627 = vpack.c.b16 %v611, %v611
  %v628 = vpack.c.b16 %v612, %v612
  %v629 = vpack.c.b16 %v613, %v613
  %v630 = vpack.c.b16 %v614, %v614
  %v631 = vpack.c.b16 %v615, %v615
  %v632 = vpack.c.b16 %v616, %v616
  %v633 = vpack.c.b16 %v617, %v617
  %v634 = vpack.c.b16 %v618, %v618
  %v635 = vpack.c.b16 %v619, %v619
  %v636 = vpack.c.b16 %v620, %v620
  %v637 = vpack.c.b16 %v621, %v621
  %v638 = vpack.c.b16 %v622, %v622
  %v639 = vpack.c.b16 %v623, %v623
  %v640 = vpack.c.b16 %v624, %v624
  %v641 = vpack.c.b16 %v625, %v625
  %v642 = vpack.c.b16 %v626, %v626
  %659 = vst [vmem:[%s4] sm:$0xf] %v627
  %660 = vst [vmem:[%s4 + $0x4] sm:$0xf] %v628
  %661 = vst [vmem:[%s4 + $0x8] sm:$0xf] %v629
  %662 = vst [vmem:[%s4 + $0xc] sm:$0xf] %v630
  %663 = vst [vmem:[%s4 + $0x10] sm:$0xf] %v631
  %664 = vst [vmem:[%s4 + $0x14] sm:$0xf] %v632
  %665 = vst [vmem:[%s4 + $0x18] sm:$0xf] %v633
  %666 = vst [vmem:[%s4 + $0x1c] sm:$0xf] %v634
  %667 = vst [vmem:[%s4 + $0x20] sm:$0xf] %v635
  %668 = vst [vmem:[%s4 + $0x24] sm:$0xf] %v636
  %669 = vst [vmem:[%s4 + $0x28] sm:$0xf] %v637
  %670 = vst [vmem:[%s4 + $0x2c] sm:$0xf] %v638
  %671 = vst [vmem:[%s4 + $0x30] sm:$0xf] %v639
  %672 = vst [vmem:[%s4 + $0x34] sm:$0xf] %v640
  %673 = vst [vmem:[%s4 + $0x38] sm:$0xf] %v641
  %674 = vst [vmem:[%s4 + $0x3c] sm:$0xf] %v642
  // Predicated region
  $region18: #{keypointnet_forward.12} parent=0 // pred_check
    _
  $region19: #{keypointnet_forward.12} parent=0 // pred_check_branch
    %676 = sbr.rel (0) target = $region21
  $region20: #{keypointnet_forward.12} parent=0 // pred_region
    _
  $region21: #{keypointnet_forward.12} parent=0 // pred_fallthru
    _
  // Predicated region
  $region22: #{keypointnet_forward.12} parent=0 // pred_check
    _
  $region23: #{keypointnet_forward.12} parent=0 // pred_check_branch
    %678 = sbr.rel (0) target = $region25
  $region24: #{keypointnet_forward.12} parent=0 // pred_region
    _
  $region25: #{keypointnet_forward.12} parent=0 // pred_fallthru
    _

// kernel: keypointnet_forward.13
$region0: #{keypointnet_forward.13}
  #allocation0 [shape = 'u32[]', space=smem, size = 0x4, offset = 0x4, fixed_abs, tag = 'smem constant byte address 0x4 - core index']
  #allocation1 [shape = 'u32[144,128]{1,0:T(1,128)}', space=vmem, size = 0x12000, scoped, tag = 'internal scratch']
  %s0 = inlined_call_operand.vmem [shape: bf16[512,288], index: 0, kind: input, shape index: {}]
  %s1 = inlined_call_operand.vmem [shape: bf16[288,128], index: 1, kind: input, shape index: {}]
  %s2 = inlined_call_operand.vmem [shape: f32[1,128], index: 2, kind: input, shape index: {}]
  %s3 = inlined_call_operand.vmem [shape: f32[1,128], index: 3, kind: input, shape index: {}]
  %s4 = inlined_call_operand.vmem [shape: bf16[512,128], index: 4, kind: output, shape index: {}]
  %s5 = sld [smem:[#allocation0]]
  $region26: #{keypointnet_forward.13} parent=0
    _
  %s7 = ssub.s32 1, %s5
  %s8 = scalar_select 0, %s7, %s5
  // Predicated region
  $region2: #{keypointnet_forward.13} parent=0 // pred_check
    _
  $region3: #{keypointnet_forward.13} parent=0 // pred_check_branch
    %10 = sbr.rel (0) target = $region5
  $region4: #{keypointnet_forward.13} parent=0 // pred_region
    _
  $region5: #{keypointnet_forward.13} parent=0 // pred_fallthru
    _
  // Predicated region
  $region6: #{keypointnet_forward.13} parent=0 // pred_check
    _
  $region7: #{keypointnet_forward.13} parent=0 // pred_check_branch
    %12 = sbr.rel (0) target = $region9
  $region8: #{keypointnet_forward.13} parent=0 // pred_region
    _
  $region9: #{keypointnet_forward.13} parent=0 // pred_fallthru
    _
  // Predicated region
  $region10: #{keypointnet_forward.13} parent=0 // pred_check
    _
  $region11: #{keypointnet_forward.13} parent=0 // pred_check_branch
    %14 = sbr.rel (0) target = $region13
  $region12: #{keypointnet_forward.13} parent=0 // pred_region
    _
  $region13: #{keypointnet_forward.13} parent=0 // pred_fallthru
    _
  // Predicated region
  $region14: #{keypointnet_forward.13} parent=0 // pred_check
    _
  $region15: #{keypointnet_forward.13} parent=0 // pred_check_branch
    %16 = sbr.rel (0) target = $region17
  $region16: #{keypointnet_forward.13} parent=0 // pred_region
    _
  $region17: #{keypointnet_forward.13} parent=0 // pred_fallthru
    _
  %v18 = vld [vmem:[%s0] sm:$0xff]
  %v19 = vld [vmem:[%s0 + $0x8] sm:$0xf]
  %v20 = vld [vmem:[%s0 + $0xc] sm:$0xff]
  %v21 = vld [vmem:[%s0 + $0x14] sm:$0xf]
  %v22 = vld [vmem:[%s0 + $0x18] sm:$0xff]
  %v23 = vld [vmem:[%s0 + $0x20] sm:$0xf]
  %v24 = vld [vmem:[%s0 + $0x24] sm:$0xff]
  %v25 = vld [vmem:[%s0 + $0x2c] sm:$0xf]
  %v26 = vld [vmem:[%s0 + $0x30] sm:$0xff]
  %v27 = vld [vmem:[%s0 + $0x38] sm:$0xf]
  %v28 = vld [vmem:[%s0 + $0x3c] sm:$0xff]
  %v29 = vld [vmem:[%s0 + $0x44] sm:$0xf]
  %v30 = vld [vmem:[%s0 + $0x48] sm:$0xff]
  %v31 = vld [vmem:[%s0 + $0x50] sm:$0xf]
  %v32 = vld [vmem:[%s0 + $0x54] sm:$0xff]
  %v33 = vld [vmem:[%s0 + $0x5c] sm:$0xf]
  %v34 = vld [vmem:[%s0 + $0x60] sm:$0xff]
  %v35 = vld [vmem:[%s0 + $0x68] sm:$0xf]
  %v36 = vld [vmem:[%s0 + $0x6c] sm:$0xff]
  %v37 = vld [vmem:[%s0 + $0x74] sm:$0xf]
  %v38 = vld [vmem:[%s0 + $0x78] sm:$0xff]
  %v39 = vld [vmem:[%s0 + $0x80] sm:$0xf]
  %v40 = vld [vmem:[%s0 + $0x84] sm:$0xff]
  %v41 = vld [vmem:[%s0 + $0x8c] sm:$0xf]
  %v42 = vld [vmem:[%s0 + $0x90] sm:$0xff]
  %v43 = vld [vmem:[%s0 + $0x98] sm:$0xf]
  %v44 = vld [vmem:[%s0 + $0x9c] sm:$0xff]
  %v45 = vld [vmem:[%s0 + $0xa4] sm:$0xf]
  %v46 = vld [vmem:[%s0 + $0xa8] sm:$0xff]
  %v47 = vld [vmem:[%s0 + $0xb0] sm:$0xf]
  %v48 = vld [vmem:[%s0 + $0xb4] sm:$0xff]
  %v49 = vld [vmem:[%s0 + $0xbc] sm:$0xf]
  %v50 = vld [vmem:[%s0 + $0xc0] sm:$0xff]
  %v51 = vld [vmem:[%s0 + $0xc8] sm:$0xf]
  %v52 = vld [vmem:[%s0 + $0xcc] sm:$0xff]
  %v53 = vld [vmem:[%s0 + $0xd4] sm:$0xf]
  %v54 = vld [vmem:[%s0 + $0xd8] sm:$0xff]
  %v55 = vld [vmem:[%s0 + $0xe0] sm:$0xf]
  %v56 = vld [vmem:[%s0 + $0xe4] sm:$0xff]
  %v57 = vld [vmem:[%s0 + $0xec] sm:$0xf]
  %v58 = vld [vmem:[%s0 + $0xf0] sm:$0xff]
  %v59 = vld [vmem:[%s0 + $0xf8] sm:$0xf]
  %v60 = vld [vmem:[%s0 + $0xfc] sm:$0xff]
  %v61 = vld [vmem:[%s0 + $0x104] sm:$0xf]
  %v62 = vld [vmem:[%s0 + $0x108] sm:$0xff]
  %v63 = vld [vmem:[%s0 + $0x110] sm:$0xf]
  %v64 = vld [vmem:[%s0 + $0x114] sm:$0xff]
  %v65 = vld [vmem:[%s0 + $0x11c] sm:$0xf]
  %v66 = vld [vmem:[%s0 + $0x120] sm:$0xff]
  %v67 = vld [vmem:[%s0 + $0x128] sm:$0xf]
  %v68 = vld [vmem:[%s0 + $0x12c] sm:$0xff]
  %v69 = vld [vmem:[%s0 + $0x134] sm:$0xf]
  %v70 = vld [vmem:[%s0 + $0x138] sm:$0xff]
  %v71 = vld [vmem:[%s0 + $0x140] sm:$0xf]
  %v72 = vld [vmem:[%s0 + $0x144] sm:$0xff]
  %v73 = vld [vmem:[%s0 + $0x14c] sm:$0xf]
  %v74 = vld [vmem:[%s0 + $0x150] sm:$0xff]
  %v75 = vld [vmem:[%s0 + $0x158] sm:$0xf]
  %v76 = vld [vmem:[%s0 + $0x15c] sm:$0xff]
  %v77 = vld [vmem:[%s0 + $0x164] sm:$0xf]
  %v78 = vld [vmem:[%s0 + $0x168] sm:$0xff]
  %v79 = vld [vmem:[%s0 + $0x170] sm:$0xf]
  %v80 = vld [vmem:[%s0 + $0x174] sm:$0xff]
  %v81 = vld [vmem:[%s0 + $0x17c] sm:$0xf]
  %v82 = vld [vmem:[%s0 + $0x180] sm:$0xff]
  %v83 = vld [vmem:[%s0 + $0x188] sm:$0xf]
  %v84 = vld [vmem:[%s0 + $0x18c] sm:$0xff]
  %v85 = vld [vmem:[%s0 + $0x194] sm:$0xf]
  %v86 = vld [vmem:[%s0 + $0x198] sm:$0xff]
  %v87 = vld [vmem:[%s0 + $0x1a0] sm:$0xf]
  %v88 = vld [vmem:[%s0 + $0x1a4] sm:$0xff]
  %v89 = vld [vmem:[%s0 + $0x1ac] sm:$0xf]
  %v90 = vld [vmem:[%s0 + $0x1b0] sm:$0xff]
  %v91 = vld [vmem:[%s0 + $0x1b8] sm:$0xf]
  %v92 = vld [vmem:[%s0 + $0x1bc] sm:$0xff]
  %v93 = vld [vmem:[%s0 + $0x1c4] sm:$0xf]
  %v94 = vld [vmem:[%s0 + $0x1c8] sm:$0xff]
  %v95 = vld [vmem:[%s0 + $0x1d0] sm:$0xf]
  %v96 = vld [vmem:[%s0 + $0x1d4] sm:$0xff]
  %v97 = vld [vmem:[%s0 + $0x1dc] sm:$0xf]
  %v98 = vld [vmem:[%s0 + $0x1e0] sm:$0xff]
  %v99 = vld [vmem:[%s0 + $0x1e8] sm:$0xf]
  %v100 = vld [vmem:[%s0 + $0x1ec] sm:$0xff]
  %v101 = vld [vmem:[%s0 + $0x1f4] sm:$0xf]
  %v102 = vld [vmem:[%s0 + $0x1f8] sm:$0xff]
  %v103 = vld [vmem:[%s0 + $0x200] sm:$0xf]
  %v104 = vld [vmem:[%s0 + $0x204] sm:$0xff]
  %v105 = vld [vmem:[%s0 + $0x20c] sm:$0xf]
  %v106 = vld [vmem:[%s0 + $0x210] sm:$0xff]
  %v107 = vld [vmem:[%s0 + $0x218] sm:$0xf]
  %v108 = vld [vmem:[%s0 + $0x21c] sm:$0xff]
  %v109 = vld [vmem:[%s0 + $0x224] sm:$0xf]
  %v110 = vld [vmem:[%s0 + $0x228] sm:$0xff]
  %v111 = vld [vmem:[%s0 + $0x230] sm:$0xf]
  %v112 = vld [vmem:[%s0 + $0x234] sm:$0xff]
  %v113 = vld [vmem:[%s0 + $0x23c] sm:$0xf]
  %v114 = vld [vmem:[%s0 + $0x240] sm:$0xff]
  %v115 = vld [vmem:[%s0 + $0x248] sm:$0xf]
  %v116 = vld [vmem:[%s0 + $0x24c] sm:$0xff]
  %v117 = vld [vmem:[%s0 + $0x254] sm:$0xf]
  %v118 = vld [vmem:[%s0 + $0x258] sm:$0xff]
  %v119 = vld [vmem:[%s0 + $0x260] sm:$0xf]
  %v120 = vld [vmem:[%s0 + $0x264] sm:$0xff]
  %v121 = vld [vmem:[%s0 + $0x26c] sm:$0xf]
  %v122 = vld [vmem:[%s0 + $0x270] sm:$0xff]
  %v123 = vld [vmem:[%s0 + $0x278] sm:$0xf]
  %v124 = vld [vmem:[%s0 + $0x27c] sm:$0xff]
  %v125 = vld [vmem:[%s0 + $0x284] sm:$0xf]
  %v126 = vld [vmem:[%s0 + $0x288] sm:$0xff]
  %v127 = vld [vmem:[%s0 + $0x290] sm:$0xf]
  %v128 = vld [vmem:[%s0 + $0x294] sm:$0xff]
  %v129 = vld [vmem:[%s0 + $0x29c] sm:$0xf]
  %v130 = vld [vmem:[%s0 + $0x2a0] sm:$0xff]
  %v131 = vld [vmem:[%s0 + $0x2a8] sm:$0xf]
  %v132 = vld [vmem:[%s0 + $0x2ac] sm:$0xff]
  %v133 = vld [vmem:[%s0 + $0x2b4] sm:$0xf]
  %v134 = vld [vmem:[%s0 + $0x2b8] sm:$0xff]
  %v135 = vld [vmem:[%s0 + $0x2c0] sm:$0xf]
  %v136 = vld [vmem:[%s0 + $0x2c4] sm:$0xff]
  %v137 = vld [vmem:[%s0 + $0x2cc] sm:$0xf]
  %v138 = vld [vmem:[%s0 + $0x2d0] sm:$0xff]
  %v139 = vld [vmem:[%s0 + $0x2d8] sm:$0xf]
  %v140 = vld [vmem:[%s0 + $0x2dc] sm:$0xff]
  %v141 = vld [vmem:[%s0 + $0x2e4] sm:$0xf]
  %v142 = vld [vmem:[%s0 + $0x2e8] sm:$0xff]
  %v143 = vld [vmem:[%s0 + $0x2f0] sm:$0xf]
  %v144 = vld [vmem:[%s0 + $0x2f4] sm:$0xff]
  %v145 = vld [vmem:[%s0 + $0x2fc] sm:$0xf]
  %v146 = vld [vmem:[%s1] sm:$0xf]
  %v147 = vld [vmem:[%s1 + $0x4] sm:$0xf]
  %v148 = vld [vmem:[%s1 + $0x8] sm:$0xf]
  %v149 = vld [vmem:[%s1 + $0xc] sm:$0xf]
  %v150 = vld [vmem:[%s1 + $0x10] sm:$0xf]
  %v151 = vld [vmem:[%s1 + $0x14] sm:$0xf]
  %v152 = vld [vmem:[%s1 + $0x18] sm:$0xf]
  %v153 = vld [vmem:[%s1 + $0x1c] sm:$0xf]
  %v154 = vld [vmem:[%s1 + $0x20] sm:$0xf]
  %v155 = vld [vmem:[%s1 + $0x24] sm:$0xf]
  %v156 = vld [vmem:[%s1 + $0x28] sm:$0xf]
  %v157 = vld [vmem:[%s1 + $0x2c] sm:$0xf]
  %v158 = vld [vmem:[%s1 + $0x30] sm:$0xf]
  %v159 = vld [vmem:[%s1 + $0x34] sm:$0xf]
  %v160 = vld [vmem:[%s1 + $0x38] sm:$0xf]
  %v161 = vld [vmem:[%s1 + $0x3c] sm:$0xf]
  %v162 = vld [vmem:[%s1 + $0x40] sm:$0xf]
  %v163 = vld [vmem:[%s1 + $0x44] sm:$0xf]
  %v164 = vld [vmem:[%s1 + $0x48] sm:$0xf]
  %v165 = vld [vmem:[%s1 + $0x4c] sm:$0xf]
  %v166 = vld [vmem:[%s1 + $0x50] sm:$0xf]
  %v167 = vld [vmem:[%s1 + $0x54] sm:$0xf]
  %v168 = vld [vmem:[%s1 + $0x58] sm:$0xf]
  %v169 = vld [vmem:[%s1 + $0x5c] sm:$0xf]
  %v170 = vld [vmem:[%s1 + $0x60] sm:$0xf]
  %v171 = vld [vmem:[%s1 + $0x64] sm:$0xf]
  %v172 = vld [vmem:[%s1 + $0x68] sm:$0xf]
  %v173 = vld [vmem:[%s1 + $0x6c] sm:$0xf]
  %v174 = vld [vmem:[%s1 + $0x70] sm:$0xf]
  %v175 = vld [vmem:[%s1 + $0x74] sm:$0xf]
  %v176 = vld [vmem:[%s1 + $0x78] sm:$0xf]
  %v177 = vld [vmem:[%s1 + $0x7c] sm:$0xf]
  %v178 = vld [vmem:[%s1 + $0x80] sm:$0xf]
  %v179 = vld [vmem:[%s1 + $0x84] sm:$0xf]
  %v180 = vld [vmem:[%s1 + $0x88] sm:$0xf]
  %v181 = vld [vmem:[%s1 + $0x8c] sm:$0xf]
  %v310 = vunpack.c.l.b16 %v18
  %v311 = vunpack.c.h.b16 %v18
  %v312 = vunpack.c.l.b16 %v19
  %v313 = vunpack.c.l.b16 %v20
  %v314 = vunpack.c.h.b16 %v20
  %v315 = vunpack.c.l.b16 %v21
  %v316 = vunpack.c.l.b16 %v22
  %v317 = vunpack.c.h.b16 %v22
  %v318 = vunpack.c.l.b16 %v23
  %v319 = vunpack.c.l.b16 %v24
  %v320 = vunpack.c.h.b16 %v24
  %v321 = vunpack.c.l.b16 %v25
  %v322 = vunpack.c.l.b16 %v26
  %v323 = vunpack.c.h.b16 %v26
  %v324 = vunpack.c.l.b16 %v27
  %v325 = vunpack.c.l.b16 %v28
  %v326 = vunpack.c.h.b16 %v28
  %v327 = vunpack.c.l.b16 %v29
  %v328 = vunpack.c.l.b16 %v30
  %v329 = vunpack.c.h.b16 %v30
  %v330 = vunpack.c.l.b16 %v31
  %v331 = vunpack.c.l.b16 %v32
  %v332 = vunpack.c.h.b16 %v32
  %v333 = vunpack.c.l.b16 %v33
  %v334 = vunpack.c.l.b16 %v34
  %v335 = vunpack.c.h.b16 %v34
  %v336 = vunpack.c.l.b16 %v35
  %v337 = vunpack.c.l.b16 %v36
  %v338 = vunpack.c.h.b16 %v36
  %v339 = vunpack.c.l.b16 %v37
  %v340 = vunpack.c.l.b16 %v38
  %v341 = vunpack.c.h.b16 %v38
  %v342 = vunpack.c.l.b16 %v39
  %v343 = vunpack.c.l.b16 %v40
  %v344 = vunpack.c.h.b16 %v40
  %v345 = vunpack.c.l.b16 %v41
  %v346 = vunpack.c.l.b16 %v42
  %v347 = vunpack.c.h.b16 %v42
  %v348 = vunpack.c.l.b16 %v43
  %v349 = vunpack.c.l.b16 %v44
  %v350 = vunpack.c.h.b16 %v44
  %v351 = vunpack.c.l.b16 %v45
  %v352 = vunpack.c.l.b16 %v46
  %v353 = vunpack.c.h.b16 %v46
  %v354 = vunpack.c.l.b16 %v47
  %v355 = vunpack.c.l.b16 %v48
  %v356 = vunpack.c.h.b16 %v48
  %v357 = vunpack.c.l.b16 %v49
  %v358 = vunpack.c.l.b16 %v50
  %v359 = vunpack.c.h.b16 %v50
  %v360 = vunpack.c.l.b16 %v51
  %v361 = vunpack.c.l.b16 %v52
  %v362 = vunpack.c.h.b16 %v52
  %v363 = vunpack.c.l.b16 %v53
  %v364 = vunpack.c.l.b16 %v54
  %v365 = vunpack.c.h.b16 %v54
  %v366 = vunpack.c.l.b16 %v55
  %v367 = vunpack.c.l.b16 %v56
  %v368 = vunpack.c.h.b16 %v56
  %v369 = vunpack.c.l.b16 %v57
  %v370 = vunpack.c.l.b16 %v58
  %v371 = vunpack.c.h.b16 %v58
  %v372 = vunpack.c.l.b16 %v59
  %v373 = vunpack.c.l.b16 %v60
  %v374 = vunpack.c.h.b16 %v60
  %v375 = vunpack.c.l.b16 %v61
  %v376 = vunpack.c.l.b16 %v62
  %v377 = vunpack.c.h.b16 %v62
  %v378 = vunpack.c.l.b16 %v63
  %v379 = vunpack.c.l.b16 %v64
  %v380 = vunpack.c.h.b16 %v64
  %v381 = vunpack.c.l.b16 %v65
  %v382 = vunpack.c.l.b16 %v66
  %v383 = vunpack.c.h.b16 %v66
  %v384 = vunpack.c.l.b16 %v67
  %v385 = vunpack.c.l.b16 %v68
  %v386 = vunpack.c.h.b16 %v68
  %v387 = vunpack.c.l.b16 %v69
  %v388 = vunpack.c.l.b16 %v70
  %v389 = vunpack.c.h.b16 %v70
  %v390 = vunpack.c.l.b16 %v71
  %v391 = vunpack.c.l.b16 %v72
  %v392 = vunpack.c.h.b16 %v72
  %v393 = vunpack.c.l.b16 %v73
  %v394 = vunpack.c.l.b16 %v74
  %v395 = vunpack.c.h.b16 %v74
  %v396 = vunpack.c.l.b16 %v75
  %v397 = vunpack.c.l.b16 %v76
  %v398 = vunpack.c.h.b16 %v76
  %v399 = vunpack.c.l.b16 %v77
  %v400 = vunpack.c.l.b16 %v78
  %v401 = vunpack.c.h.b16 %v78
  %v402 = vunpack.c.l.b16 %v79
  %v403 = vunpack.c.l.b16 %v80
  %v404 = vunpack.c.h.b16 %v80
  %v405 = vunpack.c.l.b16 %v81
  %v406 = vunpack.c.l.b16 %v82
  %v407 = vunpack.c.h.b16 %v82
  %v408 = vunpack.c.l.b16 %v83
  %v409 = vunpack.c.l.b16 %v84
  %v410 = vunpack.c.h.b16 %v84
  %v411 = vunpack.c.l.b16 %v85
  %v412 = vunpack.c.l.b16 %v86
  %v413 = vunpack.c.h.b16 %v86
  %v414 = vunpack.c.l.b16 %v87
  %v415 = vunpack.c.l.b16 %v88
  %v416 = vunpack.c.h.b16 %v88
  %v417 = vunpack.c.l.b16 %v89
  %v418 = vunpack.c.l.b16 %v90
  %v419 = vunpack.c.h.b16 %v90
  %v420 = vunpack.c.l.b16 %v91
  %v421 = vunpack.c.l.b16 %v92
  %v422 = vunpack.c.h.b16 %v92
  %v423 = vunpack.c.l.b16 %v93
  %v424 = vunpack.c.l.b16 %v94
  %v425 = vunpack.c.h.b16 %v94
  %v426 = vunpack.c.l.b16 %v95
  %v427 = vunpack.c.l.b16 %v96
  %v428 = vunpack.c.h.b16 %v96
  %v429 = vunpack.c.l.b16 %v97
  %v430 = vunpack.c.l.b16 %v98
  %v431 = vunpack.c.h.b16 %v98
  %v432 = vunpack.c.l.b16 %v99
  %v433 = vunpack.c.l.b16 %v100
  %v434 = vunpack.c.h.b16 %v100
  %v435 = vunpack.c.l.b16 %v101
  %v436 = vunpack.c.l.b16 %v102
  %v437 = vunpack.c.h.b16 %v102
  %v438 = vunpack.c.l.b16 %v103
  %v439 = vunpack.c.l.b16 %v104
  %v440 = vunpack.c.h.b16 %v104
  %v441 = vunpack.c.l.b16 %v105
  %v442 = vunpack.c.l.b16 %v106
  %v443 = vunpack.c.h.b16 %v106
  %v444 = vunpack.c.l.b16 %v107
  %v445 = vunpack.c.l.b16 %v108
  %v446 = vunpack.c.h.b16 %v108
  %v447 = vunpack.c.l.b16 %v109
  %v448 = vunpack.c.l.b16 %v110
  %v449 = vunpack.c.h.b16 %v110
  %v450 = vunpack.c.l.b16 %v111
  %v451 = vunpack.c.l.b16 %v112
  %v452 = vunpack.c.h.b16 %v112
  %v453 = vunpack.c.l.b16 %v113
  %v454 = vunpack.c.l.b16 %v114
  %v455 = vunpack.c.h.b16 %v114
  %v456 = vunpack.c.l.b16 %v115
  %v457 = vunpack.c.l.b16 %v116
  %v458 = vunpack.c.h.b16 %v116
  %v459 = vunpack.c.l.b16 %v117
  %v460 = vunpack.c.l.b16 %v118
  %v461 = vunpack.c.h.b16 %v118
  %v462 = vunpack.c.l.b16 %v119
  %v463 = vunpack.c.l.b16 %v120
  %v464 = vunpack.c.h.b16 %v120
  %v465 = vunpack.c.l.b16 %v121
  %v466 = vunpack.c.l.b16 %v122
  %v467 = vunpack.c.h.b16 %v122
  %v468 = vunpack.c.l.b16 %v123
  %v469 = vunpack.c.l.b16 %v124
  %v470 = vunpack.c.h.b16 %v124
  %v471 = vunpack.c.l.b16 %v125
  %v472 = vunpack.c.l.b16 %v126
  %v473 = vunpack.c.h.b16 %v126
  %v474 = vunpack.c.l.b16 %v127
  %v475 = vunpack.c.l.b16 %v128
  %v476 = vunpack.c.h.b16 %v128
  %v477 = vunpack.c.l.b16 %v129
  %v478 = vunpack.c.l.b16 %v130
  %v479 = vunpack.c.h.b16 %v130
  %v480 = vunpack.c.l.b16 %v131
  %v481 = vunpack.c.l.b16 %v132
  %v482 = vunpack.c.h.b16 %v132
  %v483 = vunpack.c.l.b16 %v133
  %v484 = vunpack.c.l.b16 %v134
  %v485 = vunpack.c.h.b16 %v134
  %v486 = vunpack.c.l.b16 %v135
  %v487 = vunpack.c.l.b16 %v136
  %v488 = vunpack.c.h.b16 %v136
  %v489 = vunpack.c.l.b16 %v137
  %v490 = vunpack.c.l.b16 %v138
  %v491 = vunpack.c.h.b16 %v138
  %v492 = vunpack.c.l.b16 %v139
  %v493 = vunpack.c.l.b16 %v140
  %v494 = vunpack.c.h.b16 %v140
  %v495 = vunpack.c.l.b16 %v141
  %v496 = vunpack.c.l.b16 %v142
  %v497 = vunpack.c.h.b16 %v142
  %v498 = vunpack.c.l.b16 %v143
  %v499 = vunpack.c.l.b16 %v144
  %v500 = vunpack.c.h.b16 %v144
  %v501 = vunpack.c.l.b16 %v145
  %v502 = vpack.c.b16 %v313, %v310
  %v503 = vpack.c.b16 %v314, %v311
  %v504 = vpack.c.b16 %v315, %v312
  %v505 = vpack.c.b16 %v319, %v316
  %v506 = vpack.c.b16 %v320, %v317
  %v507 = vpack.c.b16 %v321, %v318
  %v508 = vpack.c.b16 %v325, %v322
  %v509 = vpack.c.b16 %v326, %v323
  %v510 = vpack.c.b16 %v327, %v324
  %v511 = vpack.c.b16 %v331, %v328
  %v512 = vpack.c.b16 %v332, %v329
  %v513 = vpack.c.b16 %v333, %v330
  %v514 = vpack.c.b16 %v337, %v334
  %v515 = vpack.c.b16 %v338, %v335
  %v516 = vpack.c.b16 %v339, %v336
  %v517 = vpack.c.b16 %v343, %v340
  %v518 = vpack.c.b16 %v344, %v341
  %v519 = vpack.c.b16 %v345, %v342
  %v520 = vpack.c.b16 %v349, %v346
  %v521 = vpack.c.b16 %v350, %v347
  %v522 = vpack.c.b16 %v351, %v348
  %v523 = vpack.c.b16 %v355, %v352
  %v524 = vpack.c.b16 %v356, %v353
  %v525 = vpack.c.b16 %v357, %v354
  %v526 = vpack.c.b16 %v361, %v358
  %v527 = vpack.c.b16 %v362, %v359
  %v528 = vpack.c.b16 %v363, %v360
  %v529 = vpack.c.b16 %v367, %v364
  %v530 = vpack.c.b16 %v368, %v365
  %v531 = vpack.c.b16 %v369, %v366
  %v532 = vpack.c.b16 %v373, %v370
  %v533 = vpack.c.b16 %v374, %v371
  %v534 = vpack.c.b16 %v375, %v372
  %v535 = vpack.c.b16 %v379, %v376
  %v536 = vpack.c.b16 %v380, %v377
  %v537 = vpack.c.b16 %v381, %v378
  %v538 = vpack.c.b16 %v385, %v382
  %v539 = vpack.c.b16 %v386, %v383
  %v540 = vpack.c.b16 %v387, %v384
  %v541 = vpack.c.b16 %v391, %v388
  %v542 = vpack.c.b16 %v392, %v389
  %v543 = vpack.c.b16 %v393, %v390
  %v544 = vpack.c.b16 %v397, %v394
  %v545 = vpack.c.b16 %v398, %v395
  %v546 = vpack.c.b16 %v399, %v396
  %v547 = vpack.c.b16 %v403, %v400
  %v548 = vpack.c.b16 %v404, %v401
  %v549 = vpack.c.b16 %v405, %v402
  %v550 = vpack.c.b16 %v409, %v406
  %v551 = vpack.c.b16 %v410, %v407
  %v552 = vpack.c.b16 %v411, %v408
  %v553 = vpack.c.b16 %v415, %v412
  %v554 = vpack.c.b16 %v416, %v413
  %v555 = vpack.c.b16 %v417, %v414
  %v556 = vpack.c.b16 %v421, %v418
  %v557 = vpack.c.b16 %v422, %v419
  %v558 = vpack.c.b16 %v423, %v420
  %v559 = vpack.c.b16 %v427, %v424
  %v560 = vpack.c.b16 %v428, %v425
  %v561 = vpack.c.b16 %v429, %v426
  %v562 = vpack.c.b16 %v433, %v430
  %v563 = vpack.c.b16 %v434, %v431
  %v564 = vpack.c.b16 %v435, %v432
  %v565 = vpack.c.b16 %v439, %v436
  %v566 = vpack.c.b16 %v440, %v437
  %v567 = vpack.c.b16 %v441, %v438
  %v568 = vpack.c.b16 %v445, %v442
  %v569 = vpack.c.b16 %v446, %v443
  %v570 = vpack.c.b16 %v447, %v444
  %v571 = vpack.c.b16 %v451, %v448
  %v572 = vpack.c.b16 %v452, %v449
  %v573 = vpack.c.b16 %v453, %v450
  %v574 = vpack.c.b16 %v457, %v454
  %v575 = vpack.c.b16 %v458, %v455
  %v576 = vpack.c.b16 %v459, %v456
  %v577 = vpack.c.b16 %v463, %v460
  %v578 = vpack.c.b16 %v464, %v461
  %v579 = vpack.c.b16 %v465, %v462
  %v580 = vpack.c.b16 %v469, %v466
  %v581 = vpack.c.b16 %v470, %v467
  %v582 = vpack.c.b16 %v471, %v468
  %v583 = vpack.c.b16 %v475, %v472
  %v584 = vpack.c.b16 %v476, %v473
  %v585 = vpack.c.b16 %v477, %v474
  %v586 = vpack.c.b16 %v481, %v478
  %v587 = vpack.c.b16 %v482, %v479
  %v588 = vpack.c.b16 %v483, %v480
  %v589 = vpack.c.b16 %v487, %v484
  %v590 = vpack.c.b16 %v488, %v485
  %v591 = vpack.c.b16 %v489, %v486
  %v592 = vpack.c.b16 %v493, %v490
  %v593 = vpack.c.b16 %v494, %v491
  %v594 = vpack.c.b16 %v495, %v492
  %v595 = vpack.c.b16 %v499, %v496
  %v596 = vpack.c.b16 %v500, %v497
  %v597 = vpack.c.b16 %v501, %v498
  %v698 = vunpack.c.l.b16 %v146
  %v699 = vunpack.c.l.b16 %v147
  %v700 = vunpack.c.l.b16 %v148
  %v701 = vunpack.c.l.b16 %v149
  %v702 = vunpack.c.l.b16 %v150
  %v703 = vunpack.c.l.b16 %v151
  %v704 = vunpack.c.l.b16 %v152
  %v705 = vunpack.c.l.b16 %v153
  %v706 = vunpack.c.l.b16 %v154
  %v707 = vunpack.c.l.b16 %v155
  %v708 = vunpack.c.l.b16 %v156
  %v709 = vunpack.c.l.b16 %v157
  %v710 = vunpack.c.l.b16 %v158
  %v711 = vunpack.c.l.b16 %v159
  %v712 = vunpack.c.l.b16 %v160
  %v713 = vunpack.c.l.b16 %v161
  %v714 = vunpack.c.l.b16 %v162
  %v715 = vunpack.c.l.b16 %v163
  %v716 = vunpack.c.l.b16 %v164
  %v717 = vunpack.c.l.b16 %v165
  %v718 = vunpack.c.l.b16 %v166
  %v719 = vunpack.c.l.b16 %v167
  %v720 = vunpack.c.l.b16 %v168
  %v721 = vunpack.c.l.b16 %v169
  %v722 = vunpack.c.l.b16 %v170
  %v723 = vunpack.c.l.b16 %v171
  %v724 = vunpack.c.l.b16 %v172
  %v725 = vunpack.c.l.b16 %v173
  %v726 = vunpack.c.l.b16 %v174
  %v727 = vunpack.c.l.b16 %v175
  %v728 = vunpack.c.l.b16 %v176
  %v729 = vunpack.c.l.b16 %v177
  %v730 = vunpack.c.l.b16 %v178
  %v731 = vunpack.c.l.b16 %v179
  %v732 = vunpack.c.l.b16 %v180
  %v733 = vunpack.c.l.b16 %v181
  %v734 = vpack.c.b16 %v699, %v698
  %v735 = vpack.c.b16 %v701, %v700
  %v736 = vpack.c.b16 %v703, %v702
  %v737 = vpack.c.b16 %v705, %v704
  %v738 = vpack.c.b16 %v707, %v706
  %v739 = vpack.c.b16 %v709, %v708
  %v740 = vpack.c.b16 %v711, %v710
  %v741 = vpack.c.b16 %v713, %v712
  %v742 = vpack.c.b16 %v715, %v714
  %v743 = vpack.c.b16 %v717, %v716
  %v744 = vpack.c.b16 %v719, %v718
  %v745 = vpack.c.b16 %v721, %v720
  %v746 = vpack.c.b16 %v723, %v722
  %v747 = vpack.c.b16 %v725, %v724
  %v748 = vpack.c.b16 %v727, %v726
  %v749 = vpack.c.b16 %v729, %v728
  %v750 = vpack.c.b16 %v731, %v730
  %v751 = vpack.c.b16 %v733, %v732
  %vm770 = vcmask 261120
  %v772 = vsel %vm770, %v504, 0
  %v775 = vsel %vm770, %v507, 0
  %v778 = vsel %vm770, %v510, 0
  %v781 = vsel %vm770, %v513, 0
  %v784 = vsel %vm770, %v516, 0
  %v787 = vsel %vm770, %v519, 0
  %v790 = vsel %vm770, %v522, 0
  %v793 = vsel %vm770, %v525, 0
  %v796 = vsel %vm770, %v528, 0
  %v799 = vsel %vm770, %v531, 0
  %v802 = vsel %vm770, %v534, 0
  %v805 = vsel %vm770, %v537, 0
  %v808 = vsel %vm770, %v540, 0
  %v811 = vsel %vm770, %v543, 0
  %v814 = vsel %vm770, %v546, 0
  %v817 = vsel %vm770, %v549, 0
  %v820 = vsel %vm770, %v552, 0
  %v823 = vsel %vm770, %v555, 0
  %v826 = vsel %vm770, %v558, 0
  %v829 = vsel %vm770, %v561, 0
  %v832 = vsel %vm770, %v564, 0
  %v835 = vsel %vm770, %v567, 0
  %v838 = vsel %vm770, %v570, 0
  %v841 = vsel %vm770, %v573, 0
  %v844 = vsel %vm770, %v576, 0
  %v847 = vsel %vm770, %v579, 0
  %v850 = vsel %vm770, %v582, 0
  %v853 = vsel %vm770, %v585, 0
  %v856 = vsel %vm770, %v588, 0
  %v859 = vsel %vm770, %v591, 0
  %v862 = vsel %vm770, %v594, 0
  %v865 = vsel %vm770, %v597, 0
  %867 = vmatprep.subr.bf16.mxu0 0
  %868 = vmatpush1.bf16.msra.mxu0 %v734
  %869 = vmatprep.subr.bf16.mxu0 0
  %870 = vmatpush1.bf16.msra.mxu0 %v735
  %871 = vmatprep.subr.bf16.mxu0 0
  %872 = vmatpush1.bf16.msra.mxu0 %v736
  %873 = vmatprep.subr.bf16.mxu0 0
  %874 = vmatpush1.bf16.msra.mxu0 %v737
  %875 = vmatprep.subr.bf16.mxu0 0
  %876 = vmatpush1.bf16.msra.mxu0 %v738
  %877 = vmatprep.subr.bf16.mxu0 0
  %878 = vmatpush1.bf16.msra.mxu0 %v739
  %879 = vmatprep.subr.bf16.mxu0 0
  %880 = vmatpush1.bf16.msra.mxu0 %v740
  %881 = vmatprep.subr.bf16.mxu0 0
  %882 = vmatpush1.bf16.msra.mxu0 %v741
  %883 = vmatprep.subr.bf16.mxu0 0
  %884 = vmatpush1.bf16.msra.mxu0 %v742
  %885 = vmatprep.subr.bf16.mxu0 0
  %886 = vmatpush1.bf16.msra.mxu0 %v743
  %887 = vmatprep.subr.bf16.mxu0 0
  %888 = vmatpush1.bf16.msra.mxu0 %v744
  %889 = vmatprep.subr.bf16.mxu0 0
  %890 = vmatpush1.bf16.msra.mxu0 %v745
  %891 = vmatprep.subr.bf16.mxu0 0
  %892 = vmatpush1.bf16.msra.mxu0 %v746
  %893 = vmatprep.subr.bf16.mxu0 0
  %894 = vmatpush1.bf16.msra.mxu0 %v747
  %895 = vmatprep.subr.bf16.mxu0 0
  %896 = vmatpush1.bf16.msra.mxu0 %v748
  %897 = vmatprep.subr.bf16.mxu0 0
  %898 = vmatpush1.bf16.msra.mxu0 %v749
  %899 = vmatprep.mubr.bf16.mxu0 %v503
  %900 = vmatmul.mubr.bf16.gmra.mrb[0].mxu0 %v502
  %v901 = vpop.f32.mrb[0].mxu0
  %v902 = vadd.f32 0.0, %v901
  %v903 = vpop.f32.mrb[0].mxu0
  %v904 = vpop.f32.mrb[0].mxu0
  %v905 = vadd.f32 0.0, %v904
  %v906 = vpop.f32.mrb[0].mxu0
  %907 = vmatprep.mubr.bf16.mxu0 %v506
  %908 = vmatmul.mubr.bf16.gmra.mrb[0].mxu0 %v505
  %v909 = vpop.f32.mrb[0].mxu0
  %v910 = vadd.f32 0.0, %v909
  %v911 = vpop.f32.mrb[0].mxu0
  %v912 = vpop.f32.mrb[0].mxu0
  %v913 = vadd.f32 0.0, %v912
  %v914 = vpop.f32.mrb[0].mxu0
  %915 = vmatprep.mubr.bf16.mxu0 %v509
  %916 = vmatmul.mubr.bf16.gmra.mrb[0].mxu0 %v508
  %v917 = vpop.f32.mrb[0].mxu0
  %v918 = vadd.f32 0.0, %v917
  %v919 = vpop.f32.mrb[0].mxu0
  %v920 = vpop.f32.mrb[0].mxu0
  %v921 = vadd.f32 0.0, %v920
  %v922 = vpop.f32.mrb[0].mxu0
  %923 = vmatprep.mubr.bf16.mxu0 %v512
  %924 = vmatmul.mubr.bf16.gmra.mrb[0].mxu0 %v511
  %v925 = vpop.f32.mrb[0].mxu0
  %v926 = vadd.f32 0.0, %v925
  %v927 = vpop.f32.mrb[0].mxu0
  %v928 = vpop.f32.mrb[0].mxu0
  %v929 = vadd.f32 0.0, %v928
  %v930 = vpop.f32.mrb[0].mxu0
  %931 = vmatprep.mubr.bf16.mxu0 %v515
  %932 = vmatmul.mubr.bf16.gmra.mrb[0].mxu0 %v514
  %v933 = vpop.f32.mrb[0].mxu0
  %v934 = vadd.f32 0.0, %v933
  %v935 = vpop.f32.mrb[0].mxu0
  %v936 = vpop.f32.mrb[0].mxu0
  %v937 = vadd.f32 0.0, %v936
  %v938 = vpop.f32.mrb[0].mxu0
  %939 = vmatprep.mubr.bf16.mxu0 %v518
  %940 = vmatmul.mubr.bf16.gmra.mrb[0].mxu0 %v517
  %v941 = vpop.f32.mrb[0].mxu0
  %v942 = vadd.f32 0.0, %v941
  %v943 = vpop.f32.mrb[0].mxu0
  %v944 = vpop.f32.mrb[0].mxu0
  %v945 = vadd.f32 0.0, %v944
  %v946 = vpop.f32.mrb[0].mxu0
  %947 = vmatprep.mubr.bf16.mxu0 %v521
  %948 = vmatmul.mubr.bf16.gmra.mrb[0].mxu0 %v520
  %v949 = vpop.f32.mrb[0].mxu0
  %v950 = vadd.f32 0.0, %v949
  %v951 = vpop.f32.mrb[0].mxu0
  %v952 = vpop.f32.mrb[0].mxu0
  %v953 = vadd.f32 0.0, %v952
  %v954 = vpop.f32.mrb[0].mxu0
  %955 = vmatprep.mubr.bf16.mxu0 %v524
  %956 = vmatmul.mubr.bf16.gmra.mrb[0].mxu0 %v523
  %v957 = vpop.f32.mrb[0].mxu0
  %v958 = vadd.f32 0.0, %v957
  %v959 = vpop.f32.mrb[0].mxu0
  %v960 = vpop.f32.mrb[0].mxu0
  %v961 = vadd.f32 0.0, %v960
  %v962 = vpop.f32.mrb[0].mxu0
  %963 = vmatprep.mubr.bf16.mxu0 %v527
  %964 = vmatmul.mubr.bf16.gmra.mrb[0].mxu0 %v526
  %v965 = vpop.f32.mrb[0].mxu0
  %v966 = vadd.f32 0.0, %v965
  %v967 = vpop.f32.mrb[0].mxu0
  %v968 = vpop.f32.mrb[0].mxu0
  %v969 = vadd.f32 0.0, %v968
  %v970 = vpop.f32.mrb[0].mxu0
  %971 = vmatprep.mubr.bf16.mxu0 %v530
  %972 = vmatmul.mubr.bf16.gmra.mrb[0].mxu0 %v529
  %v973 = vpop.f32.mrb[0].mxu0
  %v974 = vadd.f32 0.0, %v973
  %v975 = vpop.f32.mrb[0].mxu0
  %v976 = vpop.f32.mrb[0].mxu0
  %v977 = vadd.f32 0.0, %v976
  %v978 = vpop.f32.mrb[0].mxu0
  %979 = vmatprep.mubr.bf16.mxu0 %v533
  %980 = vmatmul.mubr.bf16.gmra.mrb[0].mxu0 %v532
  %v981 = vpop.f32.mrb[0].mxu0
  %v982 = vadd.f32 0.0, %v981
  %v983 = vpop.f32.mrb[0].mxu0
  %v984 = vpop.f32.mrb[0].mxu0
  %v985 = vadd.f32 0.0, %v984
  %v986 = vpop.f32.mrb[0].mxu0
  %987 = vmatprep.mubr.bf16.mxu0 %v536
  %988 = vmatmul.mubr.bf16.gmra.mrb[0].mxu0 %v535
  %v989 = vpop.f32.mrb[0].mxu0
  %v990 = vadd.f32 0.0, %v989
  %v991 = vpop.f32.mrb[0].mxu0
  %v992 = vpop.f32.mrb[0].mxu0
  %v993 = vadd.f32 0.0, %v992
  %v994 = vpop.f32.mrb[0].mxu0
  %995 = vmatprep.mubr.bf16.mxu0 %v539
  %996 = vmatmul.mubr.bf16.gmra.mrb[0].mxu0 %v538
  %v997 = vpop.f32.mrb[0].mxu0
  %v998 = vadd.f32 0.0, %v997
  %v999 = vpop.f32.mrb[0].mxu0
  %v1000 = vpop.f32.mrb[0].mxu0
  %v1001 = vadd.f32 0.0, %v1000
  %v1002 = vpop.f32.mrb[0].mxu0
  %1003 = vmatprep.mubr.bf16.mxu0 %v542
  %1004 = vmatmul.mubr.bf16.gmra.mrb[0].mxu0 %v541
  %v1005 = vpop.f32.mrb[0].mxu0
  %v1006 = vadd.f32 0.0, %v1005
  %v1007 = vpop.f32.mrb[0].mxu0
  %v1008 = vpop.f32.mrb[0].mxu0
  %v1009 = vadd.f32 0.0, %v1008
  %v1010 = vpop.f32.mrb[0].mxu0
  %1011 = vmatprep.mubr.bf16.mxu0 %v545
  %1012 = vmatmul.mubr.bf16.gmra.mrb[0].mxu0 %v544
  %v1013 = vpop.f32.mrb[0].mxu0
  %v1014 = vadd.f32 0.0, %v1013
  %v1015 = vpop.f32.mrb[0].mxu0
  %v1016 = vpop.f32.mrb[0].mxu0
  %v1017 = vadd.f32 0.0, %v1016
  %v1018 = vpop.f32.mrb[0].mxu0
  %1019 = vmatprep.mubr.bf16.mxu0 %v548
  %1020 = vmatmul.mubr.bf16.gmra.mrb[0].mxu0 %v547
  %v1021 = vpop.f32.mrb[0].mxu0
  %v1022 = vadd.f32 0.0, %v1021
  %v1023 = vpop.f32.mrb[0].mxu0
  %v1024 = vpop.f32.mrb[0].mxu0
  %v1025 = vadd.f32 0.0, %v1024
  %v1026 = vpop.f32.mrb[0].mxu0
  %1027 = vmatprep.mubr.bf16.mxu0 %v551
  %1028 = vmatmul.mubr.bf16.gmra.mrb[0].mxu0 %v550
  %v1029 = vpop.f32.mrb[0].mxu0
  %v1030 = vadd.f32 0.0, %v1029
  %v1031 = vpop.f32.mrb[0].mxu0
  %v1032 = vpop.f32.mrb[0].mxu0
  %v1033 = vadd.f32 0.0, %v1032
  %v1034 = vpop.f32.mrb[0].mxu0
  %1035 = vmatprep.mubr.bf16.mxu0 %v554
  %1036 = vmatmul.mubr.bf16.gmra.mrb[0].mxu0 %v553
  %v1037 = vpop.f32.mrb[0].mxu0
  %v1038 = vadd.f32 0.0, %v1037
  %v1039 = vpop.f32.mrb[0].mxu0
  %v1040 = vpop.f32.mrb[0].mxu0
  %v1041 = vadd.f32 0.0, %v1040
  %v1042 = vpop.f32.mrb[0].mxu0
  %1043 = vmatprep.mubr.bf16.mxu0 %v557
  %1044 = vmatmul.mubr.bf16.gmra.mrb[0].mxu0 %v556
  %v1045 = vpop.f32.mrb[0].mxu0
  %v1046 = vadd.f32 0.0, %v1045
  %v1047 = vpop.f32.mrb[0].mxu0
  %v1048 = vpop.f32.mrb[0].mxu0
  %v1049 = vadd.f32 0.0, %v1048
  %v1050 = vpop.f32.mrb[0].mxu0
  %1051 = vmatprep.mubr.bf16.mxu0 %v560
  %1052 = vmatmul.mubr.bf16.gmra.mrb[0].mxu0 %v559
  %v1053 = vpop.f32.mrb[0].mxu0
  %v1054 = vadd.f32 0.0, %v1053
  %v1055 = vpop.f32.mrb[0].mxu0
  %v1056 = vpop.f32.mrb[0].mxu0
  %v1057 = vadd.f32 0.0, %v1056
  %v1058 = vpop.f32.mrb[0].mxu0
  %1059 = vmatprep.mubr.bf16.mxu0 %v563
  %1060 = vmatmul.mubr.bf16.gmra.mrb[0].mxu0 %v562
  %v1061 = vpop.f32.mrb[0].mxu0
  %v1062 = vadd.f32 0.0, %v1061
  %v1063 = vpop.f32.mrb[0].mxu0
  %v1064 = vpop.f32.mrb[0].mxu0
  %v1065 = vadd.f32 0.0, %v1064
  %v1066 = vpop.f32.mrb[0].mxu0
  %1067 = vmatprep.mubr.bf16.mxu0 %v566
  %1068 = vmatmul.mubr.bf16.gmra.mrb[0].mxu0 %v565
  %v1069 = vpop.f32.mrb[0].mxu0
  %v1070 = vadd.f32 0.0, %v1069
  %v1071 = vpop.f32.mrb[0].mxu0
  %v1072 = vpop.f32.mrb[0].mxu0
  %v1073 = vadd.f32 0.0, %v1072
  %v1074 = vpop.f32.mrb[0].mxu0
  %1075 = vmatprep.mubr.bf16.mxu0 %v569
  %1076 = vmatmul.mubr.bf16.gmra.mrb[0].mxu0 %v568
  %v1077 = vpop.f32.mrb[0].mxu0
  %v1078 = vadd.f32 0.0, %v1077
  %v1079 = vpop.f32.mrb[0].mxu0
  %v1080 = vpop.f32.mrb[0].mxu0
  %v1081 = vadd.f32 0.0, %v1080
  %v1082 = vpop.f32.mrb[0].mxu0
  %1083 = vmatprep.mubr.bf16.mxu0 %v572
  %1084 = vmatmul.mubr.bf16.gmra.mrb[0].mxu0 %v571
  %v1085 = vpop.f32.mrb[0].mxu0
  %v1086 = vadd.f32 0.0, %v1085
  %v1087 = vpop.f32.mrb[0].mxu0
  %v1088 = vpop.f32.mrb[0].mxu0
  %v1089 = vadd.f32 0.0, %v1088
  %v1090 = vpop.f32.mrb[0].mxu0
  %1091 = vmatprep.mubr.bf16.mxu0 %v575
  %1092 = vmatmul.mubr.bf16.gmra.mrb[0].mxu0 %v574
  %v1093 = vpop.f32.mrb[0].mxu0
  %v1094 = vadd.f32 0.0, %v1093
  %v1095 = vpop.f32.mrb[0].mxu0
  %v1096 = vpop.f32.mrb[0].mxu0
  %v1097 = vadd.f32 0.0, %v1096
  %v1098 = vpop.f32.mrb[0].mxu0
  %1099 = vmatprep.mubr.bf16.mxu0 %v578
  %1100 = vmatmul.mubr.bf16.gmra.mrb[0].mxu0 %v577
  %v1101 = vpop.f32.mrb[0].mxu0
  %v1102 = vadd.f32 0.0, %v1101
  %v1103 = vpop.f32.mrb[0].mxu0
  %v1104 = vpop.f32.mrb[0].mxu0
  %v1105 = vadd.f32 0.0, %v1104
  %v1106 = vpop.f32.mrb[0].mxu0
  %1107 = vmatprep.mubr.bf16.mxu0 %v581
  %1108 = vmatmul.mubr.bf16.gmra.mrb[0].mxu0 %v580
  %v1109 = vpop.f32.mrb[0].mxu0
  %v1110 = vadd.f32 0.0, %v1109
  %v1111 = vpop.f32.mrb[0].mxu0
  %v1112 = vpop.f32.mrb[0].mxu0
  %v1113 = vadd.f32 0.0, %v1112
  %v1114 = vpop.f32.mrb[0].mxu0
  %1115 = vmatprep.mubr.bf16.mxu0 %v584
  %1116 = vmatmul.mubr.bf16.gmra.mrb[0].mxu0 %v583
  %v1117 = vpop.f32.mrb[0].mxu0
  %v1118 = vadd.f32 0.0, %v1117
  %v1119 = vpop.f32.mrb[0].mxu0
  %v1120 = vpop.f32.mrb[0].mxu0
  %v1121 = vadd.f32 0.0, %v1120
  %v1122 = vpop.f32.mrb[0].mxu0
  %1123 = vmatprep.mubr.bf16.mxu0 %v587
  %1124 = vmatmul.mubr.bf16.gmra.mrb[0].mxu0 %v586
  %v1125 = vpop.f32.mrb[0].mxu0
  %v1126 = vadd.f32 0.0, %v1125
  %v1127 = vpop.f32.mrb[0].mxu0
  %v1128 = vpop.f32.mrb[0].mxu0
  %v1129 = vadd.f32 0.0, %v1128
  %v1130 = vpop.f32.mrb[0].mxu0
  %1131 = vmatprep.mubr.bf16.mxu0 %v590
  %1132 = vmatmul.mubr.bf16.gmra.mrb[0].mxu0 %v589
  %v1133 = vpop.f32.mrb[0].mxu0
  %v1134 = vadd.f32 0.0, %v1133
  %v1135 = vpop.f32.mrb[0].mxu0
  %v1136 = vpop.f32.mrb[0].mxu0
  %v1137 = vadd.f32 0.0, %v1136
  %v1138 = vpop.f32.mrb[0].mxu0
  %1139 = vmatprep.mubr.bf16.mxu0 %v593
  %1140 = vmatmul.mubr.bf16.gmra.mrb[0].mxu0 %v592
  %v1141 = vpop.f32.mrb[0].mxu0
  %v1142 = vadd.f32 0.0, %v1141
  %v1143 = vpop.f32.mrb[0].mxu0
  %v1144 = vpop.f32.mrb[0].mxu0
  %v1145 = vadd.f32 0.0, %v1144
  %v1146 = vpop.f32.mrb[0].mxu0
  %1147 = vmatprep.mubr.bf16.mxu0 %v596
  %1148 = vmatmul.mubr.bf16.gmra.mrb[0].mxu0 %v595
  %v1149 = vpop.f32.mrb[0].mxu0
  %v1150 = vadd.f32 0.0, %v1149
  %v1151 = vpop.f32.mrb[0].mxu0
  %v1152 = vpop.f32.mrb[0].mxu0
  %v1153 = vadd.f32 0.0, %v1152
  %v1154 = vpop.f32.mrb[0].mxu0
  %1155 = vdwg.mxu0
  %1156 = vmatprep.subr.bf16.mxu0 0
  %1157 = vmatpush1.bf16.msra.mxu0 %v750
  %1158 = vmatprep.subr.bf16.mxu0 0
  %1159 = vmatpush1.bf16.msra.mxu0 %v751
  %1160 = vmatprep.subr.bf16.mxu0 0
  %1161 = vmatpush1.bf16.msra.mxu0 0
  %1162 = vmatprep.subr.bf16.mxu0 0
  %1163 = vmatpush1.bf16.msra.mxu0 0
  %1164 = vmatprep.subr.bf16.mxu0 0
  %1165 = vmatpush1.bf16.msra.mxu0 0
  %1166 = vmatprep.subr.bf16.mxu0 0
  %1167 = vmatpush1.bf16.msra.mxu0 0
  %1168 = vmatprep.subr.bf16.mxu0 0
  %1169 = vmatpush1.bf16.msra.mxu0 0
  %1170 = vmatprep.subr.bf16.mxu0 0
  %1171 = vmatpush1.bf16.msra.mxu0 0
  %1172 = vmatprep.subr.bf16.mxu0 0
  %1173 = vmatpush1.bf16.msra.mxu0 0
  %1174 = vmatprep.subr.bf16.mxu0 0
  %1175 = vmatpush1.bf16.msra.mxu0 0
  %1176 = vmatprep.subr.bf16.mxu0 0
  %1177 = vmatpush1.bf16.msra.mxu0 0
  %1178 = vmatprep.subr.bf16.mxu0 0
  %1179 = vmatpush1.bf16.msra.mxu0 0
  %1180 = vmatprep.subr.bf16.mxu0 0
  %1181 = vmatpush1.bf16.msra.mxu0 0
  %1182 = vmatprep.subr.bf16.mxu0 0
  %1183 = vmatpush1.bf16.msra.mxu0 0
  %1184 = vmatprep.subr.bf16.mxu0 0
  %1185 = vmatpush1.bf16.msra.mxu0 0
  %1186 = vmatprep.subr.bf16.mxu0 0
  %1187 = vmatpush1.bf16.msra.mxu0 0
  %1188 = vmatprep.mubr.bf16.mxu0 0
  %1189 = vmatmul.mubr.bf16.gmra.mrb[0].mxu0 %v772
  %v1190 = vpop.f32.mrb[0].mxu0
  %v1191 = vadd.f32 %v902, %v1190
  %v1192 = vpop.f32.mrb[0].mxu0
  %v1193 = vpop.f32.mrb[0].mxu0
  %v1194 = vadd.f32 %v905, %v1193
  %v1195 = vpop.f32.mrb[0].mxu0
  %1196 = vmatprep.mubr.bf16.mxu0 0
  %1197 = vmatmul.mubr.bf16.gmra.mrb[0].mxu0 %v775
  %v1198 = vpop.f32.mrb[0].mxu0
  %v1199 = vadd.f32 %v910, %v1198
  %v1200 = vpop.f32.mrb[0].mxu0
  %v1201 = vpop.f32.mrb[0].mxu0
  %v1202 = vadd.f32 %v913, %v1201
  %v1203 = vpop.f32.mrb[0].mxu0
  %1204 = vmatprep.mubr.bf16.mxu0 0
  %1205 = vmatmul.mubr.bf16.gmra.mrb[0].mxu0 %v778
  %v1206 = vpop.f32.mrb[0].mxu0
  %v1207 = vadd.f32 %v918, %v1206
  %v1208 = vpop.f32.mrb[0].mxu0
  %v1209 = vpop.f32.mrb[0].mxu0
  %v1210 = vadd.f32 %v921, %v1209
  %v1211 = vpop.f32.mrb[0].mxu0
  %1212 = vmatprep.mubr.bf16.mxu0 0
  %1213 = vmatmul.mubr.bf16.gmra.mrb[0].mxu0 %v781
  %v1214 = vpop.f32.mrb[0].mxu0
  %v1215 = vadd.f32 %v926, %v1214
  %v1216 = vpop.f32.mrb[0].mxu0
  %v1217 = vpop.f32.mrb[0].mxu0
  %v1218 = vadd.f32 %v929, %v1217
  %v1219 = vpop.f32.mrb[0].mxu0
  %1220 = vmatprep.mubr.bf16.mxu0 0
  %1221 = vmatmul.mubr.bf16.gmra.mrb[0].mxu0 %v784
  %v1222 = vpop.f32.mrb[0].mxu0
  %v1223 = vadd.f32 %v934, %v1222
  %v1224 = vpop.f32.mrb[0].mxu0
  %v1225 = vpop.f32.mrb[0].mxu0
  %v1226 = vadd.f32 %v937, %v1225
  %v1227 = vpop.f32.mrb[0].mxu0
  %1228 = vmatprep.mubr.bf16.mxu0 0
  %1229 = vmatmul.mubr.bf16.gmra.mrb[0].mxu0 %v787
  %v1230 = vpop.f32.mrb[0].mxu0
  %v1231 = vadd.f32 %v942, %v1230
  %v1232 = vpop.f32.mrb[0].mxu0
  %v1233 = vpop.f32.mrb[0].mxu0
  %v1234 = vadd.f32 %v945, %v1233
  %v1235 = vpop.f32.mrb[0].mxu0
  %1236 = vmatprep.mubr.bf16.mxu0 0
  %1237 = vmatmul.mubr.bf16.gmra.mrb[0].mxu0 %v790
  %v1238 = vpop.f32.mrb[0].mxu0
  %v1239 = vadd.f32 %v950, %v1238
  %v1240 = vpop.f32.mrb[0].mxu0
  %v1241 = vpop.f32.mrb[0].mxu0
  %v1242 = vadd.f32 %v953, %v1241
  %v1243 = vpop.f32.mrb[0].mxu0
  %1244 = vmatprep.mubr.bf16.mxu0 0
  %1245 = vmatmul.mubr.bf16.gmra.mrb[0].mxu0 %v793
  %v1246 = vpop.f32.mrb[0].mxu0
  %v1247 = vadd.f32 %v958, %v1246
  %v1248 = vpop.f32.mrb[0].mxu0
  %v1249 = vpop.f32.mrb[0].mxu0
  %v1250 = vadd.f32 %v961, %v1249
  %v1251 = vpop.f32.mrb[0].mxu0
  %1252 = vmatprep.mubr.bf16.mxu0 0
  %1253 = vmatmul.mubr.bf16.gmra.mrb[0].mxu0 %v796
  %v1254 = vpop.f32.mrb[0].mxu0
  %v1255 = vadd.f32 %v966, %v1254
  %v1256 = vpop.f32.mrb[0].mxu0
  %v1257 = vpop.f32.mrb[0].mxu0
  %v1258 = vadd.f32 %v969, %v1257
  %v1259 = vpop.f32.mrb[0].mxu0
  %1260 = vmatprep.mubr.bf16.mxu0 0
  %1261 = vmatmul.mubr.bf16.gmra.mrb[0].mxu0 %v799
  %v1262 = vpop.f32.mrb[0].mxu0
  %v1263 = vadd.f32 %v974, %v1262
  %v1264 = vpop.f32.mrb[0].mxu0
  %v1265 = vpop.f32.mrb[0].mxu0
  %v1266 = vadd.f32 %v977, %v1265
  %v1267 = vpop.f32.mrb[0].mxu0
  %1268 = vmatprep.mubr.bf16.mxu0 0
  %1269 = vmatmul.mubr.bf16.gmra.mrb[0].mxu0 %v802
  %v1270 = vpop.f32.mrb[0].mxu0
  %v1271 = vadd.f32 %v982, %v1270
  %v1272 = vpop.f32.mrb[0].mxu0
  %v1273 = vpop.f32.mrb[0].mxu0
  %v1274 = vadd.f32 %v985, %v1273
  %v1275 = vpop.f32.mrb[0].mxu0
  %1276 = vmatprep.mubr.bf16.mxu0 0
  %1277 = vmatmul.mubr.bf16.gmra.mrb[0].mxu0 %v805
  %v1278 = vpop.f32.mrb[0].mxu0
  %v1279 = vadd.f32 %v990, %v1278
  %v1280 = vpop.f32.mrb[0].mxu0
  %v1281 = vpop.f32.mrb[0].mxu0
  %v1282 = vadd.f32 %v993, %v1281
  %v1283 = vpop.f32.mrb[0].mxu0
  %1284 = vmatprep.mubr.bf16.mxu0 0
  %1285 = vmatmul.mubr.bf16.gmra.mrb[0].mxu0 %v808
  %v1286 = vpop.f32.mrb[0].mxu0
  %v1287 = vadd.f32 %v998, %v1286
  %v1288 = vpop.f32.mrb[0].mxu0
  %v1289 = vpop.f32.mrb[0].mxu0
  %v1290 = vadd.f32 %v1001, %v1289
  %v1291 = vpop.f32.mrb[0].mxu0
  %1292 = vmatprep.mubr.bf16.mxu0 0
  %1293 = vmatmul.mubr.bf16.gmra.mrb[0].mxu0 %v811
  %v1294 = vpop.f32.mrb[0].mxu0
  %v1295 = vadd.f32 %v1006, %v1294
  %v1296 = vpop.f32.mrb[0].mxu0
  %v1297 = vpop.f32.mrb[0].mxu0
  %v1298 = vadd.f32 %v1009, %v1297
  %v1299 = vpop.f32.mrb[0].mxu0
  %1300 = vmatprep.mubr.bf16.mxu0 0
  %1301 = vmatmul.mubr.bf16.gmra.mrb[0].mxu0 %v814
  %v1302 = vpop.f32.mrb[0].mxu0
  %v1303 = vadd.f32 %v1014, %v1302
  %v1304 = vpop.f32.mrb[0].mxu0
  %v1305 = vpop.f32.mrb[0].mxu0
  %v1306 = vadd.f32 %v1017, %v1305
  %v1307 = vpop.f32.mrb[0].mxu0
  %1308 = vmatprep.mubr.bf16.mxu0 0
  %1309 = vmatmul.mubr.bf16.gmra.mrb[0].mxu0 %v817
  %v1310 = vpop.f32.mrb[0].mxu0
  %v1311 = vadd.f32 %v1022, %v1310
  %v1312 = vpop.f32.mrb[0].mxu0
  %v1313 = vpop.f32.mrb[0].mxu0
  %v1314 = vadd.f32 %v1025, %v1313
  %v1315 = vpop.f32.mrb[0].mxu0
  %1316 = vmatprep.mubr.bf16.mxu0 0
  %1317 = vmatmul.mubr.bf16.gmra.mrb[0].mxu0 %v820
  %v1318 = vpop.f32.mrb[0].mxu0
  %v1319 = vadd.f32 %v1030, %v1318
  %v1320 = vpop.f32.mrb[0].mxu0
  %v1321 = vpop.f32.mrb[0].mxu0
  %v1322 = vadd.f32 %v1033, %v1321
  %v1323 = vpop.f32.mrb[0].mxu0
  %1324 = vmatprep.mubr.bf16.mxu0 0
  %1325 = vmatmul.mubr.bf16.gmra.mrb[0].mxu0 %v823
  %v1326 = vpop.f32.mrb[0].mxu0
  %v1327 = vadd.f32 %v1038, %v1326
  %v1328 = vpop.f32.mrb[0].mxu0
  %v1329 = vpop.f32.mrb[0].mxu0
  %v1330 = vadd.f32 %v1041, %v1329
  %v1331 = vpop.f32.mrb[0].mxu0
  %1332 = vmatprep.mubr.bf16.mxu0 0
  %1333 = vmatmul.mubr.bf16.gmra.mrb[0].mxu0 %v826
  %v1334 = vpop.f32.mrb[0].mxu0
  %v1335 = vadd.f32 %v1046, %v1334
  %v1336 = vpop.f32.mrb[0].mxu0
  %v1337 = vpop.f32.mrb[0].mxu0
  %v1338 = vadd.f32 %v1049, %v1337
  %v1339 = vpop.f32.mrb[0].mxu0
  %1340 = vmatprep.mubr.bf16.mxu0 0
  %1341 = vmatmul.mubr.bf16.gmra.mrb[0].mxu0 %v829
  %v1342 = vpop.f32.mrb[0].mxu0
  %v1343 = vadd.f32 %v1054, %v1342
  %v1344 = vpop.f32.mrb[0].mxu0
  %v1345 = vpop.f32.mrb[0].mxu0
  %v1346 = vadd.f32 %v1057, %v1345
  %v1347 = vpop.f32.mrb[0].mxu0
  %1348 = vmatprep.mubr.bf16.mxu0 0
  %1349 = vmatmul.mubr.bf16.gmra.mrb[0].mxu0 %v832
  %v1350 = vpop.f32.mrb[0].mxu0
  %v1351 = vadd.f32 %v1062, %v1350
  %v1352 = vpop.f32.mrb[0].mxu0
  %v1353 = vpop.f32.mrb[0].mxu0
  %v1354 = vadd.f32 %v1065, %v1353
  %v1355 = vpop.f32.mrb[0].mxu0
  %1356 = vmatprep.mubr.bf16.mxu0 0
  %1357 = vmatmul.mubr.bf16.gmra.mrb[0].mxu0 %v835
  %v1358 = vpop.f32.mrb[0].mxu0
  %v1359 = vadd.f32 %v1070, %v1358
  %v1360 = vpop.f32.mrb[0].mxu0
  %v1361 = vpop.f32.mrb[0].mxu0
  %v1362 = vadd.f32 %v1073, %v1361
  %v1363 = vpop.f32.mrb[0].mxu0
  %1364 = vmatprep.mubr.bf16.mxu0 0
  %1365 = vmatmul.mubr.bf16.gmra.mrb[0].mxu0 %v838
  %v1366 = vpop.f32.mrb[0].mxu0
  %v1367 = vadd.f32 %v1078, %v1366
  %v1368 = vpop.f32.mrb[0].mxu0
  %v1369 = vpop.f32.mrb[0].mxu0
  %v1370 = vadd.f32 %v1081, %v1369
  %v1371 = vpop.f32.mrb[0].mxu0
  %1372 = vmatprep.mubr.bf16.mxu0 0
  %1373 = vmatmul.mubr.bf16.gmra.mrb[0].mxu0 %v841
  %v1374 = vpop.f32.mrb[0].mxu0
  %v1375 = vadd.f32 %v1086, %v1374
  %v1376 = vpop.f32.mrb[0].mxu0
  %v1377 = vpop.f32.mrb[0].mxu0
  %v1378 = vadd.f32 %v1089, %v1377
  %v1379 = vpop.f32.mrb[0].mxu0
  %1380 = vmatprep.mubr.bf16.mxu0 0
  %1381 = vmatmul.mubr.bf16.gmra.mrb[0].mxu0 %v844
  %v1382 = vpop.f32.mrb[0].mxu0
  %v1383 = vadd.f32 %v1094, %v1382
  %v1384 = vpop.f32.mrb[0].mxu0
  %v1385 = vpop.f32.mrb[0].mxu0
  %v1386 = vadd.f32 %v1097, %v1385
  %v1387 = vpop.f32.mrb[0].mxu0
  %1388 = vmatprep.mubr.bf16.mxu0 0
  %1389 = vmatmul.mubr.bf16.gmra.mrb[0].mxu0 %v847
  %v1390 = vpop.f32.mrb[0].mxu0
  %v1391 = vadd.f32 %v1102, %v1390
  %v1392 = vpop.f32.mrb[0].mxu0
  %v1393 = vpop.f32.mrb[0].mxu0
  %v1394 = vadd.f32 %v1105, %v1393
  %v1395 = vpop.f32.mrb[0].mxu0
  %1396 = vmatprep.mubr.bf16.mxu0 0
  %1397 = vmatmul.mubr.bf16.gmra.mrb[0].mxu0 %v850
  %v1398 = vpop.f32.mrb[0].mxu0
  %v1399 = vadd.f32 %v1110, %v1398
  %v1400 = vpop.f32.mrb[0].mxu0
  %v1401 = vpop.f32.mrb[0].mxu0
  %v1402 = vadd.f32 %v1113, %v1401
  %v1403 = vpop.f32.mrb[0].mxu0
  %1404 = vmatprep.mubr.bf16.mxu0 0
  %1405 = vmatmul.mubr.bf16.gmra.mrb[0].mxu0 %v853
  %v1406 = vpop.f32.mrb[0].mxu0
  %v1407 = vadd.f32 %v1118, %v1406
  %v1408 = vpop.f32.mrb[0].mxu0
  %v1409 = vpop.f32.mrb[0].mxu0
  %v1410 = vadd.f32 %v1121, %v1409
  %v1411 = vpop.f32.mrb[0].mxu0
  %1412 = vmatprep.mubr.bf16.mxu0 0
  %1413 = vmatmul.mubr.bf16.gmra.mrb[0].mxu0 %v856
  %v1414 = vpop.f32.mrb[0].mxu0
  %v1415 = vadd.f32 %v1126, %v1414
  %v1416 = vpop.f32.mrb[0].mxu0
  %v1417 = vpop.f32.mrb[0].mxu0
  %v1418 = vadd.f32 %v1129, %v1417
  %v1419 = vpop.f32.mrb[0].mxu0
  %1420 = vmatprep.mubr.bf16.mxu0 0
  %1421 = vmatmul.mubr.bf16.gmra.mrb[0].mxu0 %v859
  %v1422 = vpop.f32.mrb[0].mxu0
  %v1423 = vadd.f32 %v1134, %v1422
  %v1424 = vpop.f32.mrb[0].mxu0
  %v1425 = vpop.f32.mrb[0].mxu0
  %v1426 = vadd.f32 %v1137, %v1425
  %v1427 = vpop.f32.mrb[0].mxu0
  %1428 = vmatprep.mubr.bf16.mxu0 0
  %1429 = vmatmul.mubr.bf16.gmra.mrb[0].mxu0 %v862
  %v1430 = vpop.f32.mrb[0].mxu0
  %v1431 = vadd.f32 %v1142, %v1430
  %v1432 = vpop.f32.mrb[0].mxu0
  %v1433 = vpop.f32.mrb[0].mxu0
  %v1434 = vadd.f32 %v1145, %v1433
  %v1435 = vpop.f32.mrb[0].mxu0
  %1436 = vmatprep.mubr.bf16.mxu0 0
  %1437 = vmatmul.mubr.bf16.gmra.mrb[0].mxu0 %v865
  %v1438 = vpop.f32.mrb[0].mxu0
  %v1439 = vadd.f32 %v1150, %v1438
  %v1440 = vpop.f32.mrb[0].mxu0
  %v1441 = vpop.f32.mrb[0].mxu0
  %v1442 = vadd.f32 %v1153, %v1441
  %v1443 = vpop.f32.mrb[0].mxu0
  %1444 = vdwg.mxu0
  %v1445 = vld [vmem:[%s2] sm:$0x1]
  %v1447 = vlaneseq
  %v1448 = vshrl.u32 %v1447, 7
  %v1449 = vsub.s32 0, %v1448
  %v1450 = vrot.slane %v1445, %v1449
  %v1452 = vmul.f32 %v1191, %v1450
  %v1453 = vmul.f32 %v1194, %v1450
  %v1454 = vmul.f32 %v1199, %v1450
  %v1455 = vmul.f32 %v1202, %v1450
  %v1456 = vmul.f32 %v1207, %v1450
  %v1457 = vmul.f32 %v1210, %v1450
  %v1458 = vmul.f32 %v1215, %v1450
  %v1459 = vmul.f32 %v1218, %v1450
  %v1460 = vmul.f32 %v1223, %v1450
  %v1461 = vmul.f32 %v1226, %v1450
  %v1462 = vmul.f32 %v1231, %v1450
  %v1463 = vmul.f32 %v1234, %v1450
  %v1464 = vmul.f32 %v1239, %v1450
  %v1465 = vmul.f32 %v1242, %v1450
  %v1466 = vmul.f32 %v1247, %v1450
  %v1467 = vmul.f32 %v1250, %v1450
  %v1468 = vmul.f32 %v1255, %v1450
  %v1469 = vmul.f32 %v1258, %v1450
  %v1470 = vmul.f32 %v1263, %v1450
  %v1471 = vmul.f32 %v1266, %v1450
  %v1472 = vmul.f32 %v1271, %v1450
  %v1473 = vmul.f32 %v1274, %v1450
  %v1474 = vmul.f32 %v1279, %v1450
  %v1475 = vmul.f32 %v1282, %v1450
  %v1476 = vmul.f32 %v1287, %v1450
  %v1477 = vmul.f32 %v1290, %v1450
  %v1478 = vmul.f32 %v1295, %v1450
  %v1479 = vmul.f32 %v1298, %v1450
  %v1480 = vmul.f32 %v1303, %v1450
  %v1481 = vmul.f32 %v1306, %v1450
  %v1482 = vmul.f32 %v1311, %v1450
  %v1483 = vmul.f32 %v1314, %v1450
  %v1484 = vmul.f32 %v1319, %v1450
  %v1485 = vmul.f32 %v1322, %v1450
  %v1486 = vmul.f32 %v1327, %v1450
  %v1487 = vmul.f32 %v1330, %v1450
  %v1488 = vmul.f32 %v1335, %v1450
  %v1489 = vmul.f32 %v1338, %v1450
  %v1490 = vmul.f32 %v1343, %v1450
  %v1491 = vmul.f32 %v1346, %v1450
  %v1492 = vmul.f32 %v1351, %v1450
  %v1493 = vmul.f32 %v1354, %v1450
  %v1494 = vmul.f32 %v1359, %v1450
  %v1495 = vmul.f32 %v1362, %v1450
  %v1496 = vmul.f32 %v1367, %v1450
  %v1497 = vmul.f32 %v1370, %v1450
  %v1498 = vmul.f32 %v1375, %v1450
  %v1499 = vmul.f32 %v1378, %v1450
  %v1500 = vmul.f32 %v1383, %v1450
  %v1501 = vmul.f32 %v1386, %v1450
  %v1502 = vmul.f32 %v1391, %v1450
  %v1503 = vmul.f32 %v1394, %v1450
  %v1504 = vmul.f32 %v1399, %v1450
  %v1505 = vmul.f32 %v1402, %v1450
  %v1506 = vmul.f32 %v1407, %v1450
  %v1507 = vmul.f32 %v1410, %v1450
  %v1508 = vmul.f32 %v1415, %v1450
  %v1509 = vmul.f32 %v1418, %v1450
  %v1510 = vmul.f32 %v1423, %v1450
  %v1511 = vmul.f32 %v1426, %v1450
  %v1512 = vmul.f32 %v1431, %v1450
  %v1513 = vmul.f32 %v1434, %v1450
  %v1514 = vmul.f32 %v1439, %v1450
  %v1515 = vmul.f32 %v1442, %v1450
  %v1516 = vld [vmem:[%s3] sm:$0x1]
  %v1518 = vlaneseq
  %v1519 = vshrl.u32 %v1518, 7
  %v1520 = vsub.s32 0, %v1519
  %v1521 = vrot.slane %v1516, %v1520
  %v1523 = vadd.f32 %v1452, %v1521
  %v1524 = vadd.f32 %v1453, %v1521
  %v1525 = vadd.f32 %v1454, %v1521
  %v1526 = vadd.f32 %v1455, %v1521
  %v1527 = vadd.f32 %v1456, %v1521
  %v1528 = vadd.f32 %v1457, %v1521
  %v1529 = vadd.f32 %v1458, %v1521
  %v1530 = vadd.f32 %v1459, %v1521
  %v1531 = vadd.f32 %v1460, %v1521
  %v1532 = vadd.f32 %v1461, %v1521
  %v1533 = vadd.f32 %v1462, %v1521
  %v1534 = vadd.f32 %v1463, %v1521
  %v1535 = vadd.f32 %v1464, %v1521
  %v1536 = vadd.f32 %v1465, %v1521
  %v1537 = vadd.f32 %v1466, %v1521
  %v1538 = vadd.f32 %v1467, %v1521
  %v1539 = vadd.f32 %v1468, %v1521
  %v1540 = vadd.f32 %v1469, %v1521
  %v1541 = vadd.f32 %v1470, %v1521
  %v1542 = vadd.f32 %v1471, %v1521
  %v1543 = vadd.f32 %v1472, %v1521
  %v1544 = vadd.f32 %v1473, %v1521
  %v1545 = vadd.f32 %v1474, %v1521
  %v1546 = vadd.f32 %v1475, %v1521
  %v1547 = vadd.f32 %v1476, %v1521
  %v1548 = vadd.f32 %v1477, %v1521
  %v1549 = vadd.f32 %v1478, %v1521
  %v1550 = vadd.f32 %v1479, %v1521
  %v1551 = vadd.f32 %v1480, %v1521
  %v1552 = vadd.f32 %v1481, %v1521
  %v1553 = vadd.f32 %v1482, %v1521
  %v1554 = vadd.f32 %v1483, %v1521
  %v1555 = vadd.f32 %v1484, %v1521
  %v1556 = vadd.f32 %v1485, %v1521
  %v1557 = vadd.f32 %v1486, %v1521
  %v1558 = vadd.f32 %v1487, %v1521
  %v1559 = vadd.f32 %v1488, %v1521
  %v1560 = vadd.f32 %v1489, %v1521
  %v1561 = vadd.f32 %v1490, %v1521
  %v1562 = vadd.f32 %v1491, %v1521
  %v1563 = vadd.f32 %v1492, %v1521
  %v1564 = vadd.f32 %v1493, %v1521
  %v1565 = vadd.f32 %v1494, %v1521
  %v1566 = vadd.f32 %v1495, %v1521
  %v1567 = vadd.f32 %v1496, %v1521
  %v1568 = vadd.f32 %v1497, %v1521
  %v1569 = vadd.f32 %v1498, %v1521
  %v1570 = vadd.f32 %v1499, %v1521
  %v1571 = vadd.f32 %v1500, %v1521
  %v1572 = vadd.f32 %v1501, %v1521
  %v1573 = vadd.f32 %v1502, %v1521
  %v1574 = vadd.f32 %v1503, %v1521
  %v1575 = vadd.f32 %v1504, %v1521
  %v1576 = vadd.f32 %v1505, %v1521
  %v1577 = vadd.f32 %v1506, %v1521
  %v1578 = vadd.f32 %v1507, %v1521
  %v1579 = vadd.f32 %v1508, %v1521
  %v1580 = vadd.f32 %v1509, %v1521
  %v1581 = vadd.f32 %v1510, %v1521
  %v1582 = vadd.f32 %v1511, %v1521
  %v1583 = vadd.f32 %v1512, %v1521
  %v1584 = vadd.f32 %v1513, %v1521
  %v1585 = vadd.f32 %v1514, %v1521
  %v1586 = vadd.f32 %v1515, %v1521
  %v1587 = vmax.f32 %v1523, 0.0
  %v1588 = vmax.f32 %v1524, 0.0
  %v1589 = vmax.f32 %v1525, 0.0
  %v1590 = vmax.f32 %v1526, 0.0
  %v1591 = vmax.f32 %v1527, 0.0
  %v1592 = vmax.f32 %v1528, 0.0
  %v1593 = vmax.f32 %v1529, 0.0
  %v1594 = vmax.f32 %v1530, 0.0
  %v1595 = vmax.f32 %v1531, 0.0
  %v1596 = vmax.f32 %v1532, 0.0
  %v1597 = vmax.f32 %v1533, 0.0
  %v1598 = vmax.f32 %v1534, 0.0
  %v1599 = vmax.f32 %v1535, 0.0
  %v1600 = vmax.f32 %v1536, 0.0
  %v1601 = vmax.f32 %v1537, 0.0
  %v1602 = vmax.f32 %v1538, 0.0
  %v1603 = vmax.f32 %v1539, 0.0
  %v1604 = vmax.f32 %v1540, 0.0
  %v1605 = vmax.f32 %v1541, 0.0
  %v1606 = vmax.f32 %v1542, 0.0
  %v1607 = vmax.f32 %v1543, 0.0
  %v1608 = vmax.f32 %v1544, 0.0
  %v1609 = vmax.f32 %v1545, 0.0
  %v1610 = vmax.f32 %v1546, 0.0
  %v1611 = vmax.f32 %v1547, 0.0
  %v1612 = vmax.f32 %v1548, 0.0
  %v1613 = vmax.f32 %v1549, 0.0
  %v1614 = vmax.f32 %v1550, 0.0
  %v1615 = vmax.f32 %v1551, 0.0
  %v1616 = vmax.f32 %v1552, 0.0
  %v1617 = vmax.f32 %v1553, 0.0
  %v1618 = vmax.f32 %v1554, 0.0
  %v1619 = vmax.f32 %v1555, 0.0
  %v1620 = vmax.f32 %v1556, 0.0
  %v1621 = vmax.f32 %v1557, 0.0
  %v1622 = vmax.f32 %v1558, 0.0
  %v1623 = vmax.f32 %v1559, 0.0
  %v1624 = vmax.f32 %v1560, 0.0
  %v1625 = vmax.f32 %v1561, 0.0
  %v1626 = vmax.f32 %v1562, 0.0
  %v1627 = vmax.f32 %v1563, 0.0
  %v1628 = vmax.f32 %v1564, 0.0
  %v1629 = vmax.f32 %v1565, 0.0
  %v1630 = vmax.f32 %v1566, 0.0
  %v1631 = vmax.f32 %v1567, 0.0
  %v1632 = vmax.f32 %v1568, 0.0
  %v1633 = vmax.f32 %v1569, 0.0
  %v1634 = vmax.f32 %v1570, 0.0
  %v1635 = vmax.f32 %v1571, 0.0
  %v1636 = vmax.f32 %v1572, 0.0
  %v1637 = vmax.f32 %v1573, 0.0
  %v1638 = vmax.f32 %v1574, 0.0
  %v1639 = vmax.f32 %v1575, 0.0
  %v1640 = vmax.f32 %v1576, 0.0
  %v1641 = vmax.f32 %v1577, 0.0
  %v1642 = vmax.f32 %v1578, 0.0
  %v1643 = vmax.f32 %v1579, 0.0
  %v1644 = vmax.f32 %v1580, 0.0
  %v1645 = vmax.f32 %v1581, 0.0
  %v1646 = vmax.f32 %v1582, 0.0
  %v1647 = vmax.f32 %v1583, 0.0
  %v1648 = vmax.f32 %v1584, 0.0
  %v1649 = vmax.f32 %v1585, 0.0
  %v1650 = vmax.f32 %v1586, 0.0
  %v1651 = vpack.c.bf16 %v1588, %v1587
  %v1652 = vpack.c.bf16 %v1590, %v1589
  %v1653 = vpack.c.bf16 %v1592, %v1591
  %v1654 = vpack.c.bf16 %v1594, %v1593
  %v1655 = vpack.c.bf16 %v1596, %v1595
  %v1656 = vpack.c.bf16 %v1598, %v1597
  %v1657 = vpack.c.bf16 %v1600, %v1599
  %v1658 = vpack.c.bf16 %v1602, %v1601
  %v1659 = vpack.c.bf16 %v1604, %v1603
  %v1660 = vpack.c.bf16 %v1606, %v1605
  %v1661 = vpack.c.bf16 %v1608, %v1607
  %v1662 = vpack.c.bf16 %v1610, %v1609
  %v1663 = vpack.c.bf16 %v1612, %v1611
  %v1664 = vpack.c.bf16 %v1614, %v1613
  %v1665 = vpack.c.bf16 %v1616, %v1615
  %v1666 = vpack.c.bf16 %v1618, %v1617
  %v1667 = vpack.c.bf16 %v1620, %v1619
  %v1668 = vpack.c.bf16 %v1622, %v1621
  %v1669 = vpack.c.bf16 %v1624, %v1623
  %v1670 = vpack.c.bf16 %v1626, %v1625
  %v1671 = vpack.c.bf16 %v1628, %v1627
  %v1672 = vpack.c.bf16 %v1630, %v1629
  %v1673 = vpack.c.bf16 %v1632, %v1631
  %v1674 = vpack.c.bf16 %v1634, %v1633
  %v1675 = vpack.c.bf16 %v1636, %v1635
  %v1676 = vpack.c.bf16 %v1638, %v1637
  %v1677 = vpack.c.bf16 %v1640, %v1639
  %v1678 = vpack.c.bf16 %v1642, %v1641
  %v1679 = vpack.c.bf16 %v1644, %v1643
  %v1680 = vpack.c.bf16 %v1646, %v1645
  %v1681 = vpack.c.bf16 %v1648, %v1647
  %v1682 = vpack.c.bf16 %v1650, %v1649
  %v1715 = vunpack.c.l.b16 %v1651
  %v1716 = vunpack.c.h.b16 %v1651
  %v1717 = vunpack.c.l.b16 %v1652
  %v1718 = vunpack.c.h.b16 %v1652
  %v1719 = vunpack.c.l.b16 %v1653
  %v1720 = vunpack.c.h.b16 %v1653
  %v1721 = vunpack.c.l.b16 %v1654
  %v1722 = vunpack.c.h.b16 %v1654
  %v1723 = vunpack.c.l.b16 %v1655
  %v1724 = vunpack.c.h.b16 %v1655
  %v1725 = vunpack.c.l.b16 %v1656
  %v1726 = vunpack.c.h.b16 %v1656
  %v1727 = vunpack.c.l.b16 %v1657
  %v1728 = vunpack.c.h.b16 %v1657
  %v1729 = vunpack.c.l.b16 %v1658
  %v1730 = vunpack.c.h.b16 %v1658
  %v1731 = vunpack.c.l.b16 %v1659
  %v1732 = vunpack.c.h.b16 %v1659
  %v1733 = vunpack.c.l.b16 %v1660
  %v1734 = vunpack.c.h.b16 %v1660
  %v1735 = vunpack.c.l.b16 %v1661
  %v1736 = vunpack.c.h.b16 %v1661
  %v1737 = vunpack.c.l.b16 %v1662
  %v1738 = vunpack.c.h.b16 %v1662
  %v1739 = vunpack.c.l.b16 %v1663
  %v1740 = vunpack.c.h.b16 %v1663
  %v1741 = vunpack.c.l.b16 %v1664
  %v1742 = vunpack.c.h.b16 %v1664
  %v1743 = vunpack.c.l.b16 %v1665
  %v1744 = vunpack.c.h.b16 %v1665
  %v1745 = vunpack.c.l.b16 %v1666
  %v1746 = vunpack.c.h.b16 %v1666
  %v1747 = vunpack.c.l.b16 %v1667
  %v1748 = vunpack.c.h.b16 %v1667
  %v1749 = vunpack.c.l.b16 %v1668
  %v1750 = vunpack.c.h.b16 %v1668
  %v1751 = vunpack.c.l.b16 %v1669
  %v1752 = vunpack.c.h.b16 %v1669
  %v1753 = vunpack.c.l.b16 %v1670
  %v1754 = vunpack.c.h.b16 %v1670
  %v1755 = vunpack.c.l.b16 %v1671
  %v1756 = vunpack.c.h.b16 %v1671
  %v1757 = vunpack.c.l.b16 %v1672
  %v1758 = vunpack.c.h.b16 %v1672
  %v1759 = vunpack.c.l.b16 %v1673
  %v1760 = vunpack.c.h.b16 %v1673
  %v1761 = vunpack.c.l.b16 %v1674
  %v1762 = vunpack.c.h.b16 %v1674
  %v1763 = vunpack.c.l.b16 %v1675
  %v1764 = vunpack.c.h.b16 %v1675
  %v1765 = vunpack.c.l.b16 %v1676
  %v1766 = vunpack.c.h.b16 %v1676
  %v1767 = vunpack.c.l.b16 %v1677
  %v1768 = vunpack.c.h.b16 %v1677
  %v1769 = vunpack.c.l.b16 %v1678
  %v1770 = vunpack.c.h.b16 %v1678
  %v1771 = vunpack.c.l.b16 %v1679
  %v1772 = vunpack.c.h.b16 %v1679
  %v1773 = vunpack.c.l.b16 %v1680
  %v1774 = vunpack.c.h.b16 %v1680
  %v1775 = vunpack.c.l.b16 %v1681
  %v1776 = vunpack.c.h.b16 %v1681
  %v1777 = vunpack.c.l.b16 %v1682
  %v1778 = vunpack.c.h.b16 %v1682
  %v1779 = vpack.c.b16 %v1715, %v1715
  %v1780 = vpack.c.b16 %v1716, %v1716
  %v1781 = vpack.c.b16 %v1717, %v1717
  %v1782 = vpack.c.b16 %v1718, %v1718
  %v1783 = vpack.c.b16 %v1719, %v1719
  %v1784 = vpack.c.b16 %v1720, %v1720
  %v1785 = vpack.c.b16 %v1721, %v1721
  %v1786 = vpack.c.b16 %v1722, %v1722
  %v1787 = vpack.c.b16 %v1723, %v1723
  %v1788 = vpack.c.b16 %v1724, %v1724
  %v1789 = vpack.c.b16 %v1725, %v1725
  %v1790 = vpack.c.b16 %v1726, %v1726
  %v1791 = vpack.c.b16 %v1727, %v1727
  %v1792 = vpack.c.b16 %v1728, %v1728
  %v1793 = vpack.c.b16 %v1729, %v1729
  %v1794 = vpack.c.b16 %v1730, %v1730
  %v1795 = vpack.c.b16 %v1731, %v1731
  %v1796 = vpack.c.b16 %v1732, %v1732
  %v1797 = vpack.c.b16 %v1733, %v1733
  %v1798 = vpack.c.b16 %v1734, %v1734
  %v1799 = vpack.c.b16 %v1735, %v1735
  %v1800 = vpack.c.b16 %v1736, %v1736
  %v1801 = vpack.c.b16 %v1737, %v1737
  %v1802 = vpack.c.b16 %v1738, %v1738
  %v1803 = vpack.c.b16 %v1739, %v1739
  %v1804 = vpack.c.b16 %v1740, %v1740
  %v1805 = vpack.c.b16 %v1741, %v1741
  %v1806 = vpack.c.b16 %v1742, %v1742
  %v1807 = vpack.c.b16 %v1743, %v1743
  %v1808 = vpack.c.b16 %v1744, %v1744
  %v1809 = vpack.c.b16 %v1745, %v1745
  %v1810 = vpack.c.b16 %v1746, %v1746
  %v1811 = vpack.c.b16 %v1747, %v1747
  %v1812 = vpack.c.b16 %v1748, %v1748
  %v1813 = vpack.c.b16 %v1749, %v1749
  %v1814 = vpack.c.b16 %v1750, %v1750
  %v1815 = vpack.c.b16 %v1751, %v1751
  %v1816 = vpack.c.b16 %v1752, %v1752
  %v1817 = vpack.c.b16 %v1753, %v1753
  %v1818 = vpack.c.b16 %v1754, %v1754
  %v1819 = vpack.c.b16 %v1755, %v1755
  %v1820 = vpack.c.b16 %v1756, %v1756
  %v1821 = vpack.c.b16 %v1757, %v1757
  %v1822 = vpack.c.b16 %v1758, %v1758
  %v1823 = vpack.c.b16 %v1759, %v1759
  %v1824 = vpack.c.b16 %v1760, %v1760
  %v1825 = vpack.c.b16 %v1761, %v1761
  %v1826 = vpack.c.b16 %v1762, %v1762
  %v1827 = vpack.c.b16 %v1763, %v1763
  %v1828 = vpack.c.b16 %v1764, %v1764
  %v1829 = vpack.c.b16 %v1765, %v1765
  %v1830 = vpack.c.b16 %v1766, %v1766
  %v1831 = vpack.c.b16 %v1767, %v1767
  %v1832 = vpack.c.b16 %v1768, %v1768
  %v1833 = vpack.c.b16 %v1769, %v1769
  %v1834 = vpack.c.b16 %v1770, %v1770
  %v1835 = vpack.c.b16 %v1771, %v1771
  %v1836 = vpack.c.b16 %v1772, %v1772
  %v1837 = vpack.c.b16 %v1773, %v1773
  %v1838 = vpack.c.b16 %v1774, %v1774
  %v1839 = vpack.c.b16 %v1775, %v1775
  %v1840 = vpack.c.b16 %v1776, %v1776
  %v1841 = vpack.c.b16 %v1777, %v1777
  %v1842 = vpack.c.b16 %v1778, %v1778
  %1907 = vst [vmem:[%s4] sm:$0xf] %v1779
  %1908 = vst [vmem:[%s4 + $0x4] sm:$0xf] %v1780
  %1909 = vst [vmem:[%s4 + $0x8] sm:$0xf] %v1781
  %1910 = vst [vmem:[%s4 + $0xc] sm:$0xf] %v1782
  %1911 = vst [vmem:[%s4 + $0x10] sm:$0xf] %v1783
  %1912 = vst [vmem:[%s4 + $0x14] sm:$0xf] %v1784
  %1913 = vst [vmem:[%s4 + $0x18] sm:$0xf] %v1785
  %1914 = vst [vmem:[%s4 + $0x1c] sm:$0xf] %v1786
  %1915 = vst [vmem:[%s4 + $0x20] sm:$0xf] %v1787
  %1916 = vst [vmem:[%s4 + $0x24] sm:$0xf] %v1788
  %1917 = vst [vmem:[%s4 + $0x28] sm:$0xf] %v1789
  %1918 = vst [vmem:[%s4 + $0x2c] sm:$0xf] %v1790
  %1919 = vst [vmem:[%s4 + $0x30] sm:$0xf] %v1791
  %1920 = vst [vmem:[%s4 + $0x34] sm:$0xf] %v1792
  %1921 = vst [vmem:[%s4 + $0x38] sm:$0xf] %v1793
  %1922 = vst [vmem:[%s4 + $0x3c] sm:$0xf] %v1794
  %1923 = vst [vmem:[%s4 + $0x40] sm:$0xf] %v1795
  %1924 = vst [vmem:[%s4 + $0x44] sm:$0xf] %v1796
  %1925 = vst [vmem:[%s4 + $0x48] sm:$0xf] %v1797
  %1926 = vst [vmem:[%s4 + $0x4c] sm:$0xf] %v1798
  %1927 = vst [vmem:[%s4 + $0x50] sm:$0xf] %v1799
  %1928 = vst [vmem:[%s4 + $0x54] sm:$0xf] %v1800
  %1929 = vst [vmem:[%s4 + $0x58] sm:$0xf] %v1801
  %1930 = vst [vmem:[%s4 + $0x5c] sm:$0xf] %v1802
  %1931 = vst [vmem:[%s4 + $0x60] sm:$0xf] %v1803
  %1932 = vst [vmem:[%s4 + $0x64] sm:$0xf] %v1804
  %1933 = vst [vmem:[%s4 + $0x68] sm:$0xf] %v1805
  %1934 = vst [vmem:[%s4 + $0x6c] sm:$0xf] %v1806
  %1935 = vst [vmem:[%s4 + $0x70] sm:$0xf] %v1807
  %1936 = vst [vmem:[%s4 + $0x74] sm:$0xf] %v1808
  %1937 = vst [vmem:[%s4 + $0x78] sm:$0xf] %v1809
  %1938 = vst [vmem:[%s4 + $0x7c] sm:$0xf] %v1810
  %1939 = vst [vmem:[%s4 + $0x80] sm:$0xf] %v1811
  %1940 = vst [vmem:[%s4 + $0x84] sm:$0xf] %v1812
  %1941 = vst [vmem:[%s4 + $0x88] sm:$0xf] %v1813
  %1942 = vst [vmem:[%s4 + $0x8c] sm:$0xf] %v1814
  %1943 = vst [vmem:[%s4 + $0x90] sm:$0xf] %v1815
  %1944 = vst [vmem:[%s4 + $0x94] sm:$0xf] %v1816
  %1945 = vst [vmem:[%s4 + $0x98] sm:$0xf] %v1817
  %1946 = vst [vmem:[%s4 + $0x9c] sm:$0xf] %v1818
  %1947 = vst [vmem:[%s4 + $0xa0] sm:$0xf] %v1819
  %1948 = vst [vmem:[%s4 + $0xa4] sm:$0xf] %v1820
  %1949 = vst [vmem:[%s4 + $0xa8] sm:$0xf] %v1821
  %1950 = vst [vmem:[%s4 + $0xac] sm:$0xf] %v1822
  %1951 = vst [vmem:[%s4 + $0xb0] sm:$0xf] %v1823
  %1952 = vst [vmem:[%s4 + $0xb4] sm:$0xf] %v1824
  %1953 = vst [vmem:[%s4 + $0xb8] sm:$0xf] %v1825
  %1954 = vst [vmem:[%s4 + $0xbc] sm:$0xf] %v1826
  %1955 = vst [vmem:[%s4 + $0xc0] sm:$0xf] %v1827
  %1956 = vst [vmem:[%s4 + $0xc4] sm:$0xf] %v1828
  %1957 = vst [vmem:[%s4 + $0xc8] sm:$0xf] %v1829
  %1958 = vst [vmem:[%s4 + $0xcc] sm:$0xf] %v1830
  %1959 = vst [vmem:[%s4 + $0xd0] sm:$0xf] %v1831
  %1960 = vst [vmem:[%s4 + $0xd4] sm:$0xf] %v1832
  %1961 = vst [vmem:[%s4 + $0xd8] sm:$0xf] %v1833
  %1962 = vst [vmem:[%s4 + $0xdc] sm:$0xf] %v1834
  %1963 = vst [vmem:[%s4 + $0xe0] sm:$0xf] %v1835
  %1964 = vst [vmem:[%s4 + $0xe4] sm:$0xf] %v1836
  %1965 = vst [vmem:[%s4 + $0xe8] sm:$0xf] %v1837
  %1966 = vst [vmem:[%s4 + $0xec] sm:$0xf] %v1838
  %1967 = vst [vmem:[%s4 + $0xf0] sm:$0xf] %v1839
  %1968 = vst [vmem:[%s4 + $0xf4] sm:$0xf] %v1840
  %1969 = vst [vmem:[%s4 + $0xf8] sm:$0xf] %v1841
  %1970 = vst [vmem:[%s4 + $0xfc] sm:$0xf] %v1842
  // Predicated region
  $region18: #{keypointnet_forward.13} parent=0 // pred_check
    _
  $region19: #{keypointnet_forward.13} parent=0 // pred_check_branch
    %1972 = sbr.rel (0) target = $region21
  $region20: #{keypointnet_forward.13} parent=0 // pred_region
    _
  $region21: #{keypointnet_forward.13} parent=0 // pred_fallthru
    _
  // Predicated region
  $region22: #{keypointnet_forward.13} parent=0 // pred_check
    _
  $region23: #{keypointnet_forward.13} parent=0 // pred_check_branch
    %1974 = sbr.rel (0) target = $region25
  $region24: #{keypointnet_forward.13} parent=0 // pred_region
    _
  $region25: #{keypointnet_forward.13} parent=0 // pred_fallthru
    _

// kernel: keypointnet_forward.14
$region0: #{keypointnet_forward.14}
  #allocation0 [shape = 'u32[]', space=smem, size = 0x4, offset = 0x4, fixed_abs, tag = 'smem constant byte address 0x4 - core index']
  #allocation1 [shape = 'u32[144,128]{1,0:T(1,128)}', space=vmem, size = 0x12000, scoped, tag = 'internal scratch']
  %s0 = inlined_call_operand.vmem [shape: bf16[2048,288], index: 0, kind: input, shape index: {}]
  %s1 = inlined_call_operand.vmem [shape: bf16[288,128], index: 1, kind: input, shape index: {}]
  %s2 = inlined_call_operand.vmem [shape: f32[1,128], index: 2, kind: input, shape index: {}]
  %s3 = inlined_call_operand.vmem [shape: f32[1,128], index: 3, kind: input, shape index: {}]
  %s4 = inlined_call_operand.vmem [shape: bf16[2048,128], index: 4, kind: output, shape index: {}]
  %s5 = sld [smem:[#allocation0]]
  $region49: #{keypointnet_forward.14} parent=0
    _
  %s7 = ssub.s32 1, %s5
  %s8 = scalar_select 0, %s7, %s5
  loop: start=0, step=1, limit=4
  $region2: #{keypointnet_forward.14} parent=0 // loop_pre_header
    _
  $region3: #{keypointnet_forward.14} parent=0 // loop_header
    %s10 = sphi 0, %s14
    %p11 = scmp.ge.s32.totalorder %s10, 4
    %s20 = sphi 0, %s22
    %s23 = sphi 0, %s20
    %s24 = sphi 0, %s23
    %s40 = sphi 0, %s24
    %s44 = sphi 0, %s44
    %s46 = sphi 0, %s44
    %s47 = sphi 0, %s46
    %s61 = sphi 0, %s47
    %s65 = sphi 0, %s65
    %s67 = sphi 0, %s65
    %s68 = sphi 0, %s67
    %s82 = sphi 0, %s68
    %s86 = sphi 0, %s86
    %s88 = sphi 0, %s86
    %s89 = sphi 0, %s88
    %s103 = sphi 0, %s89
    %s109 = sphi 0, %s111
    %s112 = sphi 0, %s109
    %s113 = sphi 0, %s112
    %s129 = sphi 0, %s113
  $region4: #{keypointnet_forward.14} parent=0 // loop_header_branch
    %13 = sbr.rel (%p11) target = $region8
  $region5: #{keypointnet_forward.14} parent=0 // loop_body
    %s15 = ssub.s32 %s10, 1
    %s16 = ssub.s32 %s10, 2
    %s17 = sadd.s32 %s10, 1
    %s18 = ssub.s32 %s10, %s17
    %p19 = scmp.eq.s32.totalorder %s18, 0
    %s21 = sadd.s32 %s20, 1
    %s22 = scalar_select %p19, %s20, %s21
    %p25 = pneg %p19
    %p26 = scmp.eq.s32.totalorder %s10, 1
    %p27 = por %p25, %p26
    %p28 = scmp.ne.s32.totalorder %s20, %s23
    %p29 = scmp.eq.s32.totalorder %s10, 0
    %p30 = por %p28, %p29
    %p31 = scmp.ne.s32.totalorder %s20, %s23
    %p32 = scmp.eq.s32.totalorder %s15, 1
    %p33 = por %p31, %p32
    %p34 = scmp.ne.s32.totalorder %s23, %s24
    %p35 = scmp.eq.s32.totalorder %s15, 0
    %p36 = por %p34, %p35
    %p37 = scmp.ne.s32.totalorder %s23, %s24
    %p38 = scmp.eq.s32.totalorder %s16, 1
    %p39 = por %p37, %p38
    %p41 = scmp.ne.s32.totalorder %s24, %s40
    %p42 = scmp.eq.s32.totalorder %s16, 0
    %p43 = por %p41, %p42
    %s45 = sadd.s32 %s44, 1
    %p48 = scmp.eq.s32.totalorder %s10, 1
    %p49 = scmp.ne.s32.totalorder %s44, %s46
    %p50 = scmp.eq.s32.totalorder %s10, 0
    %p51 = por %p49, %p50
    %p52 = scmp.ne.s32.totalorder %s44, %s46
    %p53 = scmp.eq.s32.totalorder %s15, 1
    %p54 = por %p52, %p53
    %p55 = scmp.ne.s32.totalorder %s46, %s47
    %p56 = scmp.eq.s32.totalorder %s15, 0
    %p57 = por %p55, %p56
    %p58 = scmp.ne.s32.totalorder %s46, %s47
    %p59 = scmp.eq.s32.totalorder %s16, 1
    %p60 = por %p58, %p59
    %p62 = scmp.ne.s32.totalorder %s47, %s61
    %p63 = scmp.eq.s32.totalorder %s16, 0
    %p64 = por %p62, %p63
    %s66 = sadd.s32 %s65, 1
    %p69 = scmp.eq.s32.totalorder %s10, 1
    %p70 = scmp.ne.s32.totalorder %s65, %s67
    %p71 = scmp.eq.s32.totalorder %s10, 0
    %p72 = por %p70, %p71
    %p73 = scmp.ne.s32.totalorder %s65, %s67
    %p74 = scmp.eq.s32.totalorder %s15, 1
    %p75 = por %p73, %p74
    %p76 = scmp.ne.s32.totalorder %s67, %s68
    %p77 = scmp.eq.s32.totalorder %s15, 0
    %p78 = por %p76, %p77
    %p79 = scmp.ne.s32.totalorder %s67, %s68
    %p80 = scmp.eq.s32.totalorder %s16, 1
    %p81 = por %p79, %p80
    %p83 = scmp.ne.s32.totalorder %s68, %s82
    %p84 = scmp.eq.s32.totalorder %s16, 0
    %p85 = por %p83, %p84
    %s87 = sadd.s32 %s86, 1
    %p90 = scmp.eq.s32.totalorder %s10, 1
    %p91 = scmp.ne.s32.totalorder %s86, %s88
    %p92 = scmp.eq.s32.totalorder %s10, 0
    %p93 = por %p91, %p92
    %p94 = scmp.ne.s32.totalorder %s86, %s88
    %p95 = scmp.eq.s32.totalorder %s15, 1
    %p96 = por %p94, %p95
    %p97 = scmp.ne.s32.totalorder %s88, %s89
    %p98 = scmp.eq.s32.totalorder %s15, 0
    %p99 = por %p97, %p98
    %p100 = scmp.ne.s32.totalorder %s88, %s89
    %p101 = scmp.eq.s32.totalorder %s16, 1
    %p102 = por %p100, %p101
    %p104 = scmp.ne.s32.totalorder %s89, %s103
    %p105 = scmp.eq.s32.totalorder %s16, 0
    %p106 = por %p104, %p105
    %s107 = ssub.s32 %s10, %s17
    %p108 = scmp.eq.s32.totalorder %s107, 0
    %s110 = sadd.s32 %s109, 1
    %s111 = scalar_select %p108, %s109, %s110
    %p114 = pneg %p108
    %p115 = scmp.eq.s32.totalorder %s10, 1
    %p116 = por %p114, %p115
    %p117 = scmp.ne.s32.totalorder %s109, %s112
    %p118 = scmp.eq.s32.totalorder %s10, 0
    %p119 = por %p117, %p118
    %p120 = scmp.ne.s32.totalorder %s109, %s112
    %p121 = scmp.eq.s32.totalorder %s15, 1
    %p122 = por %p120, %p121
    %p123 = scmp.ne.s32.totalorder %s112, %s113
    %p124 = scmp.eq.s32.totalorder %s15, 0
    %p125 = por %p123, %p124
    %p126 = scmp.ne.s32.totalorder %s112, %s113
    %p127 = scmp.eq.s32.totalorder %s16, 1
    %p128 = por %p126, %p127
    %p130 = scmp.ne.s32.totalorder %s113, %s129
    %p131 = scmp.eq.s32.totalorder %s16, 0
    %p132 = por %p130, %p131
    %p133 = scmp.le.s32.totalorder 1, %s10
    %p134 = scmp.lt.s32.totalorder %s10, 3
    %p135 = pnand %p133, %p134
    %p136 = pneg %p135
    // Predicated region
    $region9: #{keypointnet_forward.14} parent=5 // pred_check
      _
    $region10: #{keypointnet_forward.14} parent=5 // pred_check_branch
      %138 = sbr.rel (%p135) target = $region12
    $region11: #{keypointnet_forward.14} parent=5 // pred_region
      %s139 = ssub.s32 %s10, 1
      // Predicated region
      $region13: #{keypointnet_forward.14} parent=11 // pred_check
        %p140 = pneg %p57
      $region14: #{keypointnet_forward.14} parent=11 // pred_check_branch
        %142 = sbr.rel (%p140) target = $region16
      $region15: #{keypointnet_forward.14} parent=11 // pred_region
        _
      $region16: #{keypointnet_forward.14} parent=11 // pred_fallthru
        _
      // Predicated region
      $region17: #{keypointnet_forward.14} parent=11 // pred_check
        %p143 = pneg %p78
      $region18: #{keypointnet_forward.14} parent=11 // pred_check_branch
        %145 = sbr.rel (%p143) target = $region20
      $region19: #{keypointnet_forward.14} parent=11 // pred_region
        _
      $region20: #{keypointnet_forward.14} parent=11 // pred_fallthru
        _
      // Predicated region
      $region21: #{keypointnet_forward.14} parent=11 // pred_check
        %p146 = pneg %p99
      $region22: #{keypointnet_forward.14} parent=11 // pred_check_branch
        %148 = sbr.rel (%p146) target = $region24
      $region23: #{keypointnet_forward.14} parent=11 // pred_region
        _
      $region24: #{keypointnet_forward.14} parent=11 // pred_fallthru
        _
    $region12: #{keypointnet_forward.14} parent=5 // pred_fallthru
      _
    %p149 = scmp.lt.s32.totalorder %s10, 2
    // Predicated region
    $region25: #{keypointnet_forward.14} parent=5 // pred_check
      %p150 = pneg %p149
    $region26: #{keypointnet_forward.14} parent=5 // pred_check_branch
      %152 = sbr.rel (%p150) target = $region28
    $region27: #{keypointnet_forward.14} parent=5 // pred_region
      // Predicated region
      $region29: #{keypointnet_forward.14} parent=27 // pred_check
        %p153 = pneg %p30
      $region30: #{keypointnet_forward.14} parent=27 // pred_check_branch
        %155 = sbr.rel (%p153) target = $region32
      $region31: #{keypointnet_forward.14} parent=27 // pred_region
        %s156 = smul.u32 128, %s10
        %p157 = scmp.lt.s32.totalorder %s156, 255
        %s158 = scalar_select %p157, %s156, 255
        %s159 = smul.addr %s158, 3
        %s160 = smul.addr %s159, 4
        %s161 = scalar_lea.vmem %s0, %s160
        %s162 = smul.u32 128, %s10
      $region32: #{keypointnet_forward.14} parent=27 // pred_fallthru
        _
    $region28: #{keypointnet_forward.14} parent=5 // pred_fallthru
      _
    %p163 = scmp.le.s32.totalorder 1, %s10
    %p164 = scmp.lt.s32.totalorder %s10, 3
    %p165 = pnand %p163, %p164
    %p166 = pneg %p165
    // Predicated region
    $region33: #{keypointnet_forward.14} parent=5 // pred_check
      _
    $region34: #{keypointnet_forward.14} parent=5 // pred_check_branch
      %168 = sbr.rel (%p165) target = $region36
    $region35: #{keypointnet_forward.14} parent=5 // pred_region
      %s169 = ssub.s32 %s10, 1
      %s170 = smul.u32 128, %s15
      %p171 = scmp.lt.s32.totalorder %s170, 255
      %s172 = scalar_select %p171, %s170, 255
      %s173 = smul.addr %s172, 3
      %s174 = smul.addr %s173, 4
      %s175 = scalar_lea.vmem %s0, %s174
      %p176 = pneg %p36
      %p177 = pneg %p33
      %p178 = pneg %p57
      %p179 = pneg %p54
      %p180 = pneg %p78
      %p181 = pneg %p75
      %p182 = pneg %p99
      %p183 = pneg %p96
      %p184 = pneg %p125
      %p185 = pneg %p122
      %s186 = smul.u32 128, %s15
      %p187 = scmp.lt.s32.totalorder %s186, 255
      %s188 = scalar_select %p187, %s186, 255
      %s189 = smul.addr %s188, 4
      %s190 = scalar_lea.vmem %s4, %s189
      %s191 = smul.u32 128, %s15
      %p192 = scmp.lt.s32.totalorder %s191, 255
      %s193 = scalar_select %p192, %s191, 255
      %s194 = smul.addr %s193, 3
      %s195 = smul.addr %s194, 4
      %s196 = scalar_lea.vmem %s0, %s195
      %s197 = smul.u32 128, %s15
      %s198 = smul.u32 128, %s15
      %p199 = scmp.lt.s32.totalorder %s198, 255
      %s200 = scalar_select %p199, %s198, 255
      %s201 = smul.addr %s200, 4
      %s202 = scalar_lea.vmem %s4, %s201
      %s203 = smul.u32 128, %s15
      %v205 = vld [vmem:[%s196] sm:$0xff]
      %v206 = vld [vmem:[%s196 + $0x8] sm:$0xf]
      %v207 = vld [vmem:[%s196 + $0xc] sm:$0xff]
      %v208 = vld [vmem:[%s196 + $0x14] sm:$0xf]
      %v209 = vld [vmem:[%s196 + $0x18] sm:$0xff]
      %v210 = vld [vmem:[%s196 + $0x20] sm:$0xf]
      %v211 = vld [vmem:[%s196 + $0x24] sm:$0xff]
      %v212 = vld [vmem:[%s196 + $0x2c] sm:$0xf]
      %v213 = vld [vmem:[%s196 + $0x30] sm:$0xff]
      %v214 = vld [vmem:[%s196 + $0x38] sm:$0xf]
      %v215 = vld [vmem:[%s196 + $0x3c] sm:$0xff]
      %v216 = vld [vmem:[%s196 + $0x44] sm:$0xf]
      %v217 = vld [vmem:[%s196 + $0x48] sm:$0xff]
      %v218 = vld [vmem:[%s196 + $0x50] sm:$0xf]
      %v219 = vld [vmem:[%s196 + $0x54] sm:$0xff]
      %v220 = vld [vmem:[%s196 + $0x5c] sm:$0xf]
      %v221 = vld [vmem:[%s196 + $0x60] sm:$0xff]
      %v222 = vld [vmem:[%s196 + $0x68] sm:$0xf]
      %v223 = vld [vmem:[%s196 + $0x6c] sm:$0xff]
      %v224 = vld [vmem:[%s196 + $0x74] sm:$0xf]
      %v225 = vld [vmem:[%s196 + $0x78] sm:$0xff]
      %v226 = vld [vmem:[%s196 + $0x80] sm:$0xf]
      %v227 = vld [vmem:[%s196 + $0x84] sm:$0xff]
      %v228 = vld [vmem:[%s196 + $0x8c] sm:$0xf]
      %v229 = vld [vmem:[%s196 + $0x90] sm:$0xff]
      %v230 = vld [vmem:[%s196 + $0x98] sm:$0xf]
      %v231 = vld [vmem:[%s196 + $0x9c] sm:$0xff]
      %v232 = vld [vmem:[%s196 + $0xa4] sm:$0xf]
      %v233 = vld [vmem:[%s196 + $0xa8] sm:$0xff]
      %v234 = vld [vmem:[%s196 + $0xb0] sm:$0xf]
      %v235 = vld [vmem:[%s196 + $0xb4] sm:$0xff]
      %v236 = vld [vmem:[%s196 + $0xbc] sm:$0xf]
      %v237 = vld [vmem:[%s196 + $0xc0] sm:$0xff]
      %v238 = vld [vmem:[%s196 + $0xc8] sm:$0xf]
      %v239 = vld [vmem:[%s196 + $0xcc] sm:$0xff]
      %v240 = vld [vmem:[%s196 + $0xd4] sm:$0xf]
      %v241 = vld [vmem:[%s196 + $0xd8] sm:$0xff]
      %v242 = vld [vmem:[%s196 + $0xe0] sm:$0xf]
      %v243 = vld [vmem:[%s196 + $0xe4] sm:$0xff]
      %v244 = vld [vmem:[%s196 + $0xec] sm:$0xf]
      %v245 = vld [vmem:[%s196 + $0xf0] sm:$0xff]
      %v246 = vld [vmem:[%s196 + $0xf8] sm:$0xf]
      %v247 = vld [vmem:[%s196 + $0xfc] sm:$0xff]
      %v248 = vld [vmem:[%s196 + $0x104] sm:$0xf]
      %v249 = vld [vmem:[%s196 + $0x108] sm:$0xff]
      %v250 = vld [vmem:[%s196 + $0x110] sm:$0xf]
      %v251 = vld [vmem:[%s196 + $0x114] sm:$0xff]
      %v252 = vld [vmem:[%s196 + $0x11c] sm:$0xf]
      %v253 = vld [vmem:[%s196 + $0x120] sm:$0xff]
      %v254 = vld [vmem:[%s196 + $0x128] sm:$0xf]
      %v255 = vld [vmem:[%s196 + $0x12c] sm:$0xff]
      %v256 = vld [vmem:[%s196 + $0x134] sm:$0xf]
      %v257 = vld [vmem:[%s196 + $0x138] sm:$0xff]
      %v258 = vld [vmem:[%s196 + $0x140] sm:$0xf]
      %v259 = vld [vmem:[%s196 + $0x144] sm:$0xff]
      %v260 = vld [vmem:[%s196 + $0x14c] sm:$0xf]
      %v261 = vld [vmem:[%s196 + $0x150] sm:$0xff]
      %v262 = vld [vmem:[%s196 + $0x158] sm:$0xf]
      %v263 = vld [vmem:[%s196 + $0x15c] sm:$0xff]
      %v264 = vld [vmem:[%s196 + $0x164] sm:$0xf]
      %v265 = vld [vmem:[%s196 + $0x168] sm:$0xff]
      %v266 = vld [vmem:[%s196 + $0x170] sm:$0xf]
      %v267 = vld [vmem:[%s196 + $0x174] sm:$0xff]
      %v268 = vld [vmem:[%s196 + $0x17c] sm:$0xf]
      %v269 = vld [vmem:[%s196 + $0x180] sm:$0xff]
      %v270 = vld [vmem:[%s196 + $0x188] sm:$0xf]
      %v271 = vld [vmem:[%s196 + $0x18c] sm:$0xff]
      %v272 = vld [vmem:[%s196 + $0x194] sm:$0xf]
      %v273 = vld [vmem:[%s196 + $0x198] sm:$0xff]
      %v274 = vld [vmem:[%s196 + $0x1a0] sm:$0xf]
      %v275 = vld [vmem:[%s196 + $0x1a4] sm:$0xff]
      %v276 = vld [vmem:[%s196 + $0x1ac] sm:$0xf]
      %v277 = vld [vmem:[%s196 + $0x1b0] sm:$0xff]
      %v278 = vld [vmem:[%s196 + $0x1b8] sm:$0xf]
      %v279 = vld [vmem:[%s196 + $0x1bc] sm:$0xff]
      %v280 = vld [vmem:[%s196 + $0x1c4] sm:$0xf]
      %v281 = vld [vmem:[%s196 + $0x1c8] sm:$0xff]
      %v282 = vld [vmem:[%s196 + $0x1d0] sm:$0xf]
      %v283 = vld [vmem:[%s196 + $0x1d4] sm:$0xff]
      %v284 = vld [vmem:[%s196 + $0x1dc] sm:$0xf]
      %v285 = vld [vmem:[%s196 + $0x1e0] sm:$0xff]
      %v286 = vld [vmem:[%s196 + $0x1e8] sm:$0xf]
      %v287 = vld [vmem:[%s196 + $0x1ec] sm:$0xff]
      %v288 = vld [vmem:[%s196 + $0x1f4] sm:$0xf]
      %v289 = vld [vmem:[%s196 + $0x1f8] sm:$0xff]
      %v290 = vld [vmem:[%s196 + $0x200] sm:$0xf]
      %v291 = vld [vmem:[%s196 + $0x204] sm:$0xff]
      %v292 = vld [vmem:[%s196 + $0x20c] sm:$0xf]
      %v293 = vld [vmem:[%s196 + $0x210] sm:$0xff]
      %v294 = vld [vmem:[%s196 + $0x218] sm:$0xf]
      %v295 = vld [vmem:[%s196 + $0x21c] sm:$0xff]
      %v296 = vld [vmem:[%s196 + $0x224] sm:$0xf]
      %v297 = vld [vmem:[%s196 + $0x228] sm:$0xff]
      %v298 = vld [vmem:[%s196 + $0x230] sm:$0xf]
      %v299 = vld [vmem:[%s196 + $0x234] sm:$0xff]
      %v300 = vld [vmem:[%s196 + $0x23c] sm:$0xf]
      %v301 = vld [vmem:[%s196 + $0x240] sm:$0xff]
      %v302 = vld [vmem:[%s196 + $0x248] sm:$0xf]
      %v303 = vld [vmem:[%s196 + $0x24c] sm:$0xff]
      %v304 = vld [vmem:[%s196 + $0x254] sm:$0xf]
      %v305 = vld [vmem:[%s196 + $0x258] sm:$0xff]
      %v306 = vld [vmem:[%s196 + $0x260] sm:$0xf]
      %v307 = vld [vmem:[%s196 + $0x264] sm:$0xff]
      %v308 = vld [vmem:[%s196 + $0x26c] sm:$0xf]
      %v309 = vld [vmem:[%s196 + $0x270] sm:$0xff]
      %v310 = vld [vmem:[%s196 + $0x278] sm:$0xf]
      %v311 = vld [vmem:[%s196 + $0x27c] sm:$0xff]
      %v312 = vld [vmem:[%s196 + $0x284] sm:$0xf]
      %v313 = vld [vmem:[%s196 + $0x288] sm:$0xff]
      %v314 = vld [vmem:[%s196 + $0x290] sm:$0xf]
      %v315 = vld [vmem:[%s196 + $0x294] sm:$0xff]
      %v316 = vld [vmem:[%s196 + $0x29c] sm:$0xf]
      %v317 = vld [vmem:[%s196 + $0x2a0] sm:$0xff]
      %v318 = vld [vmem:[%s196 + $0x2a8] sm:$0xf]
      %v319 = vld [vmem:[%s196 + $0x2ac] sm:$0xff]
      %v320 = vld [vmem:[%s196 + $0x2b4] sm:$0xf]
      %v321 = vld [vmem:[%s196 + $0x2b8] sm:$0xff]
      %v322 = vld [vmem:[%s196 + $0x2c0] sm:$0xf]
      %v323 = vld [vmem:[%s196 + $0x2c4] sm:$0xff]
      %v324 = vld [vmem:[%s196 + $0x2cc] sm:$0xf]
      %v325 = vld [vmem:[%s196 + $0x2d0] sm:$0xff]
      %v326 = vld [vmem:[%s196 + $0x2d8] sm:$0xf]
      %v327 = vld [vmem:[%s196 + $0x2dc] sm:$0xff]
      %v328 = vld [vmem:[%s196 + $0x2e4] sm:$0xf]
      %v329 = vld [vmem:[%s196 + $0x2e8] sm:$0xff]
      %v330 = vld [vmem:[%s196 + $0x2f0] sm:$0xf]
      %v331 = vld [vmem:[%s196 + $0x2f4] sm:$0xff]
      %v332 = vld [vmem:[%s196 + $0x2fc] sm:$0xf]
      %v333 = vld [vmem:[%s196 + $0x300] sm:$0xff]
      %v334 = vld [vmem:[%s196 + $0x308] sm:$0xf]
      %v335 = vld [vmem:[%s196 + $0x30c] sm:$0xff]
      %v336 = vld [vmem:[%s196 + $0x314] sm:$0xf]
      %v337 = vld [vmem:[%s196 + $0x318] sm:$0xff]
      %v338 = vld [vmem:[%s196 + $0x320] sm:$0xf]
      %v339 = vld [vmem:[%s196 + $0x324] sm:$0xff]
      %v340 = vld [vmem:[%s196 + $0x32c] sm:$0xf]
      %v341 = vld [vmem:[%s196 + $0x330] sm:$0xff]
      %v342 = vld [vmem:[%s196 + $0x338] sm:$0xf]
      %v343 = vld [vmem:[%s196 + $0x33c] sm:$0xff]
      %v344 = vld [vmem:[%s196 + $0x344] sm:$0xf]
      %v345 = vld [vmem:[%s196 + $0x348] sm:$0xff]
      %v346 = vld [vmem:[%s196 + $0x350] sm:$0xf]
      %v347 = vld [vmem:[%s196 + $0x354] sm:$0xff]
      %v348 = vld [vmem:[%s196 + $0x35c] sm:$0xf]
      %v349 = vld [vmem:[%s196 + $0x360] sm:$0xff]
      %v350 = vld [vmem:[%s196 + $0x368] sm:$0xf]
      %v351 = vld [vmem:[%s196 + $0x36c] sm:$0xff]
      %v352 = vld [vmem:[%s196 + $0x374] sm:$0xf]
      %v353 = vld [vmem:[%s196 + $0x378] sm:$0xff]
      %v354 = vld [vmem:[%s196 + $0x380] sm:$0xf]
      %v355 = vld [vmem:[%s196 + $0x384] sm:$0xff]
      %v356 = vld [vmem:[%s196 + $0x38c] sm:$0xf]
      %v357 = vld [vmem:[%s196 + $0x390] sm:$0xff]
      %v358 = vld [vmem:[%s196 + $0x398] sm:$0xf]
      %v359 = vld [vmem:[%s196 + $0x39c] sm:$0xff]
      %v360 = vld [vmem:[%s196 + $0x3a4] sm:$0xf]
      %v361 = vld [vmem:[%s196 + $0x3a8] sm:$0xff]
      %v362 = vld [vmem:[%s196 + $0x3b0] sm:$0xf]
      %v363 = vld [vmem:[%s196 + $0x3b4] sm:$0xff]
      %v364 = vld [vmem:[%s196 + $0x3bc] sm:$0xf]
      %v365 = vld [vmem:[%s196 + $0x3c0] sm:$0xff]
      %v366 = vld [vmem:[%s196 + $0x3c8] sm:$0xf]
      %v367 = vld [vmem:[%s196 + $0x3cc] sm:$0xff]
      %v368 = vld [vmem:[%s196 + $0x3d4] sm:$0xf]
      %v369 = vld [vmem:[%s196 + $0x3d8] sm:$0xff]
      %v370 = vld [vmem:[%s196 + $0x3e0] sm:$0xf]
      %v371 = vld [vmem:[%s196 + $0x3e4] sm:$0xff]
      %v372 = vld [vmem:[%s196 + $0x3ec] sm:$0xf]
      %v373 = vld [vmem:[%s196 + $0x3f0] sm:$0xff]
      %v374 = vld [vmem:[%s196 + $0x3f8] sm:$0xf]
      %v375 = vld [vmem:[%s196 + $0x3fc] sm:$0xff]
      %v376 = vld [vmem:[%s196 + $0x404] sm:$0xf]
      %v377 = vld [vmem:[%s196 + $0x408] sm:$0xff]
      %v378 = vld [vmem:[%s196 + $0x410] sm:$0xf]
      %v379 = vld [vmem:[%s196 + $0x414] sm:$0xff]
      %v380 = vld [vmem:[%s196 + $0x41c] sm:$0xf]
      %v381 = vld [vmem:[%s196 + $0x420] sm:$0xff]
      %v382 = vld [vmem:[%s196 + $0x428] sm:$0xf]
      %v383 = vld [vmem:[%s196 + $0x42c] sm:$0xff]
      %v384 = vld [vmem:[%s196 + $0x434] sm:$0xf]
      %v385 = vld [vmem:[%s196 + $0x438] sm:$0xff]
      %v386 = vld [vmem:[%s196 + $0x440] sm:$0xf]
      %v387 = vld [vmem:[%s196 + $0x444] sm:$0xff]
      %v388 = vld [vmem:[%s196 + $0x44c] sm:$0xf]
      %v389 = vld [vmem:[%s196 + $0x450] sm:$0xff]
      %v390 = vld [vmem:[%s196 + $0x458] sm:$0xf]
      %v391 = vld [vmem:[%s196 + $0x45c] sm:$0xff]
      %v392 = vld [vmem:[%s196 + $0x464] sm:$0xf]
      %v393 = vld [vmem:[%s196 + $0x468] sm:$0xff]
      %v394 = vld [vmem:[%s196 + $0x470] sm:$0xf]
      %v395 = vld [vmem:[%s196 + $0x474] sm:$0xff]
      %v396 = vld [vmem:[%s196 + $0x47c] sm:$0xf]
      %v397 = vld [vmem:[%s196 + $0x480] sm:$0xff]
      %v398 = vld [vmem:[%s196 + $0x488] sm:$0xf]
      %v399 = vld [vmem:[%s196 + $0x48c] sm:$0xff]
      %v400 = vld [vmem:[%s196 + $0x494] sm:$0xf]
      %v401 = vld [vmem:[%s196 + $0x498] sm:$0xff]
      %v402 = vld [vmem:[%s196 + $0x4a0] sm:$0xf]
      %v403 = vld [vmem:[%s196 + $0x4a4] sm:$0xff]
      %v404 = vld [vmem:[%s196 + $0x4ac] sm:$0xf]
      %v405 = vld [vmem:[%s196 + $0x4b0] sm:$0xff]
      %v406 = vld [vmem:[%s196 + $0x4b8] sm:$0xf]
      %v407 = vld [vmem:[%s196 + $0x4bc] sm:$0xff]
      %v408 = vld [vmem:[%s196 + $0x4c4] sm:$0xf]
      %v409 = vld [vmem:[%s196 + $0x4c8] sm:$0xff]
      %v410 = vld [vmem:[%s196 + $0x4d0] sm:$0xf]
      %v411 = vld [vmem:[%s196 + $0x4d4] sm:$0xff]
      %v412 = vld [vmem:[%s196 + $0x4dc] sm:$0xf]
      %v413 = vld [vmem:[%s196 + $0x4e0] sm:$0xff]
      %v414 = vld [vmem:[%s196 + $0x4e8] sm:$0xf]
      %v415 = vld [vmem:[%s196 + $0x4ec] sm:$0xff]
      %v416 = vld [vmem:[%s196 + $0x4f4] sm:$0xf]
      %v417 = vld [vmem:[%s196 + $0x4f8] sm:$0xff]
      %v418 = vld [vmem:[%s196 + $0x500] sm:$0xf]
      %v419 = vld [vmem:[%s196 + $0x504] sm:$0xff]
      %v420 = vld [vmem:[%s196 + $0x50c] sm:$0xf]
      %v421 = vld [vmem:[%s196 + $0x510] sm:$0xff]
      %v422 = vld [vmem:[%s196 + $0x518] sm:$0xf]
      %v423 = vld [vmem:[%s196 + $0x51c] sm:$0xff]
      %v424 = vld [vmem:[%s196 + $0x524] sm:$0xf]
      %v425 = vld [vmem:[%s196 + $0x528] sm:$0xff]
      %v426 = vld [vmem:[%s196 + $0x530] sm:$0xf]
      %v427 = vld [vmem:[%s196 + $0x534] sm:$0xff]
      %v428 = vld [vmem:[%s196 + $0x53c] sm:$0xf]
      %v429 = vld [vmem:[%s196 + $0x540] sm:$0xff]
      %v430 = vld [vmem:[%s196 + $0x548] sm:$0xf]
      %v431 = vld [vmem:[%s196 + $0x54c] sm:$0xff]
      %v432 = vld [vmem:[%s196 + $0x554] sm:$0xf]
      %v433 = vld [vmem:[%s196 + $0x558] sm:$0xff]
      %v434 = vld [vmem:[%s196 + $0x560] sm:$0xf]
      %v435 = vld [vmem:[%s196 + $0x564] sm:$0xff]
      %v436 = vld [vmem:[%s196 + $0x56c] sm:$0xf]
      %v437 = vld [vmem:[%s196 + $0x570] sm:$0xff]
      %v438 = vld [vmem:[%s196 + $0x578] sm:$0xf]
      %v439 = vld [vmem:[%s196 + $0x57c] sm:$0xff]
      %v440 = vld [vmem:[%s196 + $0x584] sm:$0xf]
      %v441 = vld [vmem:[%s196 + $0x588] sm:$0xff]
      %v442 = vld [vmem:[%s196 + $0x590] sm:$0xf]
      %v443 = vld [vmem:[%s196 + $0x594] sm:$0xff]
      %v444 = vld [vmem:[%s196 + $0x59c] sm:$0xf]
      %v445 = vld [vmem:[%s196 + $0x5a0] sm:$0xff]
      %v446 = vld [vmem:[%s196 + $0x5a8] sm:$0xf]
      %v447 = vld [vmem:[%s196 + $0x5ac] sm:$0xff]
      %v448 = vld [vmem:[%s196 + $0x5b4] sm:$0xf]
      %v449 = vld [vmem:[%s196 + $0x5b8] sm:$0xff]
      %v450 = vld [vmem:[%s196 + $0x5c0] sm:$0xf]
      %v451 = vld [vmem:[%s196 + $0x5c4] sm:$0xff]
      %v452 = vld [vmem:[%s196 + $0x5cc] sm:$0xf]
      %v453 = vld [vmem:[%s196 + $0x5d0] sm:$0xff]
      %v454 = vld [vmem:[%s196 + $0x5d8] sm:$0xf]
      %v455 = vld [vmem:[%s196 + $0x5dc] sm:$0xff]
      %v456 = vld [vmem:[%s196 + $0x5e4] sm:$0xf]
      %v457 = vld [vmem:[%s196 + $0x5e8] sm:$0xff]
      %v458 = vld [vmem:[%s196 + $0x5f0] sm:$0xf]
      %v459 = vld [vmem:[%s196 + $0x5f4] sm:$0xff]
      %v460 = vld [vmem:[%s196 + $0x5fc] sm:$0xf]
      %v461 = vld [vmem:[%s1] sm:$0xf]
      %v462 = vld [vmem:[%s1 + $0x4] sm:$0xf]
      %v463 = vld [vmem:[%s1 + $0x8] sm:$0xf]
      %v464 = vld [vmem:[%s1 + $0xc] sm:$0xf]
      %v465 = vld [vmem:[%s1 + $0x10] sm:$0xf]
      %v466 = vld [vmem:[%s1 + $0x14] sm:$0xf]
      %v467 = vld [vmem:[%s1 + $0x18] sm:$0xf]
      %v468 = vld [vmem:[%s1 + $0x1c] sm:$0xf]
      %v469 = vld [vmem:[%s1 + $0x20] sm:$0xf]
      %v470 = vld [vmem:[%s1 + $0x24] sm:$0xf]
      %v471 = vld [vmem:[%s1 + $0x28] sm:$0xf]
      %v472 = vld [vmem:[%s1 + $0x2c] sm:$0xf]
      %v473 = vld [vmem:[%s1 + $0x30] sm:$0xf]
      %v474 = vld [vmem:[%s1 + $0x34] sm:$0xf]
      %v475 = vld [vmem:[%s1 + $0x38] sm:$0xf]
      %v476 = vld [vmem:[%s1 + $0x3c] sm:$0xf]
      %v477 = vld [vmem:[%s1 + $0x40] sm:$0xf]
      %v478 = vld [vmem:[%s1 + $0x44] sm:$0xf]
      %v479 = vld [vmem:[%s1 + $0x48] sm:$0xf]
      %v480 = vld [vmem:[%s1 + $0x4c] sm:$0xf]
      %v481 = vld [vmem:[%s1 + $0x50] sm:$0xf]
      %v482 = vld [vmem:[%s1 + $0x54] sm:$0xf]
      %v483 = vld [vmem:[%s1 + $0x58] sm:$0xf]
      %v484 = vld [vmem:[%s1 + $0x5c] sm:$0xf]
      %v485 = vld [vmem:[%s1 + $0x60] sm:$0xf]
      %v486 = vld [vmem:[%s1 + $0x64] sm:$0xf]
      %v487 = vld [vmem:[%s1 + $0x68] sm:$0xf]
      %v488 = vld [vmem:[%s1 + $0x6c] sm:$0xf]
      %v489 = vld [vmem:[%s1 + $0x70] sm:$0xf]
      %v490 = vld [vmem:[%s1 + $0x74] sm:$0xf]
      %v491 = vld [vmem:[%s1 + $0x78] sm:$0xf]
      %v492 = vld [vmem:[%s1 + $0x7c] sm:$0xf]
      %v493 = vld [vmem:[%s1 + $0x80] sm:$0xf]
      %v494 = vld [vmem:[%s1 + $0x84] sm:$0xf]
      %v495 = vld [vmem:[%s1 + $0x88] sm:$0xf]
      %v496 = vld [vmem:[%s1 + $0x8c] sm:$0xf]
      %v753 = vunpack.c.l.b16 %v205
      %v754 = vunpack.c.h.b16 %v205
      %v755 = vunpack.c.l.b16 %v206
      %v756 = vunpack.c.l.b16 %v207
      %v757 = vunpack.c.h.b16 %v207
      %v758 = vunpack.c.l.b16 %v208
      %v759 = vunpack.c.l.b16 %v209
      %v760 = vunpack.c.h.b16 %v209
      %v761 = vunpack.c.l.b16 %v210
      %v762 = vunpack.c.l.b16 %v211
      %v763 = vunpack.c.h.b16 %v211
      %v764 = vunpack.c.l.b16 %v212
      %v765 = vunpack.c.l.b16 %v213
      %v766 = vunpack.c.h.b16 %v213
      %v767 = vunpack.c.l.b16 %v214
      %v768 = vunpack.c.l.b16 %v215
      %v769 = vunpack.c.h.b16 %v215
      %v770 = vunpack.c.l.b16 %v216
      %v771 = vunpack.c.l.b16 %v217
      %v772 = vunpack.c.h.b16 %v217
      %v773 = vunpack.c.l.b16 %v218
      %v774 = vunpack.c.l.b16 %v219
      %v775 = vunpack.c.h.b16 %v219
      %v776 = vunpack.c.l.b16 %v220
      %v777 = vunpack.c.l.b16 %v221
      %v778 = vunpack.c.h.b16 %v221
      %v779 = vunpack.c.l.b16 %v222
      %v780 = vunpack.c.l.b16 %v223
      %v781 = vunpack.c.h.b16 %v223
      %v782 = vunpack.c.l.b16 %v224
      %v783 = vunpack.c.l.b16 %v225
      %v784 = vunpack.c.h.b16 %v225
      %v785 = vunpack.c.l.b16 %v226
      %v786 = vunpack.c.l.b16 %v227
      %v787 = vunpack.c.h.b16 %v227
      %v788 = vunpack.c.l.b16 %v228
      %v789 = vunpack.c.l.b16 %v229
      %v790 = vunpack.c.h.b16 %v229
      %v791 = vunpack.c.l.b16 %v230
      %v792 = vunpack.c.l.b16 %v231
      %v793 = vunpack.c.h.b16 %v231
      %v794 = vunpack.c.l.b16 %v232
      %v795 = vunpack.c.l.b16 %v233
      %v796 = vunpack.c.h.b16 %v233
      %v797 = vunpack.c.l.b16 %v234
      %v798 = vunpack.c.l.b16 %v235
      %v799 = vunpack.c.h.b16 %v235
      %v800 = vunpack.c.l.b16 %v236
      %v801 = vunpack.c.l.b16 %v237
      %v802 = vunpack.c.h.b16 %v237
      %v803 = vunpack.c.l.b16 %v238
      %v804 = vunpack.c.l.b16 %v239
      %v805 = vunpack.c.h.b16 %v239
      %v806 = vunpack.c.l.b16 %v240
      %v807 = vunpack.c.l.b16 %v241
      %v808 = vunpack.c.h.b16 %v241
      %v809 = vunpack.c.l.b16 %v242
      %v810 = vunpack.c.l.b16 %v243
      %v811 = vunpack.c.h.b16 %v243
      %v812 = vunpack.c.l.b16 %v244
      %v813 = vunpack.c.l.b16 %v245
      %v814 = vunpack.c.h.b16 %v245
      %v815 = vunpack.c.l.b16 %v246
      %v816 = vunpack.c.l.b16 %v247
      %v817 = vunpack.c.h.b16 %v247
      %v818 = vunpack.c.l.b16 %v248
      %v819 = vunpack.c.l.b16 %v249
      %v820 = vunpack.c.h.b16 %v249
      %v821 = vunpack.c.l.b16 %v250
      %v822 = vunpack.c.l.b16 %v251
      %v823 = vunpack.c.h.b16 %v251
      %v824 = vunpack.c.l.b16 %v252
      %v825 = vunpack.c.l.b16 %v253
      %v826 = vunpack.c.h.b16 %v253
      %v827 = vunpack.c.l.b16 %v254
      %v828 = vunpack.c.l.b16 %v255
      %v829 = vunpack.c.h.b16 %v255
      %v830 = vunpack.c.l.b16 %v256
      %v831 = vunpack.c.l.b16 %v257
      %v832 = vunpack.c.h.b16 %v257
      %v833 = vunpack.c.l.b16 %v258
      %v834 = vunpack.c.l.b16 %v259
      %v835 = vunpack.c.h.b16 %v259
      %v836 = vunpack.c.l.b16 %v260
      %v837 = vunpack.c.l.b16 %v261
      %v838 = vunpack.c.h.b16 %v261
      %v839 = vunpack.c.l.b16 %v262
      %v840 = vunpack.c.l.b16 %v263
      %v841 = vunpack.c.h.b16 %v263
      %v842 = vunpack.c.l.b16 %v264
      %v843 = vunpack.c.l.b16 %v265
      %v844 = vunpack.c.h.b16 %v265
      %v845 = vunpack.c.l.b16 %v266
      %v846 = vunpack.c.l.b16 %v267
      %v847 = vunpack.c.h.b16 %v267
      %v848 = vunpack.c.l.b16 %v268
      %v849 = vunpack.c.l.b16 %v269
      %v850 = vunpack.c.h.b16 %v269
      %v851 = vunpack.c.l.b16 %v270
      %v852 = vunpack.c.l.b16 %v271
      %v853 = vunpack.c.h.b16 %v271
      %v854 = vunpack.c.l.b16 %v272
      %v855 = vunpack.c.l.b16 %v273
      %v856 = vunpack.c.h.b16 %v273
      %v857 = vunpack.c.l.b16 %v274
      %v858 = vunpack.c.l.b16 %v275
      %v859 = vunpack.c.h.b16 %v275
      %v860 = vunpack.c.l.b16 %v276
      %v861 = vunpack.c.l.b16 %v277
      %v862 = vunpack.c.h.b16 %v277
      %v863 = vunpack.c.l.b16 %v278
      %v864 = vunpack.c.l.b16 %v279
      %v865 = vunpack.c.h.b16 %v279
      %v866 = vunpack.c.l.b16 %v280
      %v867 = vunpack.c.l.b16 %v281
      %v868 = vunpack.c.h.b16 %v281
      %v869 = vunpack.c.l.b16 %v282
      %v870 = vunpack.c.l.b16 %v283
      %v871 = vunpack.c.h.b16 %v283
      %v872 = vunpack.c.l.b16 %v284
      %v873 = vunpack.c.l.b16 %v285
      %v874 = vunpack.c.h.b16 %v285
      %v875 = vunpack.c.l.b16 %v286
      %v876 = vunpack.c.l.b16 %v287
      %v877 = vunpack.c.h.b16 %v287
      %v878 = vunpack.c.l.b16 %v288
      %v879 = vunpack.c.l.b16 %v289
      %v880 = vunpack.c.h.b16 %v289
      %v881 = vunpack.c.l.b16 %v290
      %v882 = vunpack.c.l.b16 %v291
      %v883 = vunpack.c.h.b16 %v291
      %v884 = vunpack.c.l.b16 %v292
      %v885 = vunpack.c.l.b16 %v293
      %v886 = vunpack.c.h.b16 %v293
      %v887 = vunpack.c.l.b16 %v294
      %v888 = vunpack.c.l.b16 %v295
      %v889 = vunpack.c.h.b16 %v295
      %v890 = vunpack.c.l.b16 %v296
      %v891 = vunpack.c.l.b16 %v297
      %v892 = vunpack.c.h.b16 %v297
      %v893 = vunpack.c.l.b16 %v298
      %v894 = vunpack.c.l.b16 %v299
      %v895 = vunpack.c.h.b16 %v299
      %v896 = vunpack.c.l.b16 %v300
      %v897 = vunpack.c.l.b16 %v301
      %v898 = vunpack.c.h.b16 %v301
      %v899 = vunpack.c.l.b16 %v302
      %v900 = vunpack.c.l.b16 %v303
      %v901 = vunpack.c.h.b16 %v303
      %v902 = vunpack.c.l.b16 %v304
      %v903 = vunpack.c.l.b16 %v305
      %v904 = vunpack.c.h.b16 %v305
      %v905 = vunpack.c.l.b16 %v306
      %v906 = vunpack.c.l.b16 %v307
      %v907 = vunpack.c.h.b16 %v307
      %v908 = vunpack.c.l.b16 %v308
      %v909 = vunpack.c.l.b16 %v309
      %v910 = vunpack.c.h.b16 %v309
      %v911 = vunpack.c.l.b16 %v310
      %v912 = vunpack.c.l.b16 %v311
      %v913 = vunpack.c.h.b16 %v311
      %v914 = vunpack.c.l.b16 %v312
      %v915 = vunpack.c.l.b16 %v313
      %v916 = vunpack.c.h.b16 %v313
      %v917 = vunpack.c.l.b16 %v314
      %v918 = vunpack.c.l.b16 %v315
      %v919 = vunpack.c.h.b16 %v315
      %v920 = vunpack.c.l.b16 %v316
      %v921 = vunpack.c.l.b16 %v317
      %v922 = vunpack.c.h.b16 %v317
      %v923 = vunpack.c.l.b16 %v318
      %v924 = vunpack.c.l.b16 %v319
      %v925 = vunpack.c.h.b16 %v319
      %v926 = vunpack.c.l.b16 %v320
      %v927 = vunpack.c.l.b16 %v321
      %v928 = vunpack.c.h.b16 %v321
      %v929 = vunpack.c.l.b16 %v322
      %v930 = vunpack.c.l.b16 %v323
      %v931 = vunpack.c.h.b16 %v323
      %v932 = vunpack.c.l.b16 %v324
      %v933 = vunpack.c.l.b16 %v325
      %v934 = vunpack.c.h.b16 %v325
      %v935 = vunpack.c.l.b16 %v326
      %v936 = vunpack.c.l.b16 %v327
      %v937 = vunpack.c.h.b16 %v327
      %v938 = vunpack.c.l.b16 %v328
      %v939 = vunpack.c.l.b16 %v329
      %v940 = vunpack.c.h.b16 %v329
      %v941 = vunpack.c.l.b16 %v330
      %v942 = vunpack.c.l.b16 %v331
      %v943 = vunpack.c.h.b16 %v331
      %v944 = vunpack.c.l.b16 %v332
      %v945 = vunpack.c.l.b16 %v333
      %v946 = vunpack.c.h.b16 %v333
      %v947 = vunpack.c.l.b16 %v334
      %v948 = vunpack.c.l.b16 %v335
      %v949 = vunpack.c.h.b16 %v335
      %v950 = vunpack.c.l.b16 %v336
      %v951 = vunpack.c.l.b16 %v337
      %v952 = vunpack.c.h.b16 %v337
      %v953 = vunpack.c.l.b16 %v338
      %v954 = vunpack.c.l.b16 %v339
      %v955 = vunpack.c.h.b16 %v339
      %v956 = vunpack.c.l.b16 %v340
      %v957 = vunpack.c.l.b16 %v341
      %v958 = vunpack.c.h.b16 %v341
      %v959 = vunpack.c.l.b16 %v342
      %v960 = vunpack.c.l.b16 %v343
      %v961 = vunpack.c.h.b16 %v343
      %v962 = vunpack.c.l.b16 %v344
      %v963 = vunpack.c.l.b16 %v345
      %v964 = vunpack.c.h.b16 %v345
      %v965 = vunpack.c.l.b16 %v346
      %v966 = vunpack.c.l.b16 %v347
      %v967 = vunpack.c.h.b16 %v347
      %v968 = vunpack.c.l.b16 %v348
      %v969 = vunpack.c.l.b16 %v349
      %v970 = vunpack.c.h.b16 %v349
      %v971 = vunpack.c.l.b16 %v350
      %v972 = vunpack.c.l.b16 %v351
      %v973 = vunpack.c.h.b16 %v351
      %v974 = vunpack.c.l.b16 %v352
      %v975 = vunpack.c.l.b16 %v353
      %v976 = vunpack.c.h.b16 %v353
      %v977 = vunpack.c.l.b16 %v354
      %v978 = vunpack.c.l.b16 %v355
      %v979 = vunpack.c.h.b16 %v355
      %v980 = vunpack.c.l.b16 %v356
      %v981 = vunpack.c.l.b16 %v357
      %v982 = vunpack.c.h.b16 %v357
      %v983 = vunpack.c.l.b16 %v358
      %v984 = vunpack.c.l.b16 %v359
      %v985 = vunpack.c.h.b16 %v359
      %v986 = vunpack.c.l.b16 %v360
      %v987 = vunpack.c.l.b16 %v361
      %v988 = vunpack.c.h.b16 %v361
      %v989 = vunpack.c.l.b16 %v362
      %v990 = vunpack.c.l.b16 %v363
      %v991 = vunpack.c.h.b16 %v363
      %v992 = vunpack.c.l.b16 %v364
      %v993 = vunpack.c.l.b16 %v365
      %v994 = vunpack.c.h.b16 %v365
      %v995 = vunpack.c.l.b16 %v366
      %v996 = vunpack.c.l.b16 %v367
      %v997 = vunpack.c.h.b16 %v367
      %v998 = vunpack.c.l.b16 %v368
      %v999 = vunpack.c.l.b16 %v369
      %v1000 = vunpack.c.h.b16 %v369
      %v1001 = vunpack.c.l.b16 %v370
      %v1002 = vunpack.c.l.b16 %v371
      %v1003 = vunpack.c.h.b16 %v371
      %v1004 = vunpack.c.l.b16 %v372
      %v1005 = vunpack.c.l.b16 %v373
      %v1006 = vunpack.c.h.b16 %v373
      %v1007 = vunpack.c.l.b16 %v374
      %v1008 = vunpack.c.l.b16 %v375
      %v1009 = vunpack.c.h.b16 %v375
      %v1010 = vunpack.c.l.b16 %v376
      %v1011 = vunpack.c.l.b16 %v377
      %v1012 = vunpack.c.h.b16 %v377
      %v1013 = vunpack.c.l.b16 %v378
      %v1014 = vunpack.c.l.b16 %v379
      %v1015 = vunpack.c.h.b16 %v379
      %v1016 = vunpack.c.l.b16 %v380
      %v1017 = vunpack.c.l.b16 %v381
      %v1018 = vunpack.c.h.b16 %v381
      %v1019 = vunpack.c.l.b16 %v382
      %v1020 = vunpack.c.l.b16 %v383
      %v1021 = vunpack.c.h.b16 %v383
      %v1022 = vunpack.c.l.b16 %v384
      %v1023 = vunpack.c.l.b16 %v385
      %v1024 = vunpack.c.h.b16 %v385
      %v1025 = vunpack.c.l.b16 %v386
      %v1026 = vunpack.c.l.b16 %v387
      %v1027 = vunpack.c.h.b16 %v387
      %v1028 = vunpack.c.l.b16 %v388
      %v1029 = vunpack.c.l.b16 %v389
      %v1030 = vunpack.c.h.b16 %v389
      %v1031 = vunpack.c.l.b16 %v390
      %v1032 = vunpack.c.l.b16 %v391
      %v1033 = vunpack.c.h.b16 %v391
      %v1034 = vunpack.c.l.b16 %v392
      %v1035 = vunpack.c.l.b16 %v393
      %v1036 = vunpack.c.h.b16 %v393
      %v1037 = vunpack.c.l.b16 %v394
      %v1038 = vunpack.c.l.b16 %v395
      %v1039 = vunpack.c.h.b16 %v395
      %v1040 = vunpack.c.l.b16 %v396
      %v1041 = vunpack.c.l.b16 %v397
      %v1042 = vunpack.c.h.b16 %v397
      %v1043 = vunpack.c.l.b16 %v398
      %v1044 = vunpack.c.l.b16 %v399
      %v1045 = vunpack.c.h.b16 %v399
      %v1046 = vunpack.c.l.b16 %v400
      %v1047 = vunpack.c.l.b16 %v401
      %v1048 = vunpack.c.h.b16 %v401
      %v1049 = vunpack.c.l.b16 %v402
      %v1050 = vunpack.c.l.b16 %v403
      %v1051 = vunpack.c.h.b16 %v403
      %v1052 = vunpack.c.l.b16 %v404
      %v1053 = vunpack.c.l.b16 %v405
      %v1054 = vunpack.c.h.b16 %v405
      %v1055 = vunpack.c.l.b16 %v406
      %v1056 = vunpack.c.l.b16 %v407
      %v1057 = vunpack.c.h.b16 %v407
      %v1058 = vunpack.c.l.b16 %v408
      %v1059 = vunpack.c.l.b16 %v409
      %v1060 = vunpack.c.h.b16 %v409
      %v1061 = vunpack.c.l.b16 %v410
      %v1062 = vunpack.c.l.b16 %v411
      %v1063 = vunpack.c.h.b16 %v411
      %v1064 = vunpack.c.l.b16 %v412
      %v1065 = vunpack.c.l.b16 %v413
      %v1066 = vunpack.c.h.b16 %v413
      %v1067 = vunpack.c.l.b16 %v414
      %v1068 = vunpack.c.l.b16 %v415
      %v1069 = vunpack.c.h.b16 %v415
      %v1070 = vunpack.c.l.b16 %v416
      %v1071 = vunpack.c.l.b16 %v417
      %v1072 = vunpack.c.h.b16 %v417
      %v1073 = vunpack.c.l.b16 %v418
      %v1074 = vunpack.c.l.b16 %v419
      %v1075 = vunpack.c.h.b16 %v419
      %v1076 = vunpack.c.l.b16 %v420
      %v1077 = vunpack.c.l.b16 %v421
      %v1078 = vunpack.c.h.b16 %v421
      %v1079 = vunpack.c.l.b16 %v422
      %v1080 = vunpack.c.l.b16 %v423
      %v1081 = vunpack.c.h.b16 %v423
      %v1082 = vunpack.c.l.b16 %v424
      %v1083 = vunpack.c.l.b16 %v425
      %v1084 = vunpack.c.h.b16 %v425
      %v1085 = vunpack.c.l.b16 %v426
      %v1086 = vunpack.c.l.b16 %v427
      %v1087 = vunpack.c.h.b16 %v427
      %v1088 = vunpack.c.l.b16 %v428
      %v1089 = vunpack.c.l.b16 %v429
      %v1090 = vunpack.c.h.b16 %v429
      %v1091 = vunpack.c.l.b16 %v430
      %v1092 = vunpack.c.l.b16 %v431
      %v1093 = vunpack.c.h.b16 %v431
      %v1094 = vunpack.c.l.b16 %v432
      %v1095 = vunpack.c.l.b16 %v433
      %v1096 = vunpack.c.h.b16 %v433
      %v1097 = vunpack.c.l.b16 %v434
      %v1098 = vunpack.c.l.b16 %v435
      %v1099 = vunpack.c.h.b16 %v435
      %v1100 = vunpack.c.l.b16 %v436
      %v1101 = vunpack.c.l.b16 %v437
      %v1102 = vunpack.c.h.b16 %v437
      %v1103 = vunpack.c.l.b16 %v438
      %v1104 = vunpack.c.l.b16 %v439
      %v1105 = vunpack.c.h.b16 %v439
      %v1106 = vunpack.c.l.b16 %v440
      %v1107 = vunpack.c.l.b16 %v441
      %v1108 = vunpack.c.h.b16 %v441
      %v1109 = vunpack.c.l.b16 %v442
      %v1110 = vunpack.c.l.b16 %v443
      %v1111 = vunpack.c.h.b16 %v443
      %v1112 = vunpack.c.l.b16 %v444
      %v1113 = vunpack.c.l.b16 %v445
      %v1114 = vunpack.c.h.b16 %v445
      %v1115 = vunpack.c.l.b16 %v446
      %v1116 = vunpack.c.l.b16 %v447
      %v1117 = vunpack.c.h.b16 %v447
      %v1118 = vunpack.c.l.b16 %v448
      %v1119 = vunpack.c.l.b16 %v449
      %v1120 = vunpack.c.h.b16 %v449
      %v1121 = vunpack.c.l.b16 %v450
      %v1122 = vunpack.c.l.b16 %v451
      %v1123 = vunpack.c.h.b16 %v451
      %v1124 = vunpack.c.l.b16 %v452
      %v1125 = vunpack.c.l.b16 %v453
      %v1126 = vunpack.c.h.b16 %v453
      %v1127 = vunpack.c.l.b16 %v454
      %v1128 = vunpack.c.l.b16 %v455
      %v1129 = vunpack.c.h.b16 %v455
      %v1130 = vunpack.c.l.b16 %v456
      %v1131 = vunpack.c.l.b16 %v457
      %v1132 = vunpack.c.h.b16 %v457
      %v1133 = vunpack.c.l.b16 %v458
      %v1134 = vunpack.c.l.b16 %v459
      %v1135 = vunpack.c.h.b16 %v459
      %v1136 = vunpack.c.l.b16 %v460
      %v1137 = vpack.c.b16 %v756, %v753
      %v1138 = vpack.c.b16 %v757, %v754
      %v1139 = vpack.c.b16 %v758, %v755
      %v1140 = vpack.c.b16 %v762, %v759
      %v1141 = vpack.c.b16 %v763, %v760
      %v1142 = vpack.c.b16 %v764, %v761
      %v1143 = vpack.c.b16 %v768, %v765
      %v1144 = vpack.c.b16 %v769, %v766
      %v1145 = vpack.c.b16 %v770, %v767
      %v1146 = vpack.c.b16 %v774, %v771
      %v1147 = vpack.c.b16 %v775, %v772
      %v1148 = vpack.c.b16 %v776, %v773
      %v1149 = vpack.c.b16 %v780, %v777
      %v1150 = vpack.c.b16 %v781, %v778
      %v1151 = vpack.c.b16 %v782, %v779
      %v1152 = vpack.c.b16 %v786, %v783
      %v1153 = vpack.c.b16 %v787, %v784
      %v1154 = vpack.c.b16 %v788, %v785
      %v1155 = vpack.c.b16 %v792, %v789
      %v1156 = vpack.c.b16 %v793, %v790
      %v1157 = vpack.c.b16 %v794, %v791
      %v1158 = vpack.c.b16 %v798, %v795
      %v1159 = vpack.c.b16 %v799, %v796
      %v1160 = vpack.c.b16 %v800, %v797
      %v1161 = vpack.c.b16 %v804, %v801
      %v1162 = vpack.c.b16 %v805, %v802
      %v1163 = vpack.c.b16 %v806, %v803
      %v1164 = vpack.c.b16 %v810, %v807
      %v1165 = vpack.c.b16 %v811, %v808
      %v1166 = vpack.c.b16 %v812, %v809
      %v1167 = vpack.c.b16 %v816, %v813
      %v1168 = vpack.c.b16 %v817, %v814
      %v1169 = vpack.c.b16 %v818, %v815
      %v1170 = vpack.c.b16 %v822, %v819
      %v1171 = vpack.c.b16 %v823, %v820
      %v1172 = vpack.c.b16 %v824, %v821
      %v1173 = vpack.c.b16 %v828, %v825
      %v1174 = vpack.c.b16 %v829, %v826
      %v1175 = vpack.c.b16 %v830, %v827
      %v1176 = vpack.c.b16 %v834, %v831
      %v1177 = vpack.c.b16 %v835, %v832
      %v1178 = vpack.c.b16 %v836, %v833
      %v1179 = vpack.c.b16 %v840, %v837
      %v1180 = vpack.c.b16 %v841, %v838
      %v1181 = vpack.c.b16 %v842, %v839
      %v1182 = vpack.c.b16 %v846, %v843
      %v1183 = vpack.c.b16 %v847, %v844
      %v1184 = vpack.c.b16 %v848, %v845
      %v1185 = vpack.c.b16 %v852, %v849
      %v1186 = vpack.c.b16 %v853, %v850
      %v1187 = vpack.c.b16 %v854, %v851
      %v1188 = vpack.c.b16 %v858, %v855
      %v1189 = vpack.c.b16 %v859, %v856
      %v1190 = vpack.c.b16 %v860, %v857
      %v1191 = vpack.c.b16 %v864, %v861
      %v1192 = vpack.c.b16 %v865, %v862
      %v1193 = vpack.c.b16 %v866, %v863
      %v1194 = vpack.c.b16 %v870, %v867
      %v1195 = vpack.c.b16 %v871, %v868
      %v1196 = vpack.c.b16 %v872, %v869
      %v1197 = vpack.c.b16 %v876, %v873
      %v1198 = vpack.c.b16 %v877, %v874
      %v1199 = vpack.c.b16 %v878, %v875
      %v1200 = vpack.c.b16 %v882, %v879
      %v1201 = vpack.c.b16 %v883, %v880
      %v1202 = vpack.c.b16 %v884, %v881
      %v1203 = vpack.c.b16 %v888, %v885
      %v1204 = vpack.c.b16 %v889, %v886
      %v1205 = vpack.c.b16 %v890, %v887
      %v1206 = vpack.c.b16 %v894, %v891
      %v1207 = vpack.c.b16 %v895, %v892
      %v1208 = vpack.c.b16 %v896, %v893
      %v1209 = vpack.c.b16 %v900, %v897
      %v1210 = vpack.c.b16 %v901, %v898
      %v1211 = vpack.c.b16 %v902, %v899
      %v1212 = vpack.c.b16 %v906, %v903
      %v1213 = vpack.c.b16 %v907, %v904
      %v1214 = vpack.c.b16 %v908, %v905
      %v1215 = vpack.c.b16 %v912, %v909
      %v1216 = vpack.c.b16 %v913, %v910
      %v1217 = vpack.c.b16 %v914, %v911
      %v1218 = vpack.c.b16 %v918, %v915
      %v1219 = vpack.c.b16 %v919, %v916
      %v1220 = vpack.c.b16 %v920, %v917
      %v1221 = vpack.c.b16 %v924, %v921
      %v1222 = vpack.c.b16 %v925, %v922
      %v1223 = vpack.c.b16 %v926, %v923
      %v1224 = vpack.c.b16 %v930, %v927
      %v1225 = vpack.c.b16 %v931, %v928
      %v1226 = vpack.c.b16 %v932, %v929
      %v1227 = vpack.c.b16 %v936, %v933
      %v1228 = vpack.c.b16 %v937, %v934
      %v1229 = vpack.c.b16 %v938, %v935
      %v1230 = vpack.c.b16 %v942, %v939
      %v1231 = vpack.c.b16 %v943, %v940
      %v1232 = vpack.c.b16 %v944, %v941
      %v1233 = vpack.c.b16 %v948, %v945
      %v1234 = vpack.c.b16 %v949, %v946
      %v1235 = vpack.c.b16 %v950, %v947
      %v1236 = vpack.c.b16 %v954, %v951
      %v1237 = vpack.c.b16 %v955, %v952
      %v1238 = vpack.c.b16 %v956, %v953
      %v1239 = vpack.c.b16 %v960, %v957
      %v1240 = vpack.c.b16 %v961, %v958
      %v1241 = vpack.c.b16 %v962, %v959
      %v1242 = vpack.c.b16 %v966, %v963
      %v1243 = vpack.c.b16 %v967, %v964
      %v1244 = vpack.c.b16 %v968, %v965
      %v1245 = vpack.c.b16 %v972, %v969
      %v1246 = vpack.c.b16 %v973, %v970
      %v1247 = vpack.c.b16 %v974, %v971
      %v1248 = vpack.c.b16 %v978, %v975
      %v1249 = vpack.c.b16 %v979, %v976
      %v1250 = vpack.c.b16 %v980, %v977
      %v1251 = vpack.c.b16 %v984, %v981
      %v1252 = vpack.c.b16 %v985, %v982
      %v1253 = vpack.c.b16 %v986, %v983
      %v1254 = vpack.c.b16 %v990, %v987
      %v1255 = vpack.c.b16 %v991, %v988
      %v1256 = vpack.c.b16 %v992, %v989
      %v1257 = vpack.c.b16 %v996, %v993
      %v1258 = vpack.c.b16 %v997, %v994
      %v1259 = vpack.c.b16 %v998, %v995
      %v1260 = vpack.c.b16 %v1002, %v999
      %v1261 = vpack.c.b16 %v1003, %v1000
      %v1262 = vpack.c.b16 %v1004, %v1001
      %v1263 = vpack.c.b16 %v1008, %v1005
      %v1264 = vpack.c.b16 %v1009, %v1006
      %v1265 = vpack.c.b16 %v1010, %v1007
      %v1266 = vpack.c.b16 %v1014, %v1011
      %v1267 = vpack.c.b16 %v1015, %v1012
      %v1268 = vpack.c.b16 %v1016, %v1013
      %v1269 = vpack.c.b16 %v1020, %v1017
      %v1270 = vpack.c.b16 %v1021, %v1018
      %v1271 = vpack.c.b16 %v1022, %v1019
      %v1272 = vpack.c.b16 %v1026, %v1023
      %v1273 = vpack.c.b16 %v1027, %v1024
      %v1274 = vpack.c.b16 %v1028, %v1025
      %v1275 = vpack.c.b16 %v1032, %v1029
      %v1276 = vpack.c.b16 %v1033, %v1030
      %v1277 = vpack.c.b16 %v1034, %v1031
      %v1278 = vpack.c.b16 %v1038, %v1035
      %v1279 = vpack.c.b16 %v1039, %v1036
      %v1280 = vpack.c.b16 %v1040, %v1037
      %v1281 = vpack.c.b16 %v1044, %v1041
      %v1282 = vpack.c.b16 %v1045, %v1042
      %v1283 = vpack.c.b16 %v1046, %v1043
      %v1284 = vpack.c.b16 %v1050, %v1047
      %v1285 = vpack.c.b16 %v1051, %v1048
      %v1286 = vpack.c.b16 %v1052, %v1049
      %v1287 = vpack.c.b16 %v1056, %v1053
      %v1288 = vpack.c.b16 %v1057, %v1054
      %v1289 = vpack.c.b16 %v1058, %v1055
      %v1290 = vpack.c.b16 %v1062, %v1059
      %v1291 = vpack.c.b16 %v1063, %v1060
      %v1292 = vpack.c.b16 %v1064, %v1061
      %v1293 = vpack.c.b16 %v1068, %v1065
      %v1294 = vpack.c.b16 %v1069, %v1066
      %v1295 = vpack.c.b16 %v1070, %v1067
      %v1296 = vpack.c.b16 %v1074, %v1071
      %v1297 = vpack.c.b16 %v1075, %v1072
      %v1298 = vpack.c.b16 %v1076, %v1073
      %v1299 = vpack.c.b16 %v1080, %v1077
      %v1300 = vpack.c.b16 %v1081, %v1078
      %v1301 = vpack.c.b16 %v1082, %v1079
      %v1302 = vpack.c.b16 %v1086, %v1083
      %v1303 = vpack.c.b16 %v1087, %v1084
      %v1304 = vpack.c.b16 %v1088, %v1085
      %v1305 = vpack.c.b16 %v1092, %v1089
      %v1306 = vpack.c.b16 %v1093, %v1090
      %v1307 = vpack.c.b16 %v1094, %v1091
      %v1308 = vpack.c.b16 %v1098, %v1095
      %v1309 = vpack.c.b16 %v1099, %v1096
      %v1310 = vpack.c.b16 %v1100, %v1097
      %v1311 = vpack.c.b16 %v1104, %v1101
      %v1312 = vpack.c.b16 %v1105, %v1102
      %v1313 = vpack.c.b16 %v1106, %v1103
      %v1314 = vpack.c.b16 %v1110, %v1107
      %v1315 = vpack.c.b16 %v1111, %v1108
      %v1316 = vpack.c.b16 %v1112, %v1109
      %v1317 = vpack.c.b16 %v1116, %v1113
      %v1318 = vpack.c.b16 %v1117, %v1114
      %v1319 = vpack.c.b16 %v1118, %v1115
      %v1320 = vpack.c.b16 %v1122, %v1119
      %v1321 = vpack.c.b16 %v1123, %v1120
      %v1322 = vpack.c.b16 %v1124, %v1121
      %v1323 = vpack.c.b16 %v1128, %v1125
      %v1324 = vpack.c.b16 %v1129, %v1126
      %v1325 = vpack.c.b16 %v1130, %v1127
      %v1326 = vpack.c.b16 %v1134, %v1131
      %v1327 = vpack.c.b16 %v1135, %v1132
      %v1328 = vpack.c.b16 %v1136, %v1133
      %v1493 = vunpack.c.l.b16 %v461
      %v1494 = vunpack.c.l.b16 %v462
      %v1495 = vunpack.c.l.b16 %v463
      %v1496 = vunpack.c.l.b16 %v464
      %v1497 = vunpack.c.l.b16 %v465
      %v1498 = vunpack.c.l.b16 %v466
      %v1499 = vunpack.c.l.b16 %v467
      %v1500 = vunpack.c.l.b16 %v468
      %v1501 = vunpack.c.l.b16 %v469
      %v1502 = vunpack.c.l.b16 %v470
      %v1503 = vunpack.c.l.b16 %v471
      %v1504 = vunpack.c.l.b16 %v472
      %v1505 = vunpack.c.l.b16 %v473
      %v1506 = vunpack.c.l.b16 %v474
      %v1507 = vunpack.c.l.b16 %v475
      %v1508 = vunpack.c.l.b16 %v476
      %v1509 = vunpack.c.l.b16 %v477
      %v1510 = vunpack.c.l.b16 %v478
      %v1511 = vunpack.c.l.b16 %v479
      %v1512 = vunpack.c.l.b16 %v480
      %v1513 = vunpack.c.l.b16 %v481
      %v1514 = vunpack.c.l.b16 %v482
      %v1515 = vunpack.c.l.b16 %v483
      %v1516 = vunpack.c.l.b16 %v484
      %v1517 = vunpack.c.l.b16 %v485
      %v1518 = vunpack.c.l.b16 %v486
      %v1519 = vunpack.c.l.b16 %v487
      %v1520 = vunpack.c.l.b16 %v488
      %v1521 = vunpack.c.l.b16 %v489
      %v1522 = vunpack.c.l.b16 %v490
      %v1523 = vunpack.c.l.b16 %v491
      %v1524 = vunpack.c.l.b16 %v492
      %v1525 = vunpack.c.l.b16 %v493
      %v1526 = vunpack.c.l.b16 %v494
      %v1527 = vunpack.c.l.b16 %v495
      %v1528 = vunpack.c.l.b16 %v496
      %v1529 = vpack.c.b16 %v1494, %v1493
      %v1530 = vpack.c.b16 %v1496, %v1495
      %v1531 = vpack.c.b16 %v1498, %v1497
      %v1532 = vpack.c.b16 %v1500, %v1499
      %v1533 = vpack.c.b16 %v1502, %v1501
      %v1534 = vpack.c.b16 %v1504, %v1503
      %v1535 = vpack.c.b16 %v1506, %v1505
      %v1536 = vpack.c.b16 %v1508, %v1507
      %v1537 = vpack.c.b16 %v1510, %v1509
      %v1538 = vpack.c.b16 %v1512, %v1511
      %v1539 = vpack.c.b16 %v1514, %v1513
      %v1540 = vpack.c.b16 %v1516, %v1515
      %v1541 = vpack.c.b16 %v1518, %v1517
      %v1542 = vpack.c.b16 %v1520, %v1519
      %v1543 = vpack.c.b16 %v1522, %v1521
      %v1544 = vpack.c.b16 %v1524, %v1523
      %v1545 = vpack.c.b16 %v1526, %v1525
      %v1546 = vpack.c.b16 %v1528, %v1527
      %vm1565 = vcmask 261120
      %v1567 = vsel %vm1565, %v1139, 0
      %v1570 = vsel %vm1565, %v1142, 0
      %v1573 = vsel %vm1565, %v1145, 0
      %v1576 = vsel %vm1565, %v1148, 0
      %v1579 = vsel %vm1565, %v1151, 0
      %v1582 = vsel %vm1565, %v1154, 0
      %v1585 = vsel %vm1565, %v1157, 0
      %v1588 = vsel %vm1565, %v1160, 0
      %v1591 = vsel %vm1565, %v1163, 0
      %v1594 = vsel %vm1565, %v1166, 0
      %v1597 = vsel %vm1565, %v1169, 0
      %v1600 = vsel %vm1565, %v1172, 0
      %v1603 = vsel %vm1565, %v1175, 0
      %v1606 = vsel %vm1565, %v1178, 0
      %v1609 = vsel %vm1565, %v1181, 0
      %v1612 = vsel %vm1565, %v1184, 0
      %v1615 = vsel %vm1565, %v1187, 0
      %v1618 = vsel %vm1565, %v1190, 0
      %v1621 = vsel %vm1565, %v1193, 0
      %v1624 = vsel %vm1565, %v1196, 0
      %v1627 = vsel %vm1565, %v1199, 0
      %v1630 = vsel %vm1565, %v1202, 0
      %v1633 = vsel %vm1565, %v1205, 0
      %v1636 = vsel %vm1565, %v1208, 0
      %v1639 = vsel %vm1565, %v1211, 0
      %v1642 = vsel %vm1565, %v1214, 0
      %v1645 = vsel %vm1565, %v1217, 0
      %v1648 = vsel %vm1565, %v1220, 0
      %v1651 = vsel %vm1565, %v1223, 0
      %v1654 = vsel %vm1565, %v1226, 0
      %v1657 = vsel %vm1565, %v1229, 0
      %v1660 = vsel %vm1565, %v1232, 0
      %v1663 = vsel %vm1565, %v1235, 0
      %v1666 = vsel %vm1565, %v1238, 0
      %v1669 = vsel %vm1565, %v1241, 0
      %v1672 = vsel %vm1565, %v1244, 0
      %v1675 = vsel %vm1565, %v1247, 0
      %v1678 = vsel %vm1565, %v1250, 0
      %v1681 = vsel %vm1565, %v1253, 0
      %v1684 = vsel %vm1565, %v1256, 0
      %v1687 = vsel %vm1565, %v1259, 0
      %v1690 = vsel %vm1565, %v1262, 0
      %v1693 = vsel %vm1565, %v1265, 0
      %v1696 = vsel %vm1565, %v1268, 0
      %v1699 = vsel %vm1565, %v1271, 0
      %v1702 = vsel %vm1565, %v1274, 0
      %v1705 = vsel %vm1565, %v1277, 0
      %v1708 = vsel %vm1565, %v1280, 0
      %v1711 = vsel %vm1565, %v1283, 0
      %v1714 = vsel %vm1565, %v1286, 0
      %v1717 = vsel %vm1565, %v1289, 0
      %v1720 = vsel %vm1565, %v1292, 0
      %v1723 = vsel %vm1565, %v1295, 0
      %v1726 = vsel %vm1565, %v1298, 0
      %v1729 = vsel %vm1565, %v1301, 0
      %v1732 = vsel %vm1565, %v1304, 0
      %v1735 = vsel %vm1565, %v1307, 0
      %v1738 = vsel %vm1565, %v1310, 0
      %v1741 = vsel %vm1565, %v1313, 0
      %v1744 = vsel %vm1565, %v1316, 0
      %v1747 = vsel %vm1565, %v1319, 0
      %v1750 = vsel %vm1565, %v1322, 0
      %v1753 = vsel %vm1565, %v1325, 0
      %v1756 = vsel %vm1565, %v1328, 0
      %1758 = vmatprep.subr.bf16.mxu0 0
      %1759 = vmatpush1.bf16.msra.mxu0 %v1529
      %1760 = vmatprep.subr.bf16.mxu0 0
      %1761 = vmatpush1.bf16.msra.mxu0 %v1530
      %1762 = vmatprep.subr.bf16.mxu0 0
      %1763 = vmatpush1.bf16.msra.mxu0 %v1531
      %1764 = vmatprep.subr.bf16.mxu0 0
      %1765 = vmatpush1.bf16.msra.mxu0 %v1532
      %1766 = vmatprep.subr.bf16.mxu0 0
      %1767 = vmatpush1.bf16.msra.mxu0 %v1533
      %1768 = vmatprep.subr.bf16.mxu0 0
      %1769 = vmatpush1.bf16.msra.mxu0 %v1534
      %1770 = vmatprep.subr.bf16.mxu0 0
      %1771 = vmatpush1.bf16.msra.mxu0 %v1535
      %1772 = vmatprep.subr.bf16.mxu0 0
      %1773 = vmatpush1.bf16.msra.mxu0 %v1536
      %1774 = vmatprep.subr.bf16.mxu0 0
      %1775 = vmatpush1.bf16.msra.mxu0 %v1537
      %1776 = vmatprep.subr.bf16.mxu0 0
      %1777 = vmatpush1.bf16.msra.mxu0 %v1538
      %1778 = vmatprep.subr.bf16.mxu0 0
      %1779 = vmatpush1.bf16.msra.mxu0 %v1539
      %1780 = vmatprep.subr.bf16.mxu0 0
      %1781 = vmatpush1.bf16.msra.mxu0 %v1540
      %1782 = vmatprep.subr.bf16.mxu0 0
      %1783 = vmatpush1.bf16.msra.mxu0 %v1541
      %1784 = vmatprep.subr.bf16.mxu0 0
      %1785 = vmatpush1.bf16.msra.mxu0 %v1542
      %1786 = vmatprep.subr.bf16.mxu0 0
      %1787 = vmatpush1.bf16.msra.mxu0 %v1543
      %1788 = vmatprep.subr.bf16.mxu0 0
      %1789 = vmatpush1.bf16.msra.mxu0 %v1544
      %1790 = vmatprep.mubr.bf16.mxu0 %v1138
      %1791 = vmatmul.mubr.bf16.gmra.mrb[0].mxu0 %v1137
      %v1792 = vpop.f32.mrb[0].mxu0
      %v1793 = vadd.f32 0.0, %v1792
      %v1794 = vpop.f32.mrb[0].mxu0
      %v1795 = vpop.f32.mrb[0].mxu0
      %v1796 = vadd.f32 0.0, %v1795
      %v1797 = vpop.f32.mrb[0].mxu0
      %1798 = vmatprep.mubr.bf16.mxu0 %v1141
      %1799 = vmatmul.mubr.bf16.gmra.mrb[0].mxu0 %v1140
      %v1800 = vpop.f32.mrb[0].mxu0
      %v1801 = vadd.f32 0.0, %v1800
      %v1802 = vpop.f32.mrb[0].mxu0
      %v1803 = vpop.f32.mrb[0].mxu0
      %v1804 = vadd.f32 0.0, %v1803
      %v1805 = vpop.f32.mrb[0].mxu0
      %1806 = vmatprep.mubr.bf16.mxu0 %v1144
      %1807 = vmatmul.mubr.bf16.gmra.mrb[0].mxu0 %v1143
      %v1808 = vpop.f32.mrb[0].mxu0
      %v1809 = vadd.f32 0.0, %v1808
      %v1810 = vpop.f32.mrb[0].mxu0
      %v1811 = vpop.f32.mrb[0].mxu0
      %v1812 = vadd.f32 0.0, %v1811
      %v1813 = vpop.f32.mrb[0].mxu0
      %1814 = vmatprep.mubr.bf16.mxu0 %v1147
      %1815 = vmatmul.mubr.bf16.gmra.mrb[0].mxu0 %v1146
      %v1816 = vpop.f32.mrb[0].mxu0
      %v1817 = vadd.f32 0.0, %v1816
      %v1818 = vpop.f32.mrb[0].mxu0
      %v1819 = vpop.f32.mrb[0].mxu0
      %v1820 = vadd.f32 0.0, %v1819
      %v1821 = vpop.f32.mrb[0].mxu0
      %1822 = vmatprep.mubr.bf16.mxu0 %v1150
      %1823 = vmatmul.mubr.bf16.gmra.mrb[0].mxu0 %v1149
      %v1824 = vpop.f32.mrb[0].mxu0
      %v1825 = vadd.f32 0.0, %v1824
      %v1826 = vpop.f32.mrb[0].mxu0
      %v1827 = vpop.f32.mrb[0].mxu0
      %v1828 = vadd.f32 0.0, %v1827
      %v1829 = vpop.f32.mrb[0].mxu0
      %1830 = vmatprep.mubr.bf16.mxu0 %v1153
      %1831 = vmatmul.mubr.bf16.gmra.mrb[0].mxu0 %v1152
      %v1832 = vpop.f32.mrb[0].mxu0
      %v1833 = vadd.f32 0.0, %v1832
      %v1834 = vpop.f32.mrb[0].mxu0
      %v1835 = vpop.f32.mrb[0].mxu0
      %v1836 = vadd.f32 0.0, %v1835
      %v1837 = vpop.f32.mrb[0].mxu0
      %1838 = vmatprep.mubr.bf16.mxu0 %v1156
      %1839 = vmatmul.mubr.bf16.gmra.mrb[0].mxu0 %v1155
      %v1840 = vpop.f32.mrb[0].mxu0
      %v1841 = vadd.f32 0.0, %v1840
      %v1842 = vpop.f32.mrb[0].mxu0
      %v1843 = vpop.f32.mrb[0].mxu0
      %v1844 = vadd.f32 0.0, %v1843
      %v1845 = vpop.f32.mrb[0].mxu0
      %1846 = vmatprep.mubr.bf16.mxu0 %v1159
      %1847 = vmatmul.mubr.bf16.gmra.mrb[0].mxu0 %v1158
      %v1848 = vpop.f32.mrb[0].mxu0
      %v1849 = vadd.f32 0.0, %v1848
      %v1850 = vpop.f32.mrb[0].mxu0
      %v1851 = vpop.f32.mrb[0].mxu0
      %v1852 = vadd.f32 0.0, %v1851
      %v1853 = vpop.f32.mrb[0].mxu0
      %1854 = vmatprep.mubr.bf16.mxu0 %v1162
      %1855 = vmatmul.mubr.bf16.gmra.mrb[0].mxu0 %v1161
      %v1856 = vpop.f32.mrb[0].mxu0
      %v1857 = vadd.f32 0.0, %v1856
      %v1858 = vpop.f32.mrb[0].mxu0
      %v1859 = vpop.f32.mrb[0].mxu0
      %v1860 = vadd.f32 0.0, %v1859
      %v1861 = vpop.f32.mrb[0].mxu0
      %1862 = vmatprep.mubr.bf16.mxu0 %v1165
      %1863 = vmatmul.mubr.bf16.gmra.mrb[0].mxu0 %v1164
      %v1864 = vpop.f32.mrb[0].mxu0
      %v1865 = vadd.f32 0.0, %v1864
      %v1866 = vpop.f32.mrb[0].mxu0
      %v1867 = vpop.f32.mrb[0].mxu0
      %v1868 = vadd.f32 0.0, %v1867
      %v1869 = vpop.f32.mrb[0].mxu0
      %1870 = vmatprep.mubr.bf16.mxu0 %v1168
      %1871 = vmatmul.mubr.bf16.gmra.mrb[0].mxu0 %v1167
      %v1872 = vpop.f32.mrb[0].mxu0
      %v1873 = vadd.f32 0.0, %v1872
      %v1874 = vpop.f32.mrb[0].mxu0
      %v1875 = vpop.f32.mrb[0].mxu0
      %v1876 = vadd.f32 0.0, %v1875
      %v1877 = vpop.f32.mrb[0].mxu0
      %1878 = vmatprep.mubr.bf16.mxu0 %v1171
      %1879 = vmatmul.mubr.bf16.gmra.mrb[0].mxu0 %v1170
      %v1880 = vpop.f32.mrb[0].mxu0
      %v1881 = vadd.f32 0.0, %v1880
      %v1882 = vpop.f32.mrb[0].mxu0
      %v1883 = vpop.f32.mrb[0].mxu0
      %v1884 = vadd.f32 0.0, %v1883
      %v1885 = vpop.f32.mrb[0].mxu0
      %1886 = vmatprep.mubr.bf16.mxu0 %v1174
      %1887 = vmatmul.mubr.bf16.gmra.mrb[0].mxu0 %v1173
      %v1888 = vpop.f32.mrb[0].mxu0
      %v1889 = vadd.f32 0.0, %v1888
      %v1890 = vpop.f32.mrb[0].mxu0
      %v1891 = vpop.f32.mrb[0].mxu0
      %v1892 = vadd.f32 0.0, %v1891
      %v1893 = vpop.f32.mrb[0].mxu0
      %1894 = vmatprep.mubr.bf16.mxu0 %v1177
      %1895 = vmatmul.mubr.bf16.gmra.mrb[0].mxu0 %v1176
      %v1896 = vpop.f32.mrb[0].mxu0
      %v1897 = vadd.f32 0.0, %v1896
      %v1898 = vpop.f32.mrb[0].mxu0
      %v1899 = vpop.f32.mrb[0].mxu0
      %v1900 = vadd.f32 0.0, %v1899
      %v1901 = vpop.f32.mrb[0].mxu0
      %1902 = vmatprep.mubr.bf16.mxu0 %v1180
      %1903 = vmatmul.mubr.bf16.gmra.mrb[0].mxu0 %v1179
      %v1904 = vpop.f32.mrb[0].mxu0
      %v1905 = vadd.f32 0.0, %v1904
      %v1906 = vpop.f32.mrb[0].mxu0
      %v1907 = vpop.f32.mrb[0].mxu0
      %v1908 = vadd.f32 0.0, %v1907
      %v1909 = vpop.f32.mrb[0].mxu0
      %1910 = vmatprep.mubr.bf16.mxu0 %v1183
      %1911 = vmatmul.mubr.bf16.gmra.mrb[0].mxu0 %v1182
      %v1912 = vpop.f32.mrb[0].mxu0
      %v1913 = vadd.f32 0.0, %v1912
      %v1914 = vpop.f32.mrb[0].mxu0
      %v1915 = vpop.f32.mrb[0].mxu0
      %v1916 = vadd.f32 0.0, %v1915
      %v1917 = vpop.f32.mrb[0].mxu0
      %1918 = vmatprep.mubr.bf16.mxu0 %v1186
      %1919 = vmatmul.mubr.bf16.gmra.mrb[0].mxu0 %v1185
      %v1920 = vpop.f32.mrb[0].mxu0
      %v1921 = vadd.f32 0.0, %v1920
      %v1922 = vpop.f32.mrb[0].mxu0
      %v1923 = vpop.f32.mrb[0].mxu0
      %v1924 = vadd.f32 0.0, %v1923
      %v1925 = vpop.f32.mrb[0].mxu0
      %1926 = vmatprep.mubr.bf16.mxu0 %v1189
      %1927 = vmatmul.mubr.bf16.gmra.mrb[0].mxu0 %v1188
      %v1928 = vpop.f32.mrb[0].mxu0
      %v1929 = vadd.f32 0.0, %v1928
      %v1930 = vpop.f32.mrb[0].mxu0
      %v1931 = vpop.f32.mrb[0].mxu0
      %v1932 = vadd.f32 0.0, %v1931
      %v1933 = vpop.f32.mrb[0].mxu0
      %1934 = vmatprep.mubr.bf16.mxu0 %v1192
      %1935 = vmatmul.mubr.bf16.gmra.mrb[0].mxu0 %v1191
      %v1936 = vpop.f32.mrb[0].mxu0
      %v1937 = vadd.f32 0.0, %v1936
      %v1938 = vpop.f32.mrb[0].mxu0
      %v1939 = vpop.f32.mrb[0].mxu0
      %v1940 = vadd.f32 0.0, %v1939
      %v1941 = vpop.f32.mrb[0].mxu0
      %1942 = vmatprep.mubr.bf16.mxu0 %v1195
      %1943 = vmatmul.mubr.bf16.gmra.mrb[0].mxu0 %v1194
      %v1944 = vpop.f32.mrb[0].mxu0
      %v1945 = vadd.f32 0.0, %v1944
      %v1946 = vpop.f32.mrb[0].mxu0
      %v1947 = vpop.f32.mrb[0].mxu0
      %v1948 = vadd.f32 0.0, %v1947
      %v1949 = vpop.f32.mrb[0].mxu0
      %1950 = vmatprep.mubr.bf16.mxu0 %v1198
      %1951 = vmatmul.mubr.bf16.gmra.mrb[0].mxu0 %v1197
      %v1952 = vpop.f32.mrb[0].mxu0
      %v1953 = vadd.f32 0.0, %v1952
      %v1954 = vpop.f32.mrb[0].mxu0
      %v1955 = vpop.f32.mrb[0].mxu0
      %v1956 = vadd.f32 0.0, %v1955
      %v1957 = vpop.f32.mrb[0].mxu0
      %1958 = vmatprep.mubr.bf16.mxu0 %v1201
      %1959 = vmatmul.mubr.bf16.gmra.mrb[0].mxu0 %v1200
      %v1960 = vpop.f32.mrb[0].mxu0
      %v1961 = vadd.f32 0.0, %v1960
      %v1962 = vpop.f32.mrb[0].mxu0
      %v1963 = vpop.f32.mrb[0].mxu0
      %v1964 = vadd.f32 0.0, %v1963
      %v1965 = vpop.f32.mrb[0].mxu0
      %1966 = vmatprep.mubr.bf16.mxu0 %v1204
      %1967 = vmatmul.mubr.bf16.gmra.mrb[0].mxu0 %v1203
      %v1968 = vpop.f32.mrb[0].mxu0
      %v1969 = vadd.f32 0.0, %v1968
      %v1970 = vpop.f32.mrb[0].mxu0
      %v1971 = vpop.f32.mrb[0].mxu0
      %v1972 = vadd.f32 0.0, %v1971
      %v1973 = vpop.f32.mrb[0].mxu0
      %1974 = vmatprep.mubr.bf16.mxu0 %v1207
      %1975 = vmatmul.mubr.bf16.gmra.mrb[0].mxu0 %v1206
      %v1976 = vpop.f32.mrb[0].mxu0
      %v1977 = vadd.f32 0.0, %v1976
      %v1978 = vpop.f32.mrb[0].mxu0
      %v1979 = vpop.f32.mrb[0].mxu0
      %v1980 = vadd.f32 0.0, %v1979
      %v1981 = vpop.f32.mrb[0].mxu0
      %1982 = vmatprep.mubr.bf16.mxu0 %v1210
      %1983 = vmatmul.mubr.bf16.gmra.mrb[0].mxu0 %v1209
      %v1984 = vpop.f32.mrb[0].mxu0
      %v1985 = vadd.f32 0.0, %v1984
      %v1986 = vpop.f32.mrb[0].mxu0
      %v1987 = vpop.f32.mrb[0].mxu0
      %v1988 = vadd.f32 0.0, %v1987
      %v1989 = vpop.f32.mrb[0].mxu0
      %1990 = vmatprep.mubr.bf16.mxu0 %v1213
      %1991 = vmatmul.mubr.bf16.gmra.mrb[0].mxu0 %v1212
      %v1992 = vpop.f32.mrb[0].mxu0
      %v1993 = vadd.f32 0.0, %v1992
      %v1994 = vpop.f32.mrb[0].mxu0
      %v1995 = vpop.f32.mrb[0].mxu0
      %v1996 = vadd.f32 0.0, %v1995
      %v1997 = vpop.f32.mrb[0].mxu0
      %1998 = vmatprep.mubr.bf16.mxu0 %v1216
      %1999 = vmatmul.mubr.bf16.gmra.mrb[0].mxu0 %v1215
      %v2000 = vpop.f32.mrb[0].mxu0
      %v2001 = vadd.f32 0.0, %v2000
      %v2002 = vpop.f32.mrb[0].mxu0
      %v2003 = vpop.f32.mrb[0].mxu0
      %v2004 = vadd.f32 0.0, %v2003
      %v2005 = vpop.f32.mrb[0].mxu0
      %2006 = vmatprep.mubr.bf16.mxu0 %v1219
      %2007 = vmatmul.mubr.bf16.gmra.mrb[0].mxu0 %v1218
      %v2008 = vpop.f32.mrb[0].mxu0
      %v2009 = vadd.f32 0.0, %v2008
      %v2010 = vpop.f32.mrb[0].mxu0
      %v2011 = vpop.f32.mrb[0].mxu0
      %v2012 = vadd.f32 0.0, %v2011
      %v2013 = vpop.f32.mrb[0].mxu0
      %2014 = vmatprep.mubr.bf16.mxu0 %v1222
      %2015 = vmatmul.mubr.bf16.gmra.mrb[0].mxu0 %v1221
      %v2016 = vpop.f32.mrb[0].mxu0
      %v2017 = vadd.f32 0.0, %v2016
      %v2018 = vpop.f32.mrb[0].mxu0
      %v2019 = vpop.f32.mrb[0].mxu0
      %v2020 = vadd.f32 0.0, %v2019
      %v2021 = vpop.f32.mrb[0].mxu0
      %2022 = vmatprep.mubr.bf16.mxu0 %v1225
      %2023 = vmatmul.mubr.bf16.gmra.mrb[0].mxu0 %v1224
      %v2024 = vpop.f32.mrb[0].mxu0
      %v2025 = vadd.f32 0.0, %v2024
      %v2026 = vpop.f32.mrb[0].mxu0
      %v2027 = vpop.f32.mrb[0].mxu0
      %v2028 = vadd.f32 0.0, %v2027
      %v2029 = vpop.f32.mrb[0].mxu0
      %2030 = vmatprep.mubr.bf16.mxu0 %v1228
      %2031 = vmatmul.mubr.bf16.gmra.mrb[0].mxu0 %v1227
      %v2032 = vpop.f32.mrb[0].mxu0
      %v2033 = vadd.f32 0.0, %v2032
      %v2034 = vpop.f32.mrb[0].mxu0
      %v2035 = vpop.f32.mrb[0].mxu0
      %v2036 = vadd.f32 0.0, %v2035
      %v2037 = vpop.f32.mrb[0].mxu0
      %2038 = vmatprep.mubr.bf16.mxu0 %v1231
      %2039 = vmatmul.mubr.bf16.gmra.mrb[0].mxu0 %v1230
      %v2040 = vpop.f32.mrb[0].mxu0
      %v2041 = vadd.f32 0.0, %v2040
      %v2042 = vpop.f32.mrb[0].mxu0
      %v2043 = vpop.f32.mrb[0].mxu0
      %v2044 = vadd.f32 0.0, %v2043
      %v2045 = vpop.f32.mrb[0].mxu0
      %2046 = vmatprep.mubr.bf16.mxu0 %v1234
      %2047 = vmatmul.mubr.bf16.gmra.mrb[0].mxu0 %v1233
      %v2048 = vpop.f32.mrb[0].mxu0
      %v2049 = vadd.f32 0.0, %v2048
      %v2050 = vpop.f32.mrb[0].mxu0
      %v2051 = vpop.f32.mrb[0].mxu0
      %v2052 = vadd.f32 0.0, %v2051
      %v2053 = vpop.f32.mrb[0].mxu0
      %2054 = vmatprep.mubr.bf16.mxu0 %v1237
      %2055 = vmatmul.mubr.bf16.gmra.mrb[0].mxu0 %v1236
      %v2056 = vpop.f32.mrb[0].mxu0
      %v2057 = vadd.f32 0.0, %v2056
      %v2058 = vpop.f32.mrb[0].mxu0
      %v2059 = vpop.f32.mrb[0].mxu0
      %v2060 = vadd.f32 0.0, %v2059
      %v2061 = vpop.f32.mrb[0].mxu0
      %2062 = vmatprep.mubr.bf16.mxu0 %v1240
      %2063 = vmatmul.mubr.bf16.gmra.mrb[0].mxu0 %v1239
      %v2064 = vpop.f32.mrb[0].mxu0
      %v2065 = vadd.f32 0.0, %v2064
      %v2066 = vpop.f32.mrb[0].mxu0
      %v2067 = vpop.f32.mrb[0].mxu0
      %v2068 = vadd.f32 0.0, %v2067
      %v2069 = vpop.f32.mrb[0].mxu0
      %2070 = vmatprep.mubr.bf16.mxu0 %v1243
      %2071 = vmatmul.mubr.bf16.gmra.mrb[0].mxu0 %v1242
      %v2072 = vpop.f32.mrb[0].mxu0
      %v2073 = vadd.f32 0.0, %v2072
      %v2074 = vpop.f32.mrb[0].mxu0
      %v2075 = vpop.f32.mrb[0].mxu0
      %v2076 = vadd.f32 0.0, %v2075
      %v2077 = vpop.f32.mrb[0].mxu0
      %2078 = vmatprep.mubr.bf16.mxu0 %v1246
      %2079 = vmatmul.mubr.bf16.gmra.mrb[0].mxu0 %v1245
      %v2080 = vpop.f32.mrb[0].mxu0
      %v2081 = vadd.f32 0.0, %v2080
      %v2082 = vpop.f32.mrb[0].mxu0
      %v2083 = vpop.f32.mrb[0].mxu0
      %v2084 = vadd.f32 0.0, %v2083
      %v2085 = vpop.f32.mrb[0].mxu0
      %2086 = vmatprep.mubr.bf16.mxu0 %v1249
      %2087 = vmatmul.mubr.bf16.gmra.mrb[0].mxu0 %v1248
      %v2088 = vpop.f32.mrb[0].mxu0
      %v2089 = vadd.f32 0.0, %v2088
      %v2090 = vpop.f32.mrb[0].mxu0
      %v2091 = vpop.f32.mrb[0].mxu0
      %v2092 = vadd.f32 0.0, %v2091
      %v2093 = vpop.f32.mrb[0].mxu0
      %2094 = vmatprep.mubr.bf16.mxu0 %v1252
      %2095 = vmatmul.mubr.bf16.gmra.mrb[0].mxu0 %v1251
      %v2096 = vpop.f32.mrb[0].mxu0
      %v2097 = vadd.f32 0.0, %v2096
      %v2098 = vpop.f32.mrb[0].mxu0
      %v2099 = vpop.f32.mrb[0].mxu0
      %v2100 = vadd.f32 0.0, %v2099
      %v2101 = vpop.f32.mrb[0].mxu0
      %2102 = vmatprep.mubr.bf16.mxu0 %v1255
      %2103 = vmatmul.mubr.bf16.gmra.mrb[0].mxu0 %v1254
      %v2104 = vpop.f32.mrb[0].mxu0
      %v2105 = vadd.f32 0.0, %v2104
      %v2106 = vpop.f32.mrb[0].mxu0
      %v2107 = vpop.f32.mrb[0].mxu0
      %v2108 = vadd.f32 0.0, %v2107
      %v2109 = vpop.f32.mrb[0].mxu0
      %2110 = vmatprep.mubr.bf16.mxu0 %v1258
      %2111 = vmatmul.mubr.bf16.gmra.mrb[0].mxu0 %v1257
      %v2112 = vpop.f32.mrb[0].mxu0
      %v2113 = vadd.f32 0.0, %v2112
      %v2114 = vpop.f32.mrb[0].mxu0
      %v2115 = vpop.f32.mrb[0].mxu0
      %v2116 = vadd.f32 0.0, %v2115
      %v2117 = vpop.f32.mrb[0].mxu0
      %2118 = vmatprep.mubr.bf16.mxu0 %v1261
      %2119 = vmatmul.mubr.bf16.gmra.mrb[0].mxu0 %v1260
      %v2120 = vpop.f32.mrb[0].mxu0
      %v2121 = vadd.f32 0.0, %v2120
      %v2122 = vpop.f32.mrb[0].mxu0
      %v2123 = vpop.f32.mrb[0].mxu0
      %v2124 = vadd.f32 0.0, %v2123
      %v2125 = vpop.f32.mrb[0].mxu0
      %2126 = vmatprep.mubr.bf16.mxu0 %v1264
      %2127 = vmatmul.mubr.bf16.gmra.mrb[0].mxu0 %v1263
      %v2128 = vpop.f32.mrb[0].mxu0
      %v2129 = vadd.f32 0.0, %v2128
      %v2130 = vpop.f32.mrb[0].mxu0
      %v2131 = vpop.f32.mrb[0].mxu0
      %v2132 = vadd.f32 0.0, %v2131
      %v2133 = vpop.f32.mrb[0].mxu0
      %2134 = vmatprep.mubr.bf16.mxu0 %v1267
      %2135 = vmatmul.mubr.bf16.gmra.mrb[0].mxu0 %v1266
      %v2136 = vpop.f32.mrb[0].mxu0
      %v2137 = vadd.f32 0.0, %v2136
      %v2138 = vpop.f32.mrb[0].mxu0
      %v2139 = vpop.f32.mrb[0].mxu0
      %v2140 = vadd.f32 0.0, %v2139
      %v2141 = vpop.f32.mrb[0].mxu0
      %2142 = vmatprep.mubr.bf16.mxu0 %v1270
      %2143 = vmatmul.mubr.bf16.gmra.mrb[0].mxu0 %v1269
      %v2144 = vpop.f32.mrb[0].mxu0
      %v2145 = vadd.f32 0.0, %v2144
      %v2146 = vpop.f32.mrb[0].mxu0
      %v2147 = vpop.f32.mrb[0].mxu0
      %v2148 = vadd.f32 0.0, %v2147
      %v2149 = vpop.f32.mrb[0].mxu0
      %2150 = vmatprep.mubr.bf16.mxu0 %v1273
      %2151 = vmatmul.mubr.bf16.gmra.mrb[0].mxu0 %v1272
      %v2152 = vpop.f32.mrb[0].mxu0
      %v2153 = vadd.f32 0.0, %v2152
      %v2154 = vpop.f32.mrb[0].mxu0
      %v2155 = vpop.f32.mrb[0].mxu0
      %v2156 = vadd.f32 0.0, %v2155
      %v2157 = vpop.f32.mrb[0].mxu0
      %2158 = vmatprep.mubr.bf16.mxu0 %v1276
      %2159 = vmatmul.mubr.bf16.gmra.mrb[0].mxu0 %v1275
      %v2160 = vpop.f32.mrb[0].mxu0
      %v2161 = vadd.f32 0.0, %v2160
      %v2162 = vpop.f32.mrb[0].mxu0
      %v2163 = vpop.f32.mrb[0].mxu0
      %v2164 = vadd.f32 0.0, %v2163
      %v2165 = vpop.f32.mrb[0].mxu0
      %2166 = vmatprep.mubr.bf16.mxu0 %v1279
      %2167 = vmatmul.mubr.bf16.gmra.mrb[0].mxu0 %v1278
      %v2168 = vpop.f32.mrb[0].mxu0
      %v2169 = vadd.f32 0.0, %v2168
      %v2170 = vpop.f32.mrb[0].mxu0
      %v2171 = vpop.f32.mrb[0].mxu0
      %v2172 = vadd.f32 0.0, %v2171
      %v2173 = vpop.f32.mrb[0].mxu0
      %2174 = vmatprep.mubr.bf16.mxu0 %v1282
      %2175 = vmatmul.mubr.bf16.gmra.mrb[0].mxu0 %v1281
      %v2176 = vpop.f32.mrb[0].mxu0
      %v2177 = vadd.f32 0.0, %v2176
      %v2178 = vpop.f32.mrb[0].mxu0
      %v2179 = vpop.f32.mrb[0].mxu0
      %v2180 = vadd.f32 0.0, %v2179
      %v2181 = vpop.f32.mrb[0].mxu0
      %2182 = vmatprep.mubr.bf16.mxu0 %v1285
      %2183 = vmatmul.mubr.bf16.gmra.mrb[0].mxu0 %v1284
      %v2184 = vpop.f32.mrb[0].mxu0
      %v2185 = vadd.f32 0.0, %v2184
      %v2186 = vpop.f32.mrb[0].mxu0
      %v2187 = vpop.f32.mrb[0].mxu0
      %v2188 = vadd.f32 0.0, %v2187
      %v2189 = vpop.f32.mrb[0].mxu0
      %2190 = vmatprep.mubr.bf16.mxu0 %v1288
      %2191 = vmatmul.mubr.bf16.gmra.mrb[0].mxu0 %v1287
      %v2192 = vpop.f32.mrb[0].mxu0
      %v2193 = vadd.f32 0.0, %v2192
      %v2194 = vpop.f32.mrb[0].mxu0
      %v2195 = vpop.f32.mrb[0].mxu0
      %v2196 = vadd.f32 0.0, %v2195
      %v2197 = vpop.f32.mrb[0].mxu0
      %2198 = vmatprep.mubr.bf16.mxu0 %v1291
      %2199 = vmatmul.mubr.bf16.gmra.mrb[0].mxu0 %v1290
      %v2200 = vpop.f32.mrb[0].mxu0
      %v2201 = vadd.f32 0.0, %v2200
      %v2202 = vpop.f32.mrb[0].mxu0
      %v2203 = vpop.f32.mrb[0].mxu0
      %v2204 = vadd.f32 0.0, %v2203
      %v2205 = vpop.f32.mrb[0].mxu0
      %2206 = vmatprep.mubr.bf16.mxu0 %v1294
      %2207 = vmatmul.mubr.bf16.gmra.mrb[0].mxu0 %v1293
      %v2208 = vpop.f32.mrb[0].mxu0
      %v2209 = vadd.f32 0.0, %v2208
      %v2210 = vpop.f32.mrb[0].mxu0
      %v2211 = vpop.f32.mrb[0].mxu0
      %v2212 = vadd.f32 0.0, %v2211
      %v2213 = vpop.f32.mrb[0].mxu0
      %2214 = vmatprep.mubr.bf16.mxu0 %v1297
      %2215 = vmatmul.mubr.bf16.gmra.mrb[0].mxu0 %v1296
      %v2216 = vpop.f32.mrb[0].mxu0
      %v2217 = vadd.f32 0.0, %v2216
      %v2218 = vpop.f32.mrb[0].mxu0
      %v2219 = vpop.f32.mrb[0].mxu0
      %v2220 = vadd.f32 0.0, %v2219
      %v2221 = vpop.f32.mrb[0].mxu0
      %2222 = vmatprep.mubr.bf16.mxu0 %v1300
      %2223 = vmatmul.mubr.bf16.gmra.mrb[0].mxu0 %v1299
      %v2224 = vpop.f32.mrb[0].mxu0
      %v2225 = vadd.f32 0.0, %v2224
      %v2226 = vpop.f32.mrb[0].mxu0
      %v2227 = vpop.f32.mrb[0].mxu0
      %v2228 = vadd.f32 0.0, %v2227
      %v2229 = vpop.f32.mrb[0].mxu0
      %2230 = vmatprep.mubr.bf16.mxu0 %v1303
      %2231 = vmatmul.mubr.bf16.gmra.mrb[0].mxu0 %v1302
      %v2232 = vpop.f32.mrb[0].mxu0
      %v2233 = vadd.f32 0.0, %v2232
      %v2234 = vpop.f32.mrb[0].mxu0
      %v2235 = vpop.f32.mrb[0].mxu0
      %v2236 = vadd.f32 0.0, %v2235
      %v2237 = vpop.f32.mrb[0].mxu0
      %2238 = vmatprep.mubr.bf16.mxu0 %v1306
      %2239 = vmatmul.mubr.bf16.gmra.mrb[0].mxu0 %v1305
      %v2240 = vpop.f32.mrb[0].mxu0
      %v2241 = vadd.f32 0.0, %v2240
      %v2242 = vpop.f32.mrb[0].mxu0
      %v2243 = vpop.f32.mrb[0].mxu0
      %v2244 = vadd.f32 0.0, %v2243
      %v2245 = vpop.f32.mrb[0].mxu0
      %2246 = vmatprep.mubr.bf16.mxu0 %v1309
      %2247 = vmatmul.mubr.bf16.gmra.mrb[0].mxu0 %v1308
      %v2248 = vpop.f32.mrb[0].mxu0
      %v2249 = vadd.f32 0.0, %v2248
      %v2250 = vpop.f32.mrb[0].mxu0
      %v2251 = vpop.f32.mrb[0].mxu0
      %v2252 = vadd.f32 0.0, %v2251
      %v2253 = vpop.f32.mrb[0].mxu0
      %2254 = vmatprep.mubr.bf16.mxu0 %v1312
      %2255 = vmatmul.mubr.bf16.gmra.mrb[0].mxu0 %v1311
      %v2256 = vpop.f32.mrb[0].mxu0
      %v2257 = vadd.f32 0.0, %v2256
      %v2258 = vpop.f32.mrb[0].mxu0
      %v2259 = vpop.f32.mrb[0].mxu0
      %v2260 = vadd.f32 0.0, %v2259
      %v2261 = vpop.f32.mrb[0].mxu0
      %2262 = vmatprep.mubr.bf16.mxu0 %v1315
      %2263 = vmatmul.mubr.bf16.gmra.mrb[0].mxu0 %v1314
      %v2264 = vpop.f32.mrb[0].mxu0
      %v2265 = vadd.f32 0.0, %v2264
      %v2266 = vpop.f32.mrb[0].mxu0
      %v2267 = vpop.f32.mrb[0].mxu0
      %v2268 = vadd.f32 0.0, %v2267
      %v2269 = vpop.f32.mrb[0].mxu0
      %2270 = vmatprep.mubr.bf16.mxu0 %v1318
      %2271 = vmatmul.mubr.bf16.gmra.mrb[0].mxu0 %v1317
      %v2272 = vpop.f32.mrb[0].mxu0
      %v2273 = vadd.f32 0.0, %v2272
      %v2274 = vpop.f32.mrb[0].mxu0
      %v2275 = vpop.f32.mrb[0].mxu0
      %v2276 = vadd.f32 0.0, %v2275
      %v2277 = vpop.f32.mrb[0].mxu0
      %2278 = vmatprep.mubr.bf16.mxu0 %v1321
      %2279 = vmatmul.mubr.bf16.gmra.mrb[0].mxu0 %v1320
      %v2280 = vpop.f32.mrb[0].mxu0
      %v2281 = vadd.f32 0.0, %v2280
      %v2282 = vpop.f32.mrb[0].mxu0
      %v2283 = vpop.f32.mrb[0].mxu0
      %v2284 = vadd.f32 0.0, %v2283
      %v2285 = vpop.f32.mrb[0].mxu0
      %2286 = vmatprep.mubr.bf16.mxu0 %v1324
      %2287 = vmatmul.mubr.bf16.gmra.mrb[0].mxu0 %v1323
      %v2288 = vpop.f32.mrb[0].mxu0
      %v2289 = vadd.f32 0.0, %v2288
      %v2290 = vpop.f32.mrb[0].mxu0
      %v2291 = vpop.f32.mrb[0].mxu0
      %v2292 = vadd.f32 0.0, %v2291
      %v2293 = vpop.f32.mrb[0].mxu0
      %2294 = vmatprep.mubr.bf16.mxu0 %v1327
      %2295 = vmatmul.mubr.bf16.gmra.mrb[0].mxu0 %v1326
      %v2296 = vpop.f32.mrb[0].mxu0
      %v2297 = vadd.f32 0.0, %v2296
      %v2298 = vpop.f32.mrb[0].mxu0
      %v2299 = vpop.f32.mrb[0].mxu0
      %v2300 = vadd.f32 0.0, %v2299
      %v2301 = vpop.f32.mrb[0].mxu0
      %2302 = vdwg.mxu0
      %2303 = vmatprep.subr.bf16.mxu0 0
      %2304 = vmatpush1.bf16.msra.mxu0 %v1545
      %2305 = vmatprep.subr.bf16.mxu0 0
      %2306 = vmatpush1.bf16.msra.mxu0 %v1546
      %2307 = vmatprep.subr.bf16.mxu0 0
      %2308 = vmatpush1.bf16.msra.mxu0 0
      %2309 = vmatprep.subr.bf16.mxu0 0
      %2310 = vmatpush1.bf16.msra.mxu0 0
      %2311 = vmatprep.subr.bf16.mxu0 0
      %2312 = vmatpush1.bf16.msra.mxu0 0
      %2313 = vmatprep.subr.bf16.mxu0 0
      %2314 = vmatpush1.bf16.msra.mxu0 0
      %2315 = vmatprep.subr.bf16.mxu0 0
      %2316 = vmatpush1.bf16.msra.mxu0 0
      %2317 = vmatprep.subr.bf16.mxu0 0
      %2318 = vmatpush1.bf16.msra.mxu0 0
      %2319 = vmatprep.subr.bf16.mxu0 0
      %2320 = vmatpush1.bf16.msra.mxu0 0
      %2321 = vmatprep.subr.bf16.mxu0 0
      %2322 = vmatpush1.bf16.msra.mxu0 0
      %2323 = vmatprep.subr.bf16.mxu0 0
      %2324 = vmatpush1.bf16.msra.mxu0 0
      %2325 = vmatprep.subr.bf16.mxu0 0
      %2326 = vmatpush1.bf16.msra.mxu0 0
      %2327 = vmatprep.subr.bf16.mxu0 0
      %2328 = vmatpush1.bf16.msra.mxu0 0
      %2329 = vmatprep.subr.bf16.mxu0 0
      %2330 = vmatpush1.bf16.msra.mxu0 0
      %2331 = vmatprep.subr.bf16.mxu0 0
      %2332 = vmatpush1.bf16.msra.mxu0 0
      %2333 = vmatprep.subr.bf16.mxu0 0
      %2334 = vmatpush1.bf16.msra.mxu0 0
      %2335 = vmatprep.mubr.bf16.mxu0 0
      %2336 = vmatmul.mubr.bf16.gmra.mrb[0].mxu0 %v1567
      %v2337 = vpop.f32.mrb[0].mxu0
      %v2338 = vadd.f32 %v1793, %v2337
      %v2339 = vpop.f32.mrb[0].mxu0
      %v2340 = vpop.f32.mrb[0].mxu0
      %v2341 = vadd.f32 %v1796, %v2340
      %v2342 = vpop.f32.mrb[0].mxu0
      %2343 = vmatprep.mubr.bf16.mxu0 0
      %2344 = vmatmul.mubr.bf16.gmra.mrb[0].mxu0 %v1570
      %v2345 = vpop.f32.mrb[0].mxu0
      %v2346 = vadd.f32 %v1801, %v2345
      %v2347 = vpop.f32.mrb[0].mxu0
      %v2348 = vpop.f32.mrb[0].mxu0
      %v2349 = vadd.f32 %v1804, %v2348
      %v2350 = vpop.f32.mrb[0].mxu0
      %2351 = vmatprep.mubr.bf16.mxu0 0
      %2352 = vmatmul.mubr.bf16.gmra.mrb[0].mxu0 %v1573
      %v2353 = vpop.f32.mrb[0].mxu0
      %v2354 = vadd.f32 %v1809, %v2353
      %v2355 = vpop.f32.mrb[0].mxu0
      %v2356 = vpop.f32.mrb[0].mxu0
      %v2357 = vadd.f32 %v1812, %v2356
      %v2358 = vpop.f32.mrb[0].mxu0
      %2359 = vmatprep.mubr.bf16.mxu0 0
      %2360 = vmatmul.mubr.bf16.gmra.mrb[0].mxu0 %v1576
      %v2361 = vpop.f32.mrb[0].mxu0
      %v2362 = vadd.f32 %v1817, %v2361
      %v2363 = vpop.f32.mrb[0].mxu0
      %v2364 = vpop.f32.mrb[0].mxu0
      %v2365 = vadd.f32 %v1820, %v2364
      %v2366 = vpop.f32.mrb[0].mxu0
      %2367 = vmatprep.mubr.bf16.mxu0 0
      %2368 = vmatmul.mubr.bf16.gmra.mrb[0].mxu0 %v1579
      %v2369 = vpop.f32.mrb[0].mxu0
      %v2370 = vadd.f32 %v1825, %v2369
      %v2371 = vpop.f32.mrb[0].mxu0
      %v2372 = vpop.f32.mrb[0].mxu0
      %v2373 = vadd.f32 %v1828, %v2372
      %v2374 = vpop.f32.mrb[0].mxu0
      %2375 = vmatprep.mubr.bf16.mxu0 0
      %2376 = vmatmul.mubr.bf16.gmra.mrb[0].mxu0 %v1582
      %v2377 = vpop.f32.mrb[0].mxu0
      %v2378 = vadd.f32 %v1833, %v2377
      %v2379 = vpop.f32.mrb[0].mxu0
      %v2380 = vpop.f32.mrb[0].mxu0
      %v2381 = vadd.f32 %v1836, %v2380
      %v2382 = vpop.f32.mrb[0].mxu0
      %2383 = vmatprep.mubr.bf16.mxu0 0
      %2384 = vmatmul.mubr.bf16.gmra.mrb[0].mxu0 %v1585
      %v2385 = vpop.f32.mrb[0].mxu0
      %v2386 = vadd.f32 %v1841, %v2385
      %v2387 = vpop.f32.mrb[0].mxu0
      %v2388 = vpop.f32.mrb[0].mxu0
      %v2389 = vadd.f32 %v1844, %v2388
      %v2390 = vpop.f32.mrb[0].mxu0
      %2391 = vmatprep.mubr.bf16.mxu0 0
      %2392 = vmatmul.mubr.bf16.gmra.mrb[0].mxu0 %v1588
      %v2393 = vpop.f32.mrb[0].mxu0
      %v2394 = vadd.f32 %v1849, %v2393
      %v2395 = vpop.f32.mrb[0].mxu0
      %v2396 = vpop.f32.mrb[0].mxu0
      %v2397 = vadd.f32 %v1852, %v2396
      %v2398 = vpop.f32.mrb[0].mxu0
      %2399 = vmatprep.mubr.bf16.mxu0 0
      %2400 = vmatmul.mubr.bf16.gmra.mrb[0].mxu0 %v1591
      %v2401 = vpop.f32.mrb[0].mxu0
      %v2402 = vadd.f32 %v1857, %v2401
      %v2403 = vpop.f32.mrb[0].mxu0
      %v2404 = vpop.f32.mrb[0].mxu0
      %v2405 = vadd.f32 %v1860, %v2404
      %v2406 = vpop.f32.mrb[0].mxu0
      %2407 = vmatprep.mubr.bf16.mxu0 0
      %2408 = vmatmul.mubr.bf16.gmra.mrb[0].mxu0 %v1594
      %v2409 = vpop.f32.mrb[0].mxu0
      %v2410 = vadd.f32 %v1865, %v2409
      %v2411 = vpop.f32.mrb[0].mxu0
      %v2412 = vpop.f32.mrb[0].mxu0
      %v2413 = vadd.f32 %v1868, %v2412
      %v2414 = vpop.f32.mrb[0].mxu0
      %2415 = vmatprep.mubr.bf16.mxu0 0
      %2416 = vmatmul.mubr.bf16.gmra.mrb[0].mxu0 %v1597
      %v2417 = vpop.f32.mrb[0].mxu0
      %v2418 = vadd.f32 %v1873, %v2417
      %v2419 = vpop.f32.mrb[0].mxu0
      %v2420 = vpop.f32.mrb[0].mxu0
      %v2421 = vadd.f32 %v1876, %v2420
      %v2422 = vpop.f32.mrb[0].mxu0
      %2423 = vmatprep.mubr.bf16.mxu0 0
      %2424 = vmatmul.mubr.bf16.gmra.mrb[0].mxu0 %v1600
      %v2425 = vpop.f32.mrb[0].mxu0
      %v2426 = vadd.f32 %v1881, %v2425
      %v2427 = vpop.f32.mrb[0].mxu0
      %v2428 = vpop.f32.mrb[0].mxu0
      %v2429 = vadd.f32 %v1884, %v2428
      %v2430 = vpop.f32.mrb[0].mxu0
      %2431 = vmatprep.mubr.bf16.mxu0 0
      %2432 = vmatmul.mubr.bf16.gmra.mrb[0].mxu0 %v1603
      %v2433 = vpop.f32.mrb[0].mxu0
      %v2434 = vadd.f32 %v1889, %v2433
      %v2435 = vpop.f32.mrb[0].mxu0
      %v2436 = vpop.f32.mrb[0].mxu0
      %v2437 = vadd.f32 %v1892, %v2436
      %v2438 = vpop.f32.mrb[0].mxu0
      %2439 = vmatprep.mubr.bf16.mxu0 0
      %2440 = vmatmul.mubr.bf16.gmra.mrb[0].mxu0 %v1606
      %v2441 = vpop.f32.mrb[0].mxu0
      %v2442 = vadd.f32 %v1897, %v2441
      %v2443 = vpop.f32.mrb[0].mxu0
      %v2444 = vpop.f32.mrb[0].mxu0
      %v2445 = vadd.f32 %v1900, %v2444
      %v2446 = vpop.f32.mrb[0].mxu0
      %2447 = vmatprep.mubr.bf16.mxu0 0
      %2448 = vmatmul.mubr.bf16.gmra.mrb[0].mxu0 %v1609
      %v2449 = vpop.f32.mrb[0].mxu0
      %v2450 = vadd.f32 %v1905, %v2449
      %v2451 = vpop.f32.mrb[0].mxu0
      %v2452 = vpop.f32.mrb[0].mxu0
      %v2453 = vadd.f32 %v1908, %v2452
      %v2454 = vpop.f32.mrb[0].mxu0
      %2455 = vmatprep.mubr.bf16.mxu0 0
      %2456 = vmatmul.mubr.bf16.gmra.mrb[0].mxu0 %v1612
      %v2457 = vpop.f32.mrb[0].mxu0
      %v2458 = vadd.f32 %v1913, %v2457
      %v2459 = vpop.f32.mrb[0].mxu0
      %v2460 = vpop.f32.mrb[0].mxu0
      %v2461 = vadd.f32 %v1916, %v2460
      %v2462 = vpop.f32.mrb[0].mxu0
      %2463 = vmatprep.mubr.bf16.mxu0 0
      %2464 = vmatmul.mubr.bf16.gmra.mrb[0].mxu0 %v1615
      %v2465 = vpop.f32.mrb[0].mxu0
      %v2466 = vadd.f32 %v1921, %v2465
      %v2467 = vpop.f32.mrb[0].mxu0
      %v2468 = vpop.f32.mrb[0].mxu0
      %v2469 = vadd.f32 %v1924, %v2468
      %v2470 = vpop.f32.mrb[0].mxu0
      %2471 = vmatprep.mubr.bf16.mxu0 0
      %2472 = vmatmul.mubr.bf16.gmra.mrb[0].mxu0 %v1618
      %v2473 = vpop.f32.mrb[0].mxu0
      %v2474 = vadd.f32 %v1929, %v2473
      %v2475 = vpop.f32.mrb[0].mxu0
      %v2476 = vpop.f32.mrb[0].mxu0
      %v2477 = vadd.f32 %v1932, %v2476
      %v2478 = vpop.f32.mrb[0].mxu0
      %2479 = vmatprep.mubr.bf16.mxu0 0
      %2480 = vmatmul.mubr.bf16.gmra.mrb[0].mxu0 %v1621
      %v2481 = vpop.f32.mrb[0].mxu0
      %v2482 = vadd.f32 %v1937, %v2481
      %v2483 = vpop.f32.mrb[0].mxu0
      %v2484 = vpop.f32.mrb[0].mxu0
      %v2485 = vadd.f32 %v1940, %v2484
      %v2486 = vpop.f32.mrb[0].mxu0
      %2487 = vmatprep.mubr.bf16.mxu0 0
      %2488 = vmatmul.mubr.bf16.gmra.mrb[0].mxu0 %v1624
      %v2489 = vpop.f32.mrb[0].mxu0
      %v2490 = vadd.f32 %v1945, %v2489
      %v2491 = vpop.f32.mrb[0].mxu0
      %v2492 = vpop.f32.mrb[0].mxu0
      %v2493 = vadd.f32 %v1948, %v2492
      %v2494 = vpop.f32.mrb[0].mxu0
      %2495 = vmatprep.mubr.bf16.mxu0 0
      %2496 = vmatmul.mubr.bf16.gmra.mrb[0].mxu0 %v1627
      %v2497 = vpop.f32.mrb[0].mxu0
      %v2498 = vadd.f32 %v1953, %v2497
      %v2499 = vpop.f32.mrb[0].mxu0
      %v2500 = vpop.f32.mrb[0].mxu0
      %v2501 = vadd.f32 %v1956, %v2500
      %v2502 = vpop.f32.mrb[0].mxu0
      %2503 = vmatprep.mubr.bf16.mxu0 0
      %2504 = vmatmul.mubr.bf16.gmra.mrb[0].mxu0 %v1630
      %v2505 = vpop.f32.mrb[0].mxu0
      %v2506 = vadd.f32 %v1961, %v2505
      %v2507 = vpop.f32.mrb[0].mxu0
      %v2508 = vpop.f32.mrb[0].mxu0
      %v2509 = vadd.f32 %v1964, %v2508
      %v2510 = vpop.f32.mrb[0].mxu0
      %2511 = vmatprep.mubr.bf16.mxu0 0
      %2512 = vmatmul.mubr.bf16.gmra.mrb[0].mxu0 %v1633
      %v2513 = vpop.f32.mrb[0].mxu0
      %v2514 = vadd.f32 %v1969, %v2513
      %v2515 = vpop.f32.mrb[0].mxu0
      %v2516 = vpop.f32.mrb[0].mxu0
      %v2517 = vadd.f32 %v1972, %v2516
      %v2518 = vpop.f32.mrb[0].mxu0
      %2519 = vmatprep.mubr.bf16.mxu0 0
      %2520 = vmatmul.mubr.bf16.gmra.mrb[0].mxu0 %v1636
      %v2521 = vpop.f32.mrb[0].mxu0
      %v2522 = vadd.f32 %v1977, %v2521
      %v2523 = vpop.f32.mrb[0].mxu0
      %v2524 = vpop.f32.mrb[0].mxu0
      %v2525 = vadd.f32 %v1980, %v2524
      %v2526 = vpop.f32.mrb[0].mxu0
      %2527 = vmatprep.mubr.bf16.mxu0 0
      %2528 = vmatmul.mubr.bf16.gmra.mrb[0].mxu0 %v1639
      %v2529 = vpop.f32.mrb[0].mxu0
      %v2530 = vadd.f32 %v1985, %v2529
      %v2531 = vpop.f32.mrb[0].mxu0
      %v2532 = vpop.f32.mrb[0].mxu0
      %v2533 = vadd.f32 %v1988, %v2532
      %v2534 = vpop.f32.mrb[0].mxu0
      %2535 = vmatprep.mubr.bf16.mxu0 0
      %2536 = vmatmul.mubr.bf16.gmra.mrb[0].mxu0 %v1642
      %v2537 = vpop.f32.mrb[0].mxu0
      %v2538 = vadd.f32 %v1993, %v2537
      %v2539 = vpop.f32.mrb[0].mxu0
      %v2540 = vpop.f32.mrb[0].mxu0
      %v2541 = vadd.f32 %v1996, %v2540
      %v2542 = vpop.f32.mrb[0].mxu0
      %2543 = vmatprep.mubr.bf16.mxu0 0
      %2544 = vmatmul.mubr.bf16.gmra.mrb[0].mxu0 %v1645
      %v2545 = vpop.f32.mrb[0].mxu0
      %v2546 = vadd.f32 %v2001, %v2545
      %v2547 = vpop.f32.mrb[0].mxu0
      %v2548 = vpop.f32.mrb[0].mxu0
      %v2549 = vadd.f32 %v2004, %v2548
      %v2550 = vpop.f32.mrb[0].mxu0
      %2551 = vmatprep.mubr.bf16.mxu0 0
      %2552 = vmatmul.mubr.bf16.gmra.mrb[0].mxu0 %v1648
      %v2553 = vpop.f32.mrb[0].mxu0
      %v2554 = vadd.f32 %v2009, %v2553
      %v2555 = vpop.f32.mrb[0].mxu0
      %v2556 = vpop.f32.mrb[0].mxu0
      %v2557 = vadd.f32 %v2012, %v2556
      %v2558 = vpop.f32.mrb[0].mxu0
      %2559 = vmatprep.mubr.bf16.mxu0 0
      %2560 = vmatmul.mubr.bf16.gmra.mrb[0].mxu0 %v1651
      %v2561 = vpop.f32.mrb[0].mxu0
      %v2562 = vadd.f32 %v2017, %v2561
      %v2563 = vpop.f32.mrb[0].mxu0
      %v2564 = vpop.f32.mrb[0].mxu0
      %v2565 = vadd.f32 %v2020, %v2564
      %v2566 = vpop.f32.mrb[0].mxu0
      %2567 = vmatprep.mubr.bf16.mxu0 0
      %2568 = vmatmul.mubr.bf16.gmra.mrb[0].mxu0 %v1654
      %v2569 = vpop.f32.mrb[0].mxu0
      %v2570 = vadd.f32 %v2025, %v2569
      %v2571 = vpop.f32.mrb[0].mxu0
      %v2572 = vpop.f32.mrb[0].mxu0
      %v2573 = vadd.f32 %v2028, %v2572
      %v2574 = vpop.f32.mrb[0].mxu0
      %2575 = vmatprep.mubr.bf16.mxu0 0
      %2576 = vmatmul.mubr.bf16.gmra.mrb[0].mxu0 %v1657
      %v2577 = vpop.f32.mrb[0].mxu0
      %v2578 = vadd.f32 %v2033, %v2577
      %v2579 = vpop.f32.mrb[0].mxu0
      %v2580 = vpop.f32.mrb[0].mxu0
      %v2581 = vadd.f32 %v2036, %v2580
      %v2582 = vpop.f32.mrb[0].mxu0
      %2583 = vmatprep.mubr.bf16.mxu0 0
      %2584 = vmatmul.mubr.bf16.gmra.mrb[0].mxu0 %v1660
      %v2585 = vpop.f32.mrb[0].mxu0
      %v2586 = vadd.f32 %v2041, %v2585
      %v2587 = vpop.f32.mrb[0].mxu0
      %v2588 = vpop.f32.mrb[0].mxu0
      %v2589 = vadd.f32 %v2044, %v2588
      %v2590 = vpop.f32.mrb[0].mxu0
      %2591 = vmatprep.mubr.bf16.mxu0 0
      %2592 = vmatmul.mubr.bf16.gmra.mrb[0].mxu0 %v1663
      %v2593 = vpop.f32.mrb[0].mxu0
      %v2594 = vadd.f32 %v2049, %v2593
      %v2595 = vpop.f32.mrb[0].mxu0
      %v2596 = vpop.f32.mrb[0].mxu0
      %v2597 = vadd.f32 %v2052, %v2596
      %v2598 = vpop.f32.mrb[0].mxu0
      %2599 = vmatprep.mubr.bf16.mxu0 0
      %2600 = vmatmul.mubr.bf16.gmra.mrb[0].mxu0 %v1666
      %v2601 = vpop.f32.mrb[0].mxu0
      %v2602 = vadd.f32 %v2057, %v2601
      %v2603 = vpop.f32.mrb[0].mxu0
      %v2604 = vpop.f32.mrb[0].mxu0
      %v2605 = vadd.f32 %v2060, %v2604
      %v2606 = vpop.f32.mrb[0].mxu0
      %2607 = vmatprep.mubr.bf16.mxu0 0
      %2608 = vmatmul.mubr.bf16.gmra.mrb[0].mxu0 %v1669
      %v2609 = vpop.f32.mrb[0].mxu0
      %v2610 = vadd.f32 %v2065, %v2609
      %v2611 = vpop.f32.mrb[0].mxu0
      %v2612 = vpop.f32.mrb[0].mxu0
      %v2613 = vadd.f32 %v2068, %v2612
      %v2614 = vpop.f32.mrb[0].mxu0
      %2615 = vmatprep.mubr.bf16.mxu0 0
      %2616 = vmatmul.mubr.bf16.gmra.mrb[0].mxu0 %v1672
      %v2617 = vpop.f32.mrb[0].mxu0
      %v2618 = vadd.f32 %v2073, %v2617
      %v2619 = vpop.f32.mrb[0].mxu0
      %v2620 = vpop.f32.mrb[0].mxu0
      %v2621 = vadd.f32 %v2076, %v2620
      %v2622 = vpop.f32.mrb[0].mxu0
      %2623 = vmatprep.mubr.bf16.mxu0 0
      %2624 = vmatmul.mubr.bf16.gmra.mrb[0].mxu0 %v1675
      %v2625 = vpop.f32.mrb[0].mxu0
      %v2626 = vadd.f32 %v2081, %v2625
      %v2627 = vpop.f32.mrb[0].mxu0
      %v2628 = vpop.f32.mrb[0].mxu0
      %v2629 = vadd.f32 %v2084, %v2628
      %v2630 = vpop.f32.mrb[0].mxu0
      %2631 = vmatprep.mubr.bf16.mxu0 0
      %2632 = vmatmul.mubr.bf16.gmra.mrb[0].mxu0 %v1678
      %v2633 = vpop.f32.mrb[0].mxu0
      %v2634 = vadd.f32 %v2089, %v2633
      %v2635 = vpop.f32.mrb[0].mxu0
      %v2636 = vpop.f32.mrb[0].mxu0
      %v2637 = vadd.f32 %v2092, %v2636
      %v2638 = vpop.f32.mrb[0].mxu0
      %2639 = vmatprep.mubr.bf16.mxu0 0
      %2640 = vmatmul.mubr.bf16.gmra.mrb[0].mxu0 %v1681
      %v2641 = vpop.f32.mrb[0].mxu0
      %v2642 = vadd.f32 %v2097, %v2641
      %v2643 = vpop.f32.mrb[0].mxu0
      %v2644 = vpop.f32.mrb[0].mxu0
      %v2645 = vadd.f32 %v2100, %v2644
      %v2646 = vpop.f32.mrb[0].mxu0
      %2647 = vmatprep.mubr.bf16.mxu0 0
      %2648 = vmatmul.mubr.bf16.gmra.mrb[0].mxu0 %v1684
      %v2649 = vpop.f32.mrb[0].mxu0
      %v2650 = vadd.f32 %v2105, %v2649
      %v2651 = vpop.f32.mrb[0].mxu0
      %v2652 = vpop.f32.mrb[0].mxu0
      %v2653 = vadd.f32 %v2108, %v2652
      %v2654 = vpop.f32.mrb[0].mxu0
      %2655 = vmatprep.mubr.bf16.mxu0 0
      %2656 = vmatmul.mubr.bf16.gmra.mrb[0].mxu0 %v1687
      %v2657 = vpop.f32.mrb[0].mxu0
      %v2658 = vadd.f32 %v2113, %v2657
      %v2659 = vpop.f32.mrb[0].mxu0
      %v2660 = vpop.f32.mrb[0].mxu0
      %v2661 = vadd.f32 %v2116, %v2660
      %v2662 = vpop.f32.mrb[0].mxu0
      %2663 = vmatprep.mubr.bf16.mxu0 0
      %2664 = vmatmul.mubr.bf16.gmra.mrb[0].mxu0 %v1690
      %v2665 = vpop.f32.mrb[0].mxu0
      %v2666 = vadd.f32 %v2121, %v2665
      %v2667 = vpop.f32.mrb[0].mxu0
      %v2668 = vpop.f32.mrb[0].mxu0
      %v2669 = vadd.f32 %v2124, %v2668
      %v2670 = vpop.f32.mrb[0].mxu0
      %2671 = vmatprep.mubr.bf16.mxu0 0
      %2672 = vmatmul.mubr.bf16.gmra.mrb[0].mxu0 %v1693
      %v2673 = vpop.f32.mrb[0].mxu0
      %v2674 = vadd.f32 %v2129, %v2673
      %v2675 = vpop.f32.mrb[0].mxu0
      %v2676 = vpop.f32.mrb[0].mxu0
      %v2677 = vadd.f32 %v2132, %v2676
      %v2678 = vpop.f32.mrb[0].mxu0
      %2679 = vmatprep.mubr.bf16.mxu0 0
      %2680 = vmatmul.mubr.bf16.gmra.mrb[0].mxu0 %v1696
      %v2681 = vpop.f32.mrb[0].mxu0
      %v2682 = vadd.f32 %v2137, %v2681
      %v2683 = vpop.f32.mrb[0].mxu0
      %v2684 = vpop.f32.mrb[0].mxu0
      %v2685 = vadd.f32 %v2140, %v2684
      %v2686 = vpop.f32.mrb[0].mxu0
      %2687 = vmatprep.mubr.bf16.mxu0 0
      %2688 = vmatmul.mubr.bf16.gmra.mrb[0].mxu0 %v1699
      %v2689 = vpop.f32.mrb[0].mxu0
      %v2690 = vadd.f32 %v2145, %v2689
      %v2691 = vpop.f32.mrb[0].mxu0
      %v2692 = vpop.f32.mrb[0].mxu0
      %v2693 = vadd.f32 %v2148, %v2692
      %v2694 = vpop.f32.mrb[0].mxu0
      %2695 = vmatprep.mubr.bf16.mxu0 0
      %2696 = vmatmul.mubr.bf16.gmra.mrb[0].mxu0 %v1702
      %v2697 = vpop.f32.mrb[0].mxu0
      %v2698 = vadd.f32 %v2153, %v2697
      %v2699 = vpop.f32.mrb[0].mxu0
      %v2700 = vpop.f32.mrb[0].mxu0
      %v2701 = vadd.f32 %v2156, %v2700
      %v2702 = vpop.f32.mrb[0].mxu0
      %2703 = vmatprep.mubr.bf16.mxu0 0
      %2704 = vmatmul.mubr.bf16.gmra.mrb[0].mxu0 %v1705
      %v2705 = vpop.f32.mrb[0].mxu0
      %v2706 = vadd.f32 %v2161, %v2705
      %v2707 = vpop.f32.mrb[0].mxu0
      %v2708 = vpop.f32.mrb[0].mxu0
      %v2709 = vadd.f32 %v2164, %v2708
      %v2710 = vpop.f32.mrb[0].mxu0
      %2711 = vmatprep.mubr.bf16.mxu0 0
      %2712 = vmatmul.mubr.bf16.gmra.mrb[0].mxu0 %v1708
      %v2713 = vpop.f32.mrb[0].mxu0
      %v2714 = vadd.f32 %v2169, %v2713
      %v2715 = vpop.f32.mrb[0].mxu0
      %v2716 = vpop.f32.mrb[0].mxu0
      %v2717 = vadd.f32 %v2172, %v2716
      %v2718 = vpop.f32.mrb[0].mxu0
      %2719 = vmatprep.mubr.bf16.mxu0 0
      %2720 = vmatmul.mubr.bf16.gmra.mrb[0].mxu0 %v1711
      %v2721 = vpop.f32.mrb[0].mxu0
      %v2722 = vadd.f32 %v2177, %v2721
      %v2723 = vpop.f32.mrb[0].mxu0
      %v2724 = vpop.f32.mrb[0].mxu0
      %v2725 = vadd.f32 %v2180, %v2724
      %v2726 = vpop.f32.mrb[0].mxu0
      %2727 = vmatprep.mubr.bf16.mxu0 0
      %2728 = vmatmul.mubr.bf16.gmra.mrb[0].mxu0 %v1714
      %v2729 = vpop.f32.mrb[0].mxu0
      %v2730 = vadd.f32 %v2185, %v2729
      %v2731 = vpop.f32.mrb[0].mxu0
      %v2732 = vpop.f32.mrb[0].mxu0
      %v2733 = vadd.f32 %v2188, %v2732
      %v2734 = vpop.f32.mrb[0].mxu0
      %2735 = vmatprep.mubr.bf16.mxu0 0
      %2736 = vmatmul.mubr.bf16.gmra.mrb[0].mxu0 %v1717
      %v2737 = vpop.f32.mrb[0].mxu0
      %v2738 = vadd.f32 %v2193, %v2737
      %v2739 = vpop.f32.mrb[0].mxu0
      %v2740 = vpop.f32.mrb[0].mxu0
      %v2741 = vadd.f32 %v2196, %v2740
      %v2742 = vpop.f32.mrb[0].mxu0
      %2743 = vmatprep.mubr.bf16.mxu0 0
      %2744 = vmatmul.mubr.bf16.gmra.mrb[0].mxu0 %v1720
      %v2745 = vpop.f32.mrb[0].mxu0
      %v2746 = vadd.f32 %v2201, %v2745
      %v2747 = vpop.f32.mrb[0].mxu0
      %v2748 = vpop.f32.mrb[0].mxu0
      %v2749 = vadd.f32 %v2204, %v2748
      %v2750 = vpop.f32.mrb[0].mxu0
      %2751 = vmatprep.mubr.bf16.mxu0 0
      %2752 = vmatmul.mubr.bf16.gmra.mrb[0].mxu0 %v1723
      %v2753 = vpop.f32.mrb[0].mxu0
      %v2754 = vadd.f32 %v2209, %v2753
      %v2755 = vpop.f32.mrb[0].mxu0
      %v2756 = vpop.f32.mrb[0].mxu0
      %v2757 = vadd.f32 %v2212, %v2756
      %v2758 = vpop.f32.mrb[0].mxu0
      %2759 = vmatprep.mubr.bf16.mxu0 0
      %2760 = vmatmul.mubr.bf16.gmra.mrb[0].mxu0 %v1726
      %v2761 = vpop.f32.mrb[0].mxu0
      %v2762 = vadd.f32 %v2217, %v2761
      %v2763 = vpop.f32.mrb[0].mxu0
      %v2764 = vpop.f32.mrb[0].mxu0
      %v2765 = vadd.f32 %v2220, %v2764
      %v2766 = vpop.f32.mrb[0].mxu0
      %2767 = vmatprep.mubr.bf16.mxu0 0
      %2768 = vmatmul.mubr.bf16.gmra.mrb[0].mxu0 %v1729
      %v2769 = vpop.f32.mrb[0].mxu0
      %v2770 = vadd.f32 %v2225, %v2769
      %v2771 = vpop.f32.mrb[0].mxu0
      %v2772 = vpop.f32.mrb[0].mxu0
      %v2773 = vadd.f32 %v2228, %v2772
      %v2774 = vpop.f32.mrb[0].mxu0
      %2775 = vmatprep.mubr.bf16.mxu0 0
      %2776 = vmatmul.mubr.bf16.gmra.mrb[0].mxu0 %v1732
      %v2777 = vpop.f32.mrb[0].mxu0
      %v2778 = vadd.f32 %v2233, %v2777
      %v2779 = vpop.f32.mrb[0].mxu0
      %v2780 = vpop.f32.mrb[0].mxu0
      %v2781 = vadd.f32 %v2236, %v2780
      %v2782 = vpop.f32.mrb[0].mxu0
      %2783 = vmatprep.mubr.bf16.mxu0 0
      %2784 = vmatmul.mubr.bf16.gmra.mrb[0].mxu0 %v1735
      %v2785 = vpop.f32.mrb[0].mxu0
      %v2786 = vadd.f32 %v2241, %v2785
      %v2787 = vpop.f32.mrb[0].mxu0
      %v2788 = vpop.f32.mrb[0].mxu0
      %v2789 = vadd.f32 %v2244, %v2788
      %v2790 = vpop.f32.mrb[0].mxu0
      %2791 = vmatprep.mubr.bf16.mxu0 0
      %2792 = vmatmul.mubr.bf16.gmra.mrb[0].mxu0 %v1738
      %v2793 = vpop.f32.mrb[0].mxu0
      %v2794 = vadd.f32 %v2249, %v2793
      %v2795 = vpop.f32.mrb[0].mxu0
      %v2796 = vpop.f32.mrb[0].mxu0
      %v2797 = vadd.f32 %v2252, %v2796
      %v2798 = vpop.f32.mrb[0].mxu0
      %2799 = vmatprep.mubr.bf16.mxu0 0
      %2800 = vmatmul.mubr.bf16.gmra.mrb[0].mxu0 %v1741
      %v2801 = vpop.f32.mrb[0].mxu0
      %v2802 = vadd.f32 %v2257, %v2801
      %v2803 = vpop.f32.mrb[0].mxu0
      %v2804 = vpop.f32.mrb[0].mxu0
      %v2805 = vadd.f32 %v2260, %v2804
      %v2806 = vpop.f32.mrb[0].mxu0
      %2807 = vmatprep.mubr.bf16.mxu0 0
      %2808 = vmatmul.mubr.bf16.gmra.mrb[0].mxu0 %v1744
      %v2809 = vpop.f32.mrb[0].mxu0
      %v2810 = vadd.f32 %v2265, %v2809
      %v2811 = vpop.f32.mrb[0].mxu0
      %v2812 = vpop.f32.mrb[0].mxu0
      %v2813 = vadd.f32 %v2268, %v2812
      %v2814 = vpop.f32.mrb[0].mxu0
      %2815 = vmatprep.mubr.bf16.mxu0 0
      %2816 = vmatmul.mubr.bf16.gmra.mrb[0].mxu0 %v1747
      %v2817 = vpop.f32.mrb[0].mxu0
      %v2818 = vadd.f32 %v2273, %v2817
      %v2819 = vpop.f32.mrb[0].mxu0
      %v2820 = vpop.f32.mrb[0].mxu0
      %v2821 = vadd.f32 %v2276, %v2820
      %v2822 = vpop.f32.mrb[0].mxu0
      %2823 = vmatprep.mubr.bf16.mxu0 0
      %2824 = vmatmul.mubr.bf16.gmra.mrb[0].mxu0 %v1750
      %v2825 = vpop.f32.mrb[0].mxu0
      %v2826 = vadd.f32 %v2281, %v2825
      %v2827 = vpop.f32.mrb[0].mxu0
      %v2828 = vpop.f32.mrb[0].mxu0
      %v2829 = vadd.f32 %v2284, %v2828
      %v2830 = vpop.f32.mrb[0].mxu0
      %2831 = vmatprep.mubr.bf16.mxu0 0
      %2832 = vmatmul.mubr.bf16.gmra.mrb[0].mxu0 %v1753
      %v2833 = vpop.f32.mrb[0].mxu0
      %v2834 = vadd.f32 %v2289, %v2833
      %v2835 = vpop.f32.mrb[0].mxu0
      %v2836 = vpop.f32.mrb[0].mxu0
      %v2837 = vadd.f32 %v2292, %v2836
      %v2838 = vpop.f32.mrb[0].mxu0
      %2839 = vmatprep.mubr.bf16.mxu0 0
      %2840 = vmatmul.mubr.bf16.gmra.mrb[0].mxu0 %v1756
      %v2841 = vpop.f32.mrb[0].mxu0
      %v2842 = vadd.f32 %v2297, %v2841
      %v2843 = vpop.f32.mrb[0].mxu0
      %v2844 = vpop.f32.mrb[0].mxu0
      %v2845 = vadd.f32 %v2300, %v2844
      %v2846 = vpop.f32.mrb[0].mxu0
      %2847 = vdwg.mxu0
      %v2848 = vld [vmem:[%s2] sm:$0x1]
      %v2850 = vlaneseq
      %v2851 = vshrl.u32 %v2850, 7
      %v2852 = vsub.s32 0, %v2851
      %v2853 = vrot.slane %v2848, %v2852
      %v2855 = vmul.f32 %v2338, %v2853
      %v2856 = vmul.f32 %v2341, %v2853
      %v2857 = vmul.f32 %v2346, %v2853
      %v2858 = vmul.f32 %v2349, %v2853
      %v2859 = vmul.f32 %v2354, %v2853
      %v2860 = vmul.f32 %v2357, %v2853
      %v2861 = vmul.f32 %v2362, %v2853
      %v2862 = vmul.f32 %v2365, %v2853
      %v2863 = vmul.f32 %v2370, %v2853
      %v2864 = vmul.f32 %v2373, %v2853
      %v2865 = vmul.f32 %v2378, %v2853
      %v2866 = vmul.f32 %v2381, %v2853
      %v2867 = vmul.f32 %v2386, %v2853
      %v2868 = vmul.f32 %v2389, %v2853
      %v2869 = vmul.f32 %v2394, %v2853
      %v2870 = vmul.f32 %v2397, %v2853
      %v2871 = vmul.f32 %v2402, %v2853
      %v2872 = vmul.f32 %v2405, %v2853
      %v2873 = vmul.f32 %v2410, %v2853
      %v2874 = vmul.f32 %v2413, %v2853
      %v2875 = vmul.f32 %v2418, %v2853
      %v2876 = vmul.f32 %v2421, %v2853
      %v2877 = vmul.f32 %v2426, %v2853
      %v2878 = vmul.f32 %v2429, %v2853
      %v2879 = vmul.f32 %v2434, %v2853
      %v2880 = vmul.f32 %v2437, %v2853
      %v2881 = vmul.f32 %v2442, %v2853
      %v2882 = vmul.f32 %v2445, %v2853
      %v2883 = vmul.f32 %v2450, %v2853
      %v2884 = vmul.f32 %v2453, %v2853
      %v2885 = vmul.f32 %v2458, %v2853
      %v2886 = vmul.f32 %v2461, %v2853
      %v2887 = vmul.f32 %v2466, %v2853
      %v2888 = vmul.f32 %v2469, %v2853
      %v2889 = vmul.f32 %v2474, %v2853
      %v2890 = vmul.f32 %v2477, %v2853
      %v2891 = vmul.f32 %v2482, %v2853
      %v2892 = vmul.f32 %v2485, %v2853
      %v2893 = vmul.f32 %v2490, %v2853
      %v2894 = vmul.f32 %v2493, %v2853
      %v2895 = vmul.f32 %v2498, %v2853
      %v2896 = vmul.f32 %v2501, %v2853
      %v2897 = vmul.f32 %v2506, %v2853
      %v2898 = vmul.f32 %v2509, %v2853
      %v2899 = vmul.f32 %v2514, %v2853
      %v2900 = vmul.f32 %v2517, %v2853
      %v2901 = vmul.f32 %v2522, %v2853
      %v2902 = vmul.f32 %v2525, %v2853
      %v2903 = vmul.f32 %v2530, %v2853
      %v2904 = vmul.f32 %v2533, %v2853
      %v2905 = vmul.f32 %v2538, %v2853
      %v2906 = vmul.f32 %v2541, %v2853
      %v2907 = vmul.f32 %v2546, %v2853
      %v2908 = vmul.f32 %v2549, %v2853
      %v2909 = vmul.f32 %v2554, %v2853
      %v2910 = vmul.f32 %v2557, %v2853
      %v2911 = vmul.f32 %v2562, %v2853
      %v2912 = vmul.f32 %v2565, %v2853
      %v2913 = vmul.f32 %v2570, %v2853
      %v2914 = vmul.f32 %v2573, %v2853
      %v2915 = vmul.f32 %v2578, %v2853
      %v2916 = vmul.f32 %v2581, %v2853
      %v2917 = vmul.f32 %v2586, %v2853
      %v2918 = vmul.f32 %v2589, %v2853
      %v2919 = vmul.f32 %v2594, %v2853
      %v2920 = vmul.f32 %v2597, %v2853
      %v2921 = vmul.f32 %v2602, %v2853
      %v2922 = vmul.f32 %v2605, %v2853
      %v2923 = vmul.f32 %v2610, %v2853
      %v2924 = vmul.f32 %v2613, %v2853
      %v2925 = vmul.f32 %v2618, %v2853
      %v2926 = vmul.f32 %v2621, %v2853
      %v2927 = vmul.f32 %v2626, %v2853
      %v2928 = vmul.f32 %v2629, %v2853
      %v2929 = vmul.f32 %v2634, %v2853
      %v2930 = vmul.f32 %v2637, %v2853
      %v2931 = vmul.f32 %v2642, %v2853
      %v2932 = vmul.f32 %v2645, %v2853
      %v2933 = vmul.f32 %v2650, %v2853
      %v2934 = vmul.f32 %v2653, %v2853
      %v2935 = vmul.f32 %v2658, %v2853
      %v2936 = vmul.f32 %v2661, %v2853
      %v2937 = vmul.f32 %v2666, %v2853
      %v2938 = vmul.f32 %v2669, %v2853
      %v2939 = vmul.f32 %v2674, %v2853
      %v2940 = vmul.f32 %v2677, %v2853
      %v2941 = vmul.f32 %v2682, %v2853
      %v2942 = vmul.f32 %v2685, %v2853
      %v2943 = vmul.f32 %v2690, %v2853
      %v2944 = vmul.f32 %v2693, %v2853
      %v2945 = vmul.f32 %v2698, %v2853
      %v2946 = vmul.f32 %v2701, %v2853
      %v2947 = vmul.f32 %v2706, %v2853
      %v2948 = vmul.f32 %v2709, %v2853
      %v2949 = vmul.f32 %v2714, %v2853
      %v2950 = vmul.f32 %v2717, %v2853
      %v2951 = vmul.f32 %v2722, %v2853
      %v2952 = vmul.f32 %v2725, %v2853
      %v2953 = vmul.f32 %v2730, %v2853
      %v2954 = vmul.f32 %v2733, %v2853
      %v2955 = vmul.f32 %v2738, %v2853
      %v2956 = vmul.f32 %v2741, %v2853
      %v2957 = vmul.f32 %v2746, %v2853
      %v2958 = vmul.f32 %v2749, %v2853
      %v2959 = vmul.f32 %v2754, %v2853
      %v2960 = vmul.f32 %v2757, %v2853
      %v2961 = vmul.f32 %v2762, %v2853
      %v2962 = vmul.f32 %v2765, %v2853
      %v2963 = vmul.f32 %v2770, %v2853
      %v2964 = vmul.f32 %v2773, %v2853
      %v2965 = vmul.f32 %v2778, %v2853
      %v2966 = vmul.f32 %v2781, %v2853
      %v2967 = vmul.f32 %v2786, %v2853
      %v2968 = vmul.f32 %v2789, %v2853
      %v2969 = vmul.f32 %v2794, %v2853
      %v2970 = vmul.f32 %v2797, %v2853
      %v2971 = vmul.f32 %v2802, %v2853
      %v2972 = vmul.f32 %v2805, %v2853
      %v2973 = vmul.f32 %v2810, %v2853
      %v2974 = vmul.f32 %v2813, %v2853
      %v2975 = vmul.f32 %v2818, %v2853
      %v2976 = vmul.f32 %v2821, %v2853
      %v2977 = vmul.f32 %v2826, %v2853
      %v2978 = vmul.f32 %v2829, %v2853
      %v2979 = vmul.f32 %v2834, %v2853
      %v2980 = vmul.f32 %v2837, %v2853
      %v2981 = vmul.f32 %v2842, %v2853
      %v2982 = vmul.f32 %v2845, %v2853
      %v2983 = vld [vmem:[%s3] sm:$0x1]
      %v2985 = vlaneseq
      %v2986 = vshrl.u32 %v2985, 7
      %v2987 = vsub.s32 0, %v2986
      %v2988 = vrot.slane %v2983, %v2987
      %v2990 = vadd.f32 %v2855, %v2988
      %v2991 = vadd.f32 %v2856, %v2988
      %v2992 = vadd.f32 %v2857, %v2988
      %v2993 = vadd.f32 %v2858, %v2988
      %v2994 = vadd.f32 %v2859, %v2988
      %v2995 = vadd.f32 %v2860, %v2988
      %v2996 = vadd.f32 %v2861, %v2988
      %v2997 = vadd.f32 %v2862, %v2988
      %v2998 = vadd.f32 %v2863, %v2988
      %v2999 = vadd.f32 %v2864, %v2988
      %v3000 = vadd.f32 %v2865, %v2988
      %v3001 = vadd.f32 %v2866, %v2988
      %v3002 = vadd.f32 %v2867, %v2988
      %v3003 = vadd.f32 %v2868, %v2988
      %v3004 = vadd.f32 %v2869, %v2988
      %v3005 = vadd.f32 %v2870, %v2988
      %v3006 = vadd.f32 %v2871, %v2988
      %v3007 = vadd.f32 %v2872, %v2988
      %v3008 = vadd.f32 %v2873, %v2988
      %v3009 = vadd.f32 %v2874, %v2988
      %v3010 = vadd.f32 %v2875, %v2988
      %v3011 = vadd.f32 %v2876, %v2988
      %v3012 = vadd.f32 %v2877, %v2988
      %v3013 = vadd.f32 %v2878, %v2988
      %v3014 = vadd.f32 %v2879, %v2988
      %v3015 = vadd.f32 %v2880, %v2988
      %v3016 = vadd.f32 %v2881, %v2988
      %v3017 = vadd.f32 %v2882, %v2988
      %v3018 = vadd.f32 %v2883, %v2988
      %v3019 = vadd.f32 %v2884, %v2988
      %v3020 = vadd.f32 %v2885, %v2988
      %v3021 = vadd.f32 %v2886, %v2988
      %v3022 = vadd.f32 %v2887, %v2988
      %v3023 = vadd.f32 %v2888, %v2988
      %v3024 = vadd.f32 %v2889, %v2988
      %v3025 = vadd.f32 %v2890, %v2988
      %v3026 = vadd.f32 %v2891, %v2988
      %v3027 = vadd.f32 %v2892, %v2988
      %v3028 = vadd.f32 %v2893, %v2988
      %v3029 = vadd.f32 %v2894, %v2988
      %v3030 = vadd.f32 %v2895, %v2988
      %v3031 = vadd.f32 %v2896, %v2988
      %v3032 = vadd.f32 %v2897, %v2988
      %v3033 = vadd.f32 %v2898, %v2988
      %v3034 = vadd.f32 %v2899, %v2988
      %v3035 = vadd.f32 %v2900, %v2988
      %v3036 = vadd.f32 %v2901, %v2988
      %v3037 = vadd.f32 %v2902, %v2988
      %v3038 = vadd.f32 %v2903, %v2988
      %v3039 = vadd.f32 %v2904, %v2988
      %v3040 = vadd.f32 %v2905, %v2988
      %v3041 = vadd.f32 %v2906, %v2988
      %v3042 = vadd.f32 %v2907, %v2988
      %v3043 = vadd.f32 %v2908, %v2988
      %v3044 = vadd.f32 %v2909, %v2988
      %v3045 = vadd.f32 %v2910, %v2988
      %v3046 = vadd.f32 %v2911, %v2988
      %v3047 = vadd.f32 %v2912, %v2988
      %v3048 = vadd.f32 %v2913, %v2988
      %v3049 = vadd.f32 %v2914, %v2988
      %v3050 = vadd.f32 %v2915, %v2988
      %v3051 = vadd.f32 %v2916, %v2988
      %v3052 = vadd.f32 %v2917, %v2988
      %v3053 = vadd.f32 %v2918, %v2988
      %v3054 = vadd.f32 %v2919, %v2988
      %v3055 = vadd.f32 %v2920, %v2988
      %v3056 = vadd.f32 %v2921, %v2988
      %v3057 = vadd.f32 %v2922, %v2988
      %v3058 = vadd.f32 %v2923, %v2988
      %v3059 = vadd.f32 %v2924, %v2988
      %v3060 = vadd.f32 %v2925, %v2988
      %v3061 = vadd.f32 %v2926, %v2988
      %v3062 = vadd.f32 %v2927, %v2988
      %v3063 = vadd.f32 %v2928, %v2988
      %v3064 = vadd.f32 %v2929, %v2988
      %v3065 = vadd.f32 %v2930, %v2988
      %v3066 = vadd.f32 %v2931, %v2988
      %v3067 = vadd.f32 %v2932, %v2988
      %v3068 = vadd.f32 %v2933, %v2988
      %v3069 = vadd.f32 %v2934, %v2988
      %v3070 = vadd.f32 %v2935, %v2988
      %v3071 = vadd.f32 %v2936, %v2988
      %v3072 = vadd.f32 %v2937, %v2988
      %v3073 = vadd.f32 %v2938, %v2988
      %v3074 = vadd.f32 %v2939, %v2988
      %v3075 = vadd.f32 %v2940, %v2988
      %v3076 = vadd.f32 %v2941, %v2988
      %v3077 = vadd.f32 %v2942, %v2988
      %v3078 = vadd.f32 %v2943, %v2988
      %v3079 = vadd.f32 %v2944, %v2988
      %v3080 = vadd.f32 %v2945, %v2988
      %v3081 = vadd.f32 %v2946, %v2988
      %v3082 = vadd.f32 %v2947, %v2988
      %v3083 = vadd.f32 %v2948, %v2988
      %v3084 = vadd.f32 %v2949, %v2988
      %v3085 = vadd.f32 %v2950, %v2988
      %v3086 = vadd.f32 %v2951, %v2988
      %v3087 = vadd.f32 %v2952, %v2988
      %v3088 = vadd.f32 %v2953, %v2988
      %v3089 = vadd.f32 %v2954, %v2988
      %v3090 = vadd.f32 %v2955, %v2988
      %v3091 = vadd.f32 %v2956, %v2988
      %v3092 = vadd.f32 %v2957, %v2988
      %v3093 = vadd.f32 %v2958, %v2988
      %v3094 = vadd.f32 %v2959, %v2988
      %v3095 = vadd.f32 %v2960, %v2988
      %v3096 = vadd.f32 %v2961, %v2988
      %v3097 = vadd.f32 %v2962, %v2988
      %v3098 = vadd.f32 %v2963, %v2988
      %v3099 = vadd.f32 %v2964, %v2988
      %v3100 = vadd.f32 %v2965, %v2988
      %v3101 = vadd.f32 %v2966, %v2988
      %v3102 = vadd.f32 %v2967, %v2988
      %v3103 = vadd.f32 %v2968, %v2988
      %v3104 = vadd.f32 %v2969, %v2988
      %v3105 = vadd.f32 %v2970, %v2988
      %v3106 = vadd.f32 %v2971, %v2988
      %v3107 = vadd.f32 %v2972, %v2988
      %v3108 = vadd.f32 %v2973, %v2988
      %v3109 = vadd.f32 %v2974, %v2988
      %v3110 = vadd.f32 %v2975, %v2988
      %v3111 = vadd.f32 %v2976, %v2988
      %v3112 = vadd.f32 %v2977, %v2988
      %v3113 = vadd.f32 %v2978, %v2988
      %v3114 = vadd.f32 %v2979, %v2988
      %v3115 = vadd.f32 %v2980, %v2988
      %v3116 = vadd.f32 %v2981, %v2988
      %v3117 = vadd.f32 %v2982, %v2988
      %v3118 = vmax.f32 %v2990, 0.0
      %v3119 = vmax.f32 %v2991, 0.0
      %v3120 = vmax.f32 %v2992, 0.0
      %v3121 = vmax.f32 %v2993, 0.0
      %v3122 = vmax.f32 %v2994, 0.0
      %v3123 = vmax.f32 %v2995, 0.0
      %v3124 = vmax.f32 %v2996, 0.0
      %v3125 = vmax.f32 %v2997, 0.0
      %v3126 = vmax.f32 %v2998, 0.0
      %v3127 = vmax.f32 %v2999, 0.0
      %v3128 = vmax.f32 %v3000, 0.0
      %v3129 = vmax.f32 %v3001, 0.0
      %v3130 = vmax.f32 %v3002, 0.0
      %v3131 = vmax.f32 %v3003, 0.0
      %v3132 = vmax.f32 %v3004, 0.0
      %v3133 = vmax.f32 %v3005, 0.0
      %v3134 = vmax.f32 %v3006, 0.0
      %v3135 = vmax.f32 %v3007, 0.0
      %v3136 = vmax.f32 %v3008, 0.0
      %v3137 = vmax.f32 %v3009, 0.0
      %v3138 = vmax.f32 %v3010, 0.0
      %v3139 = vmax.f32 %v3011, 0.0
      %v3140 = vmax.f32 %v3012, 0.0
      %v3141 = vmax.f32 %v3013, 0.0
      %v3142 = vmax.f32 %v3014, 0.0
      %v3143 = vmax.f32 %v3015, 0.0
      %v3144 = vmax.f32 %v3016, 0.0
      %v3145 = vmax.f32 %v3017, 0.0
      %v3146 = vmax.f32 %v3018, 0.0
      %v3147 = vmax.f32 %v3019, 0.0
      %v3148 = vmax.f32 %v3020, 0.0
      %v3149 = vmax.f32 %v3021, 0.0
      %v3150 = vmax.f32 %v3022, 0.0
      %v3151 = vmax.f32 %v3023, 0.0
      %v3152 = vmax.f32 %v3024, 0.0
      %v3153 = vmax.f32 %v3025, 0.0
      %v3154 = vmax.f32 %v3026, 0.0
      %v3155 = vmax.f32 %v3027, 0.0
      %v3156 = vmax.f32 %v3028, 0.0
      %v3157 = vmax.f32 %v3029, 0.0
      %v3158 = vmax.f32 %v3030, 0.0
      %v3159 = vmax.f32 %v3031, 0.0
      %v3160 = vmax.f32 %v3032, 0.0
      %v3161 = vmax.f32 %v3033, 0.0
      %v3162 = vmax.f32 %v3034, 0.0
      %v3163 = vmax.f32 %v3035, 0.0
      %v3164 = vmax.f32 %v3036, 0.0
      %v3165 = vmax.f32 %v3037, 0.0
      %v3166 = vmax.f32 %v3038, 0.0
      %v3167 = vmax.f32 %v3039, 0.0
      %v3168 = vmax.f32 %v3040, 0.0
      %v3169 = vmax.f32 %v3041, 0.0
      %v3170 = vmax.f32 %v3042, 0.0
      %v3171 = vmax.f32 %v3043, 0.0
      %v3172 = vmax.f32 %v3044, 0.0
      %v3173 = vmax.f32 %v3045, 0.0
      %v3174 = vmax.f32 %v3046, 0.0
      %v3175 = vmax.f32 %v3047, 0.0
      %v3176 = vmax.f32 %v3048, 0.0
      %v3177 = vmax.f32 %v3049, 0.0
      %v3178 = vmax.f32 %v3050, 0.0
      %v3179 = vmax.f32 %v3051, 0.0
      %v3180 = vmax.f32 %v3052, 0.0
      %v3181 = vmax.f32 %v3053, 0.0
      %v3182 = vmax.f32 %v3054, 0.0
      %v3183 = vmax.f32 %v3055, 0.0
      %v3184 = vmax.f32 %v3056, 0.0
      %v3185 = vmax.f32 %v3057, 0.0
      %v3186 = vmax.f32 %v3058, 0.0
      %v3187 = vmax.f32 %v3059, 0.0
      %v3188 = vmax.f32 %v3060, 0.0
      %v3189 = vmax.f32 %v3061, 0.0
      %v3190 = vmax.f32 %v3062, 0.0
      %v3191 = vmax.f32 %v3063, 0.0
      %v3192 = vmax.f32 %v3064, 0.0
      %v3193 = vmax.f32 %v3065, 0.0
      %v3194 = vmax.f32 %v3066, 0.0
      %v3195 = vmax.f32 %v3067, 0.0
      %v3196 = vmax.f32 %v3068, 0.0
      %v3197 = vmax.f32 %v3069, 0.0
      %v3198 = vmax.f32 %v3070, 0.0
      %v3199 = vmax.f32 %v3071, 0.0
      %v3200 = vmax.f32 %v3072, 0.0
      %v3201 = vmax.f32 %v3073, 0.0
      %v3202 = vmax.f32 %v3074, 0.0
      %v3203 = vmax.f32 %v3075, 0.0
      %v3204 = vmax.f32 %v3076, 0.0
      %v3205 = vmax.f32 %v3077, 0.0
      %v3206 = vmax.f32 %v3078, 0.0
      %v3207 = vmax.f32 %v3079, 0.0
      %v3208 = vmax.f32 %v3080, 0.0
      %v3209 = vmax.f32 %v3081, 0.0
      %v3210 = vmax.f32 %v3082, 0.0
      %v3211 = vmax.f32 %v3083, 0.0
      %v3212 = vmax.f32 %v3084, 0.0
      %v3213 = vmax.f32 %v3085, 0.0
      %v3214 = vmax.f32 %v3086, 0.0
      %v3215 = vmax.f32 %v3087, 0.0
      %v3216 = vmax.f32 %v3088, 0.0
      %v3217 = vmax.f32 %v3089, 0.0
      %v3218 = vmax.f32 %v3090, 0.0
      %v3219 = vmax.f32 %v3091, 0.0
      %v3220 = vmax.f32 %v3092, 0.0
      %v3221 = vmax.f32 %v3093, 0.0
      %v3222 = vmax.f32 %v3094, 0.0
      %v3223 = vmax.f32 %v3095, 0.0
      %v3224 = vmax.f32 %v3096, 0.0
      %v3225 = vmax.f32 %v3097, 0.0
      %v3226 = vmax.f32 %v3098, 0.0
      %v3227 = vmax.f32 %v3099, 0.0
      %v3228 = vmax.f32 %v3100, 0.0
      %v3229 = vmax.f32 %v3101, 0.0
      %v3230 = vmax.f32 %v3102, 0.0
      %v3231 = vmax.f32 %v3103, 0.0
      %v3232 = vmax.f32 %v3104, 0.0
      %v3233 = vmax.f32 %v3105, 0.0
      %v3234 = vmax.f32 %v3106, 0.0
      %v3235 = vmax.f32 %v3107, 0.0
      %v3236 = vmax.f32 %v3108, 0.0
      %v3237 = vmax.f32 %v3109, 0.0
      %v3238 = vmax.f32 %v3110, 0.0
      %v3239 = vmax.f32 %v3111, 0.0
      %v3240 = vmax.f32 %v3112, 0.0
      %v3241 = vmax.f32 %v3113, 0.0
      %v3242 = vmax.f32 %v3114, 0.0
      %v3243 = vmax.f32 %v3115, 0.0
      %v3244 = vmax.f32 %v3116, 0.0
      %v3245 = vmax.f32 %v3117, 0.0
      %v3246 = vpack.c.bf16 %v3119, %v3118
      %v3247 = vpack.c.bf16 %v3121, %v3120
      %v3248 = vpack.c.bf16 %v3123, %v3122
      %v3249 = vpack.c.bf16 %v3125, %v3124
      %v3250 = vpack.c.bf16 %v3127, %v3126
      %v3251 = vpack.c.bf16 %v3129, %v3128
      %v3252 = vpack.c.bf16 %v3131, %v3130
      %v3253 = vpack.c.bf16 %v3133, %v3132
      %v3254 = vpack.c.bf16 %v3135, %v3134
      %v3255 = vpack.c.bf16 %v3137, %v3136
      %v3256 = vpack.c.bf16 %v3139, %v3138
      %v3257 = vpack.c.bf16 %v3141, %v3140
      %v3258 = vpack.c.bf16 %v3143, %v3142
      %v3259 = vpack.c.bf16 %v3145, %v3144
      %v3260 = vpack.c.bf16 %v3147, %v3146
      %v3261 = vpack.c.bf16 %v3149, %v3148
      %v3262 = vpack.c.bf16 %v3151, %v3150
      %v3263 = vpack.c.bf16 %v3153, %v3152
      %v3264 = vpack.c.bf16 %v3155, %v3154
      %v3265 = vpack.c.bf16 %v3157, %v3156
      %v3266 = vpack.c.bf16 %v3159, %v3158
      %v3267 = vpack.c.bf16 %v3161, %v3160
      %v3268 = vpack.c.bf16 %v3163, %v3162
      %v3269 = vpack.c.bf16 %v3165, %v3164
      %v3270 = vpack.c.bf16 %v3167, %v3166
      %v3271 = vpack.c.bf16 %v3169, %v3168
      %v3272 = vpack.c.bf16 %v3171, %v3170
      %v3273 = vpack.c.bf16 %v3173, %v3172
      %v3274 = vpack.c.bf16 %v3175, %v3174
      %v3275 = vpack.c.bf16 %v3177, %v3176
      %v3276 = vpack.c.bf16 %v3179, %v3178
      %v3277 = vpack.c.bf16 %v3181, %v3180
      %v3278 = vpack.c.bf16 %v3183, %v3182
      %v3279 = vpack.c.bf16 %v3185, %v3184
      %v3280 = vpack.c.bf16 %v3187, %v3186
      %v3281 = vpack.c.bf16 %v3189, %v3188
      %v3282 = vpack.c.bf16 %v3191, %v3190
      %v3283 = vpack.c.bf16 %v3193, %v3192
      %v3284 = vpack.c.bf16 %v3195, %v3194
      %v3285 = vpack.c.bf16 %v3197, %v3196
      %v3286 = vpack.c.bf16 %v3199, %v3198
      %v3287 = vpack.c.bf16 %v3201, %v3200
      %v3288 = vpack.c.bf16 %v3203, %v3202
      %v3289 = vpack.c.bf16 %v3205, %v3204
      %v3290 = vpack.c.bf16 %v3207, %v3206
      %v3291 = vpack.c.bf16 %v3209, %v3208
      %v3292 = vpack.c.bf16 %v3211, %v3210
      %v3293 = vpack.c.bf16 %v3213, %v3212
      %v3294 = vpack.c.bf16 %v3215, %v3214
      %v3295 = vpack.c.bf16 %v3217, %v3216
      %v3296 = vpack.c.bf16 %v3219, %v3218
      %v3297 = vpack.c.bf16 %v3221, %v3220
      %v3298 = vpack.c.bf16 %v3223, %v3222
      %v3299 = vpack.c.bf16 %v3225, %v3224
      %v3300 = vpack.c.bf16 %v3227, %v3226
      %v3301 = vpack.c.bf16 %v3229, %v3228
      %v3302 = vpack.c.bf16 %v3231, %v3230
      %v3303 = vpack.c.bf16 %v3233, %v3232
      %v3304 = vpack.c.bf16 %v3235, %v3234
      %v3305 = vpack.c.bf16 %v3237, %v3236
      %v3306 = vpack.c.bf16 %v3239, %v3238
      %v3307 = vpack.c.bf16 %v3241, %v3240
      %v3308 = vpack.c.bf16 %v3243, %v3242
      %v3309 = vpack.c.bf16 %v3245, %v3244
      %v3374 = vunpack.c.l.b16 %v3246
      %v3375 = vunpack.c.h.b16 %v3246
      %v3376 = vunpack.c.l.b16 %v3247
      %v3377 = vunpack.c.h.b16 %v3247
      %v3378 = vunpack.c.l.b16 %v3248
      %v3379 = vunpack.c.h.b16 %v3248
      %v3380 = vunpack.c.l.b16 %v3249
      %v3381 = vunpack.c.h.b16 %v3249
      %v3382 = vunpack.c.l.b16 %v3250
      %v3383 = vunpack.c.h.b16 %v3250
      %v3384 = vunpack.c.l.b16 %v3251
      %v3385 = vunpack.c.h.b16 %v3251
      %v3386 = vunpack.c.l.b16 %v3252
      %v3387 = vunpack.c.h.b16 %v3252
      %v3388 = vunpack.c.l.b16 %v3253
      %v3389 = vunpack.c.h.b16 %v3253
      %v3390 = vunpack.c.l.b16 %v3254
      %v3391 = vunpack.c.h.b16 %v3254
      %v3392 = vunpack.c.l.b16 %v3255
      %v3393 = vunpack.c.h.b16 %v3255
      %v3394 = vunpack.c.l.b16 %v3256
      %v3395 = vunpack.c.h.b16 %v3256
      %v3396 = vunpack.c.l.b16 %v3257
      %v3397 = vunpack.c.h.b16 %v3257
      %v3398 = vunpack.c.l.b16 %v3258
      %v3399 = vunpack.c.h.b16 %v3258
      %v3400 = vunpack.c.l.b16 %v3259
      %v3401 = vunpack.c.h.b16 %v3259
      %v3402 = vunpack.c.l.b16 %v3260
      %v3403 = vunpack.c.h.b16 %v3260
      %v3404 = vunpack.c.l.b16 %v3261
      %v3405 = vunpack.c.h.b16 %v3261
      %v3406 = vunpack.c.l.b16 %v3262
      %v3407 = vunpack.c.h.b16 %v3262
      %v3408 = vunpack.c.l.b16 %v3263
      %v3409 = vunpack.c.h.b16 %v3263
      %v3410 = vunpack.c.l.b16 %v3264
      %v3411 = vunpack.c.h.b16 %v3264
      %v3412 = vunpack.c.l.b16 %v3265
      %v3413 = vunpack.c.h.b16 %v3265
      %v3414 = vunpack.c.l.b16 %v3266
      %v3415 = vunpack.c.h.b16 %v3266
      %v3416 = vunpack.c.l.b16 %v3267
      %v3417 = vunpack.c.h.b16 %v3267
      %v3418 = vunpack.c.l.b16 %v3268
      %v3419 = vunpack.c.h.b16 %v3268
      %v3420 = vunpack.c.l.b16 %v3269
      %v3421 = vunpack.c.h.b16 %v3269
      %v3422 = vunpack.c.l.b16 %v3270
      %v3423 = vunpack.c.h.b16 %v3270
      %v3424 = vunpack.c.l.b16 %v3271
      %v3425 = vunpack.c.h.b16 %v3271
      %v3426 = vunpack.c.l.b16 %v3272
      %v3427 = vunpack.c.h.b16 %v3272
      %v3428 = vunpack.c.l.b16 %v3273
      %v3429 = vunpack.c.h.b16 %v3273
      %v3430 = vunpack.c.l.b16 %v3274
      %v3431 = vunpack.c.h.b16 %v3274
      %v3432 = vunpack.c.l.b16 %v3275
      %v3433 = vunpack.c.h.b16 %v3275
      %v3434 = vunpack.c.l.b16 %v3276
      %v3435 = vunpack.c.h.b16 %v3276
      %v3436 = vunpack.c.l.b16 %v3277
      %v3437 = vunpack.c.h.b16 %v3277
      %v3438 = vunpack.c.l.b16 %v3278
      %v3439 = vunpack.c.h.b16 %v3278
      %v3440 = vunpack.c.l.b16 %v3279
      %v3441 = vunpack.c.h.b16 %v3279
      %v3442 = vunpack.c.l.b16 %v3280
      %v3443 = vunpack.c.h.b16 %v3280
      %v3444 = vunpack.c.l.b16 %v3281
      %v3445 = vunpack.c.h.b16 %v3281
      %v3446 = vunpack.c.l.b16 %v3282
      %v3447 = vunpack.c.h.b16 %v3282
      %v3448 = vunpack.c.l.b16 %v3283
      %v3449 = vunpack.c.h.b16 %v3283
      %v3450 = vunpack.c.l.b16 %v3284
      %v3451 = vunpack.c.h.b16 %v3284
      %v3452 = vunpack.c.l.b16 %v3285
      %v3453 = vunpack.c.h.b16 %v3285
      %v3454 = vunpack.c.l.b16 %v3286
      %v3455 = vunpack.c.h.b16 %v3286
      %v3456 = vunpack.c.l.b16 %v3287
      %v3457 = vunpack.c.h.b16 %v3287
      %v3458 = vunpack.c.l.b16 %v3288
      %v3459 = vunpack.c.h.b16 %v3288
      %v3460 = vunpack.c.l.b16 %v3289
      %v3461 = vunpack.c.h.b16 %v3289
      %v3462 = vunpack.c.l.b16 %v3290
      %v3463 = vunpack.c.h.b16 %v3290
      %v3464 = vunpack.c.l.b16 %v3291
      %v3465 = vunpack.c.h.b16 %v3291
      %v3466 = vunpack.c.l.b16 %v3292
      %v3467 = vunpack.c.h.b16 %v3292
      %v3468 = vunpack.c.l.b16 %v3293
      %v3469 = vunpack.c.h.b16 %v3293
      %v3470 = vunpack.c.l.b16 %v3294
      %v3471 = vunpack.c.h.b16 %v3294
      %v3472 = vunpack.c.l.b16 %v3295
      %v3473 = vunpack.c.h.b16 %v3295
      %v3474 = vunpack.c.l.b16 %v3296
      %v3475 = vunpack.c.h.b16 %v3296
      %v3476 = vunpack.c.l.b16 %v3297
      %v3477 = vunpack.c.h.b16 %v3297
      %v3478 = vunpack.c.l.b16 %v3298
      %v3479 = vunpack.c.h.b16 %v3298
      %v3480 = vunpack.c.l.b16 %v3299
      %v3481 = vunpack.c.h.b16 %v3299
      %v3482 = vunpack.c.l.b16 %v3300
      %v3483 = vunpack.c.h.b16 %v3300
      %v3484 = vunpack.c.l.b16 %v3301
      %v3485 = vunpack.c.h.b16 %v3301
      %v3486 = vunpack.c.l.b16 %v3302
      %v3487 = vunpack.c.h.b16 %v3302
      %v3488 = vunpack.c.l.b16 %v3303
      %v3489 = vunpack.c.h.b16 %v3303
      %v3490 = vunpack.c.l.b16 %v3304
      %v3491 = vunpack.c.h.b16 %v3304
      %v3492 = vunpack.c.l.b16 %v3305
      %v3493 = vunpack.c.h.b16 %v3305
      %v3494 = vunpack.c.l.b16 %v3306
      %v3495 = vunpack.c.h.b16 %v3306
      %v3496 = vunpack.c.l.b16 %v3307
      %v3497 = vunpack.c.h.b16 %v3307
      %v3498 = vunpack.c.l.b16 %v3308
      %v3499 = vunpack.c.h.b16 %v3308
      %v3500 = vunpack.c.l.b16 %v3309
      %v3501 = vunpack.c.h.b16 %v3309
      %v3502 = vpack.c.b16 %v3374, %v3374
      %v3503 = vpack.c.b16 %v3375, %v3375
      %v3504 = vpack.c.b16 %v3376, %v3376
      %v3505 = vpack.c.b16 %v3377, %v3377
      %v3506 = vpack.c.b16 %v3378, %v3378
      %v3507 = vpack.c.b16 %v3379, %v3379
      %v3508 = vpack.c.b16 %v3380, %v3380
      %v3509 = vpack.c.b16 %v3381, %v3381
      %v3510 = vpack.c.b16 %v3382, %v3382
      %v3511 = vpack.c.b16 %v3383, %v3383
      %v3512 = vpack.c.b16 %v3384, %v3384
      %v3513 = vpack.c.b16 %v3385, %v3385
      %v3514 = vpack.c.b16 %v3386, %v3386
      %v3515 = vpack.c.b16 %v3387, %v3387
      %v3516 = vpack.c.b16 %v3388, %v3388
      %v3517 = vpack.c.b16 %v3389, %v3389
      %v3518 = vpack.c.b16 %v3390, %v3390
      %v3519 = vpack.c.b16 %v3391, %v3391
      %v3520 = vpack.c.b16 %v3392, %v3392
      %v3521 = vpack.c.b16 %v3393, %v3393
      %v3522 = vpack.c.b16 %v3394, %v3394
      %v3523 = vpack.c.b16 %v3395, %v3395
      %v3524 = vpack.c.b16 %v3396, %v3396
      %v3525 = vpack.c.b16 %v3397, %v3397
      %v3526 = vpack.c.b16 %v3398, %v3398
      %v3527 = vpack.c.b16 %v3399, %v3399
      %v3528 = vpack.c.b16 %v3400, %v3400
      %v3529 = vpack.c.b16 %v3401, %v3401
      %v3530 = vpack.c.b16 %v3402, %v3402
      %v3531 = vpack.c.b16 %v3403, %v3403
      %v3532 = vpack.c.b16 %v3404, %v3404
      %v3533 = vpack.c.b16 %v3405, %v3405
      %v3534 = vpack.c.b16 %v3406, %v3406
      %v3535 = vpack.c.b16 %v3407, %v3407
      %v3536 = vpack.c.b16 %v3408, %v3408
      %v3537 = vpack.c.b16 %v3409, %v3409
      %v3538 = vpack.c.b16 %v3410, %v3410
      %v3539 = vpack.c.b16 %v3411, %v3411
      %v3540 = vpack.c.b16 %v3412, %v3412
      %v3541 = vpack.c.b16 %v3413, %v3413
      %v3542 = vpack.c.b16 %v3414, %v3414
      %v3543 = vpack.c.b16 %v3415, %v3415
      %v3544 = vpack.c.b16 %v3416, %v3416
      %v3545 = vpack.c.b16 %v3417, %v3417
      %v3546 = vpack.c.b16 %v3418, %v3418
      %v3547 = vpack.c.b16 %v3419, %v3419
      %v3548 = vpack.c.b16 %v3420, %v3420
      %v3549 = vpack.c.b16 %v3421, %v3421
      %v3550 = vpack.c.b16 %v3422, %v3422
      %v3551 = vpack.c.b16 %v3423, %v3423
      %v3552 = vpack.c.b16 %v3424, %v3424
      %v3553 = vpack.c.b16 %v3425, %v3425
      %v3554 = vpack.c.b16 %v3426, %v3426
      %v3555 = vpack.c.b16 %v3427, %v3427
      %v3556 = vpack.c.b16 %v3428, %v3428
      %v3557 = vpack.c.b16 %v3429, %v3429
      %v3558 = vpack.c.b16 %v3430, %v3430
      %v3559 = vpack.c.b16 %v3431, %v3431
      %v3560 = vpack.c.b16 %v3432, %v3432
      %v3561 = vpack.c.b16 %v3433, %v3433
      %v3562 = vpack.c.b16 %v3434, %v3434
      %v3563 = vpack.c.b16 %v3435, %v3435
      %v3564 = vpack.c.b16 %v3436, %v3436
      %v3565 = vpack.c.b16 %v3437, %v3437
      %v3566 = vpack.c.b16 %v3438, %v3438
      %v3567 = vpack.c.b16 %v3439, %v3439
      %v3568 = vpack.c.b16 %v3440, %v3440
      %v3569 = vpack.c.b16 %v3441, %v3441
      %v3570 = vpack.c.b16 %v3442, %v3442
      %v3571 = vpack.c.b16 %v3443, %v3443
      %v3572 = vpack.c.b16 %v3444, %v3444
      %v3573 = vpack.c.b16 %v3445, %v3445
      %v3574 = vpack.c.b16 %v3446, %v3446
      %v3575 = vpack.c.b16 %v3447, %v3447
      %v3576 = vpack.c.b16 %v3448, %v3448
      %v3577 = vpack.c.b16 %v3449, %v3449
      %v3578 = vpack.c.b16 %v3450, %v3450
      %v3579 = vpack.c.b16 %v3451, %v3451
      %v3580 = vpack.c.b16 %v3452, %v3452
      %v3581 = vpack.c.b16 %v3453, %v3453
      %v3582 = vpack.c.b16 %v3454, %v3454
      %v3583 = vpack.c.b16 %v3455, %v3455
      %v3584 = vpack.c.b16 %v3456, %v3456
      %v3585 = vpack.c.b16 %v3457, %v3457
      %v3586 = vpack.c.b16 %v3458, %v3458
      %v3587 = vpack.c.b16 %v3459, %v3459
      %v3588 = vpack.c.b16 %v3460, %v3460
      %v3589 = vpack.c.b16 %v3461, %v3461
      %v3590 = vpack.c.b16 %v3462, %v3462
      %v3591 = vpack.c.b16 %v3463, %v3463
      %v3592 = vpack.c.b16 %v3464, %v3464
      %v3593 = vpack.c.b16 %v3465, %v3465
      %v3594 = vpack.c.b16 %v3466, %v3466
      %v3595 = vpack.c.b16 %v3467, %v3467
      %v3596 = vpack.c.b16 %v3468, %v3468
      %v3597 = vpack.c.b16 %v3469, %v3469
      %v3598 = vpack.c.b16 %v3470, %v3470
      %v3599 = vpack.c.b16 %v3471, %v3471
      %v3600 = vpack.c.b16 %v3472, %v3472
      %v3601 = vpack.c.b16 %v3473, %v3473
      %v3602 = vpack.c.b16 %v3474, %v3474
      %v3603 = vpack.c.b16 %v3475, %v3475
      %v3604 = vpack.c.b16 %v3476, %v3476
      %v3605 = vpack.c.b16 %v3477, %v3477
      %v3606 = vpack.c.b16 %v3478, %v3478
      %v3607 = vpack.c.b16 %v3479, %v3479
      %v3608 = vpack.c.b16 %v3480, %v3480
      %v3609 = vpack.c.b16 %v3481, %v3481
      %v3610 = vpack.c.b16 %v3482, %v3482
      %v3611 = vpack.c.b16 %v3483, %v3483
      %v3612 = vpack.c.b16 %v3484, %v3484
      %v3613 = vpack.c.b16 %v3485, %v3485
      %v3614 = vpack.c.b16 %v3486, %v3486
      %v3615 = vpack.c.b16 %v3487, %v3487
      %v3616 = vpack.c.b16 %v3488, %v3488
      %v3617 = vpack.c.b16 %v3489, %v3489
      %v3618 = vpack.c.b16 %v3490, %v3490
      %v3619 = vpack.c.b16 %v3491, %v3491
      %v3620 = vpack.c.b16 %v3492, %v3492
      %v3621 = vpack.c.b16 %v3493, %v3493
      %v3622 = vpack.c.b16 %v3494, %v3494
      %v3623 = vpack.c.b16 %v3495, %v3495
      %v3624 = vpack.c.b16 %v3496, %v3496
      %v3625 = vpack.c.b16 %v3497, %v3497
      %v3626 = vpack.c.b16 %v3498, %v3498
      %v3627 = vpack.c.b16 %v3499, %v3499
      %v3628 = vpack.c.b16 %v3500, %v3500
      %v3629 = vpack.c.b16 %v3501, %v3501
      %3758 = vst [vmem:[%s202] sm:$0xf] %v3502
      %3759 = vst [vmem:[%s202 + $0x4] sm:$0xf] %v3503
      %3760 = vst [vmem:[%s202 + $0x8] sm:$0xf] %v3504
      %3761 = vst [vmem:[%s202 + $0xc] sm:$0xf] %v3505
      %3762 = vst [vmem:[%s202 + $0x10] sm:$0xf] %v3506
      %3763 = vst [vmem:[%s202 + $0x14] sm:$0xf] %v3507
      %3764 = vst [vmem:[%s202 + $0x18] sm:$0xf] %v3508
      %3765 = vst [vmem:[%s202 + $0x1c] sm:$0xf] %v3509
      %3766 = vst [vmem:[%s202 + $0x20] sm:$0xf] %v3510
      %3767 = vst [vmem:[%s202 + $0x24] sm:$0xf] %v3511
      %3768 = vst [vmem:[%s202 + $0x28] sm:$0xf] %v3512
      %3769 = vst [vmem:[%s202 + $0x2c] sm:$0xf] %v3513
      %3770 = vst [vmem:[%s202 + $0x30] sm:$0xf] %v3514
      %3771 = vst [vmem:[%s202 + $0x34] sm:$0xf] %v3515
      %3772 = vst [vmem:[%s202 + $0x38] sm:$0xf] %v3516
      %3773 = vst [vmem:[%s202 + $0x3c] sm:$0xf] %v3517
      %3774 = vst [vmem:[%s202 + $0x40] sm:$0xf] %v3518
      %3775 = vst [vmem:[%s202 + $0x44] sm:$0xf] %v3519
      %3776 = vst [vmem:[%s202 + $0x48] sm:$0xf] %v3520
      %3777 = vst [vmem:[%s202 + $0x4c] sm:$0xf] %v3521
      %3778 = vst [vmem:[%s202 + $0x50] sm:$0xf] %v3522
      %3779 = vst [vmem:[%s202 + $0x54] sm:$0xf] %v3523
      %3780 = vst [vmem:[%s202 + $0x58] sm:$0xf] %v3524
      %3781 = vst [vmem:[%s202 + $0x5c] sm:$0xf] %v3525
      %3782 = vst [vmem:[%s202 + $0x60] sm:$0xf] %v3526
      %3783 = vst [vmem:[%s202 + $0x64] sm:$0xf] %v3527
      %3784 = vst [vmem:[%s202 + $0x68] sm:$0xf] %v3528
      %3785 = vst [vmem:[%s202 + $0x6c] sm:$0xf] %v3529
      %3786 = vst [vmem:[%s202 + $0x70] sm:$0xf] %v3530
      %3787 = vst [vmem:[%s202 + $0x74] sm:$0xf] %v3531
      %3788 = vst [vmem:[%s202 + $0x78] sm:$0xf] %v3532
      %3789 = vst [vmem:[%s202 + $0x7c] sm:$0xf] %v3533
      %3790 = vst [vmem:[%s202 + $0x80] sm:$0xf] %v3534
      %3791 = vst [vmem:[%s202 + $0x84] sm:$0xf] %v3535
      %3792 = vst [vmem:[%s202 + $0x88] sm:$0xf] %v3536
      %3793 = vst [vmem:[%s202 + $0x8c] sm:$0xf] %v3537
      %3794 = vst [vmem:[%s202 + $0x90] sm:$0xf] %v3538
      %3795 = vst [vmem:[%s202 + $0x94] sm:$0xf] %v3539
      %3796 = vst [vmem:[%s202 + $0x98] sm:$0xf] %v3540
      %3797 = vst [vmem:[%s202 + $0x9c] sm:$0xf] %v3541
      %3798 = vst [vmem:[%s202 + $0xa0] sm:$0xf] %v3542
      %3799 = vst [vmem:[%s202 + $0xa4] sm:$0xf] %v3543
      %3800 = vst [vmem:[%s202 + $0xa8] sm:$0xf] %v3544
      %3801 = vst [vmem:[%s202 + $0xac] sm:$0xf] %v3545
      %3802 = vst [vmem:[%s202 + $0xb0] sm:$0xf] %v3546
      %3803 = vst [vmem:[%s202 + $0xb4] sm:$0xf] %v3547
      %3804 = vst [vmem:[%s202 + $0xb8] sm:$0xf] %v3548
      %3805 = vst [vmem:[%s202 + $0xbc] sm:$0xf] %v3549
      %3806 = vst [vmem:[%s202 + $0xc0] sm:$0xf] %v3550
      %3807 = vst [vmem:[%s202 + $0xc4] sm:$0xf] %v3551
      %3808 = vst [vmem:[%s202 + $0xc8] sm:$0xf] %v3552
      %3809 = vst [vmem:[%s202 + $0xcc] sm:$0xf] %v3553
      %3810 = vst [vmem:[%s202 + $0xd0] sm:$0xf] %v3554
      %3811 = vst [vmem:[%s202 + $0xd4] sm:$0xf] %v3555
      %3812 = vst [vmem:[%s202 + $0xd8] sm:$0xf] %v3556
      %3813 = vst [vmem:[%s202 + $0xdc] sm:$0xf] %v3557
      %3814 = vst [vmem:[%s202 + $0xe0] sm:$0xf] %v3558
      %3815 = vst [vmem:[%s202 + $0xe4] sm:$0xf] %v3559
      %3816 = vst [vmem:[%s202 + $0xe8] sm:$0xf] %v3560
      %3817 = vst [vmem:[%s202 + $0xec] sm:$0xf] %v3561
      %3818 = vst [vmem:[%s202 + $0xf0] sm:$0xf] %v3562
      %3819 = vst [vmem:[%s202 + $0xf4] sm:$0xf] %v3563
      %3820 = vst [vmem:[%s202 + $0xf8] sm:$0xf] %v3564
      %3821 = vst [vmem:[%s202 + $0xfc] sm:$0xf] %v3565
      %3822 = vst [vmem:[%s202 + $0x100] sm:$0xf] %v3566
      %3823 = vst [vmem:[%s202 + $0x104] sm:$0xf] %v3567
      %3824 = vst [vmem:[%s202 + $0x108] sm:$0xf] %v3568
      %3825 = vst [vmem:[%s202 + $0x10c] sm:$0xf] %v3569
      %3826 = vst [vmem:[%s202 + $0x110] sm:$0xf] %v3570
      %3827 = vst [vmem:[%s202 + $0x114] sm:$0xf] %v3571
      %3828 = vst [vmem:[%s202 + $0x118] sm:$0xf] %v3572
      %3829 = vst [vmem:[%s202 + $0x11c] sm:$0xf] %v3573
      %3830 = vst [vmem:[%s202 + $0x120] sm:$0xf] %v3574
      %3831 = vst [vmem:[%s202 + $0x124] sm:$0xf] %v3575
      %3832 = vst [vmem:[%s202 + $0x128] sm:$0xf] %v3576
      %3833 = vst [vmem:[%s202 + $0x12c] sm:$0xf] %v3577
      %3834 = vst [vmem:[%s202 + $0x130] sm:$0xf] %v3578
      %3835 = vst [vmem:[%s202 + $0x134] sm:$0xf] %v3579
      %3836 = vst [vmem:[%s202 + $0x138] sm:$0xf] %v3580
      %3837 = vst [vmem:[%s202 + $0x13c] sm:$0xf] %v3581
      %3838 = vst [vmem:[%s202 + $0x140] sm:$0xf] %v3582
      %3839 = vst [vmem:[%s202 + $0x144] sm:$0xf] %v3583
      %3840 = vst [vmem:[%s202 + $0x148] sm:$0xf] %v3584
      %3841 = vst [vmem:[%s202 + $0x14c] sm:$0xf] %v3585
      %3842 = vst [vmem:[%s202 + $0x150] sm:$0xf] %v3586
      %3843 = vst [vmem:[%s202 + $0x154] sm:$0xf] %v3587
      %3844 = vst [vmem:[%s202 + $0x158] sm:$0xf] %v3588
      %3845 = vst [vmem:[%s202 + $0x15c] sm:$0xf] %v3589
      %3846 = vst [vmem:[%s202 + $0x160] sm:$0xf] %v3590
      %3847 = vst [vmem:[%s202 + $0x164] sm:$0xf] %v3591
      %3848 = vst [vmem:[%s202 + $0x168] sm:$0xf] %v3592
      %3849 = vst [vmem:[%s202 + $0x16c] sm:$0xf] %v3593
      %3850 = vst [vmem:[%s202 + $0x170] sm:$0xf] %v3594
      %3851 = vst [vmem:[%s202 + $0x174] sm:$0xf] %v3595
      %3852 = vst [vmem:[%s202 + $0x178] sm:$0xf] %v3596
      %3853 = vst [vmem:[%s202 + $0x17c] sm:$0xf] %v3597
      %3854 = vst [vmem:[%s202 + $0x180] sm:$0xf] %v3598
      %3855 = vst [vmem:[%s202 + $0x184] sm:$0xf] %v3599
      %3856 = vst [vmem:[%s202 + $0x188] sm:$0xf] %v3600
      %3857 = vst [vmem:[%s202 + $0x18c] sm:$0xf] %v3601
      %3858 = vst [vmem:[%s202 + $0x190] sm:$0xf] %v3602
      %3859 = vst [vmem:[%s202 + $0x194] sm:$0xf] %v3603
      %3860 = vst [vmem:[%s202 + $0x198] sm:$0xf] %v3604
      %3861 = vst [vmem:[%s202 + $0x19c] sm:$0xf] %v3605
      %3862 = vst [vmem:[%s202 + $0x1a0] sm:$0xf] %v3606
      %3863 = vst [vmem:[%s202 + $0x1a4] sm:$0xf] %v3607
      %3864 = vst [vmem:[%s202 + $0x1a8] sm:$0xf] %v3608
      %3865 = vst [vmem:[%s202 + $0x1ac] sm:$0xf] %v3609
      %3866 = vst [vmem:[%s202 + $0x1b0] sm:$0xf] %v3610
      %3867 = vst [vmem:[%s202 + $0x1b4] sm:$0xf] %v3611
      %3868 = vst [vmem:[%s202 + $0x1b8] sm:$0xf] %v3612
      %3869 = vst [vmem:[%s202 + $0x1bc] sm:$0xf] %v3613
      %3870 = vst [vmem:[%s202 + $0x1c0] sm:$0xf] %v3614
      %3871 = vst [vmem:[%s202 + $0x1c4] sm:$0xf] %v3615
      %3872 = vst [vmem:[%s202 + $0x1c8] sm:$0xf] %v3616
      %3873 = vst [vmem:[%s202 + $0x1cc] sm:$0xf] %v3617
      %3874 = vst [vmem:[%s202 + $0x1d0] sm:$0xf] %v3618
      %3875 = vst [vmem:[%s202 + $0x1d4] sm:$0xf] %v3619
      %3876 = vst [vmem:[%s202 + $0x1d8] sm:$0xf] %v3620
      %3877 = vst [vmem:[%s202 + $0x1dc] sm:$0xf] %v3621
      %3878 = vst [vmem:[%s202 + $0x1e0] sm:$0xf] %v3622
      %3879 = vst [vmem:[%s202 + $0x1e4] sm:$0xf] %v3623
      %3880 = vst [vmem:[%s202 + $0x1e8] sm:$0xf] %v3624
      %3881 = vst [vmem:[%s202 + $0x1ec] sm:$0xf] %v3625
      %3882 = vst [vmem:[%s202 + $0x1f0] sm:$0xf] %v3626
      %3883 = vst [vmem:[%s202 + $0x1f4] sm:$0xf] %v3627
      %3884 = vst [vmem:[%s202 + $0x1f8] sm:$0xf] %v3628
      %3885 = vst [vmem:[%s202 + $0x1fc] sm:$0xf] %v3629
      %s3886 = smul.u32 128, %s15
      %p3887 = scmp.lt.s32.totalorder %s3886, 255
      %s3888 = scalar_select %p3887, %s3886, 255
      %s3889 = smul.addr %s3888, 4
      %s3890 = scalar_lea.vmem %s4, %s3889
      // Predicated region
      $region37: #{keypointnet_forward.14} parent=35 // pred_check
        %p3891 = pneg %p122
      $region38: #{keypointnet_forward.14} parent=35 // pred_check_branch
        %3893 = sbr.rel (%p3891) target = $region40
      $region39: #{keypointnet_forward.14} parent=35 // pred_region
        %s3894 = smul.u32 128, %s15
      $region40: #{keypointnet_forward.14} parent=35 // pred_fallthru
        _
    $region36: #{keypointnet_forward.14} parent=5 // pred_fallthru
      _
    %p3895 = scmp.le.s32.totalorder 2, %s10
    // Predicated region
    $region41: #{keypointnet_forward.14} parent=5 // pred_check
      %p3896 = pneg %p3895
    $region42: #{keypointnet_forward.14} parent=5 // pred_check_branch
      %3898 = sbr.rel (%p3896) target = $region44
    $region43: #{keypointnet_forward.14} parent=5 // pred_region
      %s3899 = ssub.s32 %s10, 2
      // Predicated region
      $region45: #{keypointnet_forward.14} parent=43 // pred_check
        %p3900 = pneg %p128
      $region46: #{keypointnet_forward.14} parent=43 // pred_check_branch
        %3902 = sbr.rel (%p3900) target = $region48
      $region47: #{keypointnet_forward.14} parent=43 // pred_region
        %s3903 = smul.u32 128, %s16
        %p3904 = scmp.lt.s32.totalorder %s3903, 255
        %s3905 = scalar_select %p3904, %s3903, 255
        %s3906 = smul.addr %s3905, 4
        %s3907 = scalar_lea.vmem %s4, %s3906
      $region48: #{keypointnet_forward.14} parent=43 // pred_fallthru
        _
    $region44: #{keypointnet_forward.14} parent=5 // pred_fallthru
      _
  $region6: #{keypointnet_forward.14} parent=0 // loop_footer
    %s14 = sadd.s32 1, %s10
  $region7: #{keypointnet_forward.14} parent=0 // loop_footer_branch
    %9 = sbr.rel target = $region3
  $region8: #{keypointnet_forward.14} parent=0 // loop_exit
    _

// kernel: keypointnet_forward.15
$region0: #{keypointnet_forward.15}
  #allocation0 [shape = 'u32[]', space=smem, size = 0x4, offset = 0x4, fixed_abs, tag = 'smem constant byte address 0x4 - core index']
  #allocation1 [shape = 'u32[144,128]{1,0:T(1,128)}', space=vmem, size = 0x12000, scoped, tag = 'internal scratch']
  %s0 = inlined_call_operand.vmem [shape: bf16[2,32,4096], index: 0, kind: input, shape index: {}]
  %s1 = inlined_call_operand.vmem [shape: bf16[8,32], index: 1, kind: input, shape index: {}]
  %s2 = inlined_call_operand.vmem [shape: f32[8,1], index: 2, kind: input, shape index: {}]
  %s3 = inlined_call_operand.vmem [shape: f32[2,8,4096], index: 3, kind: output, shape index: {}]
  %s4 = sld [smem:[#allocation0]]
  $region45: #{keypointnet_forward.15} parent=0
    _
  %s6 = ssub.s32 1, %s4
  %s7 = scalar_select 0, %s6, %s4
  loop: start=0, step=1, limit=4
  $region2: #{keypointnet_forward.15} parent=0 // loop_pre_header
    _
  $region3: #{keypointnet_forward.15} parent=0 // loop_header
    %s9 = sphi 0, %s13
    %p10 = scmp.ge.s32.totalorder %s9, 4
    %s19 = sphi 0, %s21
    %s22 = sphi 0, %s19
    %s23 = sphi 0, %s22
    %s39 = sphi 0, %s23
    %s43 = sphi 0, %s43
    %s45 = sphi 0, %s43
    %s46 = sphi 0, %s45
    %s60 = sphi 0, %s46
    %s64 = sphi 0, %s64
    %s66 = sphi 0, %s64
    %s67 = sphi 0, %s66
    %s81 = sphi 0, %s67
    %s87 = sphi 0, %s89
    %s90 = sphi 0, %s87
    %s91 = sphi 0, %s90
    %s107 = sphi 0, %s91
  $region4: #{keypointnet_forward.15} parent=0 // loop_header_branch
    %12 = sbr.rel (%p10) target = $region8
  $region5: #{keypointnet_forward.15} parent=0 // loop_body
    %s14 = ssub.s32 %s9, 1
    %s15 = ssub.s32 %s9, 2
    %s16 = sadd.s32 %s9, 1
    %s17 = ssub.s32 %s9, %s16
    %p18 = scmp.eq.s32.totalorder %s17, 0
    %s20 = sadd.s32 %s19, 1
    %s21 = scalar_select %p18, %s19, %s20
    %p24 = pneg %p18
    %p25 = scmp.eq.s32.totalorder %s9, 1
    %p26 = por %p24, %p25
    %p27 = scmp.ne.s32.totalorder %s19, %s22
    %p28 = scmp.eq.s32.totalorder %s9, 0
    %p29 = por %p27, %p28
    %p30 = scmp.ne.s32.totalorder %s19, %s22
    %p31 = scmp.eq.s32.totalorder %s14, 1
    %p32 = por %p30, %p31
    %p33 = scmp.ne.s32.totalorder %s22, %s23
    %p34 = scmp.eq.s32.totalorder %s14, 0
    %p35 = por %p33, %p34
    %p36 = scmp.ne.s32.totalorder %s22, %s23
    %p37 = scmp.eq.s32.totalorder %s15, 1
    %p38 = por %p36, %p37
    %p40 = scmp.ne.s32.totalorder %s23, %s39
    %p41 = scmp.eq.s32.totalorder %s15, 0
    %p42 = por %p40, %p41
    %s44 = sadd.s32 %s43, 1
    %p47 = scmp.eq.s32.totalorder %s9, 1
    %p48 = scmp.ne.s32.totalorder %s43, %s45
    %p49 = scmp.eq.s32.totalorder %s9, 0
    %p50 = por %p48, %p49
    %p51 = scmp.ne.s32.totalorder %s43, %s45
    %p52 = scmp.eq.s32.totalorder %s14, 1
    %p53 = por %p51, %p52
    %p54 = scmp.ne.s32.totalorder %s45, %s46
    %p55 = scmp.eq.s32.totalorder %s14, 0
    %p56 = por %p54, %p55
    %p57 = scmp.ne.s32.totalorder %s45, %s46
    %p58 = scmp.eq.s32.totalorder %s15, 1
    %p59 = por %p57, %p58
    %p61 = scmp.ne.s32.totalorder %s46, %s60
    %p62 = scmp.eq.s32.totalorder %s15, 0
    %p63 = por %p61, %p62
    %s65 = sadd.s32 %s64, 1
    %p68 = scmp.eq.s32.totalorder %s9, 1
    %p69 = scmp.ne.s32.totalorder %s64, %s66
    %p70 = scmp.eq.s32.totalorder %s9, 0
    %p71 = por %p69, %p70
    %p72 = scmp.ne.s32.totalorder %s64, %s66
    %p73 = scmp.eq.s32.totalorder %s14, 1
    %p74 = por %p72, %p73
    %p75 = scmp.ne.s32.totalorder %s66, %s67
    %p76 = scmp.eq.s32.totalorder %s14, 0
    %p77 = por %p75, %p76
    %p78 = scmp.ne.s32.totalorder %s66, %s67
    %p79 = scmp.eq.s32.totalorder %s15, 1
    %p80 = por %p78, %p79
    %p82 = scmp.ne.s32.totalorder %s67, %s81
    %p83 = scmp.eq.s32.totalorder %s15, 0
    %p84 = por %p82, %p83
    %s85 = ssub.s32 %s9, %s16
    %p86 = scmp.eq.s32.totalorder %s85, 0
    %s88 = sadd.s32 %s87, 1
    %s89 = scalar_select %p86, %s87, %s88
    %p92 = pneg %p86
    %p93 = scmp.eq.s32.totalorder %s9, 1
    %p94 = por %p92, %p93
    %p95 = scmp.ne.s32.totalorder %s87, %s90
    %p96 = scmp.eq.s32.totalorder %s9, 0
    %p97 = por %p95, %p96
    %p98 = scmp.ne.s32.totalorder %s87, %s90
    %p99 = scmp.eq.s32.totalorder %s14, 1
    %p100 = por %p98, %p99
    %p101 = scmp.ne.s32.totalorder %s90, %s91
    %p102 = scmp.eq.s32.totalorder %s14, 0
    %p103 = por %p101, %p102
    %p104 = scmp.ne.s32.totalorder %s90, %s91
    %p105 = scmp.eq.s32.totalorder %s15, 1
    %p106 = por %p104, %p105
    %p108 = scmp.ne.s32.totalorder %s91, %s107
    %p109 = scmp.eq.s32.totalorder %s15, 0
    %p110 = por %p108, %p109
    %p111 = scmp.le.s32.totalorder 1, %s9
    %p112 = scmp.lt.s32.totalorder %s9, 3
    %p113 = pnand %p111, %p112
    %p114 = pneg %p113
    // Predicated region
    $region9: #{keypointnet_forward.15} parent=5 // pred_check
      _
    $region10: #{keypointnet_forward.15} parent=5 // pred_check_branch
      %116 = sbr.rel (%p113) target = $region12
    $region11: #{keypointnet_forward.15} parent=5 // pred_region
      %s117 = ssub.s32 %s9, 1
      // Predicated region
      $region13: #{keypointnet_forward.15} parent=11 // pred_check
        %p118 = pneg %p56
      $region14: #{keypointnet_forward.15} parent=11 // pred_check_branch
        %120 = sbr.rel (%p118) target = $region16
      $region15: #{keypointnet_forward.15} parent=11 // pred_region
        _
      $region16: #{keypointnet_forward.15} parent=11 // pred_fallthru
        _
      // Predicated region
      $region17: #{keypointnet_forward.15} parent=11 // pred_check
        %p121 = pneg %p77
      $region18: #{keypointnet_forward.15} parent=11 // pred_check_branch
        %123 = sbr.rel (%p121) target = $region20
      $region19: #{keypointnet_forward.15} parent=11 // pred_region
        _
      $region20: #{keypointnet_forward.15} parent=11 // pred_fallthru
        _
    $region12: #{keypointnet_forward.15} parent=5 // pred_fallthru
      _
    %p124 = scmp.lt.s32.totalorder %s9, 2
    // Predicated region
    $region21: #{keypointnet_forward.15} parent=5 // pred_check
      %p125 = pneg %p124
    $region22: #{keypointnet_forward.15} parent=5 // pred_check_branch
      %127 = sbr.rel (%p125) target = $region24
    $region23: #{keypointnet_forward.15} parent=5 // pred_region
      // Predicated region
      $region25: #{keypointnet_forward.15} parent=23 // pred_check
        %p128 = pneg %p29
      $region26: #{keypointnet_forward.15} parent=23 // pred_check_branch
        %130 = sbr.rel (%p128) target = $region28
      $region27: #{keypointnet_forward.15} parent=23 // pred_region
        %p131 = scmp.lt.s32.totalorder %s9, 1
        %s132 = scalar_select %p131, %s9, 1
        %s133 = smul.addr %s132, 128
        %s134 = smul.addr %s133, 4
        %s135 = scalar_lea.vmem %s0, %s134
      $region28: #{keypointnet_forward.15} parent=23 // pred_fallthru
        _
    $region24: #{keypointnet_forward.15} parent=5 // pred_fallthru
      _
    %p136 = scmp.le.s32.totalorder 1, %s9
    %p137 = scmp.lt.s32.totalorder %s9, 3
    %p138 = pnand %p136, %p137
    %p139 = pneg %p138
    // Predicated region
    $region29: #{keypointnet_forward.15} parent=5 // pred_check
      _
    $region30: #{keypointnet_forward.15} parent=5 // pred_check_branch
      %141 = sbr.rel (%p138) target = $region32
    $region31: #{keypointnet_forward.15} parent=5 // pred_region
      %s142 = ssub.s32 %s9, 1
      %p143 = scmp.lt.s32.totalorder %s14, 1
      %s144 = scalar_select %p143, %s14, 1
      %s145 = smul.addr %s144, 128
      %s146 = smul.addr %s145, 4
      %s147 = scalar_lea.vmem %s0, %s146
      %p148 = pneg %p35
      %p149 = pneg %p32
      %p150 = pneg %p56
      %p151 = pneg %p53
      %p152 = pneg %p77
      %p153 = pneg %p74
      %p154 = pneg %p103
      %p155 = pneg %p100
      %p156 = scmp.lt.s32.totalorder %s14, 1
      %s157 = scalar_select %p156, %s14, 1
      %s158 = smul.addr %s157, 32
      %s159 = smul.addr %s158, 8
      %s160 = scalar_lea.vmem %s3, %s159
      %p161 = scmp.lt.s32.totalorder %s14, 1
      %s162 = scalar_select %p161, %s14, 1
      %s163 = smul.addr %s162, 128
      %s164 = smul.addr %s163, 4
      %s165 = scalar_lea.vmem %s0, %s164
      %p166 = scmp.lt.s32.totalorder %s14, 1
      %s167 = scalar_select %p166, %s14, 1
      %s168 = smul.addr %s167, 32
      %s169 = smul.addr %s168, 8
      %s170 = scalar_lea.vmem %s3, %s169
      %v172 = vld [vmem:[%s1] sm:$0xf]
      %v173 = vld [vmem:[%s165] sm:$0xff]
      %v174 = vld [vmem:[%s165 + $0x8] sm:$0xff]
      %v175 = vld [vmem:[%s165 + $0x10] sm:$0xff]
      %v176 = vld [vmem:[%s165 + $0x18] sm:$0xff]
      %v177 = vld [vmem:[%s165 + $0x20] sm:$0xff]
      %v178 = vld [vmem:[%s165 + $0x28] sm:$0xff]
      %v179 = vld [vmem:[%s165 + $0x30] sm:$0xff]
      %v180 = vld [vmem:[%s165 + $0x38] sm:$0xff]
      %v181 = vld [vmem:[%s165 + $0x40] sm:$0xff]
      %v182 = vld [vmem:[%s165 + $0x48] sm:$0xff]
      %v183 = vld [vmem:[%s165 + $0x50] sm:$0xff]
      %v184 = vld [vmem:[%s165 + $0x58] sm:$0xff]
      %v185 = vld [vmem:[%s165 + $0x60] sm:$0xff]
      %v186 = vld [vmem:[%s165 + $0x68] sm:$0xff]
      %v187 = vld [vmem:[%s165 + $0x70] sm:$0xff]
      %v188 = vld [vmem:[%s165 + $0x78] sm:$0xff]
      %v189 = vld [vmem:[%s165 + $0x80] sm:$0xff]
      %v190 = vld [vmem:[%s165 + $0x88] sm:$0xff]
      %v191 = vld [vmem:[%s165 + $0x90] sm:$0xff]
      %v192 = vld [vmem:[%s165 + $0x98] sm:$0xff]
      %v193 = vld [vmem:[%s165 + $0xa0] sm:$0xff]
      %v194 = vld [vmem:[%s165 + $0xa8] sm:$0xff]
      %v195 = vld [vmem:[%s165 + $0xb0] sm:$0xff]
      %v196 = vld [vmem:[%s165 + $0xb8] sm:$0xff]
      %v197 = vld [vmem:[%s165 + $0xc0] sm:$0xff]
      %v198 = vld [vmem:[%s165 + $0xc8] sm:$0xff]
      %v199 = vld [vmem:[%s165 + $0xd0] sm:$0xff]
      %v200 = vld [vmem:[%s165 + $0xd8] sm:$0xff]
      %v201 = vld [vmem:[%s165 + $0xe0] sm:$0xff]
      %v202 = vld [vmem:[%s165 + $0xe8] sm:$0xff]
      %v203 = vld [vmem:[%s165 + $0xf0] sm:$0xff]
      %v204 = vld [vmem:[%s165 + $0xf8] sm:$0xff]
      %v205 = vld [vmem:[%s165 + $0x100] sm:$0xff]
      %v206 = vld [vmem:[%s165 + $0x108] sm:$0xff]
      %v207 = vld [vmem:[%s165 + $0x110] sm:$0xff]
      %v208 = vld [vmem:[%s165 + $0x118] sm:$0xff]
      %v209 = vld [vmem:[%s165 + $0x120] sm:$0xff]
      %v210 = vld [vmem:[%s165 + $0x128] sm:$0xff]
      %v211 = vld [vmem:[%s165 + $0x130] sm:$0xff]
      %v212 = vld [vmem:[%s165 + $0x138] sm:$0xff]
      %v213 = vld [vmem:[%s165 + $0x140] sm:$0xff]
      %v214 = vld [vmem:[%s165 + $0x148] sm:$0xff]
      %v215 = vld [vmem:[%s165 + $0x150] sm:$0xff]
      %v216 = vld [vmem:[%s165 + $0x158] sm:$0xff]
      %v217 = vld [vmem:[%s165 + $0x160] sm:$0xff]
      %v218 = vld [vmem:[%s165 + $0x168] sm:$0xff]
      %v219 = vld [vmem:[%s165 + $0x170] sm:$0xff]
      %v220 = vld [vmem:[%s165 + $0x178] sm:$0xff]
      %v221 = vld [vmem:[%s165 + $0x180] sm:$0xff]
      %v222 = vld [vmem:[%s165 + $0x188] sm:$0xff]
      %v223 = vld [vmem:[%s165 + $0x190] sm:$0xff]
      %v224 = vld [vmem:[%s165 + $0x198] sm:$0xff]
      %v225 = vld [vmem:[%s165 + $0x1a0] sm:$0xff]
      %v226 = vld [vmem:[%s165 + $0x1a8] sm:$0xff]
      %v227 = vld [vmem:[%s165 + $0x1b0] sm:$0xff]
      %v228 = vld [vmem:[%s165 + $0x1b8] sm:$0xff]
      %v229 = vld [vmem:[%s165 + $0x1c0] sm:$0xff]
      %v230 = vld [vmem:[%s165 + $0x1c8] sm:$0xff]
      %v231 = vld [vmem:[%s165 + $0x1d0] sm:$0xff]
      %v232 = vld [vmem:[%s165 + $0x1d8] sm:$0xff]
      %v233 = vld [vmem:[%s165 + $0x1e0] sm:$0xff]
      %v234 = vld [vmem:[%s165 + $0x1e8] sm:$0xff]
      %v235 = vld [vmem:[%s165 + $0x1f0] sm:$0xff]
      %v236 = vld [vmem:[%s165 + $0x1f8] sm:$0xff]
      %v237 = vld [vmem:[%s2] sm:$0xff]
      %239 = vset.pattern.permute.xlu0 0
      %240 = vperm.xlu0 %239, %v237
      %v241 = vpop.permute.xlu0 %240
      %v307 = vunpack.c.l.b16 %v173
      %v308 = vunpack.c.h.b16 %v173
      %v309 = vunpack.c.l.b16 %v174
      %v310 = vunpack.c.h.b16 %v174
      %v311 = vunpack.c.l.b16 %v175
      %v312 = vunpack.c.h.b16 %v175
      %v313 = vunpack.c.l.b16 %v176
      %v314 = vunpack.c.h.b16 %v176
      %v315 = vunpack.c.l.b16 %v177
      %v316 = vunpack.c.h.b16 %v177
      %v317 = vunpack.c.l.b16 %v178
      %v318 = vunpack.c.h.b16 %v178
      %v319 = vunpack.c.l.b16 %v179
      %v320 = vunpack.c.h.b16 %v179
      %v321 = vunpack.c.l.b16 %v180
      %v322 = vunpack.c.h.b16 %v180
      %v323 = vunpack.c.l.b16 %v181
      %v324 = vunpack.c.h.b16 %v181
      %v325 = vunpack.c.l.b16 %v182
      %v326 = vunpack.c.h.b16 %v182
      %v327 = vunpack.c.l.b16 %v183
      %v328 = vunpack.c.h.b16 %v183
      %v329 = vunpack.c.l.b16 %v184
      %v330 = vunpack.c.h.b16 %v184
      %v331 = vunpack.c.l.b16 %v185
      %v332 = vunpack.c.h.b16 %v185
      %v333 = vunpack.c.l.b16 %v186
      %v334 = vunpack.c.h.b16 %v186
      %v335 = vunpack.c.l.b16 %v187
      %v336 = vunpack.c.h.b16 %v187
      %v337 = vunpack.c.l.b16 %v188
      %v338 = vunpack.c.h.b16 %v188
      %v339 = vunpack.c.l.b16 %v189
      %v340 = vunpack.c.h.b16 %v189
      %v341 = vunpack.c.l.b16 %v190
      %v342 = vunpack.c.h.b16 %v190
      %v343 = vunpack.c.l.b16 %v191
      %v344 = vunpack.c.h.b16 %v191
      %v345 = vunpack.c.l.b16 %v192
      %v346 = vunpack.c.h.b16 %v192
      %v347 = vunpack.c.l.b16 %v193
      %v348 = vunpack.c.h.b16 %v193
      %v349 = vunpack.c.l.b16 %v194
      %v350 = vunpack.c.h.b16 %v194
      %v351 = vunpack.c.l.b16 %v195
      %v352 = vunpack.c.h.b16 %v195
      %v353 = vunpack.c.l.b16 %v196
      %v354 = vunpack.c.h.b16 %v196
      %v355 = vunpack.c.l.b16 %v197
      %v356 = vunpack.c.h.b16 %v197
      %v357 = vunpack.c.l.b16 %v198
      %v358 = vunpack.c.h.b16 %v198
      %v359 = vunpack.c.l.b16 %v199
      %v360 = vunpack.c.h.b16 %v199
      %v361 = vunpack.c.l.b16 %v200
      %v362 = vunpack.c.h.b16 %v200
      %v363 = vunpack.c.l.b16 %v201
      %v364 = vunpack.c.h.b16 %v201
      %v365 = vunpack.c.l.b16 %v202
      %v366 = vunpack.c.h.b16 %v202
      %v367 = vunpack.c.l.b16 %v203
      %v368 = vunpack.c.h.b16 %v203
      %v369 = vunpack.c.l.b16 %v204
      %v370 = vunpack.c.h.b16 %v204
      %v371 = vunpack.c.l.b16 %v205
      %v372 = vunpack.c.h.b16 %v205
      %v373 = vunpack.c.l.b16 %v206
      %v374 = vunpack.c.h.b16 %v206
      %v375 = vunpack.c.l.b16 %v207
      %v376 = vunpack.c.h.b16 %v207
      %v377 = vunpack.c.l.b16 %v208
      %v378 = vunpack.c.h.b16 %v208
      %v379 = vunpack.c.l.b16 %v209
      %v380 = vunpack.c.h.b16 %v209
      %v381 = vunpack.c.l.b16 %v210
      %v382 = vunpack.c.h.b16 %v210
      %v383 = vunpack.c.l.b16 %v211
      %v384 = vunpack.c.h.b16 %v211
      %v385 = vunpack.c.l.b16 %v212
      %v386 = vunpack.c.h.b16 %v212
      %v387 = vunpack.c.l.b16 %v213
      %v388 = vunpack.c.h.b16 %v213
      %v389 = vunpack.c.l.b16 %v214
      %v390 = vunpack.c.h.b16 %v214
      %v391 = vunpack.c.l.b16 %v215
      %v392 = vunpack.c.h.b16 %v215
      %v393 = vunpack.c.l.b16 %v216
      %v394 = vunpack.c.h.b16 %v216
      %v395 = vunpack.c.l.b16 %v217
      %v396 = vunpack.c.h.b16 %v217
      %v397 = vunpack.c.l.b16 %v218
      %v398 = vunpack.c.h.b16 %v218
      %v399 = vunpack.c.l.b16 %v219
      %v400 = vunpack.c.h.b16 %v219
      %v401 = vunpack.c.l.b16 %v220
      %v402 = vunpack.c.h.b16 %v220
      %v403 = vunpack.c.l.b16 %v221
      %v404 = vunpack.c.h.b16 %v221
      %v405 = vunpack.c.l.b16 %v222
      %v406 = vunpack.c.h.b16 %v222
      %v407 = vunpack.c.l.b16 %v223
      %v408 = vunpack.c.h.b16 %v223
      %v409 = vunpack.c.l.b16 %v224
      %v410 = vunpack.c.h.b16 %v224
      %v411 = vunpack.c.l.b16 %v225
      %v412 = vunpack.c.h.b16 %v225
      %v413 = vunpack.c.l.b16 %v226
      %v414 = vunpack.c.h.b16 %v226
      %v415 = vunpack.c.l.b16 %v227
      %v416 = vunpack.c.h.b16 %v227
      %v417 = vunpack.c.l.b16 %v228
      %v418 = vunpack.c.h.b16 %v228
      %v419 = vunpack.c.l.b16 %v229
      %v420 = vunpack.c.h.b16 %v229
      %v421 = vunpack.c.l.b16 %v230
      %v422 = vunpack.c.h.b16 %v230
      %v423 = vunpack.c.l.b16 %v231
      %v424 = vunpack.c.h.b16 %v231
      %v425 = vunpack.c.l.b16 %v232
      %v426 = vunpack.c.h.b16 %v232
      %v427 = vunpack.c.l.b16 %v233
      %v428 = vunpack.c.h.b16 %v233
      %v429 = vunpack.c.l.b16 %v234
      %v430 = vunpack.c.h.b16 %v234
      %v431 = vunpack.c.l.b16 %v235
      %v432 = vunpack.c.h.b16 %v235
      %v433 = vunpack.c.l.b16 %v236
      %v434 = vunpack.c.h.b16 %v236
      %v435 = vpack.c.b16 %v339, %v307
      %v436 = vpack.c.b16 %v340, %v308
      %v437 = vpack.c.b16 %v341, %v309
      %v438 = vpack.c.b16 %v342, %v310
      %v439 = vpack.c.b16 %v343, %v311
      %v440 = vpack.c.b16 %v344, %v312
      %v441 = vpack.c.b16 %v345, %v313
      %v442 = vpack.c.b16 %v346, %v314
      %v443 = vpack.c.b16 %v347, %v315
      %v444 = vpack.c.b16 %v348, %v316
      %v445 = vpack.c.b16 %v349, %v317
      %v446 = vpack.c.b16 %v350, %v318
      %v447 = vpack.c.b16 %v351, %v319
      %v448 = vpack.c.b16 %v352, %v320
      %v449 = vpack.c.b16 %v353, %v321
      %v450 = vpack.c.b16 %v354, %v322
      %v451 = vpack.c.b16 %v355, %v323
      %v452 = vpack.c.b16 %v356, %v324
      %v453 = vpack.c.b16 %v357, %v325
      %v454 = vpack.c.b16 %v358, %v326
      %v455 = vpack.c.b16 %v359, %v327
      %v456 = vpack.c.b16 %v360, %v328
      %v457 = vpack.c.b16 %v361, %v329
      %v458 = vpack.c.b16 %v362, %v330
      %v459 = vpack.c.b16 %v363, %v331
      %v460 = vpack.c.b16 %v364, %v332
      %v461 = vpack.c.b16 %v365, %v333
      %v462 = vpack.c.b16 %v366, %v334
      %v463 = vpack.c.b16 %v367, %v335
      %v464 = vpack.c.b16 %v368, %v336
      %v465 = vpack.c.b16 %v369, %v337
      %v466 = vpack.c.b16 %v370, %v338
      %v467 = vpack.c.b16 %v403, %v371
      %v468 = vpack.c.b16 %v404, %v372
      %v469 = vpack.c.b16 %v405, %v373
      %v470 = vpack.c.b16 %v406, %v374
      %v471 = vpack.c.b16 %v407, %v375
      %v472 = vpack.c.b16 %v408, %v376
      %v473 = vpack.c.b16 %v409, %v377
      %v474 = vpack.c.b16 %v410, %v378
      %v475 = vpack.c.b16 %v411, %v379
      %v476 = vpack.c.b16 %v412, %v380
      %v477 = vpack.c.b16 %v413, %v381
      %v478 = vpack.c.b16 %v414, %v382
      %v479 = vpack.c.b16 %v415, %v383
      %v480 = vpack.c.b16 %v416, %v384
      %v481 = vpack.c.b16 %v417, %v385
      %v482 = vpack.c.b16 %v418, %v386
      %v483 = vpack.c.b16 %v419, %v387
      %v484 = vpack.c.b16 %v420, %v388
      %v485 = vpack.c.b16 %v421, %v389
      %v486 = vpack.c.b16 %v422, %v390
      %v487 = vpack.c.b16 %v423, %v391
      %v488 = vpack.c.b16 %v424, %v392
      %v489 = vpack.c.b16 %v425, %v393
      %v490 = vpack.c.b16 %v426, %v394
      %v491 = vpack.c.b16 %v427, %v395
      %v492 = vpack.c.b16 %v428, %v396
      %v493 = vpack.c.b16 %v429, %v397
      %v494 = vpack.c.b16 %v430, %v398
      %v495 = vpack.c.b16 %v431, %v399
      %v496 = vpack.c.b16 %v432, %v400
      %v497 = vpack.c.b16 %v433, %v401
      %v498 = vpack.c.b16 %v434, %v402
      %vm563 = vcmask 261120
      %v565 = vsel %vm563, %v172, 0
      %567 = vmatprep.subr.bf16.mxu0 %v436
      %568 = vmatpush1.bf16.msra.mxu0 %v435
      %569 = vmatprep.subr.bf16.mxu0 %v468
      %570 = vmatpush1.bf16.msra.mxu0 %v467
      %571 = vmatprep.subr.bf16.mxu0 0
      %572 = vmatpush1.bf16.msra.mxu0 0
      %573 = vmatprep.subr.bf16.mxu0 0
      %574 = vmatpush1.bf16.msra.mxu0 0
      %575 = vmatprep.subr.bf16.mxu0 0
      %576 = vmatpush1.bf16.msra.mxu0 0
      %577 = vmatprep.subr.bf16.mxu0 0
      %578 = vmatpush1.bf16.msra.mxu0 0
      %579 = vmatprep.subr.bf16.mxu0 0
      %580 = vmatpush1.bf16.msra.mxu0 0
      %581 = vmatprep.subr.bf16.mxu0 0
      %582 = vmatpush1.bf16.msra.mxu0 0
      %583 = vmatprep.subr.bf16.mxu0 0
      %584 = vmatpush1.bf16.msra.mxu0 0
      %585 = vmatprep.subr.bf16.mxu0 0
      %586 = vmatpush1.bf16.msra.mxu0 0
      %587 = vmatprep.subr.bf16.mxu0 0
      %588 = vmatpush1.bf16.msra.mxu0 0
      %589 = vmatprep.subr.bf16.mxu0 0
      %590 = vmatpush1.bf16.msra.mxu0 0
      %591 = vmatprep.subr.bf16.mxu0 0
      %592 = vmatpush1.bf16.msra.mxu0 0
      %593 = vmatprep.subr.bf16.mxu0 0
      %594 = vmatpush1.bf16.msra.mxu0 0
      %595 = vmatprep.subr.bf16.mxu0 0
      %596 = vmatpush1.bf16.msra.mxu0 0
      %597 = vmatprep.subr.bf16.mxu0 0
      %598 = vmatpush1.bf16.msra.mxu0 0
      %599 = vmatprep.mubr.bf16.mxu0 0
      %600 = vmatmul.mubr.bf16.gmra.mrb[0].mxu0 %v565
      %v601 = vpop.f32.mrb[0].mxu0
      %v602 = vadd.f32 %v241, %v601
      %v603 = vpop.f32.mrb[0].mxu0
      %v604 = vadd.f32 %v241, %v603
      %v605 = vpop.f32.mrb[0].mxu0
      %v606 = vpop.f32.mrb[0].mxu0
      %607 = vdwg.mxu0
      %608 = vmatprep.subr.bf16.mxu0 %v438
      %609 = vmatpush1.bf16.msra.mxu0 %v437
      %610 = vmatprep.subr.bf16.mxu0 %v470
      %611 = vmatpush1.bf16.msra.mxu0 %v469
      %612 = vmatprep.subr.bf16.mxu0 0
      %613 = vmatpush1.bf16.msra.mxu0 0
      %614 = vmatprep.subr.bf16.mxu0 0
      %615 = vmatpush1.bf16.msra.mxu0 0
      %616 = vmatprep.subr.bf16.mxu0 0
      %617 = vmatpush1.bf16.msra.mxu0 0
      %618 = vmatprep.subr.bf16.mxu0 0
      %619 = vmatpush1.bf16.msra.mxu0 0
      %620 = vmatprep.subr.bf16.mxu0 0
      %621 = vmatpush1.bf16.msra.mxu0 0
      %622 = vmatprep.subr.bf16.mxu0 0
      %623 = vmatpush1.bf16.msra.mxu0 0
      %624 = vmatprep.subr.bf16.mxu0 0
      %625 = vmatpush1.bf16.msra.mxu0 0
      %626 = vmatprep.subr.bf16.mxu0 0
      %627 = vmatpush1.bf16.msra.mxu0 0
      %628 = vmatprep.subr.bf16.mxu0 0
      %629 = vmatpush1.bf16.msra.mxu0 0
      %630 = vmatprep.subr.bf16.mxu0 0
      %631 = vmatpush1.bf16.msra.mxu0 0
      %632 = vmatprep.subr.bf16.mxu0 0
      %633 = vmatpush1.bf16.msra.mxu0 0
      %634 = vmatprep.subr.bf16.mxu0 0
      %635 = vmatpush1.bf16.msra.mxu0 0
      %636 = vmatprep.subr.bf16.mxu0 0
      %637 = vmatpush1.bf16.msra.mxu0 0
      %638 = vmatprep.subr.bf16.mxu0 0
      %639 = vmatpush1.bf16.msra.mxu0 0
      %640 = vmatprep.mubr.bf16.mxu0 0
      %641 = vmatmul.mubr.bf16.gmra.mrb[0].mxu0 %v565
      %v642 = vpop.f32.mrb[0].mxu0
      %v643 = vadd.f32 %v241, %v642
      %v644 = vpop.f32.mrb[0].mxu0
      %v645 = vadd.f32 %v241, %v644
      %v646 = vpop.f32.mrb[0].mxu0
      %v647 = vpop.f32.mrb[0].mxu0
      %648 = vdwg.mxu0
      %649 = vmatprep.subr.bf16.mxu0 %v440
      %650 = vmatpush1.bf16.msra.mxu0 %v439
      %651 = vmatprep.subr.bf16.mxu0 %v472
      %652 = vmatpush1.bf16.msra.mxu0 %v471
      %653 = vmatprep.subr.bf16.mxu0 0
      %654 = vmatpush1.bf16.msra.mxu0 0
      %655 = vmatprep.subr.bf16.mxu0 0
      %656 = vmatpush1.bf16.msra.mxu0 0
      %657 = vmatprep.subr.bf16.mxu0 0
      %658 = vmatpush1.bf16.msra.mxu0 0
      %659 = vmatprep.subr.bf16.mxu0 0
      %660 = vmatpush1.bf16.msra.mxu0 0
      %661 = vmatprep.subr.bf16.mxu0 0
      %662 = vmatpush1.bf16.msra.mxu0 0
      %663 = vmatprep.subr.bf16.mxu0 0
      %664 = vmatpush1.bf16.msra.mxu0 0
      %665 = vmatprep.subr.bf16.mxu0 0
      %666 = vmatpush1.bf16.msra.mxu0 0
      %667 = vmatprep.subr.bf16.mxu0 0
      %668 = vmatpush1.bf16.msra.mxu0 0
      %669 = vmatprep.subr.bf16.mxu0 0
      %670 = vmatpush1.bf16.msra.mxu0 0
      %671 = vmatprep.subr.bf16.mxu0 0
      %672 = vmatpush1.bf16.msra.mxu0 0
      %673 = vmatprep.subr.bf16.mxu0 0
      %674 = vmatpush1.bf16.msra.mxu0 0
      %675 = vmatprep.subr.bf16.mxu0 0
      %676 = vmatpush1.bf16.msra.mxu0 0
      %677 = vmatprep.subr.bf16.mxu0 0
      %678 = vmatpush1.bf16.msra.mxu0 0
      %679 = vmatprep.subr.bf16.mxu0 0
      %680 = vmatpush1.bf16.msra.mxu0 0
      %681 = vmatprep.mubr.bf16.mxu0 0
      %682 = vmatmul.mubr.bf16.gmra.mrb[0].mxu0 %v565
      %v683 = vpop.f32.mrb[0].mxu0
      %v684 = vadd.f32 %v241, %v683
      %v685 = vpop.f32.mrb[0].mxu0
      %v686 = vadd.f32 %v241, %v685
      %v687 = vpop.f32.mrb[0].mxu0
      %v688 = vpop.f32.mrb[0].mxu0
      %689 = vdwg.mxu0
      %690 = vmatprep.subr.bf16.mxu0 %v442
      %691 = vmatpush1.bf16.msra.mxu0 %v441
      %692 = vmatprep.subr.bf16.mxu0 %v474
      %693 = vmatpush1.bf16.msra.mxu0 %v473
      %694 = vmatprep.subr.bf16.mxu0 0
      %695 = vmatpush1.bf16.msra.mxu0 0
      %696 = vmatprep.subr.bf16.mxu0 0
      %697 = vmatpush1.bf16.msra.mxu0 0
      %698 = vmatprep.subr.bf16.mxu0 0
      %699 = vmatpush1.bf16.msra.mxu0 0
      %700 = vmatprep.subr.bf16.mxu0 0
      %701 = vmatpush1.bf16.msra.mxu0 0
      %702 = vmatprep.subr.bf16.mxu0 0
      %703 = vmatpush1.bf16.msra.mxu0 0
      %704 = vmatprep.subr.bf16.mxu0 0
      %705 = vmatpush1.bf16.msra.mxu0 0
      %706 = vmatprep.subr.bf16.mxu0 0
      %707 = vmatpush1.bf16.msra.mxu0 0
      %708 = vmatprep.subr.bf16.mxu0 0
      %709 = vmatpush1.bf16.msra.mxu0 0
      %710 = vmatprep.subr.bf16.mxu0 0
      %711 = vmatpush1.bf16.msra.mxu0 0
      %712 = vmatprep.subr.bf16.mxu0 0
      %713 = vmatpush1.bf16.msra.mxu0 0
      %714 = vmatprep.subr.bf16.mxu0 0
      %715 = vmatpush1.bf16.msra.mxu0 0
      %716 = vmatprep.subr.bf16.mxu0 0
      %717 = vmatpush1.bf16.msra.mxu0 0
      %718 = vmatprep.subr.bf16.mxu0 0
      %719 = vmatpush1.bf16.msra.mxu0 0
      %720 = vmatprep.subr.bf16.mxu0 0
      %721 = vmatpush1.bf16.msra.mxu0 0
      %722 = vmatprep.mubr.bf16.mxu0 0
      %723 = vmatmul.mubr.bf16.gmra.mrb[0].mxu0 %v565
      %v724 = vpop.f32.mrb[0].mxu0
      %v725 = vadd.f32 %v241, %v724
      %v726 = vpop.f32.mrb[0].mxu0
      %v727 = vadd.f32 %v241, %v726
      %v728 = vpop.f32.mrb[0].mxu0
      %v729 = vpop.f32.mrb[0].mxu0
      %730 = vdwg.mxu0
      %731 = vmatprep.subr.bf16.mxu0 %v444
      %732 = vmatpush1.bf16.msra.mxu0 %v443
      %733 = vmatprep.subr.bf16.mxu0 %v476
      %734 = vmatpush1.bf16.msra.mxu0 %v475
      %735 = vmatprep.subr.bf16.mxu0 0
      %736 = vmatpush1.bf16.msra.mxu0 0
      %737 = vmatprep.subr.bf16.mxu0 0
      %738 = vmatpush1.bf16.msra.mxu0 0
      %739 = vmatprep.subr.bf16.mxu0 0
      %740 = vmatpush1.bf16.msra.mxu0 0
      %741 = vmatprep.subr.bf16.mxu0 0
      %742 = vmatpush1.bf16.msra.mxu0 0
      %743 = vmatprep.subr.bf16.mxu0 0
      %744 = vmatpush1.bf16.msra.mxu0 0
      %745 = vmatprep.subr.bf16.mxu0 0
      %746 = vmatpush1.bf16.msra.mxu0 0
      %747 = vmatprep.subr.bf16.mxu0 0
      %748 = vmatpush1.bf16.msra.mxu0 0
      %749 = vmatprep.subr.bf16.mxu0 0
      %750 = vmatpush1.bf16.msra.mxu0 0
      %751 = vmatprep.subr.bf16.mxu0 0
      %752 = vmatpush1.bf16.msra.mxu0 0
      %753 = vmatprep.subr.bf16.mxu0 0
      %754 = vmatpush1.bf16.msra.mxu0 0
      %755 = vmatprep.subr.bf16.mxu0 0
      %756 = vmatpush1.bf16.msra.mxu0 0
      %757 = vmatprep.subr.bf16.mxu0 0
      %758 = vmatpush1.bf16.msra.mxu0 0
      %759 = vmatprep.subr.bf16.mxu0 0
      %760 = vmatpush1.bf16.msra.mxu0 0
      %761 = vmatprep.subr.bf16.mxu0 0
      %762 = vmatpush1.bf16.msra.mxu0 0
      %763 = vmatprep.mubr.bf16.mxu0 0
      %764 = vmatmul.mubr.bf16.gmra.mrb[0].mxu0 %v565
      %v765 = vpop.f32.mrb[0].mxu0
      %v766 = vadd.f32 %v241, %v765
      %v767 = vpop.f32.mrb[0].mxu0
      %v768 = vadd.f32 %v241, %v767
      %v769 = vpop.f32.mrb[0].mxu0
      %v770 = vpop.f32.mrb[0].mxu0
      %771 = vdwg.mxu0
      %772 = vmatprep.subr.bf16.mxu0 %v446
      %773 = vmatpush1.bf16.msra.mxu0 %v445
      %774 = vmatprep.subr.bf16.mxu0 %v478
      %775 = vmatpush1.bf16.msra.mxu0 %v477
      %776 = vmatprep.subr.bf16.mxu0 0
      %777 = vmatpush1.bf16.msra.mxu0 0
      %778 = vmatprep.subr.bf16.mxu0 0
      %779 = vmatpush1.bf16.msra.mxu0 0
      %780 = vmatprep.subr.bf16.mxu0 0
      %781 = vmatpush1.bf16.msra.mxu0 0
      %782 = vmatprep.subr.bf16.mxu0 0
      %783 = vmatpush1.bf16.msra.mxu0 0
      %784 = vmatprep.subr.bf16.mxu0 0
      %785 = vmatpush1.bf16.msra.mxu0 0
      %786 = vmatprep.subr.bf16.mxu0 0
      %787 = vmatpush1.bf16.msra.mxu0 0
      %788 = vmatprep.subr.bf16.mxu0 0
      %789 = vmatpush1.bf16.msra.mxu0 0
      %790 = vmatprep.subr.bf16.mxu0 0
      %791 = vmatpush1.bf16.msra.mxu0 0
      %792 = vmatprep.subr.bf16.mxu0 0
      %793 = vmatpush1.bf16.msra.mxu0 0
      %794 = vmatprep.subr.bf16.mxu0 0
      %795 = vmatpush1.bf16.msra.mxu0 0
      %796 = vmatprep.subr.bf16.mxu0 0
      %797 = vmatpush1.bf16.msra.mxu0 0
      %798 = vmatprep.subr.bf16.mxu0 0
      %799 = vmatpush1.bf16.msra.mxu0 0
      %800 = vmatprep.subr.bf16.mxu0 0
      %801 = vmatpush1.bf16.msra.mxu0 0
      %802 = vmatprep.subr.bf16.mxu0 0
      %803 = vmatpush1.bf16.msra.mxu0 0
      %804 = vmatprep.mubr.bf16.mxu0 0
      %805 = vmatmul.mubr.bf16.gmra.mrb[0].mxu0 %v565
      %v806 = vpop.f32.mrb[0].mxu0
      %v807 = vadd.f32 %v241, %v806
      %v808 = vpop.f32.mrb[0].mxu0
      %v809 = vadd.f32 %v241, %v808
      %v810 = vpop.f32.mrb[0].mxu0
      %v811 = vpop.f32.mrb[0].mxu0
      %812 = vdwg.mxu0
      %813 = vmatprep.subr.bf16.mxu0 %v448
      %814 = vmatpush1.bf16.msra.mxu0 %v447
      %815 = vmatprep.subr.bf16.mxu0 %v480
      %816 = vmatpush1.bf16.msra.mxu0 %v479
      %817 = vmatprep.subr.bf16.mxu0 0
      %818 = vmatpush1.bf16.msra.mxu0 0
      %819 = vmatprep.subr.bf16.mxu0 0
      %820 = vmatpush1.bf16.msra.mxu0 0
      %821 = vmatprep.subr.bf16.mxu0 0
      %822 = vmatpush1.bf16.msra.mxu0 0
      %823 = vmatprep.subr.bf16.mxu0 0
      %824 = vmatpush1.bf16.msra.mxu0 0
      %825 = vmatprep.subr.bf16.mxu0 0
      %826 = vmatpush1.bf16.msra.mxu0 0
      %827 = vmatprep.subr.bf16.mxu0 0
      %828 = vmatpush1.bf16.msra.mxu0 0
      %829 = vmatprep.subr.bf16.mxu0 0
      %830 = vmatpush1.bf16.msra.mxu0 0
      %831 = vmatprep.subr.bf16.mxu0 0
      %832 = vmatpush1.bf16.msra.mxu0 0
      %833 = vmatprep.subr.bf16.mxu0 0
      %834 = vmatpush1.bf16.msra.mxu0 0
      %835 = vmatprep.subr.bf16.mxu0 0
      %836 = vmatpush1.bf16.msra.mxu0 0
      %837 = vmatprep.subr.bf16.mxu0 0
      %838 = vmatpush1.bf16.msra.mxu0 0
      %839 = vmatprep.subr.bf16.mxu0 0
      %840 = vmatpush1.bf16.msra.mxu0 0
      %841 = vmatprep.subr.bf16.mxu0 0
      %842 = vmatpush1.bf16.msra.mxu0 0
      %843 = vmatprep.subr.bf16.mxu0 0
      %844 = vmatpush1.bf16.msra.mxu0 0
      %845 = vmatprep.mubr.bf16.mxu0 0
      %846 = vmatmul.mubr.bf16.gmra.mrb[0].mxu0 %v565
      %v847 = vpop.f32.mrb[0].mxu0
      %v848 = vadd.f32 %v241, %v847
      %v849 = vpop.f32.mrb[0].mxu0
      %v850 = vadd.f32 %v241, %v849
      %v851 = vpop.f32.mrb[0].mxu0
      %v852 = vpop.f32.mrb[0].mxu0
      %853 = vdwg.mxu0
      %854 = vmatprep.subr.bf16.mxu0 %v450
      %855 = vmatpush1.bf16.msra.mxu0 %v449
      %856 = vmatprep.subr.bf16.mxu0 %v482
      %857 = vmatpush1.bf16.msra.mxu0 %v481
      %858 = vmatprep.subr.bf16.mxu0 0
      %859 = vmatpush1.bf16.msra.mxu0 0
      %860 = vmatprep.subr.bf16.mxu0 0
      %861 = vmatpush1.bf16.msra.mxu0 0
      %862 = vmatprep.subr.bf16.mxu0 0
      %863 = vmatpush1.bf16.msra.mxu0 0
      %864 = vmatprep.subr.bf16.mxu0 0
      %865 = vmatpush1.bf16.msra.mxu0 0
      %866 = vmatprep.subr.bf16.mxu0 0
      %867 = vmatpush1.bf16.msra.mxu0 0
      %868 = vmatprep.subr.bf16.mxu0 0
      %869 = vmatpush1.bf16.msra.mxu0 0
      %870 = vmatprep.subr.bf16.mxu0 0
      %871 = vmatpush1.bf16.msra.mxu0 0
      %872 = vmatprep.subr.bf16.mxu0 0
      %873 = vmatpush1.bf16.msra.mxu0 0
      %874 = vmatprep.subr.bf16.mxu0 0
      %875 = vmatpush1.bf16.msra.mxu0 0
      %876 = vmatprep.subr.bf16.mxu0 0
      %877 = vmatpush1.bf16.msra.mxu0 0
      %878 = vmatprep.subr.bf16.mxu0 0
      %879 = vmatpush1.bf16.msra.mxu0 0
      %880 = vmatprep.subr.bf16.mxu0 0
      %881 = vmatpush1.bf16.msra.mxu0 0
      %882 = vmatprep.subr.bf16.mxu0 0
      %883 = vmatpush1.bf16.msra.mxu0 0
      %884 = vmatprep.subr.bf16.mxu0 0
      %885 = vmatpush1.bf16.msra.mxu0 0
      %886 = vmatprep.mubr.bf16.mxu0 0
      %887 = vmatmul.mubr.bf16.gmra.mrb[0].mxu0 %v565
      %v888 = vpop.f32.mrb[0].mxu0
      %v889 = vadd.f32 %v241, %v888
      %v890 = vpop.f32.mrb[0].mxu0
      %v891 = vadd.f32 %v241, %v890
      %v892 = vpop.f32.mrb[0].mxu0
      %v893 = vpop.f32.mrb[0].mxu0
      %894 = vdwg.mxu0
      %895 = vmatprep.subr.bf16.mxu0 %v452
      %896 = vmatpush1.bf16.msra.mxu0 %v451
      %897 = vmatprep.subr.bf16.mxu0 %v484
      %898 = vmatpush1.bf16.msra.mxu0 %v483
      %899 = vmatprep.subr.bf16.mxu0 0
      %900 = vmatpush1.bf16.msra.mxu0 0
      %901 = vmatprep.subr.bf16.mxu0 0
      %902 = vmatpush1.bf16.msra.mxu0 0
      %903 = vmatprep.subr.bf16.mxu0 0
      %904 = vmatpush1.bf16.msra.mxu0 0
      %905 = vmatprep.subr.bf16.mxu0 0
      %906 = vmatpush1.bf16.msra.mxu0 0
      %907 = vmatprep.subr.bf16.mxu0 0
      %908 = vmatpush1.bf16.msra.mxu0 0
      %909 = vmatprep.subr.bf16.mxu0 0
      %910 = vmatpush1.bf16.msra.mxu0 0
      %911 = vmatprep.subr.bf16.mxu0 0
      %912 = vmatpush1.bf16.msra.mxu0 0
      %913 = vmatprep.subr.bf16.mxu0 0
      %914 = vmatpush1.bf16.msra.mxu0 0
      %915 = vmatprep.subr.bf16.mxu0 0
      %916 = vmatpush1.bf16.msra.mxu0 0
      %917 = vmatprep.subr.bf16.mxu0 0
      %918 = vmatpush1.bf16.msra.mxu0 0
      %919 = vmatprep.subr.bf16.mxu0 0
      %920 = vmatpush1.bf16.msra.mxu0 0
      %921 = vmatprep.subr.bf16.mxu0 0
      %922 = vmatpush1.bf16.msra.mxu0 0
      %923 = vmatprep.subr.bf16.mxu0 0
      %924 = vmatpush1.bf16.msra.mxu0 0
      %925 = vmatprep.subr.bf16.mxu0 0
      %926 = vmatpush1.bf16.msra.mxu0 0
      %927 = vmatprep.mubr.bf16.mxu0 0
      %928 = vmatmul.mubr.bf16.gmra.mrb[0].mxu0 %v565
      %v929 = vpop.f32.mrb[0].mxu0
      %v930 = vadd.f32 %v241, %v929
      %v931 = vpop.f32.mrb[0].mxu0
      %v932 = vadd.f32 %v241, %v931
      %v933 = vpop.f32.mrb[0].mxu0
      %v934 = vpop.f32.mrb[0].mxu0
      %935 = vdwg.mxu0
      %936 = vmatprep.subr.bf16.mxu0 %v454
      %937 = vmatpush1.bf16.msra.mxu0 %v453
      %938 = vmatprep.subr.bf16.mxu0 %v486
      %939 = vmatpush1.bf16.msra.mxu0 %v485
      %940 = vmatprep.subr.bf16.mxu0 0
      %941 = vmatpush1.bf16.msra.mxu0 0
      %942 = vmatprep.subr.bf16.mxu0 0
      %943 = vmatpush1.bf16.msra.mxu0 0
      %944 = vmatprep.subr.bf16.mxu0 0
      %945 = vmatpush1.bf16.msra.mxu0 0
      %946 = vmatprep.subr.bf16.mxu0 0
      %947 = vmatpush1.bf16.msra.mxu0 0
      %948 = vmatprep.subr.bf16.mxu0 0
      %949 = vmatpush1.bf16.msra.mxu0 0
      %950 = vmatprep.subr.bf16.mxu0 0
      %951 = vmatpush1.bf16.msra.mxu0 0
      %952 = vmatprep.subr.bf16.mxu0 0
      %953 = vmatpush1.bf16.msra.mxu0 0
      %954 = vmatprep.subr.bf16.mxu0 0
      %955 = vmatpush1.bf16.msra.mxu0 0
      %956 = vmatprep.subr.bf16.mxu0 0
      %957 = vmatpush1.bf16.msra.mxu0 0
      %958 = vmatprep.subr.bf16.mxu0 0
      %959 = vmatpush1.bf16.msra.mxu0 0
      %960 = vmatprep.subr.bf16.mxu0 0
      %961 = vmatpush1.bf16.msra.mxu0 0
      %962 = vmatprep.subr.bf16.mxu0 0
      %963 = vmatpush1.bf16.msra.mxu0 0
      %964 = vmatprep.subr.bf16.mxu0 0
      %965 = vmatpush1.bf16.msra.mxu0 0
      %966 = vmatprep.subr.bf16.mxu0 0
      %967 = vmatpush1.bf16.msra.mxu0 0
      %968 = vmatprep.mubr.bf16.mxu0 0
      %969 = vmatmul.mubr.bf16.gmra.mrb[0].mxu0 %v565
      %v970 = vpop.f32.mrb[0].mxu0
      %v971 = vadd.f32 %v241, %v970
      %v972 = vpop.f32.mrb[0].mxu0
      %v973 = vadd.f32 %v241, %v972
      %v974 = vpop.f32.mrb[0].mxu0
      %v975 = vpop.f32.mrb[0].mxu0
      %976 = vdwg.mxu0
      %977 = vmatprep.subr.bf16.mxu0 %v456
      %978 = vmatpush1.bf16.msra.mxu0 %v455
      %979 = vmatprep.subr.bf16.mxu0 %v488
      %980 = vmatpush1.bf16.msra.mxu0 %v487
      %981 = vmatprep.subr.bf16.mxu0 0
      %982 = vmatpush1.bf16.msra.mxu0 0
      %983 = vmatprep.subr.bf16.mxu0 0
      %984 = vmatpush1.bf16.msra.mxu0 0
      %985 = vmatprep.subr.bf16.mxu0 0
      %986 = vmatpush1.bf16.msra.mxu0 0
      %987 = vmatprep.subr.bf16.mxu0 0
      %988 = vmatpush1.bf16.msra.mxu0 0
      %989 = vmatprep.subr.bf16.mxu0 0
      %990 = vmatpush1.bf16.msra.mxu0 0
      %991 = vmatprep.subr.bf16.mxu0 0
      %992 = vmatpush1.bf16.msra.mxu0 0
      %993 = vmatprep.subr.bf16.mxu0 0
      %994 = vmatpush1.bf16.msra.mxu0 0
      %995 = vmatprep.subr.bf16.mxu0 0
      %996 = vmatpush1.bf16.msra.mxu0 0
      %997 = vmatprep.subr.bf16.mxu0 0
      %998 = vmatpush1.bf16.msra.mxu0 0
      %999 = vmatprep.subr.bf16.mxu0 0
      %1000 = vmatpush1.bf16.msra.mxu0 0
      %1001 = vmatprep.subr.bf16.mxu0 0
      %1002 = vmatpush1.bf16.msra.mxu0 0
      %1003 = vmatprep.subr.bf16.mxu0 0
      %1004 = vmatpush1.bf16.msra.mxu0 0
      %1005 = vmatprep.subr.bf16.mxu0 0
      %1006 = vmatpush1.bf16.msra.mxu0 0
      %1007 = vmatprep.subr.bf16.mxu0 0
      %1008 = vmatpush1.bf16.msra.mxu0 0
      %1009 = vmatprep.mubr.bf16.mxu0 0
      %1010 = vmatmul.mubr.bf16.gmra.mrb[0].mxu0 %v565
      %v1011 = vpop.f32.mrb[0].mxu0
      %v1012 = vadd.f32 %v241, %v1011
      %v1013 = vpop.f32.mrb[0].mxu0
      %v1014 = vadd.f32 %v241, %v1013
      %v1015 = vpop.f32.mrb[0].mxu0
      %v1016 = vpop.f32.mrb[0].mxu0
      %1017 = vdwg.mxu0
      %1018 = vmatprep.subr.bf16.mxu0 %v458
      %1019 = vmatpush1.bf16.msra.mxu0 %v457
      %1020 = vmatprep.subr.bf16.mxu0 %v490
      %1021 = vmatpush1.bf16.msra.mxu0 %v489
      %1022 = vmatprep.subr.bf16.mxu0 0
      %1023 = vmatpush1.bf16.msra.mxu0 0
      %1024 = vmatprep.subr.bf16.mxu0 0
      %1025 = vmatpush1.bf16.msra.mxu0 0
      %1026 = vmatprep.subr.bf16.mxu0 0
      %1027 = vmatpush1.bf16.msra.mxu0 0
      %1028 = vmatprep.subr.bf16.mxu0 0
      %1029 = vmatpush1.bf16.msra.mxu0 0
      %1030 = vmatprep.subr.bf16.mxu0 0
      %1031 = vmatpush1.bf16.msra.mxu0 0
      %1032 = vmatprep.subr.bf16.mxu0 0
      %1033 = vmatpush1.bf16.msra.mxu0 0
      %1034 = vmatprep.subr.bf16.mxu0 0
      %1035 = vmatpush1.bf16.msra.mxu0 0
      %1036 = vmatprep.subr.bf16.mxu0 0
      %1037 = vmatpush1.bf16.msra.mxu0 0
      %1038 = vmatprep.subr.bf16.mxu0 0
      %1039 = vmatpush1.bf16.msra.mxu0 0
      %1040 = vmatprep.subr.bf16.mxu0 0
      %1041 = vmatpush1.bf16.msra.mxu0 0
      %1042 = vmatprep.subr.bf16.mxu0 0
      %1043 = vmatpush1.bf16.msra.mxu0 0
      %1044 = vmatprep.subr.bf16.mxu0 0
      %1045 = vmatpush1.bf16.msra.mxu0 0
      %1046 = vmatprep.subr.bf16.mxu0 0
      %1047 = vmatpush1.bf16.msra.mxu0 0
      %1048 = vmatprep.subr.bf16.mxu0 0
      %1049 = vmatpush1.bf16.msra.mxu0 0
      %1050 = vmatprep.mubr.bf16.mxu0 0
      %1051 = vmatmul.mubr.bf16.gmra.mrb[0].mxu0 %v565
      %v1052 = vpop.f32.mrb[0].mxu0
      %v1053 = vadd.f32 %v241, %v1052
      %v1054 = vpop.f32.mrb[0].mxu0
      %v1055 = vadd.f32 %v241, %v1054
      %v1056 = vpop.f32.mrb[0].mxu0
      %v1057 = vpop.f32.mrb[0].mxu0
      %1058 = vdwg.mxu0
      %1059 = vmatprep.subr.bf16.mxu0 %v460
      %1060 = vmatpush1.bf16.msra.mxu0 %v459
      %1061 = vmatprep.subr.bf16.mxu0 %v492
      %1062 = vmatpush1.bf16.msra.mxu0 %v491
      %1063 = vmatprep.subr.bf16.mxu0 0
      %1064 = vmatpush1.bf16.msra.mxu0 0
      %1065 = vmatprep.subr.bf16.mxu0 0
      %1066 = vmatpush1.bf16.msra.mxu0 0
      %1067 = vmatprep.subr.bf16.mxu0 0
      %1068 = vmatpush1.bf16.msra.mxu0 0
      %1069 = vmatprep.subr.bf16.mxu0 0
      %1070 = vmatpush1.bf16.msra.mxu0 0
      %1071 = vmatprep.subr.bf16.mxu0 0
      %1072 = vmatpush1.bf16.msra.mxu0 0
      %1073 = vmatprep.subr.bf16.mxu0 0
      %1074 = vmatpush1.bf16.msra.mxu0 0
      %1075 = vmatprep.subr.bf16.mxu0 0
      %1076 = vmatpush1.bf16.msra.mxu0 0
      %1077 = vmatprep.subr.bf16.mxu0 0
      %1078 = vmatpush1.bf16.msra.mxu0 0
      %1079 = vmatprep.subr.bf16.mxu0 0
      %1080 = vmatpush1.bf16.msra.mxu0 0
      %1081 = vmatprep.subr.bf16.mxu0 0
      %1082 = vmatpush1.bf16.msra.mxu0 0
      %1083 = vmatprep.subr.bf16.mxu0 0
      %1084 = vmatpush1.bf16.msra.mxu0 0
      %1085 = vmatprep.subr.bf16.mxu0 0
      %1086 = vmatpush1.bf16.msra.mxu0 0
      %1087 = vmatprep.subr.bf16.mxu0 0
      %1088 = vmatpush1.bf16.msra.mxu0 0
      %1089 = vmatprep.subr.bf16.mxu0 0
      %1090 = vmatpush1.bf16.msra.mxu0 0
      %1091 = vmatprep.mubr.bf16.mxu0 0
      %1092 = vmatmul.mubr.bf16.gmra.mrb[0].mxu0 %v565
      %v1093 = vpop.f32.mrb[0].mxu0
      %v1094 = vadd.f32 %v241, %v1093
      %v1095 = vpop.f32.mrb[0].mxu0
      %v1096 = vadd.f32 %v241, %v1095
      %v1097 = vpop.f32.mrb[0].mxu0
      %v1098 = vpop.f32.mrb[0].mxu0
      %1099 = vdwg.mxu0
      %1100 = vmatprep.subr.bf16.mxu0 %v462
      %1101 = vmatpush1.bf16.msra.mxu0 %v461
      %1102 = vmatprep.subr.bf16.mxu0 %v494
      %1103 = vmatpush1.bf16.msra.mxu0 %v493
      %1104 = vmatprep.subr.bf16.mxu0 0
      %1105 = vmatpush1.bf16.msra.mxu0 0
      %1106 = vmatprep.subr.bf16.mxu0 0
      %1107 = vmatpush1.bf16.msra.mxu0 0
      %1108 = vmatprep.subr.bf16.mxu0 0
      %1109 = vmatpush1.bf16.msra.mxu0 0
      %1110 = vmatprep.subr.bf16.mxu0 0
      %1111 = vmatpush1.bf16.msra.mxu0 0
      %1112 = vmatprep.subr.bf16.mxu0 0
      %1113 = vmatpush1.bf16.msra.mxu0 0
      %1114 = vmatprep.subr.bf16.mxu0 0
      %1115 = vmatpush1.bf16.msra.mxu0 0
      %1116 = vmatprep.subr.bf16.mxu0 0
      %1117 = vmatpush1.bf16.msra.mxu0 0
      %1118 = vmatprep.subr.bf16.mxu0 0
      %1119 = vmatpush1.bf16.msra.mxu0 0
      %1120 = vmatprep.subr.bf16.mxu0 0
      %1121 = vmatpush1.bf16.msra.mxu0 0
      %1122 = vmatprep.subr.bf16.mxu0 0
      %1123 = vmatpush1.bf16.msra.mxu0 0
      %1124 = vmatprep.subr.bf16.mxu0 0
      %1125 = vmatpush1.bf16.msra.mxu0 0
      %1126 = vmatprep.subr.bf16.mxu0 0
      %1127 = vmatpush1.bf16.msra.mxu0 0
      %1128 = vmatprep.subr.bf16.mxu0 0
      %1129 = vmatpush1.bf16.msra.mxu0 0
      %1130 = vmatprep.subr.bf16.mxu0 0
      %1131 = vmatpush1.bf16.msra.mxu0 0
      %1132 = vmatprep.mubr.bf16.mxu0 0
      %1133 = vmatmul.mubr.bf16.gmra.mrb[0].mxu0 %v565
      %v1134 = vpop.f32.mrb[0].mxu0
      %v1135 = vadd.f32 %v241, %v1134
      %v1136 = vpop.f32.mrb[0].mxu0
      %v1137 = vadd.f32 %v241, %v1136
      %v1138 = vpop.f32.mrb[0].mxu0
      %v1139 = vpop.f32.mrb[0].mxu0
      %1140 = vdwg.mxu0
      %1141 = vmatprep.subr.bf16.mxu0 %v464
      %1142 = vmatpush1.bf16.msra.mxu0 %v463
      %1143 = vmatprep.subr.bf16.mxu0 %v496
      %1144 = vmatpush1.bf16.msra.mxu0 %v495
      %1145 = vmatprep.subr.bf16.mxu0 0
      %1146 = vmatpush1.bf16.msra.mxu0 0
      %1147 = vmatprep.subr.bf16.mxu0 0
      %1148 = vmatpush1.bf16.msra.mxu0 0
      %1149 = vmatprep.subr.bf16.mxu0 0
      %1150 = vmatpush1.bf16.msra.mxu0 0
      %1151 = vmatprep.subr.bf16.mxu0 0
      %1152 = vmatpush1.bf16.msra.mxu0 0
      %1153 = vmatprep.subr.bf16.mxu0 0
      %1154 = vmatpush1.bf16.msra.mxu0 0
      %1155 = vmatprep.subr.bf16.mxu0 0
      %1156 = vmatpush1.bf16.msra.mxu0 0
      %1157 = vmatprep.subr.bf16.mxu0 0
      %1158 = vmatpush1.bf16.msra.mxu0 0
      %1159 = vmatprep.subr.bf16.mxu0 0
      %1160 = vmatpush1.bf16.msra.mxu0 0
      %1161 = vmatprep.subr.bf16.mxu0 0
      %1162 = vmatpush1.bf16.msra.mxu0 0
      %1163 = vmatprep.subr.bf16.mxu0 0
      %1164 = vmatpush1.bf16.msra.mxu0 0
      %1165 = vmatprep.subr.bf16.mxu0 0
      %1166 = vmatpush1.bf16.msra.mxu0 0
      %1167 = vmatprep.subr.bf16.mxu0 0
      %1168 = vmatpush1.bf16.msra.mxu0 0
      %1169 = vmatprep.subr.bf16.mxu0 0
      %1170 = vmatpush1.bf16.msra.mxu0 0
      %1171 = vmatprep.subr.bf16.mxu0 0
      %1172 = vmatpush1.bf16.msra.mxu0 0
      %1173 = vmatprep.mubr.bf16.mxu0 0
      %1174 = vmatmul.mubr.bf16.gmra.mrb[0].mxu0 %v565
      %v1175 = vpop.f32.mrb[0].mxu0
      %v1176 = vadd.f32 %v241, %v1175
      %v1177 = vpop.f32.mrb[0].mxu0
      %v1178 = vadd.f32 %v241, %v1177
      %v1179 = vpop.f32.mrb[0].mxu0
      %v1180 = vpop.f32.mrb[0].mxu0
      %1181 = vdwg.mxu0
      %1182 = vmatprep.subr.bf16.mxu0 %v466
      %1183 = vmatpush1.bf16.msra.mxu0 %v465
      %1184 = vmatprep.subr.bf16.mxu0 %v498
      %1185 = vmatpush1.bf16.msra.mxu0 %v497
      %1186 = vmatprep.subr.bf16.mxu0 0
      %1187 = vmatpush1.bf16.msra.mxu0 0
      %1188 = vmatprep.subr.bf16.mxu0 0
      %1189 = vmatpush1.bf16.msra.mxu0 0
      %1190 = vmatprep.subr.bf16.mxu0 0
      %1191 = vmatpush1.bf16.msra.mxu0 0
      %1192 = vmatprep.subr.bf16.mxu0 0
      %1193 = vmatpush1.bf16.msra.mxu0 0
      %1194 = vmatprep.subr.bf16.mxu0 0
      %1195 = vmatpush1.bf16.msra.mxu0 0
      %1196 = vmatprep.subr.bf16.mxu0 0
      %1197 = vmatpush1.bf16.msra.mxu0 0
      %1198 = vmatprep.subr.bf16.mxu0 0
      %1199 = vmatpush1.bf16.msra.mxu0 0
      %1200 = vmatprep.subr.bf16.mxu0 0
      %1201 = vmatpush1.bf16.msra.mxu0 0
      %1202 = vmatprep.subr.bf16.mxu0 0
      %1203 = vmatpush1.bf16.msra.mxu0 0
      %1204 = vmatprep.subr.bf16.mxu0 0
      %1205 = vmatpush1.bf16.msra.mxu0 0
      %1206 = vmatprep.subr.bf16.mxu0 0
      %1207 = vmatpush1.bf16.msra.mxu0 0
      %1208 = vmatprep.subr.bf16.mxu0 0
      %1209 = vmatpush1.bf16.msra.mxu0 0
      %1210 = vmatprep.subr.bf16.mxu0 0
      %1211 = vmatpush1.bf16.msra.mxu0 0
      %1212 = vmatprep.subr.bf16.mxu0 0
      %1213 = vmatpush1.bf16.msra.mxu0 0
      %1214 = vmatprep.mubr.bf16.mxu0 0
      %1215 = vmatmul.mubr.bf16.gmra.mrb[0].mxu0 %v565
      %v1216 = vpop.f32.mrb[0].mxu0
      %v1217 = vadd.f32 %v241, %v1216
      %v1218 = vpop.f32.mrb[0].mxu0
      %v1219 = vadd.f32 %v241, %v1218
      %v1220 = vpop.f32.mrb[0].mxu0
      %v1221 = vpop.f32.mrb[0].mxu0
      %1222 = vdwg.mxu0
      %v1223 = vxor.u32 %v602, 2147483648
      %v1224 = vxor.u32 %v604, 2147483648
      %v1225 = vxor.u32 %v643, 2147483648
      %v1226 = vxor.u32 %v645, 2147483648
      %v1227 = vxor.u32 %v684, 2147483648
      %v1228 = vxor.u32 %v686, 2147483648
      %v1229 = vxor.u32 %v725, 2147483648
      %v1230 = vxor.u32 %v727, 2147483648
      %v1231 = vxor.u32 %v766, 2147483648
      %v1232 = vxor.u32 %v768, 2147483648
      %v1233 = vxor.u32 %v807, 2147483648
      %v1234 = vxor.u32 %v809, 2147483648
      %v1235 = vxor.u32 %v848, 2147483648
      %v1236 = vxor.u32 %v850, 2147483648
      %v1237 = vxor.u32 %v889, 2147483648
      %v1238 = vxor.u32 %v891, 2147483648
      %v1239 = vxor.u32 %v930, 2147483648
      %v1240 = vxor.u32 %v932, 2147483648
      %v1241 = vxor.u32 %v971, 2147483648
      %v1242 = vxor.u32 %v973, 2147483648
      %v1243 = vxor.u32 %v1012, 2147483648
      %v1244 = vxor.u32 %v1014, 2147483648
      %v1245 = vxor.u32 %v1053, 2147483648
      %v1246 = vxor.u32 %v1055, 2147483648
      %v1247 = vxor.u32 %v1094, 2147483648
      %v1248 = vxor.u32 %v1096, 2147483648
      %v1249 = vxor.u32 %v1135, 2147483648
      %v1250 = vxor.u32 %v1137, 2147483648
      %v1251 = vxor.u32 %v1176, 2147483648
      %v1252 = vxor.u32 %v1178, 2147483648
      %v1253 = vxor.u32 %v1217, 2147483648
      %v1254 = vxor.u32 %v1219, 2147483648
      %v1255 = vmul.f32 %v1223, 1.442695
      %v1256 = vpow.pop %v1255
      %v1257 = vmul.f32 %v1224, 1.442695
      %v1258 = vpow.pop %v1257
      %v1259 = vmul.f32 %v1225, 1.442695
      %v1260 = vpow.pop %v1259
      %v1261 = vmul.f32 %v1226, 1.442695
      %v1262 = vpow.pop %v1261
      %v1263 = vmul.f32 %v1227, 1.442695
      %v1264 = vpow.pop %v1263
      %v1265 = vmul.f32 %v1228, 1.442695
      %v1266 = vpow.pop %v1265
      %v1267 = vmul.f32 %v1229, 1.442695
      %v1268 = vpow.pop %v1267
      %v1269 = vmul.f32 %v1230, 1.442695
      %v1270 = vpow.pop %v1269
      %v1271 = vmul.f32 %v1231, 1.442695
      %v1272 = vpow.pop %v1271
      %v1273 = vmul.f32 %v1232, 1.442695
      %v1274 = vpow.pop %v1273
      %v1275 = vmul.f32 %v1233, 1.442695
      %v1276 = vpow.pop %v1275
      %v1277 = vmul.f32 %v1234, 1.442695
      %v1278 = vpow.pop %v1277
      %v1279 = vmul.f32 %v1235, 1.442695
      %v1280 = vpow.pop %v1279
      %v1281 = vmul.f32 %v1236, 1.442695
      %v1282 = vpow.pop %v1281
      %v1283 = vmul.f32 %v1237, 1.442695
      %v1284 = vpow.pop %v1283
      %v1285 = vmul.f32 %v1238, 1.442695
      %v1286 = vpow.pop %v1285
      %v1287 = vmul.f32 %v1239, 1.442695
      %v1288 = vpow.pop %v1287
      %v1289 = vmul.f32 %v1240, 1.442695
      %v1290 = vpow.pop %v1289
      %v1291 = vmul.f32 %v1241, 1.442695
      %v1292 = vpow.pop %v1291
      %v1293 = vmul.f32 %v1242, 1.442695
      %v1294 = vpow.pop %v1293
      %v1295 = vmul.f32 %v1243, 1.442695
      %v1296 = vpow.pop %v1295
      %v1297 = vmul.f32 %v1244, 1.442695
      %v1298 = vpow.pop %v1297
      %v1299 = vmul.f32 %v1245, 1.442695
      %v1300 = vpow.pop %v1299
      %v1301 = vmul.f32 %v1246, 1.442695
      %v1302 = vpow.pop %v1301
      %v1303 = vmul.f32 %v1247, 1.442695
      %v1304 = vpow.pop %v1303
      %v1305 = vmul.f32 %v1248, 1.442695
      %v1306 = vpow.pop %v1305
      %v1307 = vmul.f32 %v1249, 1.442695
      %v1308 = vpow.pop %v1307
      %v1309 = vmul.f32 %v1250, 1.442695
      %v1310 = vpow.pop %v1309
      %v1311 = vmul.f32 %v1251, 1.442695
      %v1312 = vpow.pop %v1311
      %v1313 = vmul.f32 %v1252, 1.442695
      %v1314 = vpow.pop %v1313
      %v1315 = vmul.f32 %v1253, 1.442695
      %v1316 = vpow.pop %v1315
      %v1317 = vmul.f32 %v1254, 1.442695
      %v1318 = vpow.pop %v1317
      %v1319 = vadd.f32 %v1256, 1.0
      %v1320 = vadd.f32 %v1258, 1.0
      %v1321 = vadd.f32 %v1260, 1.0
      %v1322 = vadd.f32 %v1262, 1.0
      %v1323 = vadd.f32 %v1264, 1.0
      %v1324 = vadd.f32 %v1266, 1.0
      %v1325 = vadd.f32 %v1268, 1.0
      %v1326 = vadd.f32 %v1270, 1.0
      %v1327 = vadd.f32 %v1272, 1.0
      %v1328 = vadd.f32 %v1274, 1.0
      %v1329 = vadd.f32 %v1276, 1.0
      %v1330 = vadd.f32 %v1278, 1.0
      %v1331 = vadd.f32 %v1280, 1.0
      %v1332 = vadd.f32 %v1282, 1.0
      %v1333 = vadd.f32 %v1284, 1.0
      %v1334 = vadd.f32 %v1286, 1.0
      %v1335 = vadd.f32 %v1288, 1.0
      %v1336 = vadd.f32 %v1290, 1.0
      %v1337 = vadd.f32 %v1292, 1.0
      %v1338 = vadd.f32 %v1294, 1.0
      %v1339 = vadd.f32 %v1296, 1.0
      %v1340 = vadd.f32 %v1298, 1.0
      %v1341 = vadd.f32 %v1300, 1.0
      %v1342 = vadd.f32 %v1302, 1.0
      %v1343 = vadd.f32 %v1304, 1.0
      %v1344 = vadd.f32 %v1306, 1.0
      %v1345 = vadd.f32 %v1308, 1.0
      %v1346 = vadd.f32 %v1310, 1.0
      %v1347 = vadd.f32 %v1312, 1.0
      %v1348 = vadd.f32 %v1314, 1.0
      %v1349 = vadd.f32 %v1316, 1.0
      %v1350 = vadd.f32 %v1318, 1.0
      %v1351 = vrcp.pop %v1319
      %v1352 = vmul.f32 1.0, %v1351
      %v1353 = vrcp.pop %v1320
      %v1354 = vmul.f32 1.0, %v1353
      %v1355 = vrcp.pop %v1321
      %v1356 = vmul.f32 1.0, %v1355
      %v1357 = vrcp.pop %v1322
      %v1358 = vmul.f32 1.0, %v1357
      %v1359 = vrcp.pop %v1323
      %v1360 = vmul.f32 1.0, %v1359
      %v1361 = vrcp.pop %v1324
      %v1362 = vmul.f32 1.0, %v1361
      %v1363 = vrcp.pop %v1325
      %v1364 = vmul.f32 1.0, %v1363
      %v1365 = vrcp.pop %v1326
      %v1366 = vmul.f32 1.0, %v1365
      %v1367 = vrcp.pop %v1327
      %v1368 = vmul.f32 1.0, %v1367
      %v1369 = vrcp.pop %v1328
      %v1370 = vmul.f32 1.0, %v1369
      %v1371 = vrcp.pop %v1329
      %v1372 = vmul.f32 1.0, %v1371
      %v1373 = vrcp.pop %v1330
      %v1374 = vmul.f32 1.0, %v1373
      %v1375 = vrcp.pop %v1331
      %v1376 = vmul.f32 1.0, %v1375
      %v1377 = vrcp.pop %v1332
      %v1378 = vmul.f32 1.0, %v1377
      %v1379 = vrcp.pop %v1333
      %v1380 = vmul.f32 1.0, %v1379
      %v1381 = vrcp.pop %v1334
      %v1382 = vmul.f32 1.0, %v1381
      %v1383 = vrcp.pop %v1335
      %v1384 = vmul.f32 1.0, %v1383
      %v1385 = vrcp.pop %v1336
      %v1386 = vmul.f32 1.0, %v1385
      %v1387 = vrcp.pop %v1337
      %v1388 = vmul.f32 1.0, %v1387
      %v1389 = vrcp.pop %v1338
      %v1390 = vmul.f32 1.0, %v1389
      %v1391 = vrcp.pop %v1339
      %v1392 = vmul.f32 1.0, %v1391
      %v1393 = vrcp.pop %v1340
      %v1394 = vmul.f32 1.0, %v1393
      %v1395 = vrcp.pop %v1341
      %v1396 = vmul.f32 1.0, %v1395
      %v1397 = vrcp.pop %v1342
      %v1398 = vmul.f32 1.0, %v1397
      %v1399 = vrcp.pop %v1343
      %v1400 = vmul.f32 1.0, %v1399
      %v1401 = vrcp.pop %v1344
      %v1402 = vmul.f32 1.0, %v1401
      %v1403 = vrcp.pop %v1345
      %v1404 = vmul.f32 1.0, %v1403
      %v1405 = vrcp.pop %v1346
      %v1406 = vmul.f32 1.0, %v1405
      %v1407 = vrcp.pop %v1347
      %v1408 = vmul.f32 1.0, %v1407
      %v1409 = vrcp.pop %v1348
      %v1410 = vmul.f32 1.0, %v1409
      %v1411 = vrcp.pop %v1349
      %v1412 = vmul.f32 1.0, %v1411
      %v1413 = vrcp.pop %v1350
      %v1414 = vmul.f32 1.0, %v1413
      %v1415 = vmin.f32 %v1352, %v1360
      %v1416 = vmin.f32 %v1354, %v1362
      %v1417 = vmin.f32 %v1356, %v1364
      %v1418 = vmin.f32 %v1358, %v1366
      %v1419 = vmin.f32 %v1415, %v1368
      %v1420 = vmin.f32 %v1416, %v1370
      %v1421 = vmin.f32 %v1417, %v1372
      %v1422 = vmin.f32 %v1418, %v1374
      %v1423 = vmin.f32 %v1419, %v1376
      %v1424 = vmin.f32 %v1420, %v1378
      %v1425 = vmin.f32 %v1421, %v1380
      %v1426 = vmin.f32 %v1422, %v1382
      %v1427 = vmin.f32 %v1423, %v1384
      %v1428 = vmin.f32 %v1424, %v1386
      %v1429 = vmin.f32 %v1425, %v1388
      %v1430 = vmin.f32 %v1426, %v1390
      %v1431 = vmin.f32 %v1427, %v1392
      %v1432 = vmin.f32 %v1428, %v1394
      %v1433 = vmin.f32 %v1429, %v1396
      %v1434 = vmin.f32 %v1430, %v1398
      %v1435 = vmin.f32 %v1431, %v1400
      %v1436 = vmin.f32 %v1432, %v1402
      %v1437 = vmin.f32 %v1433, %v1404
      %v1438 = vmin.f32 %v1434, %v1406
      %v1439 = vmin.f32 %v1435, %v1408
      %v1440 = vmin.f32 %v1436, %v1410
      %v1441 = vmin.f32 %v1437, %v1412
      %v1442 = vmin.f32 %v1438, %v1414
      %v1443 = vmin.f32 %v1439, %v1440
      %v1444 = vmin.f32 %v1441, %v1442
      %v1445 = vmin.f32 %v1443, %v1444
      %1446 = vmin.xlane.f32.xlu0 %v1445
      %v1447 = vpop.xlane.xlu0 %1446
      %v1448 = vmax.f32 %v1352, %v1360
      %v1449 = vmax.f32 %v1354, %v1362
      %v1450 = vmax.f32 %v1356, %v1364
      %v1451 = vmax.f32 %v1358, %v1366
      %v1452 = vmax.f32 %v1448, %v1368
      %v1453 = vmax.f32 %v1449, %v1370
      %v1454 = vmax.f32 %v1450, %v1372
      %v1455 = vmax.f32 %v1451, %v1374
      %v1456 = vmax.f32 %v1452, %v1376
      %v1457 = vmax.f32 %v1453, %v1378
      %v1458 = vmax.f32 %v1454, %v1380
      %v1459 = vmax.f32 %v1455, %v1382
      %v1460 = vmax.f32 %v1456, %v1384
      %v1461 = vmax.f32 %v1457, %v1386
      %v1462 = vmax.f32 %v1458, %v1388
      %v1463 = vmax.f32 %v1459, %v1390
      %v1464 = vmax.f32 %v1460, %v1392
      %v1465 = vmax.f32 %v1461, %v1394
      %v1466 = vmax.f32 %v1462, %v1396
      %v1467 = vmax.f32 %v1463, %v1398
      %v1468 = vmax.f32 %v1464, %v1400
      %v1469 = vmax.f32 %v1465, %v1402
      %v1470 = vmax.f32 %v1466, %v1404
      %v1471 = vmax.f32 %v1467, %v1406
      %v1472 = vmax.f32 %v1468, %v1408
      %v1473 = vmax.f32 %v1469, %v1410
      %v1474 = vmax.f32 %v1470, %v1412
      %v1475 = vmax.f32 %v1471, %v1414
      %v1476 = vmax.f32 %v1472, %v1473
      %v1477 = vmax.f32 %v1474, %v1475
      %v1478 = vmax.f32 %v1476, %v1477
      %1479 = vmax.xlane.f32.xlu0 %v1478
      %v1480 = vpop.xlane.xlu0 %1479
      %v1481 = vsub.f32 %v1480, %v1447
      %v1482 = vadd.f32 %v1481, 1e-08
      %v1483 = vrcp.pop %v1482
      %v1484 = vsub.f32 %v1352, %v1447
      %v1485 = vsub.f32 %v1354, %v1447
      %v1486 = vsub.f32 %v1356, %v1447
      %v1487 = vsub.f32 %v1358, %v1447
      %v1488 = vsub.f32 %v1360, %v1447
      %v1489 = vsub.f32 %v1362, %v1447
      %v1490 = vsub.f32 %v1364, %v1447
      %v1491 = vsub.f32 %v1366, %v1447
      %v1492 = vsub.f32 %v1368, %v1447
      %v1493 = vsub.f32 %v1370, %v1447
      %v1494 = vsub.f32 %v1372, %v1447
      %v1495 = vsub.f32 %v1374, %v1447
      %v1496 = vsub.f32 %v1376, %v1447
      %v1497 = vsub.f32 %v1378, %v1447
      %v1498 = vsub.f32 %v1380, %v1447
      %v1499 = vsub.f32 %v1382, %v1447
      %v1500 = vsub.f32 %v1384, %v1447
      %v1501 = vsub.f32 %v1386, %v1447
      %v1502 = vsub.f32 %v1388, %v1447
      %v1503 = vsub.f32 %v1390, %v1447
      %v1504 = vsub.f32 %v1392, %v1447
      %v1505 = vsub.f32 %v1394, %v1447
      %v1506 = vsub.f32 %v1396, %v1447
      %v1507 = vsub.f32 %v1398, %v1447
      %v1508 = vsub.f32 %v1400, %v1447
      %v1509 = vsub.f32 %v1402, %v1447
      %v1510 = vsub.f32 %v1404, %v1447
      %v1511 = vsub.f32 %v1406, %v1447
      %v1512 = vsub.f32 %v1408, %v1447
      %v1513 = vsub.f32 %v1410, %v1447
      %v1514 = vsub.f32 %v1412, %v1447
      %v1515 = vsub.f32 %v1414, %v1447
      %v1516 = vmul.f32 %v1484, %v1483
      %v1517 = vmul.f32 %v1485, %v1483
      %v1518 = vmul.f32 %v1486, %v1483
      %v1519 = vmul.f32 %v1487, %v1483
      %v1520 = vmul.f32 %v1488, %v1483
      %v1521 = vmul.f32 %v1489, %v1483
      %v1522 = vmul.f32 %v1490, %v1483
      %v1523 = vmul.f32 %v1491, %v1483
      %v1524 = vmul.f32 %v1492, %v1483
      %v1525 = vmul.f32 %v1493, %v1483
      %v1526 = vmul.f32 %v1494, %v1483
      %v1527 = vmul.f32 %v1495, %v1483
      %v1528 = vmul.f32 %v1496, %v1483
      %v1529 = vmul.f32 %v1497, %v1483
      %v1530 = vmul.f32 %v1498, %v1483
      %v1531 = vmul.f32 %v1499, %v1483
      %v1532 = vmul.f32 %v1500, %v1483
      %v1533 = vmul.f32 %v1501, %v1483
      %v1534 = vmul.f32 %v1502, %v1483
      %v1535 = vmul.f32 %v1503, %v1483
      %v1536 = vmul.f32 %v1504, %v1483
      %v1537 = vmul.f32 %v1505, %v1483
      %v1538 = vmul.f32 %v1506, %v1483
      %v1539 = vmul.f32 %v1507, %v1483
      %v1540 = vmul.f32 %v1508, %v1483
      %v1541 = vmul.f32 %v1509, %v1483
      %v1542 = vmul.f32 %v1510, %v1483
      %v1543 = vmul.f32 %v1511, %v1483
      %v1544 = vmul.f32 %v1512, %v1483
      %v1545 = vmul.f32 %v1513, %v1483
      %v1546 = vmul.f32 %v1514, %v1483
      %v1547 = vmul.f32 %v1515, %v1483
      %v1548 = vmax.f32 %v1516, 0.0
      %v1549 = vmax.f32 %v1517, 0.0
      %v1550 = vmax.f32 %v1518, 0.0
      %v1551 = vmax.f32 %v1519, 0.0
      %v1552 = vmax.f32 %v1520, 0.0
      %v1553 = vmax.f32 %v1521, 0.0
      %v1554 = vmax.f32 %v1522, 0.0
      %v1555 = vmax.f32 %v1523, 0.0
      %v1556 = vmax.f32 %v1524, 0.0
      %v1557 = vmax.f32 %v1525, 0.0
      %v1558 = vmax.f32 %v1526, 0.0
      %v1559 = vmax.f32 %v1527, 0.0
      %v1560 = vmax.f32 %v1528, 0.0
      %v1561 = vmax.f32 %v1529, 0.0
      %v1562 = vmax.f32 %v1530, 0.0
      %v1563 = vmax.f32 %v1531, 0.0
      %v1564 = vmax.f32 %v1532, 0.0
      %v1565 = vmax.f32 %v1533, 0.0
      %v1566 = vmax.f32 %v1534, 0.0
      %v1567 = vmax.f32 %v1535, 0.0
      %v1568 = vmax.f32 %v1536, 0.0
      %v1569 = vmax.f32 %v1537, 0.0
      %v1570 = vmax.f32 %v1538, 0.0
      %v1571 = vmax.f32 %v1539, 0.0
      %v1572 = vmax.f32 %v1540, 0.0
      %v1573 = vmax.f32 %v1541, 0.0
      %v1574 = vmax.f32 %v1542, 0.0
      %v1575 = vmax.f32 %v1543, 0.0
      %v1576 = vmax.f32 %v1544, 0.0
      %v1577 = vmax.f32 %v1545, 0.0
      %v1578 = vmax.f32 %v1546, 0.0
      %v1579 = vmax.f32 %v1547, 0.0
      %v1580 = vmin.f32 %v1548, 1.0
      %v1581 = vmin.f32 %v1549, 1.0
      %v1582 = vmin.f32 %v1550, 1.0
      %v1583 = vmin.f32 %v1551, 1.0
      %v1584 = vmin.f32 %v1552, 1.0
      %v1585 = vmin.f32 %v1553, 1.0
      %v1586 = vmin.f32 %v1554, 1.0
      %v1587 = vmin.f32 %v1555, 1.0
      %v1588 = vmin.f32 %v1556, 1.0
      %v1589 = vmin.f32 %v1557, 1.0
      %v1590 = vmin.f32 %v1558, 1.0
      %v1591 = vmin.f32 %v1559, 1.0
      %v1592 = vmin.f32 %v1560, 1.0
      %v1593 = vmin.f32 %v1561, 1.0
      %v1594 = vmin.f32 %v1562, 1.0
      %v1595 = vmin.f32 %v1563, 1.0
      %v1596 = vmin.f32 %v1564, 1.0
      %v1597 = vmin.f32 %v1565, 1.0
      %v1598 = vmin.f32 %v1566, 1.0
      %v1599 = vmin.f32 %v1567, 1.0
      %v1600 = vmin.f32 %v1568, 1.0
      %v1601 = vmin.f32 %v1569, 1.0
      %v1602 = vmin.f32 %v1570, 1.0
      %v1603 = vmin.f32 %v1571, 1.0
      %v1604 = vmin.f32 %v1572, 1.0
      %v1605 = vmin.f32 %v1573, 1.0
      %v1606 = vmin.f32 %v1574, 1.0
      %v1607 = vmin.f32 %v1575, 1.0
      %v1608 = vmin.f32 %v1576, 1.0
      %v1609 = vmin.f32 %v1577, 1.0
      %v1610 = vmin.f32 %v1578, 1.0
      %v1611 = vmin.f32 %v1579, 1.0
      %1612 = vst [vmem:[%s170] sm:$0xff] %v1580
      %1613 = vst [vmem:[%s170 + $0x8] sm:$0xff] %v1581
      %1614 = vst [vmem:[%s170 + $0x10] sm:$0xff] %v1582
      %1615 = vst [vmem:[%s170 + $0x18] sm:$0xff] %v1583
      %1616 = vst [vmem:[%s170 + $0x20] sm:$0xff] %v1584
      %1617 = vst [vmem:[%s170 + $0x28] sm:$0xff] %v1585
      %1618 = vst [vmem:[%s170 + $0x30] sm:$0xff] %v1586
      %1619 = vst [vmem:[%s170 + $0x38] sm:$0xff] %v1587
      %1620 = vst [vmem:[%s170 + $0x40] sm:$0xff] %v1588
      %1621 = vst [vmem:[%s170 + $0x48] sm:$0xff] %v1589
      %1622 = vst [vmem:[%s170 + $0x50] sm:$0xff] %v1590
      %1623 = vst [vmem:[%s170 + $0x58] sm:$0xff] %v1591
      %1624 = vst [vmem:[%s170 + $0x60] sm:$0xff] %v1592
      %1625 = vst [vmem:[%s170 + $0x68] sm:$0xff] %v1593
      %1626 = vst [vmem:[%s170 + $0x70] sm:$0xff] %v1594
      %1627 = vst [vmem:[%s170 + $0x78] sm:$0xff] %v1595
      %1628 = vst [vmem:[%s170 + $0x80] sm:$0xff] %v1596
      %1629 = vst [vmem:[%s170 + $0x88] sm:$0xff] %v1597
      %1630 = vst [vmem:[%s170 + $0x90] sm:$0xff] %v1598
      %1631 = vst [vmem:[%s170 + $0x98] sm:$0xff] %v1599
      %1632 = vst [vmem:[%s170 + $0xa0] sm:$0xff] %v1600
      %1633 = vst [vmem:[%s170 + $0xa8] sm:$0xff] %v1601
      %1634 = vst [vmem:[%s170 + $0xb0] sm:$0xff] %v1602
      %1635 = vst [vmem:[%s170 + $0xb8] sm:$0xff] %v1603
      %1636 = vst [vmem:[%s170 + $0xc0] sm:$0xff] %v1604
      %1637 = vst [vmem:[%s170 + $0xc8] sm:$0xff] %v1605
      %1638 = vst [vmem:[%s170 + $0xd0] sm:$0xff] %v1606
      %1639 = vst [vmem:[%s170 + $0xd8] sm:$0xff] %v1607
      %1640 = vst [vmem:[%s170 + $0xe0] sm:$0xff] %v1608
      %1641 = vst [vmem:[%s170 + $0xe8] sm:$0xff] %v1609
      %1642 = vst [vmem:[%s170 + $0xf0] sm:$0xff] %v1610
      %1643 = vst [vmem:[%s170 + $0xf8] sm:$0xff] %v1611
      %p1644 = scmp.lt.s32.totalorder %s14, 1
      %s1645 = scalar_select %p1644, %s14, 1
      %s1646 = smul.addr %s1645, 32
      %s1647 = smul.addr %s1646, 8
      %s1648 = scalar_lea.vmem %s3, %s1647
      // Predicated region
      $region33: #{keypointnet_forward.15} parent=31 // pred_check
        %p1649 = pneg %p100
      $region34: #{keypointnet_forward.15} parent=31 // pred_check_branch
        %1651 = sbr.rel (%p1649) target = $region36
      $region35: #{keypointnet_forward.15} parent=31 // pred_region
        _
      $region36: #{keypointnet_forward.15} parent=31 // pred_fallthru
        _
    $region32: #{keypointnet_forward.15} parent=5 // pred_fallthru
      _
    %p1652 = scmp.le.s32.totalorder 2, %s9
    // Predicated region
    $region37: #{keypointnet_forward.15} parent=5 // pred_check
      %p1653 = pneg %p1652
    $region38: #{keypointnet_forward.15} parent=5 // pred_check_branch
      %1655 = sbr.rel (%p1653) target = $region40
    $region39: #{keypointnet_forward.15} parent=5 // pred_region
      %s1656 = ssub.s32 %s9, 2
      // Predicated region
      $region41: #{keypointnet_forward.15} parent=39 // pred_check
        %p1657 = pneg %p106
      $region42: #{keypointnet_forward.15} parent=39 // pred_check_branch
        %1659 = sbr.rel (%p1657) target = $region44
      $region43: #{keypointnet_forward.15} parent=39 // pred_region
        %p1660 = scmp.lt.s32.totalorder %s15, 1
        %s1661 = scalar_select %p1660, %s15, 1
        %s1662 = smul.addr %s1661, 32
        %s1663 = smul.addr %s1662, 8
        %s1664 = scalar_lea.vmem %s3, %s1663
      $region44: #{keypointnet_forward.15} parent=39 // pred_fallthru
        _
    $region40: #{keypointnet_forward.15} parent=5 // pred_fallthru
      _
  $region6: #{keypointnet_forward.15} parent=0 // loop_footer
    %s13 = sadd.s32 1, %s9
  $region7: #{keypointnet_forward.15} parent=0 // loop_footer_branch
    %8 = sbr.rel target = $region3
  $region8: #{keypointnet_forward.15} parent=0 // loop_exit
    _

</llo_original>
